<compile_context>
chip_gen: v7x
topology: tpu7x:2x2x1
jax: 0.10.0
libtpu: 0.0.40
codegen_flags: <defaults>
</compile_context>

<pallas_src>
import functools

import numpy as np

import jax
import jax.numpy as jnp
from jax.experimental import pallas as pl
from jax.experimental.pallas import tpu as pltpu

LN_EPS = 1e-5                       # torch.nn.LayerNorm default
_INV_SQRT2 = 0.7071067811865476
_SQRT_2_OVER_PI = 0.7978845608028654


# ----------------------------------------------------------------------------- helpers

def _erf_approx(x):
    """Abramowitz & Stegun 7.1.26 erf (max abs error ~1.5e-7).

    Implemented with exp/abs/where only so it lowers cleanly inside Pallas (no reliance
    on a lax.erf lowering rule); the exp goes to the EUP.
    """
    a1, a2, a3, a4, a5 = 0.254829592, -0.284496736, 1.421413741, -1.453152027, 1.061405429
    p = 0.3275911
    ax = jnp.abs(x)
    t = 1.0 / (1.0 + p * ax)
    poly = ((((a5 * t + a4) * t + a3) * t + a2) * t + a1) * t
    y = 1.0 - poly * jnp.exp(-(ax * ax))
    return jnp.where(x < 0.0, -y, y)


def _gelu(h, exact):
    if exact:
        # torch.nn.GELU() default: exact (erf-based) GELU.
        return 0.5 * h * (1.0 + _erf_approx(h * _INV_SQRT2))
    # tanh approximation: transcendental on the EUP (free VLIW slot when MXU/VALU bound).
    inner = _SQRT_2_OVER_PI * (h + 0.044715 * (h * h * h))
    return 0.5 * h * (1.0 + jnp.tanh(inner))


def _layernorm_f32(x, gamma, beta):
    """LayerNorm over the last axis in f32, one-pass mean / mean-of-squares."""
    xf = x.astype(jnp.float32)
    mean = jnp.mean(xf, axis=-1, keepdims=True)
    msq = jnp.mean(xf * xf, axis=-1, keepdims=True)
    var = jnp.maximum(msq - mean * mean, 0.0)
    return (xf - mean) * jax.lax.rsqrt(var + LN_EPS) * gamma + beta


def _round_up(v, m):
    return (v + m - 1) // m * m


# ----------------------------------------------------------------------------- kernels

def _mlp_kernel_resident(x_ref, g_ref, bt_ref, w1_ref, b1_ref, w2_ref, b2_ref, o_ref,
                         *, exact_gelu, mm_dtype, mm_precision):
    """Resident-weight path: whole W1/W2 live in VMEM, single grid axis over row tiles."""
    xn = _layernorm_f32(x_ref[...], g_ref[...], bt_ref[...]).astype(mm_dtype)   # .type(x.dtype)
    h = jnp.dot(xn, w1_ref[...], preferred_element_type=jnp.float32,
                precision=mm_precision) + b1_ref[...]
    h = _gelu(h, exact_gelu).astype(mm_dtype)
    out = jnp.dot(h, w2_ref[...], preferred_element_type=jnp.float32,
                  precision=mm_precision) + b2_ref[...]
    o_ref[...] = out.astype(o_ref.dtype)


def _mlp_kernel_streamed(x_ref, g_ref, bt_ref, w1_ref, b1_ref, w2_ref, b2_ref, o_ref,
                         xn_ref, *maybe_acc, exact_gelu, mm_precision):
    """Streamed-H path: hidden dimension chunked on grid axis 1 (reduction, 'arbitrary')."""
    # When the output dtype is f32 we accumulate directly into the resident output block
    # (no separate f32 accumulator scratch); otherwise maybe_acc holds an f32 scratch.
    acc_ref = maybe_acc[0] if maybe_acc else o_ref
    hk = pl.program_id(1)

    @pl.when(hk == 0)
    def _():
        xn_ref[...] = _layernorm_f32(x_ref[...], g_ref[...], bt_ref[...]).astype(xn_ref.dtype)
        acc_ref[...] = jnp.zeros_like(acc_ref)

    h = jnp.dot(xn_ref[...], w1_ref[...], preferred_element_type=jnp.float32,
                precision=mm_precision) + b1_ref[...]
    h = _gelu(h, exact_gelu).astype(xn_ref.dtype)
    acc_ref[...] += jnp.dot(h, w2_ref[...], preferred_element_type=jnp.float32,
                            precision=mm_precision)

    @pl.when(hk == pl.num_programs(1) - 1)
    def _():
        o_ref[...] = (acc_ref[...] + b2_ref[...]).astype(o_ref.dtype)


# ----------------------------------------------------------------------------- wrapper

def _vmem_estimate(tm, th, C, H, *, x_bytes, o_bytes, mm_bytes, resident, acc_scratch):
    est = 2 * tm * C * (x_bytes + o_bytes)            # double-buffered x / out row tiles
    est += 4 * C * 4 + 2 * H * 4                      # gamma / beta / b1 / b2 (f32, small)
    if resident:
        est += 2 * 2 * C * H * mm_bytes               # W1 + W2 (2 buffers allocated)
        est += tm * H * (4 + mm_bytes)                # hidden activation temporaries
    else:
        est += 2 * 2 * C * th * mm_bytes              # streamed W1/W2 chunks, double-buffered
        est += tm * C * mm_bytes                      # xn scratch
        est += tm * C * 4 * (1 if acc_scratch else 0)  # f32 accumulator scratch
        est += tm * th * (4 + mm_bytes)               # hidden-chunk temporaries
    est += 2 * tm * C * 4                             # LayerNorm / epilogue temporaries
    return est


@functools.partial(
    jax.jit,
    static_argnames=("row_tile", "hidden_tile", "exact_gelu", "matmul_dtype",
                     "weight_vmem_budget_bytes", "force_stream", "vmem_limit_bytes"))
def mlp_forward(x, gamma, beta, w1, b1, w2, b2, *,
                row_tile=512,             # rows (tokens) per tile; 512-1024 recommended
                                          # on v5e/v6e when streaming weights, 256-512 on
                                          # v7x (64 MiB VMEM/TC) at large C/H.
                hidden_tile=512,          # H chunk when streaming (multiple of 128; keep a
                                          # multiple of 256 on v6e/v7x for MXU utilization).
                exact_gelu=True,          # True = torch.nn.GELU() (erf); False = tanh (EUP).
                matmul_dtype=None,        # e.g. jnp.bfloat16 for bf16 MXU feed (f32 accum).
                weight_vmem_budget_bytes=24 * 1024 * 1024,
                force_stream=False,       # force the streamed-H path (testing / huge tm).
                vmem_limit_bytes=None):
    """x: (B, L, C) -> (B, L, C)."""
    B, L, C = x.shape
    H = w1.shape[1]
    N = B * L

    out_dtype = x.dtype
    mm_dtype = np.dtype(x.dtype if matmul_dtype is None else matmul_dtype)
    # True f32 matmul (multi-pass MXU) when feeding f32 operands; native path for bf16.
    mm_precision = (jax.lax.Precision.HIGHEST if mm_dtype == np.dtype(np.float32)
                    else jax.lax.Precision.DEFAULT)

    # Cast weights for the MXU feed (no-op when dtypes already match).
    w1c = w1.astype(mm_dtype)
    w2c = w2.astype(mm_dtype)

    # Row tile: multiple of 8 sublanes; ragged tail block handled by Pallas (no jnp.pad).
    tm = min(_round_up(max(row_tile, 8), 8), _round_up(N, 8))
    n_row_tiles = pl.cdiv(N, tm)

    # Weight residency decision: resident => weights DMA'd exactly once per pallas_call.
    weight_bytes = 2 * C * H * mm_dtype.itemsize
    resident = (not force_stream) and (weight_bytes <= weight_vmem_budget_bytes)
    if resident:
        th = H
    else:
        th = min(hidden_tile, H)
        if H % th != 0 or (th % 128 != 0 and th != H):
            raise ValueError(
                f"hidden_tile={hidden_tile} must divide H={H} and be a multiple of 128 "
                "when streaming the hidden dimension.")
    n_h_chunks = H // th

    x2 = x.reshape(N, C)                                  # free reshape, no copy
    gamma2 = gamma.reshape(1, C).astype(jnp.float32)
    beta2 = beta.reshape(1, C).astype(jnp.float32)
    b1_2 = b1.reshape(1, H).astype(jnp.float32)
    b2_2 = b2.reshape(1, C).astype(jnp.float32)

    acc_into_out = np.dtype(out_dtype) == np.dtype(np.float32)

    if vmem_limit_bytes is None:
        est = _vmem_estimate(tm, th, C, H,
                             x_bytes=np.dtype(x.dtype).itemsize,
                             o_bytes=np.dtype(out_dtype).itemsize,
                             mm_bytes=mm_dtype.itemsize,
                             resident=resident,
                             acc_scratch=(not resident) and (not acc_into_out))
        # Actual need + 2x headroom, 32 MiB floor.  On v7x keep the working set below
        # ~48-56 MiB (64 MiB physical VMEM per TensorCore) by shrinking row/hidden tiles.
        vmem_limit_bytes = max(2 * est, 32 * 1024 * 1024)

    if resident:
        grid = (n_row_tiles,)
        in_specs = [
            pl.BlockSpec((tm, C), lambda i: (i, 0)),   # x rows
            pl.BlockSpec((1, C), lambda i: (0, 0)),    # gamma
            pl.BlockSpec((1, C), lambda i: (0, 0)),    # beta
            # Constant index maps: fetched once, revisits skipped.  On VMEM-tight configs
            # add pipeline_mode=pl.Buffered(1) here so the resident weights single-buffer.
            pl.BlockSpec((C, H), lambda i: (0, 0)),    # W1 (resident)
            pl.BlockSpec((1, H), lambda i: (0, 0)),    # b1
            pl.BlockSpec((H, C), lambda i: (0, 0)),    # W2 (resident)
            pl.BlockSpec((1, C), lambda i: (0, 0)),    # b2
        ]
        out_specs = pl.BlockSpec((tm, C), lambda i: (i, 0))
        scratch_shapes = []
        kernel = functools.partial(_mlp_kernel_resident, exact_gelu=exact_gelu,
                                   mm_dtype=mm_dtype, mm_precision=mm_precision)
        dim_sem = ("parallel",)
    else:
        grid = (n_row_tiles, n_h_chunks)               # reduction axis last
        in_specs = [
            pl.BlockSpec((tm, C), lambda i, k: (i, 0)),   # x rows (resident over k)
            pl.BlockSpec((1, C), lambda i, k: (0, 0)),    # gamma
            pl.BlockSpec((1, C), lambda i, k: (0, 0)),    # beta
            # Streamed hidden chunks (double-buffered).  Consider pl.Buffered(3) if the
            # chunk-0 weight fetch at row-tile boundaries shows up as an exposed DMA.
            pl.BlockSpec((C, th), lambda i, k: (0, k)),   # W1[:, chunk]
            pl.BlockSpec((1, th), lambda i, k: (0, k)),   # b1[chunk]
            pl.BlockSpec((th, C), lambda i, k: (k, 0)),   # W2[chunk, :]
            pl.BlockSpec((1, C), lambda i, k: (0, 0)),    # b2
        ]
        out_specs = pl.BlockSpec((tm, C), lambda i, k: (i, 0))
        scratch_shapes = [pltpu.VMEM((tm, C), mm_dtype)]          # normalized rows
        if not acc_into_out:
            scratch_shapes.append(pltpu.VMEM((tm, C), jnp.float32))  # f32 accumulator
        kernel = functools.partial(_mlp_kernel_streamed, exact_gelu=exact_gelu,
                                   mm_precision=mm_precision)
        dim_sem = ("parallel", "arbitrary")

    out2 = pl.pallas_call(
        kernel,
        out_shape=jax.ShapeDtypeStruct((N, C), out_dtype),
        grid_spec=pltpu.PrefetchScalarGridSpec(
            num_scalar_prefetch=0,
            grid=grid,
            in_specs=in_specs,
            out_specs=out_specs,
            scratch_shapes=scratch_shapes,
        ),
        compiler_params=pltpu.CompilerParams(
            dimension_semantics=dim_sem,
            vmem_limit_bytes=int(vmem_limit_bytes),
        ),
    )(x2, gamma2, beta2, w1c, b1_2, w2c, b2_2)

    return out2.reshape(B, L, C)


# ----------------------------------------------------------------------- reference/test

def init_params(key, channels, expansion, dtype=jnp.float32):
    hidden = channels * expansion
    k1, k2, k3, k4, k5, k6 = jax.random.split(key, 6)
    # torch default is gamma=1, beta=0; perturb slightly so the affine path is exercised.
    gamma = (1.0 + 0.1 * jax.random.normal(k5, (channels,))).astype(dtype)
    beta = (0.1 * jax.random.normal(k6, (channels,))).astype(dtype)
    bound1 = 1.0 / float(channels) ** 0.5
    w1 = jax.random.uniform(k1, (channels, hidden), dtype, -bound1, bound1)
    b1 = jax.random.uniform(k2, (hidden,), dtype, -bound1, bound1)
    bound2 = 1.0 / float(hidden) ** 0.5
    w2 = jax.random.uniform(k3, (hidden, channels), dtype, -bound2, bound2)
    b2 = jax.random.uniform(k4, (channels,), dtype, -bound2, bound2)
    return gamma, beta, w1, b1, w2, b2


def _reference(x, gamma, beta, w1, b1, w2, b2, exact_gelu=True):
    """Pure-JAX reference in f32 (Precision.HIGHEST matmuls = true f32 result)."""
    xf = x.astype(jnp.float32)
    mean = xf.mean(-1, keepdims=True)
    var = ((xf - mean) ** 2).mean(-1, keepdims=True)
    xn = (xf - mean) / jnp.sqrt(var + LN_EPS) * gamma.astype(jnp.float32) + beta.astype(jnp.float32)
    xn = xn.astype(x.dtype).astype(jnp.float32)       # `.type(x.dtype)` then Linear math
    h = jnp.dot(xn, w1.astype(jnp.float32), precision=jax.lax.Precision.HIGHEST)
    h = h + b1.astype(jnp.float32)
    if exact_gelu:
        h = 0.5 * h * (1.0 + jax.lax.erf(h * _INV_SQRT2))
    else:
        h = 0.5 * h * (1.0 + jnp.tanh(_SQRT_2_OVER_PI * (h + 0.044715 * h ** 3)))
    out = jnp.dot(h, w2.astype(jnp.float32), precision=jax.lax.Precision.HIGHEST)
    out = out + b2.astype(jnp.float32)
    return out.astype(x.dtype)


def _check(*, B, L, C, E, row_tile, hidden_tile=512, exact_gelu=True, matmul_dtype=None,
           force_stream=False, x_dtype=jnp.float32, atol=1e-4, rtol=1e-4):
    key = jax.random.PRNGKey(0)
    kx, kp = jax.random.split(key)
    x = jax.random.normal(kx, (B, L, C), jnp.float32).astype(x_dtype)
    gamma, beta, w1, b1, w2, b2 = init_params(kp, C, E)

    out = mlp_forward(x, gamma, beta, w1, b1, w2, b2,
                      row_tile=row_tile, hidden_tile=hidden_tile,
                      exact_gelu=exact_gelu, matmul_dtype=matmul_dtype,
                      force_stream=force_stream)
    out = jax.block_until_ready(out)
    assert out.shape == (B, L, C), out.shape
    assert out.dtype == x.dtype, out.dtype

    ref = _reference(x, gamma, beta, w1, b1, w2, b2, exact_gelu=exact_gelu)
    a = out.astype(jnp.float32)
    b = ref.astype(jnp.float32)
    err = float(jnp.max(jnp.abs(a - b)))
    assert bool(jnp.allclose(a, b, atol=atol, rtol=rtol)), \
        f"max abs err {err} (atol={atol}, rtol={rtol})"


if __name__ == "__main__":
    # 1) Resident-weight path: ragged row count (80 rows, 64-row tiles -> masked tail
    #    block), exact erf GELU, pure f32.
    _check(B=2, L=40, C=128, E=4, row_tile=64)
    # 2) Streamed-H path (forced): two hidden chunks, f32 accumulation directly into the
    #    resident output block (no accumulator scratch).
    _check(B=2, L=40, C=128, E=4, row_tile=64, hidden_tile=256, force_stream=True)
    # 3) Perf mode: bf16 MXU operands + tanh GELU (EUP); loose tolerance vs f32 reference.
    _check(B=2, L=40, C=128, E=4, row_tile=64, exact_gelu=False,
           matmul_dtype=jnp.bfloat16, atol=5e-2, rtol=5e-2)
    # 4) bf16 activations + streamed H (exercises the separate f32 accumulator scratch).
    _check(B=2, L=24, C=128, E=4, row_tile=64, hidden_tile=256, force_stream=True,
           exact_gelu=False, matmul_dtype=jnp.bfloat16, x_dtype=jnp.bfloat16,
           atol=1e-1, rtol=1e-1)
    # 5) Tiny fallback shape (C < 128 lanes -> full-dim blocks, single grid step).
    _check(B=2, L=8, C=32, E=4, row_tile=256)
    print("KERNEL_OK")
</pallas_src>

<mosaic_0001>
module attributes {stable_mosaic.version = 11 : i64} {
  func.func @_mlp_kernel_resident(%arg0: i32, %arg1: memref<64x128xf32, #tpu.memory_space<vmem>>, %arg2: memref<1x128xf32, #tpu.memory_space<vmem>>, %arg3: memref<1x128xf32, #tpu.memory_space<vmem>>, %arg4: memref<128x512xf32, #tpu.memory_space<vmem>>, %arg5: memref<1x512xf32, #tpu.memory_space<vmem>>, %arg6: memref<512x128xf32, #tpu.memory_space<vmem>>, %arg7: memref<1x128xf32, #tpu.memory_space<vmem>>, %arg8: memref<64x128xf32, #tpu.memory_space<vmem>>) attributes {dimension_semantics = [#tpu.dimension_semantics<parallel>], iteration_bounds = array<i64: 2>, scalar_prefetch = 0 : i64, scratch_operands = 0 : i64, tpu.core_type = #tpu.core_type<tc>, window_params = [{transform_indices = @transform_0, window_bounds = array<i64: 64, 128>}, {pipeline_mode = #tpu.pipeline_mode<synchronous>, transform_indices = @transform_1, window_bounds = array<i64: 1, 128>}, {pipeline_mode = #tpu.pipeline_mode<synchronous>, transform_indices = @transform_2, window_bounds = array<i64: 1, 128>}, {pipeline_mode = #tpu.pipeline_mode<synchronous>, transform_indices = @transform_3, window_bounds = array<i64: 128, 512>}, {pipeline_mode = #tpu.pipeline_mode<synchronous>, transform_indices = @transform_4, window_bounds = array<i64: 1, 512>}, {pipeline_mode = #tpu.pipeline_mode<synchronous>, transform_indices = @transform_5, window_bounds = array<i64: 512, 128>}, {pipeline_mode = #tpu.pipeline_mode<synchronous>, transform_indices = @transform_6, window_bounds = array<i64: 1, 128>}, {transform_indices = @transform_7, window_bounds = array<i64: 64, 128>}]} {
    %c0 = arith.constant 0 : index
    %c0_0 = arith.constant 0 : index
    %0 = vector.load %arg1[%c0, %c0_0] : memref<64x128xf32, #tpu.memory_space<vmem>>, vector<64x128xf32>
    %c0_1 = arith.constant 0 : index
    %c0_2 = arith.constant 0 : index
    %1 = vector.load %arg2[%c0_1, %c0_2] : memref<1x128xf32, #tpu.memory_space<vmem>>, vector<1x128xf32>
    %c0_3 = arith.constant 0 : index
    %c0_4 = arith.constant 0 : index
    %2 = vector.load %arg3[%c0_3, %c0_4] : memref<1x128xf32, #tpu.memory_space<vmem>>, vector<1x128xf32>
    %cst = arith.constant dense<0.000000e+00> : vector<64xf32>
    %3 = vector.multi_reduction <add>, %0, %cst [1] : vector<64x128xf32> to vector<64xf32>
    %4 = vector.shape_cast %3 : vector<64xf32> to vector<64x1xf32>
    %cst_5 = arith.constant 1.280000e+02 : f32
    %5 = vector.broadcast %cst_5 : f32 to vector<64x1xf32>
    %6 = arith.divf %4, %5 : vector<64x1xf32>
    %7 = arith.mulf %0, %0 : vector<64x128xf32>
    %cst_6 = arith.constant dense<0.000000e+00> : vector<64xf32>
    %8 = vector.multi_reduction <add>, %7, %cst_6 [1] : vector<64x128xf32> to vector<64xf32>
    %9 = vector.shape_cast %8 : vector<64xf32> to vector<64x1xf32>
    %cst_7 = arith.constant 1.280000e+02 : f32
    %10 = vector.broadcast %cst_7 : f32 to vector<64x1xf32>
    %11 = arith.divf %9, %10 : vector<64x1xf32>
    %12 = arith.mulf %6, %6 : vector<64x1xf32>
    %13 = arith.subf %11, %12 : vector<64x1xf32>
    %cst_8 = arith.constant 0.000000e+00 : f32
    %14 = vector.broadcast %cst_8 : f32 to vector<64x1xf32>
    %15 = arith.maximumf %13, %14 : vector<64x1xf32>
    %16 = vector.broadcast %6 : vector<64x1xf32> to vector<64x128xf32>
    %17 = arith.subf %0, %16 : vector<64x128xf32>
    %cst_9 = arith.constant 9.99999974E-6 : f32
    %18 = vector.broadcast %cst_9 : f32 to vector<64x1xf32>
    %19 = arith.addf %15, %18 : vector<64x1xf32>
    %20 = math.rsqrt %19 : vector<64x1xf32>
    %21 = vector.broadcast %20 : vector<64x1xf32> to vector<64x128xf32>
    %22 = arith.mulf %17, %21 : vector<64x128xf32>
    %23 = vector.broadcast %1 : vector<1x128xf32> to vector<64x128xf32>
    %24 = arith.mulf %22, %23 : vector<64x128xf32>
    %25 = vector.broadcast %2 : vector<1x128xf32> to vector<64x128xf32>
    %26 = arith.addf %24, %25 : vector<64x128xf32>
    %c0_10 = arith.constant 0 : index
    %c0_11 = arith.constant 0 : index
    %27 = vector.load %arg4[%c0_10, %c0_11] : memref<128x512xf32, #tpu.memory_space<vmem>>, vector<128x512xf32>
    %cst_12 = arith.constant dense<0.000000e+00> : vector<64x512xf32>
    %28 = tpu.matmul %26, %27, %cst_12 {dimension_numbers = #tpu.dot_dimension_numbers<[1], [0], [0], [1], [0, 0, 1, 1], [], []>, precision = #tpu.contract_precision<fp32>} : vector<64x128xf32>, vector<128x512xf32>, vector<64x512xf32> -> vector<64x512xf32>
    %c0_13 = arith.constant 0 : index
    %c0_14 = arith.constant 0 : index
    %29 = vector.load %arg5[%c0_13, %c0_14] : memref<1x512xf32, #tpu.memory_space<vmem>>, vector<1x512xf32>
    %30 = vector.broadcast %29 : vector<1x512xf32> to vector<64x512xf32>
    %31 = arith.addf %28, %30 : vector<64x512xf32>
    %cst_15 = arith.constant 5.000000e-01 : f32
    %32 = vector.broadcast %cst_15 : f32 to vector<64x512xf32>
    %33 = arith.mulf %32, %31 : vector<64x512xf32>
    %cst_16 = arith.constant 0.707106769 : f32
    %34 = vector.broadcast %cst_16 : f32 to vector<64x512xf32>
    %35 = arith.mulf %31, %34 : vector<64x512xf32>
    %36 = math.absf %35 : vector<64x512xf32>
    %cst_17 = arith.constant 0.327591091 : f32
    %37 = vector.broadcast %cst_17 : f32 to vector<64x512xf32>
    %38 = arith.mulf %37, %36 : vector<64x512xf32>
    %cst_18 = arith.constant 1.000000e+00 : f32
    %39 = vector.broadcast %cst_18 : f32 to vector<64x512xf32>
    %40 = arith.addf %39, %38 : vector<64x512xf32>
    %cst_19 = arith.constant 1.000000e+00 : f32
    %41 = vector.broadcast %cst_19 : f32 to vector<64x512xf32>
    %42 = arith.divf %41, %40 : vector<64x512xf32>
    %cst_20 = arith.constant 1.06140542 : f32
    %43 = vector.broadcast %cst_20 : f32 to vector<64x512xf32>
    %44 = arith.mulf %43, %42 : vector<64x512xf32>
    %cst_21 = arith.constant -1.45315206 : f32
    %45 = vector.broadcast %cst_21 : f32 to vector<64x512xf32>
    %46 = arith.addf %44, %45 : vector<64x512xf32>
    %47 = arith.mulf %46, %42 : vector<64x512xf32>
    %cst_22 = arith.constant 1.42141378 : f32
    %48 = vector.broadcast %cst_22 : f32 to vector<64x512xf32>
    %49 = arith.addf %47, %48 : vector<64x512xf32>
    %50 = arith.mulf %49, %42 : vector<64x512xf32>
    %cst_23 = arith.constant -0.284496725 : f32
    %51 = vector.broadcast %cst_23 : f32 to vector<64x512xf32>
    %52 = arith.addf %50, %51 : vector<64x512xf32>
    %53 = arith.mulf %52, %42 : vector<64x512xf32>
    %cst_24 = arith.constant 0.254829586 : f32
    %54 = vector.broadcast %cst_24 : f32 to vector<64x512xf32>
    %55 = arith.addf %53, %54 : vector<64x512xf32>
    %56 = arith.mulf %55, %42 : vector<64x512xf32>
    %57 = arith.mulf %36, %36 : vector<64x512xf32>
    %cst_25 = arith.constant 0.000000e+00 : f32
    %58 = vector.broadcast %cst_25 : f32 to vector<64x512xf32>
    %59 = arith.subf %58, %57 : vector<64x512xf32>
    %60 = math.exp %59 : vector<64x512xf32>
    %61 = arith.mulf %56, %60 : vector<64x512xf32>
    %cst_26 = arith.constant 1.000000e+00 : f32
    %62 = vector.broadcast %cst_26 : f32 to vector<64x512xf32>
    %63 = arith.subf %62, %61 : vector<64x512xf32>
    %cst_27 = arith.constant 0.000000e+00 : f32
    %64 = vector.broadcast %cst_27 : f32 to vector<64x512xf32>
    %65 = arith.cmpf olt, %35, %64 : vector<64x512xf32>
    %cst_28 = arith.constant 0.000000e+00 : f32
    %66 = vector.broadcast %cst_28 : f32 to vector<64x512xf32>
    %67 = arith.subf %66, %63 : vector<64x512xf32>
    %68 = arith.select %65, %67, %63 : vector<64x512xi1>, vector<64x512xf32>
    %cst_29 = arith.constant 1.000000e+00 : f32
    %69 = vector.broadcast %cst_29 : f32 to vector<64x512xf32>
    %70 = arith.addf %69, %68 : vector<64x512xf32>
    %71 = arith.mulf %33, %70 : vector<64x512xf32>
    %c0_30 = arith.constant 0 : index
    %c0_31 = arith.constant 0 : index
    %72 = vector.load %arg6[%c0_30, %c0_31] : memref<512x128xf32, #tpu.memory_space<vmem>>, vector<512x128xf32>
    %cst_32 = arith.constant dense<0.000000e+00> : vector<64x128xf32>
    %73 = tpu.matmul %71, %72, %cst_32 {dimension_numbers = #tpu.dot_dimension_numbers<[1], [0], [0], [1], [0, 0, 1, 1], [], []>, precision = #tpu.contract_precision<fp32>} : vector<64x512xf32>, vector<512x128xf32>, vector<64x128xf32> -> vector<64x128xf32>
    %c0_33 = arith.constant 0 : index
    %c0_34 = arith.constant 0 : index
    %74 = vector.load %arg7[%c0_33, %c0_34] : memref<1x128xf32, #tpu.memory_space<vmem>>, vector<1x128xf32>
    %75 = vector.broadcast %74 : vector<1x128xf32> to vector<64x128xf32>
    %76 = arith.addf %73, %75 : vector<64x128xf32>
    %c0_35 = arith.constant 0 : index
    %c0_36 = arith.constant 0 : index
    %77 = vector.load %arg8[%c0_35, %c0_36] : memref<64x128xf32, #tpu.memory_space<vmem>>, vector<64x128xf32>
    tpu.vector_store %arg8[%c0_35, %c0_36], %76 {strides = array<i32>} : memref<64x128xf32, #tpu.memory_space<vmem>>, vector<64x128xf32>,
    return
  }
  func.func @transform_0(%arg0: i32) -> (i32, i32) {
    %c0_i32 = arith.constant 0 : i32
    %c0_i32_0 = arith.constant 0 : i32
    return %arg0, %c0_i32 : i32, i32
  }
  func.func @transform_1(%arg0: i32) -> (i32, i32) {
    %c0_i32 = arith.constant 0 : i32
    %c0_i32_0 = arith.constant 0 : i32
    %c0_i32_1 = arith.constant 0 : i32
    return %c0_i32, %c0_i32_0 : i32, i32
  }
  func.func @transform_2(%arg0: i32) -> (i32, i32) {
    %c0_i32 = arith.constant 0 : i32
    %c0_i32_0 = arith.constant 0 : i32
    %c0_i32_1 = arith.constant 0 : i32
    return %c0_i32, %c0_i32_0 : i32, i32
  }
  func.func @transform_3(%arg0: i32) -> (i32, i32) {
    %c0_i32 = arith.constant 0 : i32
    %c0_i32_0 = arith.constant 0 : i32
    %c0_i32_1 = arith.constant 0 : i32
    return %c0_i32, %c0_i32_0 : i32, i32
  }
  func.func @transform_4(%arg0: i32) -> (i32, i32) {
    %c0_i32 = arith.constant 0 : i32
    %c0_i32_0 = arith.constant 0 : i32
    %c0_i32_1 = arith.constant 0 : i32
    return %c0_i32, %c0_i32_0 : i32, i32
  }
  func.func @transform_5(%arg0: i32) -> (i32, i32) {
    %c0_i32 = arith.constant 0 : i32
    %c0_i32_0 = arith.constant 0 : i32
    %c0_i32_1 = arith.constant 0 : i32
    return %c0_i32, %c0_i32_0 : i32, i32
  }
  func.func @transform_6(%arg0: i32) -> (i32, i32) {
    %c0_i32 = arith.constant 0 : i32
    %c0_i32_0 = arith.constant 0 : i32
    %c0_i32_1 = arith.constant 0 : i32
    return %c0_i32, %c0_i32_0 : i32, i32
  }
  func.func @transform_7(%arg0: i32) -> (i32, i32) {
    %c0_i32 = arith.constant 0 : i32
    %c0_i32_0 = arith.constant 0 : i32
    return %arg0, %c0_i32 : i32, i32
  }
}

</mosaic_0001>

<llo_original>
// kernel: mlp_forward.1
$region0: #{mlp_forward.1}
  #allocation0 [shape = 'u32[]', space=smem, size = 0x4, offset = 0x4, fixed_abs, tag = 'smem constant byte address 0x4 - core index']
  #allocation1 [shape = 'u32[144,128]{1,0:T(1,128)}', space=vmem, size = 0x12000, scoped, tag = 'internal scratch']
  %s0 = inlined_call_operand.hbm [shape: f32[80,128], index: 0, kind: input, shape index: {}]
  %s1 = inlined_call_operand.vmem [shape: f32[1,128], index: 1, kind: input, shape index: {}]
  %s2 = inlined_call_operand.vmem [shape: f32[1,128], index: 2, kind: input, shape index: {}]
  %s3 = inlined_call_operand.hbm [shape: f32[128,512], index: 3, kind: input, shape index: {}]
  %s4 = inlined_call_operand.vmem [shape: f32[1,512], index: 4, kind: input, shape index: {}]
  %s5 = inlined_call_operand.hbm [shape: f32[512,128], index: 5, kind: input, shape index: {}]
  %s6 = inlined_call_operand.vmem [shape: f32[1,128], index: 6, kind: input, shape index: {}]
  %s7 = inlined_call_operand.hbm [shape: f32[80,128], index: 7, kind: output, shape index: {}]
  %s8 = sld [smem:[#allocation0]]
  $region73: #{mlp_forward.1} parent=0
    _
  %s10 = ssub.s32 1, %s8
  %s11 = scalar_select 0, %s10, %s8
  $region1: #{mlp_forward.1} parent=0
    #allocation2 [shape = 'u8[65536]{0}', space=vmem, size = 0x10000, scoped, tag = 'input window, operand 0']
    #allocation3 [shape = 's32[2]{0}', space=sflag, size = 0x8, scoped, tag = 'scoped memory for mlp_forward.1']
    #allocation4 [shape = 's32[2]{0}', space=sflag, size = 0x8, scoped, tag = 'scoped memory for mlp_forward.1']
    #allocation5 [shape = 'u8[262144]{0}', space=vmem, size = 0x40000, scoped, tag = 'input window, operand 3, single buffered']
    #allocation6 [shape = 's32[1]{0}', space=sflag, size = 0x4, scoped, tag = 'scoped memory for mlp_forward.1']
    #allocation7 [shape = 'u8[262144]{0}', space=vmem, size = 0x40000, scoped, tag = 'input window, operand 5, single buffered']
    #allocation8 [shape = 'u8[65536]{0}', space=vmem, size = 0x10000, scoped, tag = 'output window, operand 0']
    %12 = vsyncpa [#allocation3], 0
    %s13 = scalar_lea.sflag [#allocation3], 1
    %14 = vsyncpa %s13, 0
    %15 = vsyncpa [#allocation6], 0
    %16 = vsyncpa [#allocation4], 0
    %s17 = scalar_lea.sflag [#allocation4], 1
    %18 = vsyncpa %s17, 0
    loop: start=0, step=1, limit=4
    $region2: #{mlp_forward.1} parent=1 // loop_pre_header
      _
    $region3: #{mlp_forward.1} parent=1 // loop_header
      %s20 = sphi 0, %s24
      %p21 = scmp.ge.s32.totalorder %s20, 4
      %s30 = sphi 0, %s32
      %s33 = sphi 0, %s30
      %s34 = sphi 0, %s33
      %s50 = sphi 0, %s34
      %s54 = sphi 0, %s54
      %s56 = sphi 0, %s54
      %s57 = sphi 0, %s56
      %s71 = sphi 0, %s57
      %s75 = sphi 0, %s75
      %s77 = sphi 0, %s75
      %s78 = sphi 0, %s77
      %s92 = sphi 0, %s78
      %s96 = sphi 0, %s96
      %s98 = sphi 0, %s96
      %s99 = sphi 0, %s98
      %s113 = sphi 0, %s99
      %s117 = sphi 0, %s117
      %s119 = sphi 0, %s117
      %s120 = sphi 0, %s119
      %s134 = sphi 0, %s120
      %s138 = sphi 0, %s138
      %s140 = sphi 0, %s138
      %s141 = sphi 0, %s140
      %s155 = sphi 0, %s141
      %s159 = sphi 0, %s159
      %s161 = sphi 0, %s159
      %s162 = sphi 0, %s161
      %s176 = sphi 0, %s162
      %s182 = sphi 0, %s184
      %s185 = sphi 0, %s182
      %s186 = sphi 0, %s185
      %s202 = sphi 0, %s186
    $region4: #{mlp_forward.1} parent=1 // loop_header_branch
      %23 = sbr.rel (%p21) target = $region8
    $region5: #{mlp_forward.1} parent=1 // loop_body
      %s25 = ssub.s32 %s20, 1
      %s26 = ssub.s32 %s20, 2
      %s27 = sadd.s32 %s20, 1
      %s28 = ssub.s32 %s20, %s27
      %p29 = scmp.eq.s32.totalorder %s28, 0
      %s31 = sadd.s32 %s30, 1
      %s32 = scalar_select %p29, %s30, %s31
      %p35 = pneg %p29
      %p36 = scmp.eq.s32.totalorder %s20, 1
      %p37 = por %p35, %p36
      %p38 = scmp.ne.s32.totalorder %s30, %s33
      %p39 = scmp.eq.s32.totalorder %s20, 0
      %p40 = por %p38, %p39
      %p41 = scmp.ne.s32.totalorder %s30, %s33
      %p42 = scmp.eq.s32.totalorder %s25, 1
      %p43 = por %p41, %p42
      %p44 = scmp.ne.s32.totalorder %s33, %s34
      %p45 = scmp.eq.s32.totalorder %s25, 0
      %p46 = por %p44, %p45
      %p47 = scmp.ne.s32.totalorder %s33, %s34
      %p48 = scmp.eq.s32.totalorder %s26, 1
      %p49 = por %p47, %p48
      %p51 = scmp.ne.s32.totalorder %s34, %s50
      %p52 = scmp.eq.s32.totalorder %s26, 0
      %p53 = por %p51, %p52
      %s55 = sadd.s32 %s54, 1
      %p58 = scmp.eq.s32.totalorder %s20, 1
      %p59 = scmp.ne.s32.totalorder %s54, %s56
      %p60 = scmp.eq.s32.totalorder %s20, 0
      %p61 = por %p59, %p60
      %p62 = scmp.ne.s32.totalorder %s54, %s56
      %p63 = scmp.eq.s32.totalorder %s25, 1
      %p64 = por %p62, %p63
      %p65 = scmp.ne.s32.totalorder %s56, %s57
      %p66 = scmp.eq.s32.totalorder %s25, 0
      %p67 = por %p65, %p66
      %p68 = scmp.ne.s32.totalorder %s56, %s57
      %p69 = scmp.eq.s32.totalorder %s26, 1
      %p70 = por %p68, %p69
      %p72 = scmp.ne.s32.totalorder %s57, %s71
      %p73 = scmp.eq.s32.totalorder %s26, 0
      %p74 = por %p72, %p73
      %s76 = sadd.s32 %s75, 1
      %p79 = scmp.eq.s32.totalorder %s20, 1
      %p80 = scmp.ne.s32.totalorder %s75, %s77
      %p81 = scmp.eq.s32.totalorder %s20, 0
      %p82 = por %p80, %p81
      %p83 = scmp.ne.s32.totalorder %s75, %s77
      %p84 = scmp.eq.s32.totalorder %s25, 1
      %p85 = por %p83, %p84
      %p86 = scmp.ne.s32.totalorder %s77, %s78
      %p87 = scmp.eq.s32.totalorder %s25, 0
      %p88 = por %p86, %p87
      %p89 = scmp.ne.s32.totalorder %s77, %s78
      %p90 = scmp.eq.s32.totalorder %s26, 1
      %p91 = por %p89, %p90
      %p93 = scmp.ne.s32.totalorder %s78, %s92
      %p94 = scmp.eq.s32.totalorder %s26, 0
      %p95 = por %p93, %p94
      %s97 = sadd.s32 %s96, 1
      %p100 = scmp.eq.s32.totalorder %s20, 1
      %p101 = scmp.ne.s32.totalorder %s96, %s98
      %p102 = scmp.eq.s32.totalorder %s20, 0
      %p103 = por %p101, %p102
      %p104 = scmp.ne.s32.totalorder %s96, %s98
      %p105 = scmp.eq.s32.totalorder %s25, 1
      %p106 = por %p104, %p105
      %p107 = scmp.ne.s32.totalorder %s98, %s99
      %p108 = scmp.eq.s32.totalorder %s25, 0
      %p109 = por %p107, %p108
      %p110 = scmp.ne.s32.totalorder %s98, %s99
      %p111 = scmp.eq.s32.totalorder %s26, 1
      %p112 = por %p110, %p111
      %p114 = scmp.ne.s32.totalorder %s99, %s113
      %p115 = scmp.eq.s32.totalorder %s26, 0
      %p116 = por %p114, %p115
      %s118 = sadd.s32 %s117, 1
      %p121 = scmp.eq.s32.totalorder %s20, 1
      %p122 = scmp.ne.s32.totalorder %s117, %s119
      %p123 = scmp.eq.s32.totalorder %s20, 0
      %p124 = por %p122, %p123
      %p125 = scmp.ne.s32.totalorder %s117, %s119
      %p126 = scmp.eq.s32.totalorder %s25, 1
      %p127 = por %p125, %p126
      %p128 = scmp.ne.s32.totalorder %s119, %s120
      %p129 = scmp.eq.s32.totalorder %s25, 0
      %p130 = por %p128, %p129
      %p131 = scmp.ne.s32.totalorder %s119, %s120
      %p132 = scmp.eq.s32.totalorder %s26, 1
      %p133 = por %p131, %p132
      %p135 = scmp.ne.s32.totalorder %s120, %s134
      %p136 = scmp.eq.s32.totalorder %s26, 0
      %p137 = por %p135, %p136
      %s139 = sadd.s32 %s138, 1
      %p142 = scmp.eq.s32.totalorder %s20, 1
      %p143 = scmp.ne.s32.totalorder %s138, %s140
      %p144 = scmp.eq.s32.totalorder %s20, 0
      %p145 = por %p143, %p144
      %p146 = scmp.ne.s32.totalorder %s138, %s140
      %p147 = scmp.eq.s32.totalorder %s25, 1
      %p148 = por %p146, %p147
      %p149 = scmp.ne.s32.totalorder %s140, %s141
      %p150 = scmp.eq.s32.totalorder %s25, 0
      %p151 = por %p149, %p150
      %p152 = scmp.ne.s32.totalorder %s140, %s141
      %p153 = scmp.eq.s32.totalorder %s26, 1
      %p154 = por %p152, %p153
      %p156 = scmp.ne.s32.totalorder %s141, %s155
      %p157 = scmp.eq.s32.totalorder %s26, 0
      %p158 = por %p156, %p157
      %s160 = sadd.s32 %s159, 1
      %p163 = scmp.eq.s32.totalorder %s20, 1
      %p164 = scmp.ne.s32.totalorder %s159, %s161
      %p165 = scmp.eq.s32.totalorder %s20, 0
      %p166 = por %p164, %p165
      %p167 = scmp.ne.s32.totalorder %s159, %s161
      %p168 = scmp.eq.s32.totalorder %s25, 1
      %p169 = por %p167, %p168
      %p170 = scmp.ne.s32.totalorder %s161, %s162
      %p171 = scmp.eq.s32.totalorder %s25, 0
      %p172 = por %p170, %p171
      %p173 = scmp.ne.s32.totalorder %s161, %s162
      %p174 = scmp.eq.s32.totalorder %s26, 1
      %p175 = por %p173, %p174
      %p177 = scmp.ne.s32.totalorder %s162, %s176
      %p178 = scmp.eq.s32.totalorder %s26, 0
      %p179 = por %p177, %p178
      %s180 = ssub.s32 %s20, %s27
      %p181 = scmp.eq.s32.totalorder %s180, 0
      %s183 = sadd.s32 %s182, 1
      %s184 = scalar_select %p181, %s182, %s183
      %p187 = pneg %p181
      %p188 = scmp.eq.s32.totalorder %s20, 1
      %p189 = por %p187, %p188
      %p190 = scmp.ne.s32.totalorder %s182, %s185
      %p191 = scmp.eq.s32.totalorder %s20, 0
      %p192 = por %p190, %p191
      %p193 = scmp.ne.s32.totalorder %s182, %s185
      %p194 = scmp.eq.s32.totalorder %s25, 1
      %p195 = por %p193, %p194
      %p196 = scmp.ne.s32.totalorder %s185, %s186
      %p197 = scmp.eq.s32.totalorder %s25, 0
      %p198 = por %p196, %p197
      %p199 = scmp.ne.s32.totalorder %s185, %s186
      %p200 = scmp.eq.s32.totalorder %s26, 1
      %p201 = por %p199, %p200
      %p203 = scmp.ne.s32.totalorder %s186, %s202
      %p204 = scmp.eq.s32.totalorder %s26, 0
      %p205 = por %p203, %p204
      %p206 = scmp.le.s32.totalorder 1, %s20
      %p207 = scmp.lt.s32.totalorder %s20, 3
      %p208 = pnand %p206, %p207
      %p209 = pneg %p208
      // Predicated region
      $region9: #{mlp_forward.1} parent=5 // pred_check
        _
      $region10: #{mlp_forward.1} parent=5 // pred_check_branch
        %211 = sbr.rel (%p208) target = $region12
      $region11: #{mlp_forward.1} parent=5 // pred_region
        %s212 = ssub.s32 %s20, 1
        // Predicated region
        $region13: #{mlp_forward.1} parent=11 // pred_check
          %p213 = pneg %p67
        $region14: #{mlp_forward.1} parent=11 // pred_check_branch
          %215 = sbr.rel (%p213) target = $region16
        $region15: #{mlp_forward.1} parent=11 // pred_region
          _
        $region16: #{mlp_forward.1} parent=11 // pred_fallthru
          _
        // Predicated region
        $region17: #{mlp_forward.1} parent=11 // pred_check
          %p216 = pneg %p88
        $region18: #{mlp_forward.1} parent=11 // pred_check_branch
          %218 = sbr.rel (%p216) target = $region20
        $region19: #{mlp_forward.1} parent=11 // pred_region
          _
        $region20: #{mlp_forward.1} parent=11 // pred_fallthru
          _
        // Predicated region
        $region21: #{mlp_forward.1} parent=11 // pred_check
          %p219 = pneg %p109
        $region22: #{mlp_forward.1} parent=11 // pred_check_branch
          %221 = sbr.rel (%p219) target = $region24
        $region23: #{mlp_forward.1} parent=11 // pred_region
          %s223 = ssub.s32 8192, 8192
          %224 = vsyncadd [#allocation6], %s223
          %s225 = sshll.u32 [#allocation5], 4
          %s226 = int_to_ptr.vmem [resolvable:$true] %s225
          %231 = dma.hbm_to_vmem [thread:$0]  %s3, 8192, %s226, [#allocation6], 512, 512, 32
        $region24: #{mlp_forward.1} parent=11 // pred_fallthru
          _
        // Predicated region
        $region25: #{mlp_forward.1} parent=11 // pred_check
          %p232 = pneg %p130
        $region26: #{mlp_forward.1} parent=11 // pred_check_branch
          %234 = sbr.rel (%p232) target = $region28
        $region27: #{mlp_forward.1} parent=11 // pred_region
          _
        $region28: #{mlp_forward.1} parent=11 // pred_fallthru
          _
        // Predicated region
        $region29: #{mlp_forward.1} parent=11 // pred_check
          %p235 = pneg %p151
        $region30: #{mlp_forward.1} parent=11 // pred_check_branch
          %237 = sbr.rel (%p235) target = $region32
        $region31: #{mlp_forward.1} parent=11 // pred_region
          %s239 = ssub.s32 8192, 8192
          %240 = vsyncadd [#allocation6], %s239
          %s241 = sshll.u32 [#allocation7], 4
          %s242 = int_to_ptr.vmem [resolvable:$true] %s241
          %247 = dma.hbm_to_vmem [thread:$0]  %s5, 8192, %s242, [#allocation6], 128, 128, 8
        $region32: #{mlp_forward.1} parent=11 // pred_fallthru
          _
        // Predicated region
        $region33: #{mlp_forward.1} parent=11 // pred_check
          %p248 = pneg %p172
        $region34: #{mlp_forward.1} parent=11 // pred_check_branch
          %250 = sbr.rel (%p248) target = $region36
        $region35: #{mlp_forward.1} parent=11 // pred_region
          _
        $region36: #{mlp_forward.1} parent=11 // pred_fallthru
          _
      $region12: #{mlp_forward.1} parent=5 // pred_fallthru
        _
      %p251 = scmp.lt.s32.totalorder %s20, 2
      // Predicated region
      $region37: #{mlp_forward.1} parent=5 // pred_check
        %p252 = pneg %p251
      $region38: #{mlp_forward.1} parent=5 // pred_check_branch
        %254 = sbr.rel (%p252) target = $region40
      $region39: #{mlp_forward.1} parent=5 // pred_region
        // Predicated region
        $region41: #{mlp_forward.1} parent=39 // pred_check
          %p255 = pneg %p40
        $region42: #{mlp_forward.1} parent=39 // pred_check_branch
          %257 = sbr.rel (%p255) target = $region44
        $region43: #{mlp_forward.1} parent=39 // pred_region
          %s258 = sand.u32 %s30, 1
          %s259 = scalar_lea.sflag [#allocation3], %s258
          %s260 = sand.u32 %s30, 1
          %s261 = smul.addr %s260, 64
          %s262 = scalar_lea.vmem [#allocation2], %s261
          %s263 = smul.u32 8, %s20
          %s264 = ssub.s32 10, %s263
          %p265 = scmp.lt.s32.totalorder %s264, 8
          %s266 = scalar_select %p265, %s264, 8
          %s267 = smul.u32 128, %s266
          %s269 = ssub.s32 1024, %s267
          %270 = vsyncadd %s259, %s269
          %p271 = scmp.ne.s32.totalorder 0, %s267
          %s272 = smul.addr %s263, 128
          %s273 = scalar_lea.hbm %s0, %s272
          %s274 = smul.u32 8, %s266
          %s275 = sshll.u32 %s262, 4
          %s276 = int_to_ptr.vmem [resolvable:$true] %s275
          %s277 = sshll.u32 %s274, 4
          %281 = dma.hbm_to_vmem [thread:$0]  (%p271), %s273, %s277, %s276, %s259, 128, 128, 8
        $region44: #{mlp_forward.1} parent=39 // pred_fallthru
          _
      $region40: #{mlp_forward.1} parent=5 // pred_fallthru
        _
      %p282 = scmp.le.s32.totalorder 1, %s20
      %p283 = scmp.lt.s32.totalorder %s20, 3
      %p284 = pnand %p282, %p283
      %p285 = pneg %p284
      // Predicated region
      $region45: #{mlp_forward.1} parent=5 // pred_check
        _
      $region46: #{mlp_forward.1} parent=5 // pred_check_branch
        %287 = sbr.rel (%p284) target = $region48
      $region47: #{mlp_forward.1} parent=5 // pred_region
        %s288 = ssub.s32 %s20, 1
        %s289 = sand.u32 %s33, 1
        %s290 = scalar_lea.sflag [#allocation3], %s289
        %s291 = sand.u32 %s33, 1
        %s292 = smul.addr %s291, 64
        %s293 = scalar_lea.vmem [#allocation2], %s292
        // Predicated region
        $region49: #{mlp_forward.1} parent=47 // pred_check
          %p294 = pneg %p46
        $region50: #{mlp_forward.1} parent=47 // pred_check_branch
          %296 = sbr.rel (%p294) target = $region52
        $region51: #{mlp_forward.1} parent=47 // pred_region
          %297 = dma.done %s290, 1024
        $region52: #{mlp_forward.1} parent=47 // pred_fallthru
          _
        // Predicated region
        $region53: #{mlp_forward.1} parent=47 // pred_check
          %p298 = pneg %p109
        $region54: #{mlp_forward.1} parent=47 // pred_check_branch
          %300 = sbr.rel (%p298) target = $region56
        $region55: #{mlp_forward.1} parent=47 // pred_region
          %301 = dma.done [#allocation6], 8192
        $region56: #{mlp_forward.1} parent=47 // pred_fallthru
          _
        // Predicated region
        $region57: #{mlp_forward.1} parent=47 // pred_check
          %p302 = pneg %p151
        $region58: #{mlp_forward.1} parent=47 // pred_check_branch
          %304 = sbr.rel (%p302) target = $region60
        $region59: #{mlp_forward.1} parent=47 // pred_region
          %305 = dma.done [#allocation6], 8192
        $region60: #{mlp_forward.1} parent=47 // pred_fallthru
          _
        %s306 = sand.u32 %s33, 1
        %s307 = scalar_lea.sflag [#allocation3], %s306
        %s308 = sand.u32 %s33, 1
        %s309 = smul.addr %s308, 64
        %s310 = scalar_lea.vmem [#allocation2], %s309
        %p311 = pneg %p46
        %p312 = pneg %p43
        %p313 = pneg %p67
        %p314 = pneg %p64
        %p315 = pneg %p88
        %p316 = pneg %p85
        %p317 = pneg %p109
        %p318 = pneg %p106
        %p319 = pneg %p130
        %p320 = pneg %p127
        %p321 = pneg %p151
        %p322 = pneg %p148
        %p323 = pneg %p172
        %p324 = pneg %p169
        %p325 = pneg %p198
        %p326 = pneg %p195
        %s327 = sand.u32 %s185, 1
        %s328 = scalar_lea.sflag [#allocation4], %s327
        %s329 = sand.u32 %s185, 1
        %s330 = smul.addr %s329, 64
        %s331 = scalar_lea.vmem [#allocation8], %s330
        %s332 = smul.u32 8, %s25
        %s333 = ssub.s32 10, %s332
        %p334 = scmp.lt.s32.totalorder %s333, 8
        %s335 = scalar_select %p334, %s333, 8
        %s336 = smul.u32 128, %s335
        %s337 = smul.u32 8, %s25
        %s338 = ssub.s32 10, %s337
        %p339 = scmp.lt.s32.totalorder %s338, 8
        %s340 = scalar_select %p339, %s338, 8
        %s341 = smul.u32 128, %s340
        %v342 = vld [vmem:[%s293] sm:$0xff]
        %v343 = vld [vmem:[%s293 + $0x8] sm:$0xff]
        %v344 = vld [vmem:[%s293 + $0x10] sm:$0xff]
        %v345 = vld [vmem:[%s293 + $0x18] sm:$0xff]
        %v346 = vld [vmem:[%s293 + $0x20] sm:$0xff]
        %v347 = vld [vmem:[%s293 + $0x28] sm:$0xff]
        %v348 = vld [vmem:[%s293 + $0x30] sm:$0xff]
        %v349 = vld [vmem:[%s293 + $0x38] sm:$0xff]
        %v350 = vld [vmem:[%s1] sm:$0x1]
        %v351 = vld [vmem:[%s2] sm:$0x1]
        %352 = vadd.xlane.f32.xlu0 %v342
        %v353 = vpop.xlane.xlu0 %352
        %354 = vadd.xlane.f32.xlu0 %v343
        %v355 = vpop.xlane.xlu0 %354
        %356 = vadd.xlane.f32.xlu0 %v344
        %v357 = vpop.xlane.xlu0 %356
        %358 = vadd.xlane.f32.xlu0 %v345
        %v359 = vpop.xlane.xlu0 %358
        %360 = vadd.xlane.f32.xlu0 %v346
        %v361 = vpop.xlane.xlu0 %360
        %362 = vadd.xlane.f32.xlu0 %v347
        %v363 = vpop.xlane.xlu0 %362
        %364 = vadd.xlane.f32.xlu0 %v348
        %v365 = vpop.xlane.xlu0 %364
        %366 = vadd.xlane.f32.xlu0 %v349
        %v367 = vpop.xlane.xlu0 %366
        %v368 = vrcp.pop 128.0
        %v369 = vmul.f32 %v353, %v368
        %v370 = vmul.f32 %v355, %v368
        %v371 = vmul.f32 %v357, %v368
        %v372 = vmul.f32 %v359, %v368
        %v373 = vmul.f32 %v361, %v368
        %v374 = vmul.f32 %v363, %v368
        %v375 = vmul.f32 %v365, %v368
        %v376 = vmul.f32 %v367, %v368
        %v377 = vmul.f32 %v342, %v342
        %v378 = vmul.f32 %v343, %v343
        %v379 = vmul.f32 %v344, %v344
        %v380 = vmul.f32 %v345, %v345
        %v381 = vmul.f32 %v346, %v346
        %v382 = vmul.f32 %v347, %v347
        %v383 = vmul.f32 %v348, %v348
        %v384 = vmul.f32 %v349, %v349
        %385 = vadd.xlane.f32.xlu0 %v377
        %v386 = vpop.xlane.xlu0 %385
        %387 = vadd.xlane.f32.xlu0 %v378
        %v388 = vpop.xlane.xlu0 %387
        %389 = vadd.xlane.f32.xlu0 %v379
        %v390 = vpop.xlane.xlu0 %389
        %391 = vadd.xlane.f32.xlu0 %v380
        %v392 = vpop.xlane.xlu0 %391
        %393 = vadd.xlane.f32.xlu0 %v381
        %v394 = vpop.xlane.xlu0 %393
        %395 = vadd.xlane.f32.xlu0 %v382
        %v396 = vpop.xlane.xlu0 %395
        %397 = vadd.xlane.f32.xlu0 %v383
        %v398 = vpop.xlane.xlu0 %397
        %399 = vadd.xlane.f32.xlu0 %v384
        %v400 = vpop.xlane.xlu0 %399
        %v401 = vmul.f32 %v386, %v368
        %v402 = vmul.f32 %v388, %v368
        %v403 = vmul.f32 %v390, %v368
        %v404 = vmul.f32 %v392, %v368
        %v405 = vmul.f32 %v394, %v368
        %v406 = vmul.f32 %v396, %v368
        %v407 = vmul.f32 %v398, %v368
        %v408 = vmul.f32 %v400, %v368
        %v409 = vmul.f32 %v369, %v369
        %v410 = vmul.f32 %v370, %v370
        %v411 = vmul.f32 %v371, %v371
        %v412 = vmul.f32 %v372, %v372
        %v413 = vmul.f32 %v373, %v373
        %v414 = vmul.f32 %v374, %v374
        %v415 = vmul.f32 %v375, %v375
        %v416 = vmul.f32 %v376, %v376
        %v417 = vsub.f32 %v401, %v409
        %v418 = vsub.f32 %v402, %v410
        %v419 = vsub.f32 %v403, %v411
        %v420 = vsub.f32 %v404, %v412
        %v421 = vsub.f32 %v405, %v413
        %v422 = vsub.f32 %v406, %v414
        %v423 = vsub.f32 %v407, %v415
        %v424 = vsub.f32 %v408, %v416
        %v425 = vmax.f32 %v417, 0.0
        %v426 = vmax.f32 %v418, 0.0
        %v427 = vmax.f32 %v419, 0.0
        %v428 = vmax.f32 %v420, 0.0
        %v429 = vmax.f32 %v421, 0.0
        %v430 = vmax.f32 %v422, 0.0
        %v431 = vmax.f32 %v423, 0.0
        %v432 = vmax.f32 %v424, 0.0
        %v433 = vsub.f32 %v342, %v369
        %v434 = vsub.f32 %v343, %v370
        %v435 = vsub.f32 %v344, %v371
        %v436 = vsub.f32 %v345, %v372
        %v437 = vsub.f32 %v346, %v373
        %v438 = vsub.f32 %v347, %v374
        %v439 = vsub.f32 %v348, %v375
        %v440 = vsub.f32 %v349, %v376
        %v441 = vadd.f32 %v425, 1e-05
        %v442 = vadd.f32 %v426, 1e-05
        %v443 = vadd.f32 %v427, 1e-05
        %v444 = vadd.f32 %v428, 1e-05
        %v445 = vadd.f32 %v429, 1e-05
        %v446 = vadd.f32 %v430, 1e-05
        %v447 = vadd.f32 %v431, 1e-05
        %v448 = vadd.f32 %v432, 1e-05
        %v449 = vrsqrt.pop %v441
        %v450 = vrsqrt.pop %v442
        %v451 = vrsqrt.pop %v443
        %v452 = vrsqrt.pop %v444
        %v453 = vrsqrt.pop %v445
        %v454 = vrsqrt.pop %v446
        %v455 = vrsqrt.pop %v447
        %v456 = vrsqrt.pop %v448
        %v457 = vmul.f32 %v433, %v449
        %v458 = vmul.f32 %v434, %v450
        %v459 = vmul.f32 %v435, %v451
        %v460 = vmul.f32 %v436, %v452
        %v461 = vmul.f32 %v437, %v453
        %v462 = vmul.f32 %v438, %v454
        %v463 = vmul.f32 %v439, %v455
        %v464 = vmul.f32 %v440, %v456
        %v466 = vlaneseq
        %v467 = vshrl.u32 %v466, 7
        %v468 = vsub.s32 0, %v467
        %v469 = vrot.slane %v350, %v468
        %v471 = vmul.f32 %v457, %v469
        %v472 = vmul.f32 %v458, %v469
        %v473 = vmul.f32 %v459, %v469
        %v474 = vmul.f32 %v460, %v469
        %v475 = vmul.f32 %v461, %v469
        %v476 = vmul.f32 %v462, %v469
        %v477 = vmul.f32 %v463, %v469
        %v478 = vmul.f32 %v464, %v469
        %v480 = vlaneseq
        %v481 = vshrl.u32 %v480, 7
        %v482 = vsub.s32 0, %v481
        %v483 = vrot.slane %v351, %v482
        %v485 = vadd.f32 %v471, %v483
        %v486 = vadd.f32 %v472, %v483
        %v487 = vadd.f32 %v473, %v483
        %v488 = vadd.f32 %v474, %v483
        %v489 = vadd.f32 %v475, %v483
        %v490 = vadd.f32 %v476, %v483
        %v491 = vadd.f32 %v477, %v483
        %v492 = vadd.f32 %v478, %v483
        %v493 = vld [vmem:[#allocation5] sm:$0xff]
        %v494 = vld [vmem:[#allocation5 + $0x8] sm:$0xff]
        %v495 = vld [vmem:[#allocation5 + $0x10] sm:$0xff]
        %v496 = vld [vmem:[#allocation5 + $0x18] sm:$0xff]
        %v497 = vld [vmem:[#allocation5 + $0x20] sm:$0xff]
        %v498 = vld [vmem:[#allocation5 + $0x28] sm:$0xff]
        %v499 = vld [vmem:[#allocation5 + $0x30] sm:$0xff]
        %v500 = vld [vmem:[#allocation5 + $0x38] sm:$0xff]
        %v501 = vld [vmem:[#allocation5 + $0x40] sm:$0xff]
        %v502 = vld [vmem:[#allocation5 + $0x48] sm:$0xff]
        %v503 = vld [vmem:[#allocation5 + $0x50] sm:$0xff]
        %v504 = vld [vmem:[#allocation5 + $0x58] sm:$0xff]
        %v505 = vld [vmem:[#allocation5 + $0x60] sm:$0xff]
        %v506 = vld [vmem:[#allocation5 + $0x68] sm:$0xff]
        %v507 = vld [vmem:[#allocation5 + $0x70] sm:$0xff]
        %v508 = vld [vmem:[#allocation5 + $0x78] sm:$0xff]
        %v509 = vld [vmem:[#allocation5 + $0x80] sm:$0xff]
        %v510 = vld [vmem:[#allocation5 + $0x88] sm:$0xff]
        %v511 = vld [vmem:[#allocation5 + $0x90] sm:$0xff]
        %v512 = vld [vmem:[#allocation5 + $0x98] sm:$0xff]
        %v513 = vld [vmem:[#allocation5 + $0xa0] sm:$0xff]
        %v514 = vld [vmem:[#allocation5 + $0xa8] sm:$0xff]
        %v515 = vld [vmem:[#allocation5 + $0xb0] sm:$0xff]
        %v516 = vld [vmem:[#allocation5 + $0xb8] sm:$0xff]
        %v517 = vld [vmem:[#allocation5 + $0xc0] sm:$0xff]
        %v518 = vld [vmem:[#allocation5 + $0xc8] sm:$0xff]
        %v519 = vld [vmem:[#allocation5 + $0xd0] sm:$0xff]
        %v520 = vld [vmem:[#allocation5 + $0xd8] sm:$0xff]
        %v521 = vld [vmem:[#allocation5 + $0xe0] sm:$0xff]
        %v522 = vld [vmem:[#allocation5 + $0xe8] sm:$0xff]
        %v523 = vld [vmem:[#allocation5 + $0xf0] sm:$0xff]
        %v524 = vld [vmem:[#allocation5 + $0xf8] sm:$0xff]
        %v525 = vld [vmem:[#allocation5 + $0x100] sm:$0xff]
        %v526 = vld [vmem:[#allocation5 + $0x108] sm:$0xff]
        %v527 = vld [vmem:[#allocation5 + $0x110] sm:$0xff]
        %v528 = vld [vmem:[#allocation5 + $0x118] sm:$0xff]
        %v529 = vld [vmem:[#allocation5 + $0x120] sm:$0xff]
        %v530 = vld [vmem:[#allocation5 + $0x128] sm:$0xff]
        %v531 = vld [vmem:[#allocation5 + $0x130] sm:$0xff]
        %v532 = vld [vmem:[#allocation5 + $0x138] sm:$0xff]
        %v533 = vld [vmem:[#allocation5 + $0x140] sm:$0xff]
        %v534 = vld [vmem:[#allocation5 + $0x148] sm:$0xff]
        %v535 = vld [vmem:[#allocation5 + $0x150] sm:$0xff]
        %v536 = vld [vmem:[#allocation5 + $0x158] sm:$0xff]
        %v537 = vld [vmem:[#allocation5 + $0x160] sm:$0xff]
        %v538 = vld [vmem:[#allocation5 + $0x168] sm:$0xff]
        %v539 = vld [vmem:[#allocation5 + $0x170] sm:$0xff]
        %v540 = vld [vmem:[#allocation5 + $0x178] sm:$0xff]
        %v541 = vld [vmem:[#allocation5 + $0x180] sm:$0xff]
        %v542 = vld [vmem:[#allocation5 + $0x188] sm:$0xff]
        %v543 = vld [vmem:[#allocation5 + $0x190] sm:$0xff]
        %v544 = vld [vmem:[#allocation5 + $0x198] sm:$0xff]
        %v545 = vld [vmem:[#allocation5 + $0x1a0] sm:$0xff]
        %v546 = vld [vmem:[#allocation5 + $0x1a8] sm:$0xff]
        %v547 = vld [vmem:[#allocation5 + $0x1b0] sm:$0xff]
        %v548 = vld [vmem:[#allocation5 + $0x1b8] sm:$0xff]
        %v549 = vld [vmem:[#allocation5 + $0x1c0] sm:$0xff]
        %v550 = vld [vmem:[#allocation5 + $0x1c8] sm:$0xff]
        %v551 = vld [vmem:[#allocation5 + $0x1d0] sm:$0xff]
        %v552 = vld [vmem:[#allocation5 + $0x1d8] sm:$0xff]
        %v553 = vld [vmem:[#allocation5 + $0x1e0] sm:$0xff]
        %v554 = vld [vmem:[#allocation5 + $0x1e8] sm:$0xff]
        %v555 = vld [vmem:[#allocation5 + $0x1f0] sm:$0xff]
        %v556 = vld [vmem:[#allocation5 + $0x1f8] sm:$0xff]
        %v557 = vld [vmem:[%s4] sm:$0xf]
        %v559 = vlaneseq
        %v560 = vshrl.u32 %v559, 7
        %v561 = vsub.s32 0, %v560
        %v562 = vrot.slane %v557, %v561
        %v563 = vlaneseq
        %v564 = vshrl.u32 %v563, 7
        %v565 = vsub.s32 1, %v564
        %v566 = vrot.slane %v557, %v565
        %v567 = vlaneseq
        %v568 = vshrl.u32 %v567, 7
        %v569 = vsub.s32 2, %v568
        %v570 = vrot.slane %v557, %v569
        %v571 = vlaneseq
        %v572 = vshrl.u32 %v571, 7
        %v573 = vsub.s32 3, %v572
        %v574 = vrot.slane %v557, %v573
        %v579 = vand.u32 %v494, 4294901760
        %580 = vmatprep.subr.mxu0 %v579
        %v581 = vand.u32 %v493, 4294901760
        %582 = vmatpush1.msra.mxu0 %v581
        %v583 = vand.u32 %v498, 4294901760
        %584 = vmatprep.subr.mxu0 %v583
        %v585 = vand.u32 %v497, 4294901760
        %586 = vmatpush1.msra.mxu0 %v585
        %v587 = vand.u32 %v502, 4294901760
        %588 = vmatprep.subr.mxu0 %v587
        %v589 = vand.u32 %v501, 4294901760
        %590 = vmatpush1.msra.mxu0 %v589
        %v591 = vand.u32 %v506, 4294901760
        %592 = vmatprep.subr.mxu0 %v591
        %v593 = vand.u32 %v505, 4294901760
        %594 = vmatpush1.msra.mxu0 %v593
        %v595 = vand.u32 %v510, 4294901760
        %596 = vmatprep.subr.mxu0 %v595
        %v597 = vand.u32 %v509, 4294901760
        %598 = vmatpush1.msra.mxu0 %v597
        %v599 = vand.u32 %v514, 4294901760
        %600 = vmatprep.subr.mxu0 %v599
        %v601 = vand.u32 %v513, 4294901760
        %602 = vmatpush1.msra.mxu0 %v601
        %v603 = vand.u32 %v518, 4294901760
        %604 = vmatprep.subr.mxu0 %v603
        %v605 = vand.u32 %v517, 4294901760
        %606 = vmatpush1.msra.mxu0 %v605
        %v607 = vand.u32 %v522, 4294901760
        %608 = vmatprep.subr.mxu0 %v607
        %v609 = vand.u32 %v521, 4294901760
        %610 = vmatpush1.msra.mxu0 %v609
        %v611 = vand.u32 %v526, 4294901760
        %612 = vmatprep.subr.mxu0 %v611
        %v613 = vand.u32 %v525, 4294901760
        %614 = vmatpush1.msra.mxu0 %v613
        %v615 = vand.u32 %v530, 4294901760
        %616 = vmatprep.subr.mxu0 %v615
        %v617 = vand.u32 %v529, 4294901760
        %618 = vmatpush1.msra.mxu0 %v617
        %v619 = vand.u32 %v534, 4294901760
        %620 = vmatprep.subr.mxu0 %v619
        %v621 = vand.u32 %v533, 4294901760
        %622 = vmatpush1.msra.mxu0 %v621
        %v623 = vand.u32 %v538, 4294901760
        %624 = vmatprep.subr.mxu0 %v623
        %v625 = vand.u32 %v537, 4294901760
        %626 = vmatpush1.msra.mxu0 %v625
        %v627 = vand.u32 %v542, 4294901760
        %628 = vmatprep.subr.mxu0 %v627
        %v629 = vand.u32 %v541, 4294901760
        %630 = vmatpush1.msra.mxu0 %v629
        %v631 = vand.u32 %v546, 4294901760
        %632 = vmatprep.subr.mxu0 %v631
        %v633 = vand.u32 %v545, 4294901760
        %634 = vmatpush1.msra.mxu0 %v633
        %v635 = vand.u32 %v550, 4294901760
        %636 = vmatprep.subr.mxu0 %v635
        %v637 = vand.u32 %v549, 4294901760
        %638 = vmatpush1.msra.mxu0 %v637
        %v639 = vand.u32 %v554, 4294901760
        %640 = vmatprep.subr.mxu0 %v639
        %v641 = vand.u32 %v553, 4294901760
        %642 = vmatpush1.msra.mxu0 %v641
        %643 = vmatprep.subr.mxu0 0.0
        %644 = vmatpush1.msra.mxu0 0.0
        %645 = vmatprep.subr.mxu0 0.0
        %646 = vmatpush1.msra.mxu0 0.0
        %647 = vmatprep.subr.mxu0 0.0
        %648 = vmatpush1.msra.mxu0 0.0
        %649 = vmatprep.subr.mxu0 0.0
        %650 = vmatpush1.msra.mxu0 0.0
        %651 = vmatprep.subr.mxu0 0.0
        %652 = vmatpush1.msra.mxu0 0.0
        %653 = vmatprep.subr.mxu0 0.0
        %654 = vmatpush1.msra.mxu0 0.0
        %655 = vmatprep.subr.mxu0 0.0
        %656 = vmatpush1.msra.mxu0 0.0
        %657 = vmatprep.subr.mxu0 0.0
        %658 = vmatpush1.msra.mxu0 0.0
        %659 = vmatprep.subr.mxu0 0.0
        %660 = vmatpush1.msra.mxu0 0.0
        %661 = vmatprep.subr.mxu0 0.0
        %662 = vmatpush1.msra.mxu0 0.0
        %663 = vmatprep.subr.mxu0 0.0
        %664 = vmatpush1.msra.mxu0 0.0
        %665 = vmatprep.subr.mxu0 0.0
        %666 = vmatpush1.msra.mxu0 0.0
        %667 = vmatprep.subr.mxu0 0.0
        %668 = vmatpush1.msra.mxu0 0.0
        %669 = vmatprep.subr.mxu0 0.0
        %670 = vmatpush1.msra.mxu0 0.0
        %671 = vmatprep.subr.mxu0 0.0
        %672 = vmatpush1.msra.mxu0 0.0
        %673 = vmatprep.subr.mxu0 0.0
        %674 = vmatpush1.msra.mxu0 0.0
        %675 = vmatprep.mubr.f32.mxu0 0.0
        %v676 = vand.u32 %v485, 4294901760
        %v677 = vsub.f32 %v485, %v676
        %v678 = vand.u32 %v677, 4294901760
        %v679 = vsub.f32 %v677, %v678
        %v680 = vand.u32 %v679, 4294901760
        %681 = vmatmul.mubr.f32.gmra.mrb[0].mxu0 %v680
        %v682 = vpop.f32.mrb[0].mxu0
        %v683 = vadd.f32 %v562, %v682
        %v684 = vpop.f32.mrb[0].mxu0
        %v685 = vadd.f32 %v566, %v684
        %686 = vmatprep.mubr.f32.mxu0 0.0
        %v687 = vand.u32 %v486, 4294901760
        %v688 = vsub.f32 %v486, %v687
        %v689 = vand.u32 %v688, 4294901760
        %v690 = vsub.f32 %v688, %v689
        %v691 = vand.u32 %v690, 4294901760
        %692 = vmatmul.mubr.f32.gmra.mrb[0].mxu0 %v691
        %v693 = vpop.f32.mrb[0].mxu0
        %v694 = vadd.f32 %v562, %v693
        %v695 = vpop.f32.mrb[0].mxu0
        %v696 = vadd.f32 %v566, %v695
        %697 = vmatprep.mubr.f32.mxu0 0.0
        %v698 = vand.u32 %v487, 4294901760
        %v699 = vsub.f32 %v487, %v698
        %v700 = vand.u32 %v699, 4294901760
        %v701 = vsub.f32 %v699, %v700
        %v702 = vand.u32 %v701, 4294901760
        %703 = vmatmul.mubr.f32.gmra.mrb[0].mxu0 %v702
        %v704 = vpop.f32.mrb[0].mxu0
        %v705 = vadd.f32 %v562, %v704
        %v706 = vpop.f32.mrb[0].mxu0
        %v707 = vadd.f32 %v566, %v706
        %708 = vmatprep.mubr.f32.mxu0 0.0
        %v709 = vand.u32 %v488, 4294901760
        %v710 = vsub.f32 %v488, %v709
        %v711 = vand.u32 %v710, 4294901760
        %v712 = vsub.f32 %v710, %v711
        %v713 = vand.u32 %v712, 4294901760
        %714 = vmatmul.mubr.f32.gmra.mrb[0].mxu0 %v713
        %v715 = vpop.f32.mrb[0].mxu0
        %v716 = vadd.f32 %v562, %v715
        %v717 = vpop.f32.mrb[0].mxu0
        %v718 = vadd.f32 %v566, %v717
        %719 = vmatprep.mubr.f32.mxu0 0.0
        %v720 = vand.u32 %v489, 4294901760
        %v721 = vsub.f32 %v489, %v720
        %v722 = vand.u32 %v721, 4294901760
        %v723 = vsub.f32 %v721, %v722
        %v724 = vand.u32 %v723, 4294901760
        %725 = vmatmul.mubr.f32.gmra.mrb[0].mxu0 %v724
        %v726 = vpop.f32.mrb[0].mxu0
        %v727 = vadd.f32 %v562, %v726
        %v728 = vpop.f32.mrb[0].mxu0
        %v729 = vadd.f32 %v566, %v728
        %730 = vmatprep.mubr.f32.mxu0 0.0
        %v731 = vand.u32 %v490, 4294901760
        %v732 = vsub.f32 %v490, %v731
        %v733 = vand.u32 %v732, 4294901760
        %v734 = vsub.f32 %v732, %v733
        %v735 = vand.u32 %v734, 4294901760
        %736 = vmatmul.mubr.f32.gmra.mrb[0].mxu0 %v735
        %v737 = vpop.f32.mrb[0].mxu0
        %v738 = vadd.f32 %v562, %v737
        %v739 = vpop.f32.mrb[0].mxu0
        %v740 = vadd.f32 %v566, %v739
        %741 = vmatprep.mubr.f32.mxu0 0.0
        %v742 = vand.u32 %v491, 4294901760
        %v743 = vsub.f32 %v491, %v742
        %v744 = vand.u32 %v743, 4294901760
        %v745 = vsub.f32 %v743, %v744
        %v746 = vand.u32 %v745, 4294901760
        %747 = vmatmul.mubr.f32.gmra.mrb[0].mxu0 %v746
        %v748 = vpop.f32.mrb[0].mxu0
        %v749 = vadd.f32 %v562, %v748
        %v750 = vpop.f32.mrb[0].mxu0
        %v751 = vadd.f32 %v566, %v750
        %752 = vmatprep.mubr.f32.mxu0 0.0
        %v753 = vand.u32 %v492, 4294901760
        %v754 = vsub.f32 %v492, %v753
        %v755 = vand.u32 %v754, 4294901760
        %v756 = vsub.f32 %v754, %v755
        %v757 = vand.u32 %v756, 4294901760
        %758 = vmatmul.mubr.f32.gmra.mrb[0].mxu0 %v757
        %v759 = vpop.f32.mrb[0].mxu0
        %v760 = vadd.f32 %v562, %v759
        %v761 = vpop.f32.mrb[0].mxu0
        %v762 = vadd.f32 %v566, %v761
        %763 = vdwg.mxu0
        %v764 = vand.u32 %v494, 4294901760
        %v765 = vsub.f32 %v494, %v764
        %v766 = vand.u32 %v765, 4294901760
        %v767 = vsub.f32 %v765, %v766
        %v768 = vand.u32 %v767, 4294901760
        %769 = vmatprep.subr.mxu0 %v768
        %v770 = vand.u32 %v493, 4294901760
        %v771 = vsub.f32 %v493, %v770
        %v772 = vand.u32 %v771, 4294901760
        %v773 = vsub.f32 %v771, %v772
        %v774 = vand.u32 %v773, 4294901760
        %775 = vmatpush1.msra.mxu0 %v774
        %v776 = vand.u32 %v498, 4294901760
        %v777 = vsub.f32 %v498, %v776
        %v778 = vand.u32 %v777, 4294901760
        %v779 = vsub.f32 %v777, %v778
        %v780 = vand.u32 %v779, 4294901760
        %781 = vmatprep.subr.mxu0 %v780
        %v782 = vand.u32 %v497, 4294901760
        %v783 = vsub.f32 %v497, %v782
        %v784 = vand.u32 %v783, 4294901760
        %v785 = vsub.f32 %v783, %v784
        %v786 = vand.u32 %v785, 4294901760
        %787 = vmatpush1.msra.mxu0 %v786
        %v788 = vand.u32 %v502, 4294901760
        %v789 = vsub.f32 %v502, %v788
        %v790 = vand.u32 %v789, 4294901760
        %v791 = vsub.f32 %v789, %v790
        %v792 = vand.u32 %v791, 4294901760
        %793 = vmatprep.subr.mxu0 %v792
        %v794 = vand.u32 %v501, 4294901760
        %v795 = vsub.f32 %v501, %v794
        %v796 = vand.u32 %v795, 4294901760
        %v797 = vsub.f32 %v795, %v796
        %v798 = vand.u32 %v797, 4294901760
        %799 = vmatpush1.msra.mxu0 %v798
        %v800 = vand.u32 %v506, 4294901760
        %v801 = vsub.f32 %v506, %v800
        %v802 = vand.u32 %v801, 4294901760
        %v803 = vsub.f32 %v801, %v802
        %v804 = vand.u32 %v803, 4294901760
        %805 = vmatprep.subr.mxu0 %v804
        %v806 = vand.u32 %v505, 4294901760
        %v807 = vsub.f32 %v505, %v806
        %v808 = vand.u32 %v807, 4294901760
        %v809 = vsub.f32 %v807, %v808
        %v810 = vand.u32 %v809, 4294901760
        %811 = vmatpush1.msra.mxu0 %v810
        %v812 = vand.u32 %v510, 4294901760
        %v813 = vsub.f32 %v510, %v812
        %v814 = vand.u32 %v813, 4294901760
        %v815 = vsub.f32 %v813, %v814
        %v816 = vand.u32 %v815, 4294901760
        %817 = vmatprep.subr.mxu0 %v816
        %v818 = vand.u32 %v509, 4294901760
        %v819 = vsub.f32 %v509, %v818
        %v820 = vand.u32 %v819, 4294901760
        %v821 = vsub.f32 %v819, %v820
        %v822 = vand.u32 %v821, 4294901760
        %823 = vmatpush1.msra.mxu0 %v822
        %v824 = vand.u32 %v514, 4294901760
        %v825 = vsub.f32 %v514, %v824
        %v826 = vand.u32 %v825, 4294901760
        %v827 = vsub.f32 %v825, %v826
        %v828 = vand.u32 %v827, 4294901760
        %829 = vmatprep.subr.mxu0 %v828
        %v830 = vand.u32 %v513, 4294901760
        %v831 = vsub.f32 %v513, %v830
        %v832 = vand.u32 %v831, 4294901760
        %v833 = vsub.f32 %v831, %v832
        %v834 = vand.u32 %v833, 4294901760
        %835 = vmatpush1.msra.mxu0 %v834
        %v836 = vand.u32 %v518, 4294901760
        %v837 = vsub.f32 %v518, %v836
        %v838 = vand.u32 %v837, 4294901760
        %v839 = vsub.f32 %v837, %v838
        %v840 = vand.u32 %v839, 4294901760
        %841 = vmatprep.subr.mxu0 %v840
        %v842 = vand.u32 %v517, 4294901760
        %v843 = vsub.f32 %v517, %v842
        %v844 = vand.u32 %v843, 4294901760
        %v845 = vsub.f32 %v843, %v844
        %v846 = vand.u32 %v845, 4294901760
        %847 = vmatpush1.msra.mxu0 %v846
        %v848 = vand.u32 %v522, 4294901760
        %v849 = vsub.f32 %v522, %v848
        %v850 = vand.u32 %v849, 4294901760
        %v851 = vsub.f32 %v849, %v850
        %v852 = vand.u32 %v851, 4294901760
        %853 = vmatprep.subr.mxu0 %v852
        %v854 = vand.u32 %v521, 4294901760
        %v855 = vsub.f32 %v521, %v854
        %v856 = vand.u32 %v855, 4294901760
        %v857 = vsub.f32 %v855, %v856
        %v858 = vand.u32 %v857, 4294901760
        %859 = vmatpush1.msra.mxu0 %v858
        %v860 = vand.u32 %v526, 4294901760
        %v861 = vsub.f32 %v526, %v860
        %v862 = vand.u32 %v861, 4294901760
        %v863 = vsub.f32 %v861, %v862
        %v864 = vand.u32 %v863, 4294901760
        %865 = vmatprep.subr.mxu0 %v864
        %v866 = vand.u32 %v525, 4294901760
        %v867 = vsub.f32 %v525, %v866
        %v868 = vand.u32 %v867, 4294901760
        %v869 = vsub.f32 %v867, %v868
        %v870 = vand.u32 %v869, 4294901760
        %871 = vmatpush1.msra.mxu0 %v870
        %v872 = vand.u32 %v530, 4294901760
        %v873 = vsub.f32 %v530, %v872
        %v874 = vand.u32 %v873, 4294901760
        %v875 = vsub.f32 %v873, %v874
        %v876 = vand.u32 %v875, 4294901760
        %877 = vmatprep.subr.mxu0 %v876
        %v878 = vand.u32 %v529, 4294901760
        %v879 = vsub.f32 %v529, %v878
        %v880 = vand.u32 %v879, 4294901760
        %v881 = vsub.f32 %v879, %v880
        %v882 = vand.u32 %v881, 4294901760
        %883 = vmatpush1.msra.mxu0 %v882
        %v884 = vand.u32 %v534, 4294901760
        %v885 = vsub.f32 %v534, %v884
        %v886 = vand.u32 %v885, 4294901760
        %v887 = vsub.f32 %v885, %v886
        %v888 = vand.u32 %v887, 4294901760
        %889 = vmatprep.subr.mxu0 %v888
        %v890 = vand.u32 %v533, 4294901760
        %v891 = vsub.f32 %v533, %v890
        %v892 = vand.u32 %v891, 4294901760
        %v893 = vsub.f32 %v891, %v892
        %v894 = vand.u32 %v893, 4294901760
        %895 = vmatpush1.msra.mxu0 %v894
        %v896 = vand.u32 %v538, 4294901760
        %v897 = vsub.f32 %v538, %v896
        %v898 = vand.u32 %v897, 4294901760
        %v899 = vsub.f32 %v897, %v898
        %v900 = vand.u32 %v899, 4294901760
        %901 = vmatprep.subr.mxu0 %v900
        %v902 = vand.u32 %v537, 4294901760
        %v903 = vsub.f32 %v537, %v902
        %v904 = vand.u32 %v903, 4294901760
        %v905 = vsub.f32 %v903, %v904
        %v906 = vand.u32 %v905, 4294901760
        %907 = vmatpush1.msra.mxu0 %v906
        %v908 = vand.u32 %v542, 4294901760
        %v909 = vsub.f32 %v542, %v908
        %v910 = vand.u32 %v909, 4294901760
        %v911 = vsub.f32 %v909, %v910
        %v912 = vand.u32 %v911, 4294901760
        %913 = vmatprep.subr.mxu0 %v912
        %v914 = vand.u32 %v541, 4294901760
        %v915 = vsub.f32 %v541, %v914
        %v916 = vand.u32 %v915, 4294901760
        %v917 = vsub.f32 %v915, %v916
        %v918 = vand.u32 %v917, 4294901760
        %919 = vmatpush1.msra.mxu0 %v918
        %v920 = vand.u32 %v546, 4294901760
        %v921 = vsub.f32 %v546, %v920
        %v922 = vand.u32 %v921, 4294901760
        %v923 = vsub.f32 %v921, %v922
        %v924 = vand.u32 %v923, 4294901760
        %925 = vmatprep.subr.mxu0 %v924
        %v926 = vand.u32 %v545, 4294901760
        %v927 = vsub.f32 %v545, %v926
        %v928 = vand.u32 %v927, 4294901760
        %v929 = vsub.f32 %v927, %v928
        %v930 = vand.u32 %v929, 4294901760
        %931 = vmatpush1.msra.mxu0 %v930
        %v932 = vand.u32 %v550, 4294901760
        %v933 = vsub.f32 %v550, %v932
        %v934 = vand.u32 %v933, 4294901760
        %v935 = vsub.f32 %v933, %v934
        %v936 = vand.u32 %v935, 4294901760
        %937 = vmatprep.subr.mxu0 %v936
        %v938 = vand.u32 %v549, 4294901760
        %v939 = vsub.f32 %v549, %v938
        %v940 = vand.u32 %v939, 4294901760
        %v941 = vsub.f32 %v939, %v940
        %v942 = vand.u32 %v941, 4294901760
        %943 = vmatpush1.msra.mxu0 %v942
        %v944 = vand.u32 %v554, 4294901760
        %v945 = vsub.f32 %v554, %v944
        %v946 = vand.u32 %v945, 4294901760
        %v947 = vsub.f32 %v945, %v946
        %v948 = vand.u32 %v947, 4294901760
        %949 = vmatprep.subr.mxu0 %v948
        %v950 = vand.u32 %v553, 4294901760
        %v951 = vsub.f32 %v553, %v950
        %v952 = vand.u32 %v951, 4294901760
        %v953 = vsub.f32 %v951, %v952
        %v954 = vand.u32 %v953, 4294901760
        %955 = vmatpush1.msra.mxu0 %v954
        %956 = vmatprep.subr.mxu0 0.0
        %957 = vmatpush1.msra.mxu0 0.0
        %958 = vmatprep.subr.mxu0 0.0
        %959 = vmatpush1.msra.mxu0 0.0
        %960 = vmatprep.subr.mxu0 0.0
        %961 = vmatpush1.msra.mxu0 0.0
        %962 = vmatprep.subr.mxu0 0.0
        %963 = vmatpush1.msra.mxu0 0.0
        %964 = vmatprep.subr.mxu0 0.0
        %965 = vmatpush1.msra.mxu0 0.0
        %966 = vmatprep.subr.mxu0 0.0
        %967 = vmatpush1.msra.mxu0 0.0
        %968 = vmatprep.subr.mxu0 0.0
        %969 = vmatpush1.msra.mxu0 0.0
        %970 = vmatprep.subr.mxu0 0.0
        %971 = vmatpush1.msra.mxu0 0.0
        %972 = vmatprep.subr.mxu0 0.0
        %973 = vmatpush1.msra.mxu0 0.0
        %974 = vmatprep.subr.mxu0 0.0
        %975 = vmatpush1.msra.mxu0 0.0
        %976 = vmatprep.subr.mxu0 0.0
        %977 = vmatpush1.msra.mxu0 0.0
        %978 = vmatprep.subr.mxu0 0.0
        %979 = vmatpush1.msra.mxu0 0.0
        %980 = vmatprep.subr.mxu0 0.0
        %981 = vmatpush1.msra.mxu0 0.0
        %982 = vmatprep.subr.mxu0 0.0
        %983 = vmatpush1.msra.mxu0 0.0
        %984 = vmatprep.subr.mxu0 0.0
        %985 = vmatpush1.msra.mxu0 0.0
        %986 = vmatprep.subr.mxu0 0.0
        %987 = vmatpush1.msra.mxu0 0.0
        %988 = vmatprep.mubr.f32.mxu0 0.0
        %v989 = vand.u32 %v485, 4294901760
        %990 = vmatmul.mubr.f32.gmra.mrb[0].mxu0 %v989
        %v991 = vpop.f32.mrb[0].mxu0
        %v992 = vadd.f32 %v683, %v991
        %v993 = vpop.f32.mrb[0].mxu0
        %v994 = vadd.f32 %v685, %v993
        %995 = vmatprep.mubr.f32.mxu0 0.0
        %v996 = vand.u32 %v486, 4294901760
        %997 = vmatmul.mubr.f32.gmra.mrb[0].mxu0 %v996
        %v998 = vpop.f32.mrb[0].mxu0
        %v999 = vadd.f32 %v694, %v998
        %v1000 = vpop.f32.mrb[0].mxu0
        %v1001 = vadd.f32 %v696, %v1000
        %1002 = vmatprep.mubr.f32.mxu0 0.0
        %v1003 = vand.u32 %v487, 4294901760
        %1004 = vmatmul.mubr.f32.gmra.mrb[0].mxu0 %v1003
        %v1005 = vpop.f32.mrb[0].mxu0
        %v1006 = vadd.f32 %v705, %v1005
        %v1007 = vpop.f32.mrb[0].mxu0
        %v1008 = vadd.f32 %v707, %v1007
        %1009 = vmatprep.mubr.f32.mxu0 0.0
        %v1010 = vand.u32 %v488, 4294901760
        %1011 = vmatmul.mubr.f32.gmra.mrb[0].mxu0 %v1010
        %v1012 = vpop.f32.mrb[0].mxu0
        %v1013 = vadd.f32 %v716, %v1012
        %v1014 = vpop.f32.mrb[0].mxu0
        %v1015 = vadd.f32 %v718, %v1014
        %1016 = vmatprep.mubr.f32.mxu0 0.0
        %v1017 = vand.u32 %v489, 4294901760
        %1018 = vmatmul.mubr.f32.gmra.mrb[0].mxu0 %v1017
        %v1019 = vpop.f32.mrb[0].mxu0
        %v1020 = vadd.f32 %v727, %v1019
        %v1021 = vpop.f32.mrb[0].mxu0
        %v1022 = vadd.f32 %v729, %v1021
        %1023 = vmatprep.mubr.f32.mxu0 0.0
        %v1024 = vand.u32 %v490, 4294901760
        %1025 = vmatmul.mubr.f32.gmra.mrb[0].mxu0 %v1024
        %v1026 = vpop.f32.mrb[0].mxu0
        %v1027 = vadd.f32 %v738, %v1026
        %v1028 = vpop.f32.mrb[0].mxu0
        %v1029 = vadd.f32 %v740, %v1028
        %1030 = vmatprep.mubr.f32.mxu0 0.0
        %v1031 = vand.u32 %v491, 4294901760
        %1032 = vmatmul.mubr.f32.gmra.mrb[0].mxu0 %v1031
        %v1033 = vpop.f32.mrb[0].mxu0
        %v1034 = vadd.f32 %v749, %v1033
        %v1035 = vpop.f32.mrb[0].mxu0
        %v1036 = vadd.f32 %v751, %v1035
        %1037 = vmatprep.mubr.f32.mxu0 0.0
        %v1038 = vand.u32 %v492, 4294901760
        %1039 = vmatmul.mubr.f32.gmra.mrb[0].mxu0 %v1038
        %v1040 = vpop.f32.mrb[0].mxu0
        %v1041 = vadd.f32 %v760, %v1040
        %v1042 = vpop.f32.mrb[0].mxu0
        %v1043 = vadd.f32 %v762, %v1042
        %1044 = vdwg.mxu0
        %v1045 = vand.u32 %v494, 4294901760
        %v1046 = vsub.f32 %v494, %v1045
        %1047 = vmatprep.subr.mxu0 %v1046
        %v1048 = vand.u32 %v493, 4294901760
        %v1049 = vsub.f32 %v493, %v1048
        %1050 = vmatpush1.msra.mxu0 %v1049
        %v1051 = vand.u32 %v498, 4294901760
        %v1052 = vsub.f32 %v498, %v1051
        %1053 = vmatprep.subr.mxu0 %v1052
        %v1054 = vand.u32 %v497, 4294901760
        %v1055 = vsub.f32 %v497, %v1054
        %1056 = vmatpush1.msra.mxu0 %v1055
        %v1057 = vand.u32 %v502, 4294901760
        %v1058 = vsub.f32 %v502, %v1057
        %1059 = vmatprep.subr.mxu0 %v1058
        %v1060 = vand.u32 %v501, 4294901760
        %v1061 = vsub.f32 %v501, %v1060
        %1062 = vmatpush1.msra.mxu0 %v1061
        %v1063 = vand.u32 %v506, 4294901760
        %v1064 = vsub.f32 %v506, %v1063
        %1065 = vmatprep.subr.mxu0 %v1064
        %v1066 = vand.u32 %v505, 4294901760
        %v1067 = vsub.f32 %v505, %v1066
        %1068 = vmatpush1.msra.mxu0 %v1067
        %v1069 = vand.u32 %v510, 4294901760
        %v1070 = vsub.f32 %v510, %v1069
        %1071 = vmatprep.subr.mxu0 %v1070
        %v1072 = vand.u32 %v509, 4294901760
        %v1073 = vsub.f32 %v509, %v1072
        %1074 = vmatpush1.msra.mxu0 %v1073
        %v1075 = vand.u32 %v514, 4294901760
        %v1076 = vsub.f32 %v514, %v1075
        %1077 = vmatprep.subr.mxu0 %v1076
        %v1078 = vand.u32 %v513, 4294901760
        %v1079 = vsub.f32 %v513, %v1078
        %1080 = vmatpush1.msra.mxu0 %v1079
        %v1081 = vand.u32 %v518, 4294901760
        %v1082 = vsub.f32 %v518, %v1081
        %1083 = vmatprep.subr.mxu0 %v1082
        %v1084 = vand.u32 %v517, 4294901760
        %v1085 = vsub.f32 %v517, %v1084
        %1086 = vmatpush1.msra.mxu0 %v1085
        %v1087 = vand.u32 %v522, 4294901760
        %v1088 = vsub.f32 %v522, %v1087
        %1089 = vmatprep.subr.mxu0 %v1088
        %v1090 = vand.u32 %v521, 4294901760
        %v1091 = vsub.f32 %v521, %v1090
        %1092 = vmatpush1.msra.mxu0 %v1091
        %v1093 = vand.u32 %v526, 4294901760
        %v1094 = vsub.f32 %v526, %v1093
        %1095 = vmatprep.subr.mxu0 %v1094
        %v1096 = vand.u32 %v525, 4294901760
        %v1097 = vsub.f32 %v525, %v1096
        %1098 = vmatpush1.msra.mxu0 %v1097
        %v1099 = vand.u32 %v530, 4294901760
        %v1100 = vsub.f32 %v530, %v1099
        %1101 = vmatprep.subr.mxu0 %v1100
        %v1102 = vand.u32 %v529, 4294901760
        %v1103 = vsub.f32 %v529, %v1102
        %1104 = vmatpush1.msra.mxu0 %v1103
        %v1105 = vand.u32 %v534, 4294901760
        %v1106 = vsub.f32 %v534, %v1105
        %1107 = vmatprep.subr.mxu0 %v1106
        %v1108 = vand.u32 %v533, 4294901760
        %v1109 = vsub.f32 %v533, %v1108
        %1110 = vmatpush1.msra.mxu0 %v1109
        %v1111 = vand.u32 %v538, 4294901760
        %v1112 = vsub.f32 %v538, %v1111
        %1113 = vmatprep.subr.mxu0 %v1112
        %v1114 = vand.u32 %v537, 4294901760
        %v1115 = vsub.f32 %v537, %v1114
        %1116 = vmatpush1.msra.mxu0 %v1115
        %v1117 = vand.u32 %v542, 4294901760
        %v1118 = vsub.f32 %v542, %v1117
        %1119 = vmatprep.subr.mxu0 %v1118
        %v1120 = vand.u32 %v541, 4294901760
        %v1121 = vsub.f32 %v541, %v1120
        %1122 = vmatpush1.msra.mxu0 %v1121
        %v1123 = vand.u32 %v546, 4294901760
        %v1124 = vsub.f32 %v546, %v1123
        %1125 = vmatprep.subr.mxu0 %v1124
        %v1126 = vand.u32 %v545, 4294901760
        %v1127 = vsub.f32 %v545, %v1126
        %1128 = vmatpush1.msra.mxu0 %v1127
        %v1129 = vand.u32 %v550, 4294901760
        %v1130 = vsub.f32 %v550, %v1129
        %1131 = vmatprep.subr.mxu0 %v1130
        %v1132 = vand.u32 %v549, 4294901760
        %v1133 = vsub.f32 %v549, %v1132
        %1134 = vmatpush1.msra.mxu0 %v1133
        %v1135 = vand.u32 %v554, 4294901760
        %v1136 = vsub.f32 %v554, %v1135
        %1137 = vmatprep.subr.mxu0 %v1136
        %v1138 = vand.u32 %v553, 4294901760
        %v1139 = vsub.f32 %v553, %v1138
        %1140 = vmatpush1.msra.mxu0 %v1139
        %1141 = vmatprep.subr.mxu0 0.0
        %1142 = vmatpush1.msra.mxu0 0.0
        %1143 = vmatprep.subr.mxu0 0.0
        %1144 = vmatpush1.msra.mxu0 0.0
        %1145 = vmatprep.subr.mxu0 0.0
        %1146 = vmatpush1.msra.mxu0 0.0
        %1147 = vmatprep.subr.mxu0 0.0
        %1148 = vmatpush1.msra.mxu0 0.0
        %1149 = vmatprep.subr.mxu0 0.0
        %1150 = vmatpush1.msra.mxu0 0.0
        %1151 = vmatprep.subr.mxu0 0.0
        %1152 = vmatpush1.msra.mxu0 0.0
        %1153 = vmatprep.subr.mxu0 0.0
        %1154 = vmatpush1.msra.mxu0 0.0
        %1155 = vmatprep.subr.mxu0 0.0
        %1156 = vmatpush1.msra.mxu0 0.0
        %1157 = vmatprep.subr.mxu0 0.0
        %1158 = vmatpush1.msra.mxu0 0.0
        %1159 = vmatprep.subr.mxu0 0.0
        %1160 = vmatpush1.msra.mxu0 0.0
        %1161 = vmatprep.subr.mxu0 0.0
        %1162 = vmatpush1.msra.mxu0 0.0
        %1163 = vmatprep.subr.mxu0 0.0
        %1164 = vmatpush1.msra.mxu0 0.0
        %1165 = vmatprep.subr.mxu0 0.0
        %1166 = vmatpush1.msra.mxu0 0.0
        %1167 = vmatprep.subr.mxu0 0.0
        %1168 = vmatpush1.msra.mxu0 0.0
        %1169 = vmatprep.subr.mxu0 0.0
        %1170 = vmatpush1.msra.mxu0 0.0
        %1171 = vmatprep.subr.mxu0 0.0
        %1172 = vmatpush1.msra.mxu0 0.0
        %1173 = vmatprep.mubr.f32.mxu0 0.0
        %v1174 = vand.u32 %v485, 4294901760
        %v1175 = vsub.f32 %v485, %v1174
        %1176 = vmatmul.mubr.f32.gmra.mrb[0].mxu0 %v1175
        %v1177 = vpop.f32.mrb[0].mxu0
        %v1178 = vadd.f32 %v992, %v1177
        %v1179 = vpop.f32.mrb[0].mxu0
        %v1180 = vadd.f32 %v994, %v1179
        %1181 = vmatprep.mubr.f32.mxu0 0.0
        %v1182 = vand.u32 %v486, 4294901760
        %v1183 = vsub.f32 %v486, %v1182
        %1184 = vmatmul.mubr.f32.gmra.mrb[0].mxu0 %v1183
        %v1185 = vpop.f32.mrb[0].mxu0
        %v1186 = vadd.f32 %v999, %v1185
        %v1187 = vpop.f32.mrb[0].mxu0
        %v1188 = vadd.f32 %v1001, %v1187
        %1189 = vmatprep.mubr.f32.mxu0 0.0
        %v1190 = vand.u32 %v487, 4294901760
        %v1191 = vsub.f32 %v487, %v1190
        %1192 = vmatmul.mubr.f32.gmra.mrb[0].mxu0 %v1191
        %v1193 = vpop.f32.mrb[0].mxu0
        %v1194 = vadd.f32 %v1006, %v1193
        %v1195 = vpop.f32.mrb[0].mxu0
        %v1196 = vadd.f32 %v1008, %v1195
        %1197 = vmatprep.mubr.f32.mxu0 0.0
        %v1198 = vand.u32 %v488, 4294901760
        %v1199 = vsub.f32 %v488, %v1198
        %1200 = vmatmul.mubr.f32.gmra.mrb[0].mxu0 %v1199
        %v1201 = vpop.f32.mrb[0].mxu0
        %v1202 = vadd.f32 %v1013, %v1201
        %v1203 = vpop.f32.mrb[0].mxu0
        %v1204 = vadd.f32 %v1015, %v1203
        %1205 = vmatprep.mubr.f32.mxu0 0.0
        %v1206 = vand.u32 %v489, 4294901760
        %v1207 = vsub.f32 %v489, %v1206
        %1208 = vmatmul.mubr.f32.gmra.mrb[0].mxu0 %v1207
        %v1209 = vpop.f32.mrb[0].mxu0
        %v1210 = vadd.f32 %v1020, %v1209
        %v1211 = vpop.f32.mrb[0].mxu0
        %v1212 = vadd.f32 %v1022, %v1211
        %1213 = vmatprep.mubr.f32.mxu0 0.0
        %v1214 = vand.u32 %v490, 4294901760
        %v1215 = vsub.f32 %v490, %v1214
        %1216 = vmatmul.mubr.f32.gmra.mrb[0].mxu0 %v1215
        %v1217 = vpop.f32.mrb[0].mxu0
        %v1218 = vadd.f32 %v1027, %v1217
        %v1219 = vpop.f32.mrb[0].mxu0
        %v1220 = vadd.f32 %v1029, %v1219
        %1221 = vmatprep.mubr.f32.mxu0 0.0
        %v1222 = vand.u32 %v491, 4294901760
        %v1223 = vsub.f32 %v491, %v1222
        %1224 = vmatmul.mubr.f32.gmra.mrb[0].mxu0 %v1223
        %v1225 = vpop.f32.mrb[0].mxu0
        %v1226 = vadd.f32 %v1034, %v1225
        %v1227 = vpop.f32.mrb[0].mxu0
        %v1228 = vadd.f32 %v1036, %v1227
        %1229 = vmatprep.mubr.f32.mxu0 0.0
        %v1230 = vand.u32 %v492, 4294901760
        %v1231 = vsub.f32 %v492, %v1230
        %1232 = vmatmul.mubr.f32.gmra.mrb[0].mxu0 %v1231
        %v1233 = vpop.f32.mrb[0].mxu0
        %v1234 = vadd.f32 %v1041, %v1233
        %v1235 = vpop.f32.mrb[0].mxu0
        %v1236 = vadd.f32 %v1043, %v1235
        %1237 = vdwg.mxu0
        %v1238 = vand.u32 %v494, 4294901760
        %1239 = vmatprep.subr.mxu0 %v1238
        %v1240 = vand.u32 %v493, 4294901760
        %1241 = vmatpush1.msra.mxu0 %v1240
        %v1242 = vand.u32 %v498, 4294901760
        %1243 = vmatprep.subr.mxu0 %v1242
        %v1244 = vand.u32 %v497, 4294901760
        %1245 = vmatpush1.msra.mxu0 %v1244
        %v1246 = vand.u32 %v502, 4294901760
        %1247 = vmatprep.subr.mxu0 %v1246
        %v1248 = vand.u32 %v501, 4294901760
        %1249 = vmatpush1.msra.mxu0 %v1248
        %v1250 = vand.u32 %v506, 4294901760
        %1251 = vmatprep.subr.mxu0 %v1250
        %v1252 = vand.u32 %v505, 4294901760
        %1253 = vmatpush1.msra.mxu0 %v1252
        %v1254 = vand.u32 %v510, 4294901760
        %1255 = vmatprep.subr.mxu0 %v1254
        %v1256 = vand.u32 %v509, 4294901760
        %1257 = vmatpush1.msra.mxu0 %v1256
        %v1258 = vand.u32 %v514, 4294901760
        %1259 = vmatprep.subr.mxu0 %v1258
        %v1260 = vand.u32 %v513, 4294901760
        %1261 = vmatpush1.msra.mxu0 %v1260
        %v1262 = vand.u32 %v518, 4294901760
        %1263 = vmatprep.subr.mxu0 %v1262
        %v1264 = vand.u32 %v517, 4294901760
        %1265 = vmatpush1.msra.mxu0 %v1264
        %v1266 = vand.u32 %v522, 4294901760
        %1267 = vmatprep.subr.mxu0 %v1266
        %v1268 = vand.u32 %v521, 4294901760
        %1269 = vmatpush1.msra.mxu0 %v1268
        %v1270 = vand.u32 %v526, 4294901760
        %1271 = vmatprep.subr.mxu0 %v1270
        %v1272 = vand.u32 %v525, 4294901760
        %1273 = vmatpush1.msra.mxu0 %v1272
        %v1274 = vand.u32 %v530, 4294901760
        %1275 = vmatprep.subr.mxu0 %v1274
        %v1276 = vand.u32 %v529, 4294901760
        %1277 = vmatpush1.msra.mxu0 %v1276
        %v1278 = vand.u32 %v534, 4294901760
        %1279 = vmatprep.subr.mxu0 %v1278
        %v1280 = vand.u32 %v533, 4294901760
        %1281 = vmatpush1.msra.mxu0 %v1280
        %v1282 = vand.u32 %v538, 4294901760
        %1283 = vmatprep.subr.mxu0 %v1282
        %v1284 = vand.u32 %v537, 4294901760
        %1285 = vmatpush1.msra.mxu0 %v1284
        %v1286 = vand.u32 %v542, 4294901760
        %1287 = vmatprep.subr.mxu0 %v1286
        %v1288 = vand.u32 %v541, 4294901760
        %1289 = vmatpush1.msra.mxu0 %v1288
        %v1290 = vand.u32 %v546, 4294901760
        %1291 = vmatprep.subr.mxu0 %v1290
        %v1292 = vand.u32 %v545, 4294901760
        %1293 = vmatpush1.msra.mxu0 %v1292
        %v1294 = vand.u32 %v550, 4294901760
        %1295 = vmatprep.subr.mxu0 %v1294
        %v1296 = vand.u32 %v549, 4294901760
        %1297 = vmatpush1.msra.mxu0 %v1296
        %v1298 = vand.u32 %v554, 4294901760
        %1299 = vmatprep.subr.mxu0 %v1298
        %v1300 = vand.u32 %v553, 4294901760
        %1301 = vmatpush1.msra.mxu0 %v1300
        %1302 = vmatprep.subr.mxu0 0.0
        %1303 = vmatpush1.msra.mxu0 0.0
        %1304 = vmatprep.subr.mxu0 0.0
        %1305 = vmatpush1.msra.mxu0 0.0
        %1306 = vmatprep.subr.mxu0 0.0
        %1307 = vmatpush1.msra.mxu0 0.0
        %1308 = vmatprep.subr.mxu0 0.0
        %1309 = vmatpush1.msra.mxu0 0.0
        %1310 = vmatprep.subr.mxu0 0.0
        %1311 = vmatpush1.msra.mxu0 0.0
        %1312 = vmatprep.subr.mxu0 0.0
        %1313 = vmatpush1.msra.mxu0 0.0
        %1314 = vmatprep.subr.mxu0 0.0
        %1315 = vmatpush1.msra.mxu0 0.0
        %1316 = vmatprep.subr.mxu0 0.0
        %1317 = vmatpush1.msra.mxu0 0.0
        %1318 = vmatprep.subr.mxu0 0.0
        %1319 = vmatpush1.msra.mxu0 0.0
        %1320 = vmatprep.subr.mxu0 0.0
        %1321 = vmatpush1.msra.mxu0 0.0
        %1322 = vmatprep.subr.mxu0 0.0
        %1323 = vmatpush1.msra.mxu0 0.0
        %1324 = vmatprep.subr.mxu0 0.0
        %1325 = vmatpush1.msra.mxu0 0.0
        %1326 = vmatprep.subr.mxu0 0.0
        %1327 = vmatpush1.msra.mxu0 0.0
        %1328 = vmatprep.subr.mxu0 0.0
        %1329 = vmatpush1.msra.mxu0 0.0
        %1330 = vmatprep.subr.mxu0 0.0
        %1331 = vmatpush1.msra.mxu0 0.0
        %1332 = vmatprep.subr.mxu0 0.0
        %1333 = vmatpush1.msra.mxu0 0.0
        %1334 = vmatprep.mubr.f32.mxu0 0.0
        %v1335 = vand.u32 %v485, 4294901760
        %v1336 = vsub.f32 %v485, %v1335
        %v1337 = vand.u32 %v1336, 4294901760
        %1338 = vmatmul.mubr.f32.gmra.mrb[0].mxu0 %v1337
        %v1339 = vpop.f32.mrb[0].mxu0
        %v1340 = vadd.f32 %v1178, %v1339
        %v1341 = vpop.f32.mrb[0].mxu0
        %v1342 = vadd.f32 %v1180, %v1341
        %1343 = vmatprep.mubr.f32.mxu0 0.0
        %v1344 = vand.u32 %v486, 4294901760
        %v1345 = vsub.f32 %v486, %v1344
        %v1346 = vand.u32 %v1345, 4294901760
        %1347 = vmatmul.mubr.f32.gmra.mrb[0].mxu0 %v1346
        %v1348 = vpop.f32.mrb[0].mxu0
        %v1349 = vadd.f32 %v1186, %v1348
        %v1350 = vpop.f32.mrb[0].mxu0
        %v1351 = vadd.f32 %v1188, %v1350
        %1352 = vmatprep.mubr.f32.mxu0 0.0
        %v1353 = vand.u32 %v487, 4294901760
        %v1354 = vsub.f32 %v487, %v1353
        %v1355 = vand.u32 %v1354, 4294901760
        %1356 = vmatmul.mubr.f32.gmra.mrb[0].mxu0 %v1355
        %v1357 = vpop.f32.mrb[0].mxu0
        %v1358 = vadd.f32 %v1194, %v1357
        %v1359 = vpop.f32.mrb[0].mxu0
        %v1360 = vadd.f32 %v1196, %v1359
        %1361 = vmatprep.mubr.f32.mxu0 0.0
        %v1362 = vand.u32 %v488, 4294901760
        %v1363 = vsub.f32 %v488, %v1362
        %v1364 = vand.u32 %v1363, 4294901760
        %1365 = vmatmul.mubr.f32.gmra.mrb[0].mxu0 %v1364
        %v1366 = vpop.f32.mrb[0].mxu0
        %v1367 = vadd.f32 %v1202, %v1366
        %v1368 = vpop.f32.mrb[0].mxu0
        %v1369 = vadd.f32 %v1204, %v1368
        %1370 = vmatprep.mubr.f32.mxu0 0.0
        %v1371 = vand.u32 %v489, 4294901760
        %v1372 = vsub.f32 %v489, %v1371
        %v1373 = vand.u32 %v1372, 4294901760
        %1374 = vmatmul.mubr.f32.gmra.mrb[0].mxu0 %v1373
        %v1375 = vpop.f32.mrb[0].mxu0
        %v1376 = vadd.f32 %v1210, %v1375
        %v1377 = vpop.f32.mrb[0].mxu0
        %v1378 = vadd.f32 %v1212, %v1377
        %1379 = vmatprep.mubr.f32.mxu0 0.0
        %v1380 = vand.u32 %v490, 4294901760
        %v1381 = vsub.f32 %v490, %v1380
        %v1382 = vand.u32 %v1381, 4294901760
        %1383 = vmatmul.mubr.f32.gmra.mrb[0].mxu0 %v1382
        %v1384 = vpop.f32.mrb[0].mxu0
        %v1385 = vadd.f32 %v1218, %v1384
        %v1386 = vpop.f32.mrb[0].mxu0
        %v1387 = vadd.f32 %v1220, %v1386
        %1388 = vmatprep.mubr.f32.mxu0 0.0
        %v1389 = vand.u32 %v491, 4294901760
        %v1390 = vsub.f32 %v491, %v1389
        %v1391 = vand.u32 %v1390, 4294901760
        %1392 = vmatmul.mubr.f32.gmra.mrb[0].mxu0 %v1391
        %v1393 = vpop.f32.mrb[0].mxu0
        %v1394 = vadd.f32 %v1226, %v1393
        %v1395 = vpop.f32.mrb[0].mxu0
        %v1396 = vadd.f32 %v1228, %v1395
        %1397 = vmatprep.mubr.f32.mxu0 0.0
        %v1398 = vand.u32 %v492, 4294901760
        %v1399 = vsub.f32 %v492, %v1398
        %v1400 = vand.u32 %v1399, 4294901760
        %1401 = vmatmul.mubr.f32.gmra.mrb[0].mxu0 %v1400
        %v1402 = vpop.f32.mrb[0].mxu0
        %v1403 = vadd.f32 %v1234, %v1402
        %v1404 = vpop.f32.mrb[0].mxu0
        %v1405 = vadd.f32 %v1236, %v1404
        %1406 = vdwg.mxu0
        %v1407 = vand.u32 %v494, 4294901760
        %v1408 = vsub.f32 %v494, %v1407
        %v1409 = vand.u32 %v1408, 4294901760
        %1410 = vmatprep.subr.mxu0 %v1409
        %v1411 = vand.u32 %v493, 4294901760
        %v1412 = vsub.f32 %v493, %v1411
        %v1413 = vand.u32 %v1412, 4294901760
        %1414 = vmatpush1.msra.mxu0 %v1413
        %v1415 = vand.u32 %v498, 4294901760
        %v1416 = vsub.f32 %v498, %v1415
        %v1417 = vand.u32 %v1416, 4294901760
        %1418 = vmatprep.subr.mxu0 %v1417
        %v1419 = vand.u32 %v497, 4294901760
        %v1420 = vsub.f32 %v497, %v1419
        %v1421 = vand.u32 %v1420, 4294901760
        %1422 = vmatpush1.msra.mxu0 %v1421
        %v1423 = vand.u32 %v502, 4294901760
        %v1424 = vsub.f32 %v502, %v1423
        %v1425 = vand.u32 %v1424, 4294901760
        %1426 = vmatprep.subr.mxu0 %v1425
        %v1427 = vand.u32 %v501, 4294901760
        %v1428 = vsub.f32 %v501, %v1427
        %v1429 = vand.u32 %v1428, 4294901760
        %1430 = vmatpush1.msra.mxu0 %v1429
        %v1431 = vand.u32 %v506, 4294901760
        %v1432 = vsub.f32 %v506, %v1431
        %v1433 = vand.u32 %v1432, 4294901760
        %1434 = vmatprep.subr.mxu0 %v1433
        %v1435 = vand.u32 %v505, 4294901760
        %v1436 = vsub.f32 %v505, %v1435
        %v1437 = vand.u32 %v1436, 4294901760
        %1438 = vmatpush1.msra.mxu0 %v1437
        %v1439 = vand.u32 %v510, 4294901760
        %v1440 = vsub.f32 %v510, %v1439
        %v1441 = vand.u32 %v1440, 4294901760
        %1442 = vmatprep.subr.mxu0 %v1441
        %v1443 = vand.u32 %v509, 4294901760
        %v1444 = vsub.f32 %v509, %v1443
        %v1445 = vand.u32 %v1444, 4294901760
        %1446 = vmatpush1.msra.mxu0 %v1445
        %v1447 = vand.u32 %v514, 4294901760
        %v1448 = vsub.f32 %v514, %v1447
        %v1449 = vand.u32 %v1448, 4294901760
        %1450 = vmatprep.subr.mxu0 %v1449
        %v1451 = vand.u32 %v513, 4294901760
        %v1452 = vsub.f32 %v513, %v1451
        %v1453 = vand.u32 %v1452, 4294901760
        %1454 = vmatpush1.msra.mxu0 %v1453
        %v1455 = vand.u32 %v518, 4294901760
        %v1456 = vsub.f32 %v518, %v1455
        %v1457 = vand.u32 %v1456, 4294901760
        %1458 = vmatprep.subr.mxu0 %v1457
        %v1459 = vand.u32 %v517, 4294901760
        %v1460 = vsub.f32 %v517, %v1459
        %v1461 = vand.u32 %v1460, 4294901760
        %1462 = vmatpush1.msra.mxu0 %v1461
        %v1463 = vand.u32 %v522, 4294901760
        %v1464 = vsub.f32 %v522, %v1463
        %v1465 = vand.u32 %v1464, 4294901760
        %1466 = vmatprep.subr.mxu0 %v1465
        %v1467 = vand.u32 %v521, 4294901760
        %v1468 = vsub.f32 %v521, %v1467
        %v1469 = vand.u32 %v1468, 4294901760
        %1470 = vmatpush1.msra.mxu0 %v1469
        %v1471 = vand.u32 %v526, 4294901760
        %v1472 = vsub.f32 %v526, %v1471
        %v1473 = vand.u32 %v1472, 4294901760
        %1474 = vmatprep.subr.mxu0 %v1473
        %v1475 = vand.u32 %v525, 4294901760
        %v1476 = vsub.f32 %v525, %v1475
        %v1477 = vand.u32 %v1476, 4294901760
        %1478 = vmatpush1.msra.mxu0 %v1477
        %v1479 = vand.u32 %v530, 4294901760
        %v1480 = vsub.f32 %v530, %v1479
        %v1481 = vand.u32 %v1480, 4294901760
        %1482 = vmatprep.subr.mxu0 %v1481
        %v1483 = vand.u32 %v529, 4294901760
        %v1484 = vsub.f32 %v529, %v1483
        %v1485 = vand.u32 %v1484, 4294901760
        %1486 = vmatpush1.msra.mxu0 %v1485
        %v1487 = vand.u32 %v534, 4294901760
        %v1488 = vsub.f32 %v534, %v1487
        %v1489 = vand.u32 %v1488, 4294901760
        %1490 = vmatprep.subr.mxu0 %v1489
        %v1491 = vand.u32 %v533, 4294901760
        %v1492 = vsub.f32 %v533, %v1491
        %v1493 = vand.u32 %v1492, 4294901760
        %1494 = vmatpush1.msra.mxu0 %v1493
        %v1495 = vand.u32 %v538, 4294901760
        %v1496 = vsub.f32 %v538, %v1495
        %v1497 = vand.u32 %v1496, 4294901760
        %1498 = vmatprep.subr.mxu0 %v1497
        %v1499 = vand.u32 %v537, 4294901760
        %v1500 = vsub.f32 %v537, %v1499
        %v1501 = vand.u32 %v1500, 4294901760
        %1502 = vmatpush1.msra.mxu0 %v1501
        %v1503 = vand.u32 %v542, 4294901760
        %v1504 = vsub.f32 %v542, %v1503
        %v1505 = vand.u32 %v1504, 4294901760
        %1506 = vmatprep.subr.mxu0 %v1505
        %v1507 = vand.u32 %v541, 4294901760
        %v1508 = vsub.f32 %v541, %v1507
        %v1509 = vand.u32 %v1508, 4294901760
        %1510 = vmatpush1.msra.mxu0 %v1509
        %v1511 = vand.u32 %v546, 4294901760
        %v1512 = vsub.f32 %v546, %v1511
        %v1513 = vand.u32 %v1512, 4294901760
        %1514 = vmatprep.subr.mxu0 %v1513
        %v1515 = vand.u32 %v545, 4294901760
        %v1516 = vsub.f32 %v545, %v1515
        %v1517 = vand.u32 %v1516, 4294901760
        %1518 = vmatpush1.msra.mxu0 %v1517
        %v1519 = vand.u32 %v550, 4294901760
        %v1520 = vsub.f32 %v550, %v1519
        %v1521 = vand.u32 %v1520, 4294901760
        %1522 = vmatprep.subr.mxu0 %v1521
        %v1523 = vand.u32 %v549, 4294901760
        %v1524 = vsub.f32 %v549, %v1523
        %v1525 = vand.u32 %v1524, 4294901760
        %1526 = vmatpush1.msra.mxu0 %v1525
        %v1527 = vand.u32 %v554, 4294901760
        %v1528 = vsub.f32 %v554, %v1527
        %v1529 = vand.u32 %v1528, 4294901760
        %1530 = vmatprep.subr.mxu0 %v1529
        %v1531 = vand.u32 %v553, 4294901760
        %v1532 = vsub.f32 %v553, %v1531
        %v1533 = vand.u32 %v1532, 4294901760
        %1534 = vmatpush1.msra.mxu0 %v1533
        %1535 = vmatprep.subr.mxu0 0.0
        %1536 = vmatpush1.msra.mxu0 0.0
        %1537 = vmatprep.subr.mxu0 0.0
        %1538 = vmatpush1.msra.mxu0 0.0
        %1539 = vmatprep.subr.mxu0 0.0
        %1540 = vmatpush1.msra.mxu0 0.0
        %1541 = vmatprep.subr.mxu0 0.0
        %1542 = vmatpush1.msra.mxu0 0.0
        %1543 = vmatprep.subr.mxu0 0.0
        %1544 = vmatpush1.msra.mxu0 0.0
        %1545 = vmatprep.subr.mxu0 0.0
        %1546 = vmatpush1.msra.mxu0 0.0
        %1547 = vmatprep.subr.mxu0 0.0
        %1548 = vmatpush1.msra.mxu0 0.0
        %1549 = vmatprep.subr.mxu0 0.0
        %1550 = vmatpush1.msra.mxu0 0.0
        %1551 = vmatprep.subr.mxu0 0.0
        %1552 = vmatpush1.msra.mxu0 0.0
        %1553 = vmatprep.subr.mxu0 0.0
        %1554 = vmatpush1.msra.mxu0 0.0
        %1555 = vmatprep.subr.mxu0 0.0
        %1556 = vmatpush1.msra.mxu0 0.0
        %1557 = vmatprep.subr.mxu0 0.0
        %1558 = vmatpush1.msra.mxu0 0.0
        %1559 = vmatprep.subr.mxu0 0.0
        %1560 = vmatpush1.msra.mxu0 0.0
        %1561 = vmatprep.subr.mxu0 0.0
        %1562 = vmatpush1.msra.mxu0 0.0
        %1563 = vmatprep.subr.mxu0 0.0
        %1564 = vmatpush1.msra.mxu0 0.0
        %1565 = vmatprep.subr.mxu0 0.0
        %1566 = vmatpush1.msra.mxu0 0.0
        %1567 = vmatprep.mubr.f32.mxu0 0.0
        %v1568 = vand.u32 %v485, 4294901760
        %1569 = vmatmul.mubr.f32.gmra.mrb[0].mxu0 %v1568
        %v1570 = vpop.f32.mrb[0].mxu0
        %v1571 = vadd.f32 %v1340, %v1570
        %v1572 = vpop.f32.mrb[0].mxu0
        %v1573 = vadd.f32 %v1342, %v1572
        %1574 = vmatprep.mubr.f32.mxu0 0.0
        %v1575 = vand.u32 %v486, 4294901760
        %1576 = vmatmul.mubr.f32.gmra.mrb[0].mxu0 %v1575
        %v1577 = vpop.f32.mrb[0].mxu0
        %v1578 = vadd.f32 %v1349, %v1577
        %v1579 = vpop.f32.mrb[0].mxu0
        %v1580 = vadd.f32 %v1351, %v1579
        %1581 = vmatprep.mubr.f32.mxu0 0.0
        %v1582 = vand.u32 %v487, 4294901760
        %1583 = vmatmul.mubr.f32.gmra.mrb[0].mxu0 %v1582
        %v1584 = vpop.f32.mrb[0].mxu0
        %v1585 = vadd.f32 %v1358, %v1584
        %v1586 = vpop.f32.mrb[0].mxu0
        %v1587 = vadd.f32 %v1360, %v1586
        %1588 = vmatprep.mubr.f32.mxu0 0.0
        %v1589 = vand.u32 %v488, 4294901760
        %1590 = vmatmul.mubr.f32.gmra.mrb[0].mxu0 %v1589
        %v1591 = vpop.f32.mrb[0].mxu0
        %v1592 = vadd.f32 %v1367, %v1591
        %v1593 = vpop.f32.mrb[0].mxu0
        %v1594 = vadd.f32 %v1369, %v1593
        %1595 = vmatprep.mubr.f32.mxu0 0.0
        %v1596 = vand.u32 %v489, 4294901760
        %1597 = vmatmul.mubr.f32.gmra.mrb[0].mxu0 %v1596
        %v1598 = vpop.f32.mrb[0].mxu0
        %v1599 = vadd.f32 %v1376, %v1598
        %v1600 = vpop.f32.mrb[0].mxu0
        %v1601 = vadd.f32 %v1378, %v1600
        %1602 = vmatprep.mubr.f32.mxu0 0.0
        %v1603 = vand.u32 %v490, 4294901760
        %1604 = vmatmul.mubr.f32.gmra.mrb[0].mxu0 %v1603
        %v1605 = vpop.f32.mrb[0].mxu0
        %v1606 = vadd.f32 %v1385, %v1605
        %v1607 = vpop.f32.mrb[0].mxu0
        %v1608 = vadd.f32 %v1387, %v1607
        %1609 = vmatprep.mubr.f32.mxu0 0.0
        %v1610 = vand.u32 %v491, 4294901760
        %1611 = vmatmul.mubr.f32.gmra.mrb[0].mxu0 %v1610
        %v1612 = vpop.f32.mrb[0].mxu0
        %v1613 = vadd.f32 %v1394, %v1612
        %v1614 = vpop.f32.mrb[0].mxu0
        %v1615 = vadd.f32 %v1396, %v1614
        %1616 = vmatprep.mubr.f32.mxu0 0.0
        %v1617 = vand.u32 %v492, 4294901760
        %1618 = vmatmul.mubr.f32.gmra.mrb[0].mxu0 %v1617
        %v1619 = vpop.f32.mrb[0].mxu0
        %v1620 = vadd.f32 %v1403, %v1619
        %v1621 = vpop.f32.mrb[0].mxu0
        %v1622 = vadd.f32 %v1405, %v1621
        %1623 = vdwg.mxu0
        %v1624 = vand.u32 %v494, 4294901760
        %1625 = vmatprep.subr.mxu0 %v1624
        %v1626 = vand.u32 %v493, 4294901760
        %1627 = vmatpush1.msra.mxu0 %v1626
        %v1628 = vand.u32 %v498, 4294901760
        %1629 = vmatprep.subr.mxu0 %v1628
        %v1630 = vand.u32 %v497, 4294901760
        %1631 = vmatpush1.msra.mxu0 %v1630
        %v1632 = vand.u32 %v502, 4294901760
        %1633 = vmatprep.subr.mxu0 %v1632
        %v1634 = vand.u32 %v501, 4294901760
        %1635 = vmatpush1.msra.mxu0 %v1634
        %v1636 = vand.u32 %v506, 4294901760
        %1637 = vmatprep.subr.mxu0 %v1636
        %v1638 = vand.u32 %v505, 4294901760
        %1639 = vmatpush1.msra.mxu0 %v1638
        %v1640 = vand.u32 %v510, 4294901760
        %1641 = vmatprep.subr.mxu0 %v1640
        %v1642 = vand.u32 %v509, 4294901760
        %1643 = vmatpush1.msra.mxu0 %v1642
        %v1644 = vand.u32 %v514, 4294901760
        %1645 = vmatprep.subr.mxu0 %v1644
        %v1646 = vand.u32 %v513, 4294901760
        %1647 = vmatpush1.msra.mxu0 %v1646
        %v1648 = vand.u32 %v518, 4294901760
        %1649 = vmatprep.subr.mxu0 %v1648
        %v1650 = vand.u32 %v517, 4294901760
        %1651 = vmatpush1.msra.mxu0 %v1650
        %v1652 = vand.u32 %v522, 4294901760
        %1653 = vmatprep.subr.mxu0 %v1652
        %v1654 = vand.u32 %v521, 4294901760
        %1655 = vmatpush1.msra.mxu0 %v1654
        %v1656 = vand.u32 %v526, 4294901760
        %1657 = vmatprep.subr.mxu0 %v1656
        %v1658 = vand.u32 %v525, 4294901760
        %1659 = vmatpush1.msra.mxu0 %v1658
        %v1660 = vand.u32 %v530, 4294901760
        %1661 = vmatprep.subr.mxu0 %v1660
        %v1662 = vand.u32 %v529, 4294901760
        %1663 = vmatpush1.msra.mxu0 %v1662
        %v1664 = vand.u32 %v534, 4294901760
        %1665 = vmatprep.subr.mxu0 %v1664
        %v1666 = vand.u32 %v533, 4294901760
        %1667 = vmatpush1.msra.mxu0 %v1666
        %v1668 = vand.u32 %v538, 4294901760
        %1669 = vmatprep.subr.mxu0 %v1668
        %v1670 = vand.u32 %v537, 4294901760
        %1671 = vmatpush1.msra.mxu0 %v1670
        %v1672 = vand.u32 %v542, 4294901760
        %1673 = vmatprep.subr.mxu0 %v1672
        %v1674 = vand.u32 %v541, 4294901760
        %1675 = vmatpush1.msra.mxu0 %v1674
        %v1676 = vand.u32 %v546, 4294901760
        %1677 = vmatprep.subr.mxu0 %v1676
        %v1678 = vand.u32 %v545, 4294901760
        %1679 = vmatpush1.msra.mxu0 %v1678
        %v1680 = vand.u32 %v550, 4294901760
        %1681 = vmatprep.subr.mxu0 %v1680
        %v1682 = vand.u32 %v549, 4294901760
        %1683 = vmatpush1.msra.mxu0 %v1682
        %v1684 = vand.u32 %v554, 4294901760
        %1685 = vmatprep.subr.mxu0 %v1684
        %v1686 = vand.u32 %v553, 4294901760
        %1687 = vmatpush1.msra.mxu0 %v1686
        %1688 = vmatprep.subr.mxu0 0.0
        %1689 = vmatpush1.msra.mxu0 0.0
        %1690 = vmatprep.subr.mxu0 0.0
        %1691 = vmatpush1.msra.mxu0 0.0
        %1692 = vmatprep.subr.mxu0 0.0
        %1693 = vmatpush1.msra.mxu0 0.0
        %1694 = vmatprep.subr.mxu0 0.0
        %1695 = vmatpush1.msra.mxu0 0.0
        %1696 = vmatprep.subr.mxu0 0.0
        %1697 = vmatpush1.msra.mxu0 0.0
        %1698 = vmatprep.subr.mxu0 0.0
        %1699 = vmatpush1.msra.mxu0 0.0
        %1700 = vmatprep.subr.mxu0 0.0
        %1701 = vmatpush1.msra.mxu0 0.0
        %1702 = vmatprep.subr.mxu0 0.0
        %1703 = vmatpush1.msra.mxu0 0.0
        %1704 = vmatprep.subr.mxu0 0.0
        %1705 = vmatpush1.msra.mxu0 0.0
        %1706 = vmatprep.subr.mxu0 0.0
        %1707 = vmatpush1.msra.mxu0 0.0
        %1708 = vmatprep.subr.mxu0 0.0
        %1709 = vmatpush1.msra.mxu0 0.0
        %1710 = vmatprep.subr.mxu0 0.0
        %1711 = vmatpush1.msra.mxu0 0.0
        %1712 = vmatprep.subr.mxu0 0.0
        %1713 = vmatpush1.msra.mxu0 0.0
        %1714 = vmatprep.subr.mxu0 0.0
        %1715 = vmatpush1.msra.mxu0 0.0
        %1716 = vmatprep.subr.mxu0 0.0
        %1717 = vmatpush1.msra.mxu0 0.0
        %1718 = vmatprep.subr.mxu0 0.0
        %1719 = vmatpush1.msra.mxu0 0.0
        %1720 = vmatprep.mubr.f32.mxu0 0.0
        %v1721 = vand.u32 %v485, 4294901760
        %1722 = vmatmul.mubr.f32.gmra.mrb[0].mxu0 %v1721
        %v1723 = vpop.f32.mrb[0].mxu0
        %v1724 = vadd.f32 %v1571, %v1723
        %v1725 = vpop.f32.mrb[0].mxu0
        %v1726 = vadd.f32 %v1573, %v1725
        %1727 = vmatprep.mubr.f32.mxu0 0.0
        %v1728 = vand.u32 %v486, 4294901760
        %1729 = vmatmul.mubr.f32.gmra.mrb[0].mxu0 %v1728
        %v1730 = vpop.f32.mrb[0].mxu0
        %v1731 = vadd.f32 %v1578, %v1730
        %v1732 = vpop.f32.mrb[0].mxu0
        %v1733 = vadd.f32 %v1580, %v1732
        %1734 = vmatprep.mubr.f32.mxu0 0.0
        %v1735 = vand.u32 %v487, 4294901760
        %1736 = vmatmul.mubr.f32.gmra.mrb[0].mxu0 %v1735
        %v1737 = vpop.f32.mrb[0].mxu0
        %v1738 = vadd.f32 %v1585, %v1737
        %v1739 = vpop.f32.mrb[0].mxu0
        %v1740 = vadd.f32 %v1587, %v1739
        %1741 = vmatprep.mubr.f32.mxu0 0.0
        %v1742 = vand.u32 %v488, 4294901760
        %1743 = vmatmul.mubr.f32.gmra.mrb[0].mxu0 %v1742
        %v1744 = vpop.f32.mrb[0].mxu0
        %v1745 = vadd.f32 %v1592, %v1744
        %v1746 = vpop.f32.mrb[0].mxu0
        %v1747 = vadd.f32 %v1594, %v1746
        %1748 = vmatprep.mubr.f32.mxu0 0.0
        %v1749 = vand.u32 %v489, 4294901760
        %1750 = vmatmul.mubr.f32.gmra.mrb[0].mxu0 %v1749
        %v1751 = vpop.f32.mrb[0].mxu0
        %v1752 = vadd.f32 %v1599, %v1751
        %v1753 = vpop.f32.mrb[0].mxu0
        %v1754 = vadd.f32 %v1601, %v1753
        %1755 = vmatprep.mubr.f32.mxu0 0.0
        %v1756 = vand.u32 %v490, 4294901760
        %1757 = vmatmul.mubr.f32.gmra.mrb[0].mxu0 %v1756
        %v1758 = vpop.f32.mrb[0].mxu0
        %v1759 = vadd.f32 %v1606, %v1758
        %v1760 = vpop.f32.mrb[0].mxu0
        %v1761 = vadd.f32 %v1608, %v1760
        %1762 = vmatprep.mubr.f32.mxu0 0.0
        %v1763 = vand.u32 %v491, 4294901760
        %1764 = vmatmul.mubr.f32.gmra.mrb[0].mxu0 %v1763
        %v1765 = vpop.f32.mrb[0].mxu0
        %v1766 = vadd.f32 %v1613, %v1765
        %v1767 = vpop.f32.mrb[0].mxu0
        %v1768 = vadd.f32 %v1615, %v1767
        %1769 = vmatprep.mubr.f32.mxu0 0.0
        %v1770 = vand.u32 %v492, 4294901760
        %1771 = vmatmul.mubr.f32.gmra.mrb[0].mxu0 %v1770
        %v1772 = vpop.f32.mrb[0].mxu0
        %v1773 = vadd.f32 %v1620, %v1772
        %v1774 = vpop.f32.mrb[0].mxu0
        %v1775 = vadd.f32 %v1622, %v1774
        %1776 = vdwg.mxu0
        %v1777 = vand.u32 %v496, 4294901760
        %1778 = vmatprep.subr.mxu0 %v1777
        %v1779 = vand.u32 %v495, 4294901760
        %1780 = vmatpush1.msra.mxu0 %v1779
        %v1781 = vand.u32 %v500, 4294901760
        %1782 = vmatprep.subr.mxu0 %v1781
        %v1783 = vand.u32 %v499, 4294901760
        %1784 = vmatpush1.msra.mxu0 %v1783
        %v1785 = vand.u32 %v504, 4294901760
        %1786 = vmatprep.subr.mxu0 %v1785
        %v1787 = vand.u32 %v503, 4294901760
        %1788 = vmatpush1.msra.mxu0 %v1787
        %v1789 = vand.u32 %v508, 4294901760
        %1790 = vmatprep.subr.mxu0 %v1789
        %v1791 = vand.u32 %v507, 4294901760
        %1792 = vmatpush1.msra.mxu0 %v1791
        %v1793 = vand.u32 %v512, 4294901760
        %1794 = vmatprep.subr.mxu0 %v1793
        %v1795 = vand.u32 %v511, 4294901760
        %1796 = vmatpush1.msra.mxu0 %v1795
        %v1797 = vand.u32 %v516, 4294901760
        %1798 = vmatprep.subr.mxu0 %v1797
        %v1799 = vand.u32 %v515, 4294901760
        %1800 = vmatpush1.msra.mxu0 %v1799
        %v1801 = vand.u32 %v520, 4294901760
        %1802 = vmatprep.subr.mxu0 %v1801
        %v1803 = vand.u32 %v519, 4294901760
        %1804 = vmatpush1.msra.mxu0 %v1803
        %v1805 = vand.u32 %v524, 4294901760
        %1806 = vmatprep.subr.mxu0 %v1805
        %v1807 = vand.u32 %v523, 4294901760
        %1808 = vmatpush1.msra.mxu0 %v1807
        %v1809 = vand.u32 %v528, 4294901760
        %1810 = vmatprep.subr.mxu0 %v1809
        %v1811 = vand.u32 %v527, 4294901760
        %1812 = vmatpush1.msra.mxu0 %v1811
        %v1813 = vand.u32 %v532, 4294901760
        %1814 = vmatprep.subr.mxu0 %v1813
        %v1815 = vand.u32 %v531, 4294901760
        %1816 = vmatpush1.msra.mxu0 %v1815
        %v1817 = vand.u32 %v536, 4294901760
        %1818 = vmatprep.subr.mxu0 %v1817
        %v1819 = vand.u32 %v535, 4294901760
        %1820 = vmatpush1.msra.mxu0 %v1819
        %v1821 = vand.u32 %v540, 4294901760
        %1822 = vmatprep.subr.mxu0 %v1821
        %v1823 = vand.u32 %v539, 4294901760
        %1824 = vmatpush1.msra.mxu0 %v1823
        %v1825 = vand.u32 %v544, 4294901760
        %1826 = vmatprep.subr.mxu0 %v1825
        %v1827 = vand.u32 %v543, 4294901760
        %1828 = vmatpush1.msra.mxu0 %v1827
        %v1829 = vand.u32 %v548, 4294901760
        %1830 = vmatprep.subr.mxu0 %v1829
        %v1831 = vand.u32 %v547, 4294901760
        %1832 = vmatpush1.msra.mxu0 %v1831
        %v1833 = vand.u32 %v552, 4294901760
        %1834 = vmatprep.subr.mxu0 %v1833
        %v1835 = vand.u32 %v551, 4294901760
        %1836 = vmatpush1.msra.mxu0 %v1835
        %v1837 = vand.u32 %v556, 4294901760
        %1838 = vmatprep.subr.mxu0 %v1837
        %v1839 = vand.u32 %v555, 4294901760
        %1840 = vmatpush1.msra.mxu0 %v1839
        %1841 = vmatprep.subr.mxu0 0.0
        %1842 = vmatpush1.msra.mxu0 0.0
        %1843 = vmatprep.subr.mxu0 0.0
        %1844 = vmatpush1.msra.mxu0 0.0
        %1845 = vmatprep.subr.mxu0 0.0
        %1846 = vmatpush1.msra.mxu0 0.0
        %1847 = vmatprep.subr.mxu0 0.0
        %1848 = vmatpush1.msra.mxu0 0.0
        %1849 = vmatprep.subr.mxu0 0.0
        %1850 = vmatpush1.msra.mxu0 0.0
        %1851 = vmatprep.subr.mxu0 0.0
        %1852 = vmatpush1.msra.mxu0 0.0
        %1853 = vmatprep.subr.mxu0 0.0
        %1854 = vmatpush1.msra.mxu0 0.0
        %1855 = vmatprep.subr.mxu0 0.0
        %1856 = vmatpush1.msra.mxu0 0.0
        %1857 = vmatprep.subr.mxu0 0.0
        %1858 = vmatpush1.msra.mxu0 0.0
        %1859 = vmatprep.subr.mxu0 0.0
        %1860 = vmatpush1.msra.mxu0 0.0
        %1861 = vmatprep.subr.mxu0 0.0
        %1862 = vmatpush1.msra.mxu0 0.0
        %1863 = vmatprep.subr.mxu0 0.0
        %1864 = vmatpush1.msra.mxu0 0.0
        %1865 = vmatprep.subr.mxu0 0.0
        %1866 = vmatpush1.msra.mxu0 0.0
        %1867 = vmatprep.subr.mxu0 0.0
        %1868 = vmatpush1.msra.mxu0 0.0
        %1869 = vmatprep.subr.mxu0 0.0
        %1870 = vmatpush1.msra.mxu0 0.0
        %1871 = vmatprep.subr.mxu0 0.0
        %1872 = vmatpush1.msra.mxu0 0.0
        %1873 = vmatprep.mubr.f32.mxu0 0.0
        %v1874 = vand.u32 %v485, 4294901760
        %v1875 = vsub.f32 %v485, %v1874
        %v1876 = vand.u32 %v1875, 4294901760
        %v1877 = vsub.f32 %v1875, %v1876
        %v1878 = vand.u32 %v1877, 4294901760
        %1879 = vmatmul.mubr.f32.gmra.mrb[0].mxu0 %v1878
        %v1880 = vpop.f32.mrb[0].mxu0
        %v1881 = vadd.f32 %v570, %v1880
        %v1882 = vpop.f32.mrb[0].mxu0
        %v1883 = vadd.f32 %v574, %v1882
        %1884 = vmatprep.mubr.f32.mxu0 0.0
        %v1885 = vand.u32 %v486, 4294901760
        %v1886 = vsub.f32 %v486, %v1885
        %v1887 = vand.u32 %v1886, 4294901760
        %v1888 = vsub.f32 %v1886, %v1887
        %v1889 = vand.u32 %v1888, 4294901760
        %1890 = vmatmul.mubr.f32.gmra.mrb[0].mxu0 %v1889
        %v1891 = vpop.f32.mrb[0].mxu0
        %v1892 = vadd.f32 %v570, %v1891
        %v1893 = vpop.f32.mrb[0].mxu0
        %v1894 = vadd.f32 %v574, %v1893
        %1895 = vmatprep.mubr.f32.mxu0 0.0
        %v1896 = vand.u32 %v487, 4294901760
        %v1897 = vsub.f32 %v487, %v1896
        %v1898 = vand.u32 %v1897, 4294901760
        %v1899 = vsub.f32 %v1897, %v1898
        %v1900 = vand.u32 %v1899, 4294901760
        %1901 = vmatmul.mubr.f32.gmra.mrb[0].mxu0 %v1900
        %v1902 = vpop.f32.mrb[0].mxu0
        %v1903 = vadd.f32 %v570, %v1902
        %v1904 = vpop.f32.mrb[0].mxu0
        %v1905 = vadd.f32 %v574, %v1904
        %1906 = vmatprep.mubr.f32.mxu0 0.0
        %v1907 = vand.u32 %v488, 4294901760
        %v1908 = vsub.f32 %v488, %v1907
        %v1909 = vand.u32 %v1908, 4294901760
        %v1910 = vsub.f32 %v1908, %v1909
        %v1911 = vand.u32 %v1910, 4294901760
        %1912 = vmatmul.mubr.f32.gmra.mrb[0].mxu0 %v1911
        %v1913 = vpop.f32.mrb[0].mxu0
        %v1914 = vadd.f32 %v570, %v1913
        %v1915 = vpop.f32.mrb[0].mxu0
        %v1916 = vadd.f32 %v574, %v1915
        %1917 = vmatprep.mubr.f32.mxu0 0.0
        %v1918 = vand.u32 %v489, 4294901760
        %v1919 = vsub.f32 %v489, %v1918
        %v1920 = vand.u32 %v1919, 4294901760
        %v1921 = vsub.f32 %v1919, %v1920
        %v1922 = vand.u32 %v1921, 4294901760
        %1923 = vmatmul.mubr.f32.gmra.mrb[0].mxu0 %v1922
        %v1924 = vpop.f32.mrb[0].mxu0
        %v1925 = vadd.f32 %v570, %v1924
        %v1926 = vpop.f32.mrb[0].mxu0
        %v1927 = vadd.f32 %v574, %v1926
        %1928 = vmatprep.mubr.f32.mxu0 0.0
        %v1929 = vand.u32 %v490, 4294901760
        %v1930 = vsub.f32 %v490, %v1929
        %v1931 = vand.u32 %v1930, 4294901760
        %v1932 = vsub.f32 %v1930, %v1931
        %v1933 = vand.u32 %v1932, 4294901760
        %1934 = vmatmul.mubr.f32.gmra.mrb[0].mxu0 %v1933
        %v1935 = vpop.f32.mrb[0].mxu0
        %v1936 = vadd.f32 %v570, %v1935
        %v1937 = vpop.f32.mrb[0].mxu0
        %v1938 = vadd.f32 %v574, %v1937
        %1939 = vmatprep.mubr.f32.mxu0 0.0
        %v1940 = vand.u32 %v491, 4294901760
        %v1941 = vsub.f32 %v491, %v1940
        %v1942 = vand.u32 %v1941, 4294901760
        %v1943 = vsub.f32 %v1941, %v1942
        %v1944 = vand.u32 %v1943, 4294901760
        %1945 = vmatmul.mubr.f32.gmra.mrb[0].mxu0 %v1944
        %v1946 = vpop.f32.mrb[0].mxu0
        %v1947 = vadd.f32 %v570, %v1946
        %v1948 = vpop.f32.mrb[0].mxu0
        %v1949 = vadd.f32 %v574, %v1948
        %1950 = vmatprep.mubr.f32.mxu0 0.0
        %v1951 = vand.u32 %v492, 4294901760
        %v1952 = vsub.f32 %v492, %v1951
        %v1953 = vand.u32 %v1952, 4294901760
        %v1954 = vsub.f32 %v1952, %v1953
        %v1955 = vand.u32 %v1954, 4294901760
        %1956 = vmatmul.mubr.f32.gmra.mrb[0].mxu0 %v1955
        %v1957 = vpop.f32.mrb[0].mxu0
        %v1958 = vadd.f32 %v570, %v1957
        %v1959 = vpop.f32.mrb[0].mxu0
        %v1960 = vadd.f32 %v574, %v1959
        %1961 = vdwg.mxu0
        %v1962 = vand.u32 %v496, 4294901760
        %v1963 = vsub.f32 %v496, %v1962
        %v1964 = vand.u32 %v1963, 4294901760
        %v1965 = vsub.f32 %v1963, %v1964
        %v1966 = vand.u32 %v1965, 4294901760
        %1967 = vmatprep.subr.mxu0 %v1966
        %v1968 = vand.u32 %v495, 4294901760
        %v1969 = vsub.f32 %v495, %v1968
        %v1970 = vand.u32 %v1969, 4294901760
        %v1971 = vsub.f32 %v1969, %v1970
        %v1972 = vand.u32 %v1971, 4294901760
        %1973 = vmatpush1.msra.mxu0 %v1972
        %v1974 = vand.u32 %v500, 4294901760
        %v1975 = vsub.f32 %v500, %v1974
        %v1976 = vand.u32 %v1975, 4294901760
        %v1977 = vsub.f32 %v1975, %v1976
        %v1978 = vand.u32 %v1977, 4294901760
        %1979 = vmatprep.subr.mxu0 %v1978
        %v1980 = vand.u32 %v499, 4294901760
        %v1981 = vsub.f32 %v499, %v1980
        %v1982 = vand.u32 %v1981, 4294901760
        %v1983 = vsub.f32 %v1981, %v1982
        %v1984 = vand.u32 %v1983, 4294901760
        %1985 = vmatpush1.msra.mxu0 %v1984
        %v1986 = vand.u32 %v504, 4294901760
        %v1987 = vsub.f32 %v504, %v1986
        %v1988 = vand.u32 %v1987, 4294901760
        %v1989 = vsub.f32 %v1987, %v1988
        %v1990 = vand.u32 %v1989, 4294901760
        %1991 = vmatprep.subr.mxu0 %v1990
        %v1992 = vand.u32 %v503, 4294901760
        %v1993 = vsub.f32 %v503, %v1992
        %v1994 = vand.u32 %v1993, 4294901760
        %v1995 = vsub.f32 %v1993, %v1994
        %v1996 = vand.u32 %v1995, 4294901760
        %1997 = vmatpush1.msra.mxu0 %v1996
        %v1998 = vand.u32 %v508, 4294901760
        %v1999 = vsub.f32 %v508, %v1998
        %v2000 = vand.u32 %v1999, 4294901760
        %v2001 = vsub.f32 %v1999, %v2000
        %v2002 = vand.u32 %v2001, 4294901760
        %2003 = vmatprep.subr.mxu0 %v2002
        %v2004 = vand.u32 %v507, 4294901760
        %v2005 = vsub.f32 %v507, %v2004
        %v2006 = vand.u32 %v2005, 4294901760
        %v2007 = vsub.f32 %v2005, %v2006
        %v2008 = vand.u32 %v2007, 4294901760
        %2009 = vmatpush1.msra.mxu0 %v2008
        %v2010 = vand.u32 %v512, 4294901760
        %v2011 = vsub.f32 %v512, %v2010
        %v2012 = vand.u32 %v2011, 4294901760
        %v2013 = vsub.f32 %v2011, %v2012
        %v2014 = vand.u32 %v2013, 4294901760
        %2015 = vmatprep.subr.mxu0 %v2014
        %v2016 = vand.u32 %v511, 4294901760
        %v2017 = vsub.f32 %v511, %v2016
        %v2018 = vand.u32 %v2017, 4294901760
        %v2019 = vsub.f32 %v2017, %v2018
        %v2020 = vand.u32 %v2019, 4294901760
        %2021 = vmatpush1.msra.mxu0 %v2020
        %v2022 = vand.u32 %v516, 4294901760
        %v2023 = vsub.f32 %v516, %v2022
        %v2024 = vand.u32 %v2023, 4294901760
        %v2025 = vsub.f32 %v2023, %v2024
        %v2026 = vand.u32 %v2025, 4294901760
        %2027 = vmatprep.subr.mxu0 %v2026
        %v2028 = vand.u32 %v515, 4294901760
        %v2029 = vsub.f32 %v515, %v2028
        %v2030 = vand.u32 %v2029, 4294901760
        %v2031 = vsub.f32 %v2029, %v2030
        %v2032 = vand.u32 %v2031, 4294901760
        %2033 = vmatpush1.msra.mxu0 %v2032
        %v2034 = vand.u32 %v520, 4294901760
        %v2035 = vsub.f32 %v520, %v2034
        %v2036 = vand.u32 %v2035, 4294901760
        %v2037 = vsub.f32 %v2035, %v2036
        %v2038 = vand.u32 %v2037, 4294901760
        %2039 = vmatprep.subr.mxu0 %v2038
        %v2040 = vand.u32 %v519, 4294901760
        %v2041 = vsub.f32 %v519, %v2040
        %v2042 = vand.u32 %v2041, 4294901760
        %v2043 = vsub.f32 %v2041, %v2042
        %v2044 = vand.u32 %v2043, 4294901760
        %2045 = vmatpush1.msra.mxu0 %v2044
        %v2046 = vand.u32 %v524, 4294901760
        %v2047 = vsub.f32 %v524, %v2046
        %v2048 = vand.u32 %v2047, 4294901760
        %v2049 = vsub.f32 %v2047, %v2048
        %v2050 = vand.u32 %v2049, 4294901760
        %2051 = vmatprep.subr.mxu0 %v2050
        %v2052 = vand.u32 %v523, 4294901760
        %v2053 = vsub.f32 %v523, %v2052
        %v2054 = vand.u32 %v2053, 4294901760
        %v2055 = vsub.f32 %v2053, %v2054
        %v2056 = vand.u32 %v2055, 4294901760
        %2057 = vmatpush1.msra.mxu0 %v2056
        %v2058 = vand.u32 %v528, 4294901760
        %v2059 = vsub.f32 %v528, %v2058
        %v2060 = vand.u32 %v2059, 4294901760
        %v2061 = vsub.f32 %v2059, %v2060
        %v2062 = vand.u32 %v2061, 4294901760
        %2063 = vmatprep.subr.mxu0 %v2062
        %v2064 = vand.u32 %v527, 4294901760
        %v2065 = vsub.f32 %v527, %v2064
        %v2066 = vand.u32 %v2065, 4294901760
        %v2067 = vsub.f32 %v2065, %v2066
        %v2068 = vand.u32 %v2067, 4294901760
        %2069 = vmatpush1.msra.mxu0 %v2068
        %v2070 = vand.u32 %v532, 4294901760
        %v2071 = vsub.f32 %v532, %v2070
        %v2072 = vand.u32 %v2071, 4294901760
        %v2073 = vsub.f32 %v2071, %v2072
        %v2074 = vand.u32 %v2073, 4294901760
        %2075 = vmatprep.subr.mxu0 %v2074
        %v2076 = vand.u32 %v531, 4294901760
        %v2077 = vsub.f32 %v531, %v2076
        %v2078 = vand.u32 %v2077, 4294901760
        %v2079 = vsub.f32 %v2077, %v2078
        %v2080 = vand.u32 %v2079, 4294901760
        %2081 = vmatpush1.msra.mxu0 %v2080
        %v2082 = vand.u32 %v536, 4294901760
        %v2083 = vsub.f32 %v536, %v2082
        %v2084 = vand.u32 %v2083, 4294901760
        %v2085 = vsub.f32 %v2083, %v2084
        %v2086 = vand.u32 %v2085, 4294901760
        %2087 = vmatprep.subr.mxu0 %v2086
        %v2088 = vand.u32 %v535, 4294901760
        %v2089 = vsub.f32 %v535, %v2088
        %v2090 = vand.u32 %v2089, 4294901760
        %v2091 = vsub.f32 %v2089, %v2090
        %v2092 = vand.u32 %v2091, 4294901760
        %2093 = vmatpush1.msra.mxu0 %v2092
        %v2094 = vand.u32 %v540, 4294901760
        %v2095 = vsub.f32 %v540, %v2094
        %v2096 = vand.u32 %v2095, 4294901760
        %v2097 = vsub.f32 %v2095, %v2096
        %v2098 = vand.u32 %v2097, 4294901760
        %2099 = vmatprep.subr.mxu0 %v2098
        %v2100 = vand.u32 %v539, 4294901760
        %v2101 = vsub.f32 %v539, %v2100
        %v2102 = vand.u32 %v2101, 4294901760
        %v2103 = vsub.f32 %v2101, %v2102
        %v2104 = vand.u32 %v2103, 4294901760
        %2105 = vmatpush1.msra.mxu0 %v2104
        %v2106 = vand.u32 %v544, 4294901760
        %v2107 = vsub.f32 %v544, %v2106
        %v2108 = vand.u32 %v2107, 4294901760
        %v2109 = vsub.f32 %v2107, %v2108
        %v2110 = vand.u32 %v2109, 4294901760
        %2111 = vmatprep.subr.mxu0 %v2110
        %v2112 = vand.u32 %v543, 4294901760
        %v2113 = vsub.f32 %v543, %v2112
        %v2114 = vand.u32 %v2113, 4294901760
        %v2115 = vsub.f32 %v2113, %v2114
        %v2116 = vand.u32 %v2115, 4294901760
        %2117 = vmatpush1.msra.mxu0 %v2116
        %v2118 = vand.u32 %v548, 4294901760
        %v2119 = vsub.f32 %v548, %v2118
        %v2120 = vand.u32 %v2119, 4294901760
        %v2121 = vsub.f32 %v2119, %v2120
        %v2122 = vand.u32 %v2121, 4294901760
        %2123 = vmatprep.subr.mxu0 %v2122
        %v2124 = vand.u32 %v547, 4294901760
        %v2125 = vsub.f32 %v547, %v2124
        %v2126 = vand.u32 %v2125, 4294901760
        %v2127 = vsub.f32 %v2125, %v2126
        %v2128 = vand.u32 %v2127, 4294901760
        %2129 = vmatpush1.msra.mxu0 %v2128
        %v2130 = vand.u32 %v552, 4294901760
        %v2131 = vsub.f32 %v552, %v2130
        %v2132 = vand.u32 %v2131, 4294901760
        %v2133 = vsub.f32 %v2131, %v2132
        %v2134 = vand.u32 %v2133, 4294901760
        %2135 = vmatprep.subr.mxu0 %v2134
        %v2136 = vand.u32 %v551, 4294901760
        %v2137 = vsub.f32 %v551, %v2136
        %v2138 = vand.u32 %v2137, 4294901760
        %v2139 = vsub.f32 %v2137, %v2138
        %v2140 = vand.u32 %v2139, 4294901760
        %2141 = vmatpush1.msra.mxu0 %v2140
        %v2142 = vand.u32 %v556, 4294901760
        %v2143 = vsub.f32 %v556, %v2142
        %v2144 = vand.u32 %v2143, 4294901760
        %v2145 = vsub.f32 %v2143, %v2144
        %v2146 = vand.u32 %v2145, 4294901760
        %2147 = vmatprep.subr.mxu0 %v2146
        %v2148 = vand.u32 %v555, 4294901760
        %v2149 = vsub.f32 %v555, %v2148
        %v2150 = vand.u32 %v2149, 4294901760
        %v2151 = vsub.f32 %v2149, %v2150
        %v2152 = vand.u32 %v2151, 4294901760
        %2153 = vmatpush1.msra.mxu0 %v2152
        %2154 = vmatprep.subr.mxu0 0.0
        %2155 = vmatpush1.msra.mxu0 0.0
        %2156 = vmatprep.subr.mxu0 0.0
        %2157 = vmatpush1.msra.mxu0 0.0
        %2158 = vmatprep.subr.mxu0 0.0
        %2159 = vmatpush1.msra.mxu0 0.0
        %2160 = vmatprep.subr.mxu0 0.0
        %2161 = vmatpush1.msra.mxu0 0.0
        %2162 = vmatprep.subr.mxu0 0.0
        %2163 = vmatpush1.msra.mxu0 0.0
        %2164 = vmatprep.subr.mxu0 0.0
        %2165 = vmatpush1.msra.mxu0 0.0
        %2166 = vmatprep.subr.mxu0 0.0
        %2167 = vmatpush1.msra.mxu0 0.0
        %2168 = vmatprep.subr.mxu0 0.0
        %2169 = vmatpush1.msra.mxu0 0.0
        %2170 = vmatprep.subr.mxu0 0.0
        %2171 = vmatpush1.msra.mxu0 0.0
        %2172 = vmatprep.subr.mxu0 0.0
        %2173 = vmatpush1.msra.mxu0 0.0
        %2174 = vmatprep.subr.mxu0 0.0
        %2175 = vmatpush1.msra.mxu0 0.0
        %2176 = vmatprep.subr.mxu0 0.0
        %2177 = vmatpush1.msra.mxu0 0.0
        %2178 = vmatprep.subr.mxu0 0.0
        %2179 = vmatpush1.msra.mxu0 0.0
        %2180 = vmatprep.subr.mxu0 0.0
        %2181 = vmatpush1.msra.mxu0 0.0
        %2182 = vmatprep.subr.mxu0 0.0
        %2183 = vmatpush1.msra.mxu0 0.0
        %2184 = vmatprep.subr.mxu0 0.0
        %2185 = vmatpush1.msra.mxu0 0.0
        %2186 = vmatprep.mubr.f32.mxu0 0.0
        %v2187 = vand.u32 %v485, 4294901760
        %2188 = vmatmul.mubr.f32.gmra.mrb[0].mxu0 %v2187
        %v2189 = vpop.f32.mrb[0].mxu0
        %v2190 = vadd.f32 %v1881, %v2189
        %v2191 = vpop.f32.mrb[0].mxu0
        %v2192 = vadd.f32 %v1883, %v2191
        %2193 = vmatprep.mubr.f32.mxu0 0.0
        %v2194 = vand.u32 %v486, 4294901760
        %2195 = vmatmul.mubr.f32.gmra.mrb[0].mxu0 %v2194
        %v2196 = vpop.f32.mrb[0].mxu0
        %v2197 = vadd.f32 %v1892, %v2196
        %v2198 = vpop.f32.mrb[0].mxu0
        %v2199 = vadd.f32 %v1894, %v2198
        %2200 = vmatprep.mubr.f32.mxu0 0.0
        %v2201 = vand.u32 %v487, 4294901760
        %2202 = vmatmul.mubr.f32.gmra.mrb[0].mxu0 %v2201
        %v2203 = vpop.f32.mrb[0].mxu0
        %v2204 = vadd.f32 %v1903, %v2203
        %v2205 = vpop.f32.mrb[0].mxu0
        %v2206 = vadd.f32 %v1905, %v2205
        %2207 = vmatprep.mubr.f32.mxu0 0.0
        %v2208 = vand.u32 %v488, 4294901760
        %2209 = vmatmul.mubr.f32.gmra.mrb[0].mxu0 %v2208
        %v2210 = vpop.f32.mrb[0].mxu0
        %v2211 = vadd.f32 %v1914, %v2210
        %v2212 = vpop.f32.mrb[0].mxu0
        %v2213 = vadd.f32 %v1916, %v2212
        %2214 = vmatprep.mubr.f32.mxu0 0.0
        %v2215 = vand.u32 %v489, 4294901760
        %2216 = vmatmul.mubr.f32.gmra.mrb[0].mxu0 %v2215
        %v2217 = vpop.f32.mrb[0].mxu0
        %v2218 = vadd.f32 %v1925, %v2217
        %v2219 = vpop.f32.mrb[0].mxu0
        %v2220 = vadd.f32 %v1927, %v2219
        %2221 = vmatprep.mubr.f32.mxu0 0.0
        %v2222 = vand.u32 %v490, 4294901760
        %2223 = vmatmul.mubr.f32.gmra.mrb[0].mxu0 %v2222
        %v2224 = vpop.f32.mrb[0].mxu0
        %v2225 = vadd.f32 %v1936, %v2224
        %v2226 = vpop.f32.mrb[0].mxu0
        %v2227 = vadd.f32 %v1938, %v2226
        %2228 = vmatprep.mubr.f32.mxu0 0.0
        %v2229 = vand.u32 %v491, 4294901760
        %2230 = vmatmul.mubr.f32.gmra.mrb[0].mxu0 %v2229
        %v2231 = vpop.f32.mrb[0].mxu0
        %v2232 = vadd.f32 %v1947, %v2231
        %v2233 = vpop.f32.mrb[0].mxu0
        %v2234 = vadd.f32 %v1949, %v2233
        %2235 = vmatprep.mubr.f32.mxu0 0.0
        %v2236 = vand.u32 %v492, 4294901760
        %2237 = vmatmul.mubr.f32.gmra.mrb[0].mxu0 %v2236
        %v2238 = vpop.f32.mrb[0].mxu0
        %v2239 = vadd.f32 %v1958, %v2238
        %v2240 = vpop.f32.mrb[0].mxu0
        %v2241 = vadd.f32 %v1960, %v2240
        %2242 = vdwg.mxu0
        %v2243 = vand.u32 %v496, 4294901760
        %v2244 = vsub.f32 %v496, %v2243
        %2245 = vmatprep.subr.mxu0 %v2244
        %v2246 = vand.u32 %v495, 4294901760
        %v2247 = vsub.f32 %v495, %v2246
        %2248 = vmatpush1.msra.mxu0 %v2247
        %v2249 = vand.u32 %v500, 4294901760
        %v2250 = vsub.f32 %v500, %v2249
        %2251 = vmatprep.subr.mxu0 %v2250
        %v2252 = vand.u32 %v499, 4294901760
        %v2253 = vsub.f32 %v499, %v2252
        %2254 = vmatpush1.msra.mxu0 %v2253
        %v2255 = vand.u32 %v504, 4294901760
        %v2256 = vsub.f32 %v504, %v2255
        %2257 = vmatprep.subr.mxu0 %v2256
        %v2258 = vand.u32 %v503, 4294901760
        %v2259 = vsub.f32 %v503, %v2258
        %2260 = vmatpush1.msra.mxu0 %v2259
        %v2261 = vand.u32 %v508, 4294901760
        %v2262 = vsub.f32 %v508, %v2261
        %2263 = vmatprep.subr.mxu0 %v2262
        %v2264 = vand.u32 %v507, 4294901760
        %v2265 = vsub.f32 %v507, %v2264
        %2266 = vmatpush1.msra.mxu0 %v2265
        %v2267 = vand.u32 %v512, 4294901760
        %v2268 = vsub.f32 %v512, %v2267
        %2269 = vmatprep.subr.mxu0 %v2268
        %v2270 = vand.u32 %v511, 4294901760
        %v2271 = vsub.f32 %v511, %v2270
        %2272 = vmatpush1.msra.mxu0 %v2271
        %v2273 = vand.u32 %v516, 4294901760
        %v2274 = vsub.f32 %v516, %v2273
        %2275 = vmatprep.subr.mxu0 %v2274
        %v2276 = vand.u32 %v515, 4294901760
        %v2277 = vsub.f32 %v515, %v2276
        %2278 = vmatpush1.msra.mxu0 %v2277
        %v2279 = vand.u32 %v520, 4294901760
        %v2280 = vsub.f32 %v520, %v2279
        %2281 = vmatprep.subr.mxu0 %v2280
        %v2282 = vand.u32 %v519, 4294901760
        %v2283 = vsub.f32 %v519, %v2282
        %2284 = vmatpush1.msra.mxu0 %v2283
        %v2285 = vand.u32 %v524, 4294901760
        %v2286 = vsub.f32 %v524, %v2285
        %2287 = vmatprep.subr.mxu0 %v2286
        %v2288 = vand.u32 %v523, 4294901760
        %v2289 = vsub.f32 %v523, %v2288
        %2290 = vmatpush1.msra.mxu0 %v2289
        %v2291 = vand.u32 %v528, 4294901760
        %v2292 = vsub.f32 %v528, %v2291
        %2293 = vmatprep.subr.mxu0 %v2292
        %v2294 = vand.u32 %v527, 4294901760
        %v2295 = vsub.f32 %v527, %v2294
        %2296 = vmatpush1.msra.mxu0 %v2295
        %v2297 = vand.u32 %v532, 4294901760
        %v2298 = vsub.f32 %v532, %v2297
        %2299 = vmatprep.subr.mxu0 %v2298
        %v2300 = vand.u32 %v531, 4294901760
        %v2301 = vsub.f32 %v531, %v2300
        %2302 = vmatpush1.msra.mxu0 %v2301
        %v2303 = vand.u32 %v536, 4294901760
        %v2304 = vsub.f32 %v536, %v2303
        %2305 = vmatprep.subr.mxu0 %v2304
        %v2306 = vand.u32 %v535, 4294901760
        %v2307 = vsub.f32 %v535, %v2306
        %2308 = vmatpush1.msra.mxu0 %v2307
        %v2309 = vand.u32 %v540, 4294901760
        %v2310 = vsub.f32 %v540, %v2309
        %2311 = vmatprep.subr.mxu0 %v2310
        %v2312 = vand.u32 %v539, 4294901760
        %v2313 = vsub.f32 %v539, %v2312
        %2314 = vmatpush1.msra.mxu0 %v2313
        %v2315 = vand.u32 %v544, 4294901760
        %v2316 = vsub.f32 %v544, %v2315
        %2317 = vmatprep.subr.mxu0 %v2316
        %v2318 = vand.u32 %v543, 4294901760
        %v2319 = vsub.f32 %v543, %v2318
        %2320 = vmatpush1.msra.mxu0 %v2319
        %v2321 = vand.u32 %v548, 4294901760
        %v2322 = vsub.f32 %v548, %v2321
        %2323 = vmatprep.subr.mxu0 %v2322
        %v2324 = vand.u32 %v547, 4294901760
        %v2325 = vsub.f32 %v547, %v2324
        %2326 = vmatpush1.msra.mxu0 %v2325
        %v2327 = vand.u32 %v552, 4294901760
        %v2328 = vsub.f32 %v552, %v2327
        %2329 = vmatprep.subr.mxu0 %v2328
        %v2330 = vand.u32 %v551, 4294901760
        %v2331 = vsub.f32 %v551, %v2330
        %2332 = vmatpush1.msra.mxu0 %v2331
        %v2333 = vand.u32 %v556, 4294901760
        %v2334 = vsub.f32 %v556, %v2333
        %2335 = vmatprep.subr.mxu0 %v2334
        %v2336 = vand.u32 %v555, 4294901760
        %v2337 = vsub.f32 %v555, %v2336
        %2338 = vmatpush1.msra.mxu0 %v2337
        %2339 = vmatprep.subr.mxu0 0.0
        %2340 = vmatpush1.msra.mxu0 0.0
        %2341 = vmatprep.subr.mxu0 0.0
        %2342 = vmatpush1.msra.mxu0 0.0
        %2343 = vmatprep.subr.mxu0 0.0
        %2344 = vmatpush1.msra.mxu0 0.0
        %2345 = vmatprep.subr.mxu0 0.0
        %2346 = vmatpush1.msra.mxu0 0.0
        %2347 = vmatprep.subr.mxu0 0.0
        %2348 = vmatpush1.msra.mxu0 0.0
        %2349 = vmatprep.subr.mxu0 0.0
        %2350 = vmatpush1.msra.mxu0 0.0
        %2351 = vmatprep.subr.mxu0 0.0
        %2352 = vmatpush1.msra.mxu0 0.0
        %2353 = vmatprep.subr.mxu0 0.0
        %2354 = vmatpush1.msra.mxu0 0.0
        %2355 = vmatprep.subr.mxu0 0.0
        %2356 = vmatpush1.msra.mxu0 0.0
        %2357 = vmatprep.subr.mxu0 0.0
        %2358 = vmatpush1.msra.mxu0 0.0
        %2359 = vmatprep.subr.mxu0 0.0
        %2360 = vmatpush1.msra.mxu0 0.0
        %2361 = vmatprep.subr.mxu0 0.0
        %2362 = vmatpush1.msra.mxu0 0.0
        %2363 = vmatprep.subr.mxu0 0.0
        %2364 = vmatpush1.msra.mxu0 0.0
        %2365 = vmatprep.subr.mxu0 0.0
        %2366 = vmatpush1.msra.mxu0 0.0
        %2367 = vmatprep.subr.mxu0 0.0
        %2368 = vmatpush1.msra.mxu0 0.0
        %2369 = vmatprep.subr.mxu0 0.0
        %2370 = vmatpush1.msra.mxu0 0.0
        %2371 = vmatprep.mubr.f32.mxu0 0.0
        %v2372 = vand.u32 %v485, 4294901760
        %v2373 = vsub.f32 %v485, %v2372
        %2374 = vmatmul.mubr.f32.gmra.mrb[0].mxu0 %v2373
        %v2375 = vpop.f32.mrb[0].mxu0
        %v2376 = vadd.f32 %v2190, %v2375
        %v2377 = vpop.f32.mrb[0].mxu0
        %v2378 = vadd.f32 %v2192, %v2377
        %2379 = vmatprep.mubr.f32.mxu0 0.0
        %v2380 = vand.u32 %v486, 4294901760
        %v2381 = vsub.f32 %v486, %v2380
        %2382 = vmatmul.mubr.f32.gmra.mrb[0].mxu0 %v2381
        %v2383 = vpop.f32.mrb[0].mxu0
        %v2384 = vadd.f32 %v2197, %v2383
        %v2385 = vpop.f32.mrb[0].mxu0
        %v2386 = vadd.f32 %v2199, %v2385
        %2387 = vmatprep.mubr.f32.mxu0 0.0
        %v2388 = vand.u32 %v487, 4294901760
        %v2389 = vsub.f32 %v487, %v2388
        %2390 = vmatmul.mubr.f32.gmra.mrb[0].mxu0 %v2389
        %v2391 = vpop.f32.mrb[0].mxu0
        %v2392 = vadd.f32 %v2204, %v2391
        %v2393 = vpop.f32.mrb[0].mxu0
        %v2394 = vadd.f32 %v2206, %v2393
        %2395 = vmatprep.mubr.f32.mxu0 0.0
        %v2396 = vand.u32 %v488, 4294901760
        %v2397 = vsub.f32 %v488, %v2396
        %2398 = vmatmul.mubr.f32.gmra.mrb[0].mxu0 %v2397
        %v2399 = vpop.f32.mrb[0].mxu0
        %v2400 = vadd.f32 %v2211, %v2399
        %v2401 = vpop.f32.mrb[0].mxu0
        %v2402 = vadd.f32 %v2213, %v2401
        %2403 = vmatprep.mubr.f32.mxu0 0.0
        %v2404 = vand.u32 %v489, 4294901760
        %v2405 = vsub.f32 %v489, %v2404
        %2406 = vmatmul.mubr.f32.gmra.mrb[0].mxu0 %v2405
        %v2407 = vpop.f32.mrb[0].mxu0
        %v2408 = vadd.f32 %v2218, %v2407
        %v2409 = vpop.f32.mrb[0].mxu0
        %v2410 = vadd.f32 %v2220, %v2409
        %2411 = vmatprep.mubr.f32.mxu0 0.0
        %v2412 = vand.u32 %v490, 4294901760
        %v2413 = vsub.f32 %v490, %v2412
        %2414 = vmatmul.mubr.f32.gmra.mrb[0].mxu0 %v2413
        %v2415 = vpop.f32.mrb[0].mxu0
        %v2416 = vadd.f32 %v2225, %v2415
        %v2417 = vpop.f32.mrb[0].mxu0
        %v2418 = vadd.f32 %v2227, %v2417
        %2419 = vmatprep.mubr.f32.mxu0 0.0
        %v2420 = vand.u32 %v491, 4294901760
        %v2421 = vsub.f32 %v491, %v2420
        %2422 = vmatmul.mubr.f32.gmra.mrb[0].mxu0 %v2421
        %v2423 = vpop.f32.mrb[0].mxu0
        %v2424 = vadd.f32 %v2232, %v2423
        %v2425 = vpop.f32.mrb[0].mxu0
        %v2426 = vadd.f32 %v2234, %v2425
        %2427 = vmatprep.mubr.f32.mxu0 0.0
        %v2428 = vand.u32 %v492, 4294901760
        %v2429 = vsub.f32 %v492, %v2428
        %2430 = vmatmul.mubr.f32.gmra.mrb[0].mxu0 %v2429
        %v2431 = vpop.f32.mrb[0].mxu0
        %v2432 = vadd.f32 %v2239, %v2431
        %v2433 = vpop.f32.mrb[0].mxu0
        %v2434 = vadd.f32 %v2241, %v2433
        %2435 = vdwg.mxu0
        %v2436 = vand.u32 %v496, 4294901760
        %2437 = vmatprep.subr.mxu0 %v2436
        %v2438 = vand.u32 %v495, 4294901760
        %2439 = vmatpush1.msra.mxu0 %v2438
        %v2440 = vand.u32 %v500, 4294901760
        %2441 = vmatprep.subr.mxu0 %v2440
        %v2442 = vand.u32 %v499, 4294901760
        %2443 = vmatpush1.msra.mxu0 %v2442
        %v2444 = vand.u32 %v504, 4294901760
        %2445 = vmatprep.subr.mxu0 %v2444
        %v2446 = vand.u32 %v503, 4294901760
        %2447 = vmatpush1.msra.mxu0 %v2446
        %v2448 = vand.u32 %v508, 4294901760
        %2449 = vmatprep.subr.mxu0 %v2448
        %v2450 = vand.u32 %v507, 4294901760
        %2451 = vmatpush1.msra.mxu0 %v2450
        %v2452 = vand.u32 %v512, 4294901760
        %2453 = vmatprep.subr.mxu0 %v2452
        %v2454 = vand.u32 %v511, 4294901760
        %2455 = vmatpush1.msra.mxu0 %v2454
        %v2456 = vand.u32 %v516, 4294901760
        %2457 = vmatprep.subr.mxu0 %v2456
        %v2458 = vand.u32 %v515, 4294901760
        %2459 = vmatpush1.msra.mxu0 %v2458
        %v2460 = vand.u32 %v520, 4294901760
        %2461 = vmatprep.subr.mxu0 %v2460
        %v2462 = vand.u32 %v519, 4294901760
        %2463 = vmatpush1.msra.mxu0 %v2462
        %v2464 = vand.u32 %v524, 4294901760
        %2465 = vmatprep.subr.mxu0 %v2464
        %v2466 = vand.u32 %v523, 4294901760
        %2467 = vmatpush1.msra.mxu0 %v2466
        %v2468 = vand.u32 %v528, 4294901760
        %2469 = vmatprep.subr.mxu0 %v2468
        %v2470 = vand.u32 %v527, 4294901760
        %2471 = vmatpush1.msra.mxu0 %v2470
        %v2472 = vand.u32 %v532, 4294901760
        %2473 = vmatprep.subr.mxu0 %v2472
        %v2474 = vand.u32 %v531, 4294901760
        %2475 = vmatpush1.msra.mxu0 %v2474
        %v2476 = vand.u32 %v536, 4294901760
        %2477 = vmatprep.subr.mxu0 %v2476
        %v2478 = vand.u32 %v535, 4294901760
        %2479 = vmatpush1.msra.mxu0 %v2478
        %v2480 = vand.u32 %v540, 4294901760
        %2481 = vmatprep.subr.mxu0 %v2480
        %v2482 = vand.u32 %v539, 4294901760
        %2483 = vmatpush1.msra.mxu0 %v2482
        %v2484 = vand.u32 %v544, 4294901760
        %2485 = vmatprep.subr.mxu0 %v2484
        %v2486 = vand.u32 %v543, 4294901760
        %2487 = vmatpush1.msra.mxu0 %v2486
        %v2488 = vand.u32 %v548, 4294901760
        %2489 = vmatprep.subr.mxu0 %v2488
        %v2490 = vand.u32 %v547, 4294901760
        %2491 = vmatpush1.msra.mxu0 %v2490
        %v2492 = vand.u32 %v552, 4294901760
        %2493 = vmatprep.subr.mxu0 %v2492
        %v2494 = vand.u32 %v551, 4294901760
        %2495 = vmatpush1.msra.mxu0 %v2494
        %v2496 = vand.u32 %v556, 4294901760
        %2497 = vmatprep.subr.mxu0 %v2496
        %v2498 = vand.u32 %v555, 4294901760
        %2499 = vmatpush1.msra.mxu0 %v2498
        %2500 = vmatprep.subr.mxu0 0.0
        %2501 = vmatpush1.msra.mxu0 0.0
        %2502 = vmatprep.subr.mxu0 0.0
        %2503 = vmatpush1.msra.mxu0 0.0
        %2504 = vmatprep.subr.mxu0 0.0
        %2505 = vmatpush1.msra.mxu0 0.0
        %2506 = vmatprep.subr.mxu0 0.0
        %2507 = vmatpush1.msra.mxu0 0.0
        %2508 = vmatprep.subr.mxu0 0.0
        %2509 = vmatpush1.msra.mxu0 0.0
        %2510 = vmatprep.subr.mxu0 0.0
        %2511 = vmatpush1.msra.mxu0 0.0
        %2512 = vmatprep.subr.mxu0 0.0
        %2513 = vmatpush1.msra.mxu0 0.0
        %2514 = vmatprep.subr.mxu0 0.0
        %2515 = vmatpush1.msra.mxu0 0.0
        %2516 = vmatprep.subr.mxu0 0.0
        %2517 = vmatpush1.msra.mxu0 0.0
        %2518 = vmatprep.subr.mxu0 0.0
        %2519 = vmatpush1.msra.mxu0 0.0
        %2520 = vmatprep.subr.mxu0 0.0
        %2521 = vmatpush1.msra.mxu0 0.0
        %2522 = vmatprep.subr.mxu0 0.0
        %2523 = vmatpush1.msra.mxu0 0.0
        %2524 = vmatprep.subr.mxu0 0.0
        %2525 = vmatpush1.msra.mxu0 0.0
        %2526 = vmatprep.subr.mxu0 0.0
        %2527 = vmatpush1.msra.mxu0 0.0
        %2528 = vmatprep.subr.mxu0 0.0
        %2529 = vmatpush1.msra.mxu0 0.0
        %2530 = vmatprep.subr.mxu0 0.0
        %2531 = vmatpush1.msra.mxu0 0.0
        %2532 = vmatprep.mubr.f32.mxu0 0.0
        %v2533 = vand.u32 %v485, 4294901760
        %v2534 = vsub.f32 %v485, %v2533
        %v2535 = vand.u32 %v2534, 4294901760
        %2536 = vmatmul.mubr.f32.gmra.mrb[0].mxu0 %v2535
        %v2537 = vpop.f32.mrb[0].mxu0
        %v2538 = vadd.f32 %v2376, %v2537
        %v2539 = vpop.f32.mrb[0].mxu0
        %v2540 = vadd.f32 %v2378, %v2539
        %2541 = vmatprep.mubr.f32.mxu0 0.0
        %v2542 = vand.u32 %v486, 4294901760
        %v2543 = vsub.f32 %v486, %v2542
        %v2544 = vand.u32 %v2543, 4294901760
        %2545 = vmatmul.mubr.f32.gmra.mrb[0].mxu0 %v2544
        %v2546 = vpop.f32.mrb[0].mxu0
        %v2547 = vadd.f32 %v2384, %v2546
        %v2548 = vpop.f32.mrb[0].mxu0
        %v2549 = vadd.f32 %v2386, %v2548
        %2550 = vmatprep.mubr.f32.mxu0 0.0
        %v2551 = vand.u32 %v487, 4294901760
        %v2552 = vsub.f32 %v487, %v2551
        %v2553 = vand.u32 %v2552, 4294901760
        %2554 = vmatmul.mubr.f32.gmra.mrb[0].mxu0 %v2553
        %v2555 = vpop.f32.mrb[0].mxu0
        %v2556 = vadd.f32 %v2392, %v2555
        %v2557 = vpop.f32.mrb[0].mxu0
        %v2558 = vadd.f32 %v2394, %v2557
        %2559 = vmatprep.mubr.f32.mxu0 0.0
        %v2560 = vand.u32 %v488, 4294901760
        %v2561 = vsub.f32 %v488, %v2560
        %v2562 = vand.u32 %v2561, 4294901760
        %2563 = vmatmul.mubr.f32.gmra.mrb[0].mxu0 %v2562
        %v2564 = vpop.f32.mrb[0].mxu0
        %v2565 = vadd.f32 %v2400, %v2564
        %v2566 = vpop.f32.mrb[0].mxu0
        %v2567 = vadd.f32 %v2402, %v2566
        %2568 = vmatprep.mubr.f32.mxu0 0.0
        %v2569 = vand.u32 %v489, 4294901760
        %v2570 = vsub.f32 %v489, %v2569
        %v2571 = vand.u32 %v2570, 4294901760
        %2572 = vmatmul.mubr.f32.gmra.mrb[0].mxu0 %v2571
        %v2573 = vpop.f32.mrb[0].mxu0
        %v2574 = vadd.f32 %v2408, %v2573
        %v2575 = vpop.f32.mrb[0].mxu0
        %v2576 = vadd.f32 %v2410, %v2575
        %2577 = vmatprep.mubr.f32.mxu0 0.0
        %v2578 = vand.u32 %v490, 4294901760
        %v2579 = vsub.f32 %v490, %v2578
        %v2580 = vand.u32 %v2579, 4294901760
        %2581 = vmatmul.mubr.f32.gmra.mrb[0].mxu0 %v2580
        %v2582 = vpop.f32.mrb[0].mxu0
        %v2583 = vadd.f32 %v2416, %v2582
        %v2584 = vpop.f32.mrb[0].mxu0
        %v2585 = vadd.f32 %v2418, %v2584
        %2586 = vmatprep.mubr.f32.mxu0 0.0
        %v2587 = vand.u32 %v491, 4294901760
        %v2588 = vsub.f32 %v491, %v2587
        %v2589 = vand.u32 %v2588, 4294901760
        %2590 = vmatmul.mubr.f32.gmra.mrb[0].mxu0 %v2589
        %v2591 = vpop.f32.mrb[0].mxu0
        %v2592 = vadd.f32 %v2424, %v2591
        %v2593 = vpop.f32.mrb[0].mxu0
        %v2594 = vadd.f32 %v2426, %v2593
        %2595 = vmatprep.mubr.f32.mxu0 0.0
        %v2596 = vand.u32 %v492, 4294901760
        %v2597 = vsub.f32 %v492, %v2596
        %v2598 = vand.u32 %v2597, 4294901760
        %2599 = vmatmul.mubr.f32.gmra.mrb[0].mxu0 %v2598
        %v2600 = vpop.f32.mrb[0].mxu0
        %v2601 = vadd.f32 %v2432, %v2600
        %v2602 = vpop.f32.mrb[0].mxu0
        %v2603 = vadd.f32 %v2434, %v2602
        %2604 = vdwg.mxu0
        %v2605 = vand.u32 %v496, 4294901760
        %v2606 = vsub.f32 %v496, %v2605
        %v2607 = vand.u32 %v2606, 4294901760
        %2608 = vmatprep.subr.mxu0 %v2607
        %v2609 = vand.u32 %v495, 4294901760
        %v2610 = vsub.f32 %v495, %v2609
        %v2611 = vand.u32 %v2610, 4294901760
        %2612 = vmatpush1.msra.mxu0 %v2611
        %v2613 = vand.u32 %v500, 4294901760
        %v2614 = vsub.f32 %v500, %v2613
        %v2615 = vand.u32 %v2614, 4294901760
        %2616 = vmatprep.subr.mxu0 %v2615
        %v2617 = vand.u32 %v499, 4294901760
        %v2618 = vsub.f32 %v499, %v2617
        %v2619 = vand.u32 %v2618, 4294901760
        %2620 = vmatpush1.msra.mxu0 %v2619
        %v2621 = vand.u32 %v504, 4294901760
        %v2622 = vsub.f32 %v504, %v2621
        %v2623 = vand.u32 %v2622, 4294901760
        %2624 = vmatprep.subr.mxu0 %v2623
        %v2625 = vand.u32 %v503, 4294901760
        %v2626 = vsub.f32 %v503, %v2625
        %v2627 = vand.u32 %v2626, 4294901760
        %2628 = vmatpush1.msra.mxu0 %v2627
        %v2629 = vand.u32 %v508, 4294901760
        %v2630 = vsub.f32 %v508, %v2629
        %v2631 = vand.u32 %v2630, 4294901760
        %2632 = vmatprep.subr.mxu0 %v2631
        %v2633 = vand.u32 %v507, 4294901760
        %v2634 = vsub.f32 %v507, %v2633
        %v2635 = vand.u32 %v2634, 4294901760
        %2636 = vmatpush1.msra.mxu0 %v2635
        %v2637 = vand.u32 %v512, 4294901760
        %v2638 = vsub.f32 %v512, %v2637
        %v2639 = vand.u32 %v2638, 4294901760
        %2640 = vmatprep.subr.mxu0 %v2639
        %v2641 = vand.u32 %v511, 4294901760
        %v2642 = vsub.f32 %v511, %v2641
        %v2643 = vand.u32 %v2642, 4294901760
        %2644 = vmatpush1.msra.mxu0 %v2643
        %v2645 = vand.u32 %v516, 4294901760
        %v2646 = vsub.f32 %v516, %v2645
        %v2647 = vand.u32 %v2646, 4294901760
        %2648 = vmatprep.subr.mxu0 %v2647
        %v2649 = vand.u32 %v515, 4294901760
        %v2650 = vsub.f32 %v515, %v2649
        %v2651 = vand.u32 %v2650, 4294901760
        %2652 = vmatpush1.msra.mxu0 %v2651
        %v2653 = vand.u32 %v520, 4294901760
        %v2654 = vsub.f32 %v520, %v2653
        %v2655 = vand.u32 %v2654, 4294901760
        %2656 = vmatprep.subr.mxu0 %v2655
        %v2657 = vand.u32 %v519, 4294901760
        %v2658 = vsub.f32 %v519, %v2657
        %v2659 = vand.u32 %v2658, 4294901760
        %2660 = vmatpush1.msra.mxu0 %v2659
        %v2661 = vand.u32 %v524, 4294901760
        %v2662 = vsub.f32 %v524, %v2661
        %v2663 = vand.u32 %v2662, 4294901760
        %2664 = vmatprep.subr.mxu0 %v2663
        %v2665 = vand.u32 %v523, 4294901760
        %v2666 = vsub.f32 %v523, %v2665
        %v2667 = vand.u32 %v2666, 4294901760
        %2668 = vmatpush1.msra.mxu0 %v2667
        %v2669 = vand.u32 %v528, 4294901760
        %v2670 = vsub.f32 %v528, %v2669
        %v2671 = vand.u32 %v2670, 4294901760
        %2672 = vmatprep.subr.mxu0 %v2671
        %v2673 = vand.u32 %v527, 4294901760
        %v2674 = vsub.f32 %v527, %v2673
        %v2675 = vand.u32 %v2674, 4294901760
        %2676 = vmatpush1.msra.mxu0 %v2675
        %v2677 = vand.u32 %v532, 4294901760
        %v2678 = vsub.f32 %v532, %v2677
        %v2679 = vand.u32 %v2678, 4294901760
        %2680 = vmatprep.subr.mxu0 %v2679
        %v2681 = vand.u32 %v531, 4294901760
        %v2682 = vsub.f32 %v531, %v2681
        %v2683 = vand.u32 %v2682, 4294901760
        %2684 = vmatpush1.msra.mxu0 %v2683
        %v2685 = vand.u32 %v536, 4294901760
        %v2686 = vsub.f32 %v536, %v2685
        %v2687 = vand.u32 %v2686, 4294901760
        %2688 = vmatprep.subr.mxu0 %v2687
        %v2689 = vand.u32 %v535, 4294901760
        %v2690 = vsub.f32 %v535, %v2689
        %v2691 = vand.u32 %v2690, 4294901760
        %2692 = vmatpush1.msra.mxu0 %v2691
        %v2693 = vand.u32 %v540, 4294901760
        %v2694 = vsub.f32 %v540, %v2693
        %v2695 = vand.u32 %v2694, 4294901760
        %2696 = vmatprep.subr.mxu0 %v2695
        %v2697 = vand.u32 %v539, 4294901760
        %v2698 = vsub.f32 %v539, %v2697
        %v2699 = vand.u32 %v2698, 4294901760
        %2700 = vmatpush1.msra.mxu0 %v2699
        %v2701 = vand.u32 %v544, 4294901760
        %v2702 = vsub.f32 %v544, %v2701
        %v2703 = vand.u32 %v2702, 4294901760
        %2704 = vmatprep.subr.mxu0 %v2703
        %v2705 = vand.u32 %v543, 4294901760
        %v2706 = vsub.f32 %v543, %v2705
        %v2707 = vand.u32 %v2706, 4294901760
        %2708 = vmatpush1.msra.mxu0 %v2707
        %v2709 = vand.u32 %v548, 4294901760
        %v2710 = vsub.f32 %v548, %v2709
        %v2711 = vand.u32 %v2710, 4294901760
        %2712 = vmatprep.subr.mxu0 %v2711
        %v2713 = vand.u32 %v547, 4294901760
        %v2714 = vsub.f32 %v547, %v2713
        %v2715 = vand.u32 %v2714, 4294901760
        %2716 = vmatpush1.msra.mxu0 %v2715
        %v2717 = vand.u32 %v552, 4294901760
        %v2718 = vsub.f32 %v552, %v2717
        %v2719 = vand.u32 %v2718, 4294901760
        %2720 = vmatprep.subr.mxu0 %v2719
        %v2721 = vand.u32 %v551, 4294901760
        %v2722 = vsub.f32 %v551, %v2721
        %v2723 = vand.u32 %v2722, 4294901760
        %2724 = vmatpush1.msra.mxu0 %v2723
        %v2725 = vand.u32 %v556, 4294901760
        %v2726 = vsub.f32 %v556, %v2725
        %v2727 = vand.u32 %v2726, 4294901760
        %2728 = vmatprep.subr.mxu0 %v2727
        %v2729 = vand.u32 %v555, 4294901760
        %v2730 = vsub.f32 %v555, %v2729
        %v2731 = vand.u32 %v2730, 4294901760
        %2732 = vmatpush1.msra.mxu0 %v2731
        %2733 = vmatprep.subr.mxu0 0.0
        %2734 = vmatpush1.msra.mxu0 0.0
        %2735 = vmatprep.subr.mxu0 0.0
        %2736 = vmatpush1.msra.mxu0 0.0
        %2737 = vmatprep.subr.mxu0 0.0
        %2738 = vmatpush1.msra.mxu0 0.0
        %2739 = vmatprep.subr.mxu0 0.0
        %2740 = vmatpush1.msra.mxu0 0.0
        %2741 = vmatprep.subr.mxu0 0.0
        %2742 = vmatpush1.msra.mxu0 0.0
        %2743 = vmatprep.subr.mxu0 0.0
        %2744 = vmatpush1.msra.mxu0 0.0
        %2745 = vmatprep.subr.mxu0 0.0
        %2746 = vmatpush1.msra.mxu0 0.0
        %2747 = vmatprep.subr.mxu0 0.0
        %2748 = vmatpush1.msra.mxu0 0.0
        %2749 = vmatprep.subr.mxu0 0.0
        %2750 = vmatpush1.msra.mxu0 0.0
        %2751 = vmatprep.subr.mxu0 0.0
        %2752 = vmatpush1.msra.mxu0 0.0
        %2753 = vmatprep.subr.mxu0 0.0
        %2754 = vmatpush1.msra.mxu0 0.0
        %2755 = vmatprep.subr.mxu0 0.0
        %2756 = vmatpush1.msra.mxu0 0.0
        %2757 = vmatprep.subr.mxu0 0.0
        %2758 = vmatpush1.msra.mxu0 0.0
        %2759 = vmatprep.subr.mxu0 0.0
        %2760 = vmatpush1.msra.mxu0 0.0
        %2761 = vmatprep.subr.mxu0 0.0
        %2762 = vmatpush1.msra.mxu0 0.0
        %2763 = vmatprep.subr.mxu0 0.0
        %2764 = vmatpush1.msra.mxu0 0.0
        %2765 = vmatprep.mubr.f32.mxu0 0.0
        %v2766 = vand.u32 %v485, 4294901760
        %2767 = vmatmul.mubr.f32.gmra.mrb[0].mxu0 %v2766
        %v2768 = vpop.f32.mrb[0].mxu0
        %v2769 = vadd.f32 %v2538, %v2768
        %v2770 = vpop.f32.mrb[0].mxu0
        %v2771 = vadd.f32 %v2540, %v2770
        %2772 = vmatprep.mubr.f32.mxu0 0.0
        %v2773 = vand.u32 %v486, 4294901760
        %2774 = vmatmul.mubr.f32.gmra.mrb[0].mxu0 %v2773
        %v2775 = vpop.f32.mrb[0].mxu0
        %v2776 = vadd.f32 %v2547, %v2775
        %v2777 = vpop.f32.mrb[0].mxu0
        %v2778 = vadd.f32 %v2549, %v2777
        %2779 = vmatprep.mubr.f32.mxu0 0.0
        %v2780 = vand.u32 %v487, 4294901760
        %2781 = vmatmul.mubr.f32.gmra.mrb[0].mxu0 %v2780
        %v2782 = vpop.f32.mrb[0].mxu0
        %v2783 = vadd.f32 %v2556, %v2782
        %v2784 = vpop.f32.mrb[0].mxu0
        %v2785 = vadd.f32 %v2558, %v2784
        %2786 = vmatprep.mubr.f32.mxu0 0.0
        %v2787 = vand.u32 %v488, 4294901760
        %2788 = vmatmul.mubr.f32.gmra.mrb[0].mxu0 %v2787
        %v2789 = vpop.f32.mrb[0].mxu0
        %v2790 = vadd.f32 %v2565, %v2789
        %v2791 = vpop.f32.mrb[0].mxu0
        %v2792 = vadd.f32 %v2567, %v2791
        %2793 = vmatprep.mubr.f32.mxu0 0.0
        %v2794 = vand.u32 %v489, 4294901760
        %2795 = vmatmul.mubr.f32.gmra.mrb[0].mxu0 %v2794
        %v2796 = vpop.f32.mrb[0].mxu0
        %v2797 = vadd.f32 %v2574, %v2796
        %v2798 = vpop.f32.mrb[0].mxu0
        %v2799 = vadd.f32 %v2576, %v2798
        %2800 = vmatprep.mubr.f32.mxu0 0.0
        %v2801 = vand.u32 %v490, 4294901760
        %2802 = vmatmul.mubr.f32.gmra.mrb[0].mxu0 %v2801
        %v2803 = vpop.f32.mrb[0].mxu0
        %v2804 = vadd.f32 %v2583, %v2803
        %v2805 = vpop.f32.mrb[0].mxu0
        %v2806 = vadd.f32 %v2585, %v2805
        %2807 = vmatprep.mubr.f32.mxu0 0.0
        %v2808 = vand.u32 %v491, 4294901760
        %2809 = vmatmul.mubr.f32.gmra.mrb[0].mxu0 %v2808
        %v2810 = vpop.f32.mrb[0].mxu0
        %v2811 = vadd.f32 %v2592, %v2810
        %v2812 = vpop.f32.mrb[0].mxu0
        %v2813 = vadd.f32 %v2594, %v2812
        %2814 = vmatprep.mubr.f32.mxu0 0.0
        %v2815 = vand.u32 %v492, 4294901760
        %2816 = vmatmul.mubr.f32.gmra.mrb[0].mxu0 %v2815
        %v2817 = vpop.f32.mrb[0].mxu0
        %v2818 = vadd.f32 %v2601, %v2817
        %v2819 = vpop.f32.mrb[0].mxu0
        %v2820 = vadd.f32 %v2603, %v2819
        %2821 = vdwg.mxu0
        %v2822 = vand.u32 %v496, 4294901760
        %2823 = vmatprep.subr.mxu0 %v2822
        %v2824 = vand.u32 %v495, 4294901760
        %2825 = vmatpush1.msra.mxu0 %v2824
        %v2826 = vand.u32 %v500, 4294901760
        %2827 = vmatprep.subr.mxu0 %v2826
        %v2828 = vand.u32 %v499, 4294901760
        %2829 = vmatpush1.msra.mxu0 %v2828
        %v2830 = vand.u32 %v504, 4294901760
        %2831 = vmatprep.subr.mxu0 %v2830
        %v2832 = vand.u32 %v503, 4294901760
        %2833 = vmatpush1.msra.mxu0 %v2832
        %v2834 = vand.u32 %v508, 4294901760
        %2835 = vmatprep.subr.mxu0 %v2834
        %v2836 = vand.u32 %v507, 4294901760
        %2837 = vmatpush1.msra.mxu0 %v2836
        %v2838 = vand.u32 %v512, 4294901760
        %2839 = vmatprep.subr.mxu0 %v2838
        %v2840 = vand.u32 %v511, 4294901760
        %2841 = vmatpush1.msra.mxu0 %v2840
        %v2842 = vand.u32 %v516, 4294901760
        %2843 = vmatprep.subr.mxu0 %v2842
        %v2844 = vand.u32 %v515, 4294901760
        %2845 = vmatpush1.msra.mxu0 %v2844
        %v2846 = vand.u32 %v520, 4294901760
        %2847 = vmatprep.subr.mxu0 %v2846
        %v2848 = vand.u32 %v519, 4294901760
        %2849 = vmatpush1.msra.mxu0 %v2848
        %v2850 = vand.u32 %v524, 4294901760
        %2851 = vmatprep.subr.mxu0 %v2850
        %v2852 = vand.u32 %v523, 4294901760
        %2853 = vmatpush1.msra.mxu0 %v2852
        %v2854 = vand.u32 %v528, 4294901760
        %2855 = vmatprep.subr.mxu0 %v2854
        %v2856 = vand.u32 %v527, 4294901760
        %2857 = vmatpush1.msra.mxu0 %v2856
        %v2858 = vand.u32 %v532, 4294901760
        %2859 = vmatprep.subr.mxu0 %v2858
        %v2860 = vand.u32 %v531, 4294901760
        %2861 = vmatpush1.msra.mxu0 %v2860
        %v2862 = vand.u32 %v536, 4294901760
        %2863 = vmatprep.subr.mxu0 %v2862
        %v2864 = vand.u32 %v535, 4294901760
        %2865 = vmatpush1.msra.mxu0 %v2864
        %v2866 = vand.u32 %v540, 4294901760
        %2867 = vmatprep.subr.mxu0 %v2866
        %v2868 = vand.u32 %v539, 4294901760
        %2869 = vmatpush1.msra.mxu0 %v2868
        %v2870 = vand.u32 %v544, 4294901760
        %2871 = vmatprep.subr.mxu0 %v2870
        %v2872 = vand.u32 %v543, 4294901760
        %2873 = vmatpush1.msra.mxu0 %v2872
        %v2874 = vand.u32 %v548, 4294901760
        %2875 = vmatprep.subr.mxu0 %v2874
        %v2876 = vand.u32 %v547, 4294901760
        %2877 = vmatpush1.msra.mxu0 %v2876
        %v2878 = vand.u32 %v552, 4294901760
        %2879 = vmatprep.subr.mxu0 %v2878
        %v2880 = vand.u32 %v551, 4294901760
        %2881 = vmatpush1.msra.mxu0 %v2880
        %v2882 = vand.u32 %v556, 4294901760
        %2883 = vmatprep.subr.mxu0 %v2882
        %v2884 = vand.u32 %v555, 4294901760
        %2885 = vmatpush1.msra.mxu0 %v2884
        %2886 = vmatprep.subr.mxu0 0.0
        %2887 = vmatpush1.msra.mxu0 0.0
        %2888 = vmatprep.subr.mxu0 0.0
        %2889 = vmatpush1.msra.mxu0 0.0
        %2890 = vmatprep.subr.mxu0 0.0
        %2891 = vmatpush1.msra.mxu0 0.0
        %2892 = vmatprep.subr.mxu0 0.0
        %2893 = vmatpush1.msra.mxu0 0.0
        %2894 = vmatprep.subr.mxu0 0.0
        %2895 = vmatpush1.msra.mxu0 0.0
        %2896 = vmatprep.subr.mxu0 0.0
        %2897 = vmatpush1.msra.mxu0 0.0
        %2898 = vmatprep.subr.mxu0 0.0
        %2899 = vmatpush1.msra.mxu0 0.0
        %2900 = vmatprep.subr.mxu0 0.0
        %2901 = vmatpush1.msra.mxu0 0.0
        %2902 = vmatprep.subr.mxu0 0.0
        %2903 = vmatpush1.msra.mxu0 0.0
        %2904 = vmatprep.subr.mxu0 0.0
        %2905 = vmatpush1.msra.mxu0 0.0
        %2906 = vmatprep.subr.mxu0 0.0
        %2907 = vmatpush1.msra.mxu0 0.0
        %2908 = vmatprep.subr.mxu0 0.0
        %2909 = vmatpush1.msra.mxu0 0.0
        %2910 = vmatprep.subr.mxu0 0.0
        %2911 = vmatpush1.msra.mxu0 0.0
        %2912 = vmatprep.subr.mxu0 0.0
        %2913 = vmatpush1.msra.mxu0 0.0
        %2914 = vmatprep.subr.mxu0 0.0
        %2915 = vmatpush1.msra.mxu0 0.0
        %2916 = vmatprep.subr.mxu0 0.0
        %2917 = vmatpush1.msra.mxu0 0.0
        %2918 = vmatprep.mubr.f32.mxu0 0.0
        %v2919 = vand.u32 %v485, 4294901760
        %2920 = vmatmul.mubr.f32.gmra.mrb[0].mxu0 %v2919
        %v2921 = vpop.f32.mrb[0].mxu0
        %v2922 = vadd.f32 %v2769, %v2921
        %v2923 = vpop.f32.mrb[0].mxu0
        %v2924 = vadd.f32 %v2771, %v2923
        %2925 = vmatprep.mubr.f32.mxu0 0.0
        %v2926 = vand.u32 %v486, 4294901760
        %2927 = vmatmul.mubr.f32.gmra.mrb[0].mxu0 %v2926
        %v2928 = vpop.f32.mrb[0].mxu0
        %v2929 = vadd.f32 %v2776, %v2928
        %v2930 = vpop.f32.mrb[0].mxu0
        %v2931 = vadd.f32 %v2778, %v2930
        %2932 = vmatprep.mubr.f32.mxu0 0.0
        %v2933 = vand.u32 %v487, 4294901760
        %2934 = vmatmul.mubr.f32.gmra.mrb[0].mxu0 %v2933
        %v2935 = vpop.f32.mrb[0].mxu0
        %v2936 = vadd.f32 %v2783, %v2935
        %v2937 = vpop.f32.mrb[0].mxu0
        %v2938 = vadd.f32 %v2785, %v2937
        %2939 = vmatprep.mubr.f32.mxu0 0.0
        %v2940 = vand.u32 %v488, 4294901760
        %2941 = vmatmul.mubr.f32.gmra.mrb[0].mxu0 %v2940
        %v2942 = vpop.f32.mrb[0].mxu0
        %v2943 = vadd.f32 %v2790, %v2942
        %v2944 = vpop.f32.mrb[0].mxu0
        %v2945 = vadd.f32 %v2792, %v2944
        %2946 = vmatprep.mubr.f32.mxu0 0.0
        %v2947 = vand.u32 %v489, 4294901760
        %2948 = vmatmul.mubr.f32.gmra.mrb[0].mxu0 %v2947
        %v2949 = vpop.f32.mrb[0].mxu0
        %v2950 = vadd.f32 %v2797, %v2949
        %v2951 = vpop.f32.mrb[0].mxu0
        %v2952 = vadd.f32 %v2799, %v2951
        %2953 = vmatprep.mubr.f32.mxu0 0.0
        %v2954 = vand.u32 %v490, 4294901760
        %2955 = vmatmul.mubr.f32.gmra.mrb[0].mxu0 %v2954
        %v2956 = vpop.f32.mrb[0].mxu0
        %v2957 = vadd.f32 %v2804, %v2956
        %v2958 = vpop.f32.mrb[0].mxu0
        %v2959 = vadd.f32 %v2806, %v2958
        %2960 = vmatprep.mubr.f32.mxu0 0.0
        %v2961 = vand.u32 %v491, 4294901760
        %2962 = vmatmul.mubr.f32.gmra.mrb[0].mxu0 %v2961
        %v2963 = vpop.f32.mrb[0].mxu0
        %v2964 = vadd.f32 %v2811, %v2963
        %v2965 = vpop.f32.mrb[0].mxu0
        %v2966 = vadd.f32 %v2813, %v2965
        %2967 = vmatprep.mubr.f32.mxu0 0.0
        %v2968 = vand.u32 %v492, 4294901760
        %2969 = vmatmul.mubr.f32.gmra.mrb[0].mxu0 %v2968
        %v2970 = vpop.f32.mrb[0].mxu0
        %v2971 = vadd.f32 %v2818, %v2970
        %v2972 = vpop.f32.mrb[0].mxu0
        %v2973 = vadd.f32 %v2820, %v2972
        %2974 = vdwg.mxu0
        %v2975 = vmul.f32 %v1724, 0.5
        %v2976 = vmul.f32 %v1726, 0.5
        %v2977 = vmul.f32 %v2922, 0.5
        %v2978 = vmul.f32 %v2924, 0.5
        %v2979 = vmul.f32 %v1731, 0.5
        %v2980 = vmul.f32 %v1733, 0.5
        %v2981 = vmul.f32 %v2929, 0.5
        %v2982 = vmul.f32 %v2931, 0.5
        %v2983 = vmul.f32 %v1738, 0.5
        %v2984 = vmul.f32 %v1740, 0.5
        %v2985 = vmul.f32 %v2936, 0.5
        %v2986 = vmul.f32 %v2938, 0.5
        %v2987 = vmul.f32 %v1745, 0.5
        %v2988 = vmul.f32 %v1747, 0.5
        %v2989 = vmul.f32 %v2943, 0.5
        %v2990 = vmul.f32 %v2945, 0.5
        %v2991 = vmul.f32 %v1752, 0.5
        %v2992 = vmul.f32 %v1754, 0.5
        %v2993 = vmul.f32 %v2950, 0.5
        %v2994 = vmul.f32 %v2952, 0.5
        %v2995 = vmul.f32 %v1759, 0.5
        %v2996 = vmul.f32 %v1761, 0.5
        %v2997 = vmul.f32 %v2957, 0.5
        %v2998 = vmul.f32 %v2959, 0.5
        %v2999 = vmul.f32 %v1766, 0.5
        %v3000 = vmul.f32 %v1768, 0.5
        %v3001 = vmul.f32 %v2964, 0.5
        %v3002 = vmul.f32 %v2966, 0.5
        %v3003 = vmul.f32 %v1773, 0.5
        %v3004 = vmul.f32 %v1775, 0.5
        %v3005 = vmul.f32 %v2971, 0.5
        %v3006 = vmul.f32 %v2973, 0.5
        %v3007 = vmul.f32 %v1724, 0.70710677
        %v3008 = vmul.f32 %v1726, 0.70710677
        %v3009 = vmul.f32 %v2922, 0.70710677
        %v3010 = vmul.f32 %v2924, 0.70710677
        %v3011 = vmul.f32 %v1731, 0.70710677
        %v3012 = vmul.f32 %v1733, 0.70710677
        %v3013 = vmul.f32 %v2929, 0.70710677
        %v3014 = vmul.f32 %v2931, 0.70710677
        %v3015 = vmul.f32 %v1738, 0.70710677
        %v3016 = vmul.f32 %v1740, 0.70710677
        %v3017 = vmul.f32 %v2936, 0.70710677
        %v3018 = vmul.f32 %v2938, 0.70710677
        %v3019 = vmul.f32 %v1745, 0.70710677
        %v3020 = vmul.f32 %v1747, 0.70710677
        %v3021 = vmul.f32 %v2943, 0.70710677
        %v3022 = vmul.f32 %v2945, 0.70710677
        %v3023 = vmul.f32 %v1752, 0.70710677
        %v3024 = vmul.f32 %v1754, 0.70710677
        %v3025 = vmul.f32 %v2950, 0.70710677
        %v3026 = vmul.f32 %v2952, 0.70710677
        %v3027 = vmul.f32 %v1759, 0.70710677
        %v3028 = vmul.f32 %v1761, 0.70710677
        %v3029 = vmul.f32 %v2957, 0.70710677
        %v3030 = vmul.f32 %v2959, 0.70710677
        %v3031 = vmul.f32 %v1766, 0.70710677
        %v3032 = vmul.f32 %v1768, 0.70710677
        %v3033 = vmul.f32 %v2964, 0.70710677
        %v3034 = vmul.f32 %v2966, 0.70710677
        %v3035 = vmul.f32 %v1773, 0.70710677
        %v3036 = vmul.f32 %v1775, 0.70710677
        %v3037 = vmul.f32 %v2971, 0.70710677
        %v3038 = vmul.f32 %v2973, 0.70710677
        %v3039 = vand.u32 2147483647, %v3007
        %v3040 = vand.u32 2147483647, %v3008
        %v3041 = vand.u32 2147483647, %v3009
        %v3042 = vand.u32 2147483647, %v3010
        %v3043 = vand.u32 2147483647, %v3011
        %v3044 = vand.u32 2147483647, %v3012
        %v3045 = vand.u32 2147483647, %v3013
        %v3046 = vand.u32 2147483647, %v3014
        %v3047 = vand.u32 2147483647, %v3015
        %v3048 = vand.u32 2147483647, %v3016
        %v3049 = vand.u32 2147483647, %v3017
        %v3050 = vand.u32 2147483647, %v3018
        %v3051 = vand.u32 2147483647, %v3019
        %v3052 = vand.u32 2147483647, %v3020
        %v3053 = vand.u32 2147483647, %v3021
        %v3054 = vand.u32 2147483647, %v3022
        %v3055 = vand.u32 2147483647, %v3023
        %v3056 = vand.u32 2147483647, %v3024
        %v3057 = vand.u32 2147483647, %v3025
        %v3058 = vand.u32 2147483647, %v3026
        %v3059 = vand.u32 2147483647, %v3027
        %v3060 = vand.u32 2147483647, %v3028
        %v3061 = vand.u32 2147483647, %v3029
        %v3062 = vand.u32 2147483647, %v3030
        %v3063 = vand.u32 2147483647, %v3031
        %v3064 = vand.u32 2147483647, %v3032
        %v3065 = vand.u32 2147483647, %v3033
        %v3066 = vand.u32 2147483647, %v3034
        %v3067 = vand.u32 2147483647, %v3035
        %v3068 = vand.u32 2147483647, %v3036
        %v3069 = vand.u32 2147483647, %v3037
        %v3070 = vand.u32 2147483647, %v3038
        %v3071 = vmul.f32 %v3039, 0.3275911
        %v3072 = vmul.f32 %v3040, 0.3275911
        %v3073 = vmul.f32 %v3041, 0.3275911
        %v3074 = vmul.f32 %v3042, 0.3275911
        %v3075 = vmul.f32 %v3043, 0.3275911
        %v3076 = vmul.f32 %v3044, 0.3275911
        %v3077 = vmul.f32 %v3045, 0.3275911
        %v3078 = vmul.f32 %v3046, 0.3275911
        %v3079 = vmul.f32 %v3047, 0.3275911
        %v3080 = vmul.f32 %v3048, 0.3275911
        %v3081 = vmul.f32 %v3049, 0.3275911
        %v3082 = vmul.f32 %v3050, 0.3275911
        %v3083 = vmul.f32 %v3051, 0.3275911
        %v3084 = vmul.f32 %v3052, 0.3275911
        %v3085 = vmul.f32 %v3053, 0.3275911
        %v3086 = vmul.f32 %v3054, 0.3275911
        %v3087 = vmul.f32 %v3055, 0.3275911
        %v3088 = vmul.f32 %v3056, 0.3275911
        %v3089 = vmul.f32 %v3057, 0.3275911
        %v3090 = vmul.f32 %v3058, 0.3275911
        %v3091 = vmul.f32 %v3059, 0.3275911
        %v3092 = vmul.f32 %v3060, 0.3275911
        %v3093 = vmul.f32 %v3061, 0.3275911
        %v3094 = vmul.f32 %v3062, 0.3275911
        %v3095 = vmul.f32 %v3063, 0.3275911
        %v3096 = vmul.f32 %v3064, 0.3275911
        %v3097 = vmul.f32 %v3065, 0.3275911
        %v3098 = vmul.f32 %v3066, 0.3275911
        %v3099 = vmul.f32 %v3067, 0.3275911
        %v3100 = vmul.f32 %v3068, 0.3275911
        %v3101 = vmul.f32 %v3069, 0.3275911
        %v3102 = vmul.f32 %v3070, 0.3275911
        %v3103 = vadd.f32 %v3071, 1.0
        %v3104 = vadd.f32 %v3072, 1.0
        %v3105 = vadd.f32 %v3073, 1.0
        %v3106 = vadd.f32 %v3074, 1.0
        %v3107 = vadd.f32 %v3075, 1.0
        %v3108 = vadd.f32 %v3076, 1.0
        %v3109 = vadd.f32 %v3077, 1.0
        %v3110 = vadd.f32 %v3078, 1.0
        %v3111 = vadd.f32 %v3079, 1.0
        %v3112 = vadd.f32 %v3080, 1.0
        %v3113 = vadd.f32 %v3081, 1.0
        %v3114 = vadd.f32 %v3082, 1.0
        %v3115 = vadd.f32 %v3083, 1.0
        %v3116 = vadd.f32 %v3084, 1.0
        %v3117 = vadd.f32 %v3085, 1.0
        %v3118 = vadd.f32 %v3086, 1.0
        %v3119 = vadd.f32 %v3087, 1.0
        %v3120 = vadd.f32 %v3088, 1.0
        %v3121 = vadd.f32 %v3089, 1.0
        %v3122 = vadd.f32 %v3090, 1.0
        %v3123 = vadd.f32 %v3091, 1.0
        %v3124 = vadd.f32 %v3092, 1.0
        %v3125 = vadd.f32 %v3093, 1.0
        %v3126 = vadd.f32 %v3094, 1.0
        %v3127 = vadd.f32 %v3095, 1.0
        %v3128 = vadd.f32 %v3096, 1.0
        %v3129 = vadd.f32 %v3097, 1.0
        %v3130 = vadd.f32 %v3098, 1.0
        %v3131 = vadd.f32 %v3099, 1.0
        %v3132 = vadd.f32 %v3100, 1.0
        %v3133 = vadd.f32 %v3101, 1.0
        %v3134 = vadd.f32 %v3102, 1.0
        %v3135 = vrcp.pop %v3103
        %v3136 = vmul.f32 1.0, %v3135
        %v3137 = vrcp.pop %v3104
        %v3138 = vmul.f32 1.0, %v3137
        %v3139 = vrcp.pop %v3105
        %v3140 = vmul.f32 1.0, %v3139
        %v3141 = vrcp.pop %v3106
        %v3142 = vmul.f32 1.0, %v3141
        %v3143 = vrcp.pop %v3107
        %v3144 = vmul.f32 1.0, %v3143
        %v3145 = vrcp.pop %v3108
        %v3146 = vmul.f32 1.0, %v3145
        %v3147 = vrcp.pop %v3109
        %v3148 = vmul.f32 1.0, %v3147
        %v3149 = vrcp.pop %v3110
        %v3150 = vmul.f32 1.0, %v3149
        %v3151 = vrcp.pop %v3111
        %v3152 = vmul.f32 1.0, %v3151
        %v3153 = vrcp.pop %v3112
        %v3154 = vmul.f32 1.0, %v3153
        %v3155 = vrcp.pop %v3113
        %v3156 = vmul.f32 1.0, %v3155
        %v3157 = vrcp.pop %v3114
        %v3158 = vmul.f32 1.0, %v3157
        %v3159 = vrcp.pop %v3115
        %v3160 = vmul.f32 1.0, %v3159
        %v3161 = vrcp.pop %v3116
        %v3162 = vmul.f32 1.0, %v3161
        %v3163 = vrcp.pop %v3117
        %v3164 = vmul.f32 1.0, %v3163
        %v3165 = vrcp.pop %v3118
        %v3166 = vmul.f32 1.0, %v3165
        %v3167 = vrcp.pop %v3119
        %v3168 = vmul.f32 1.0, %v3167
        %v3169 = vrcp.pop %v3120
        %v3170 = vmul.f32 1.0, %v3169
        %v3171 = vrcp.pop %v3121
        %v3172 = vmul.f32 1.0, %v3171
        %v3173 = vrcp.pop %v3122
        %v3174 = vmul.f32 1.0, %v3173
        %v3175 = vrcp.pop %v3123
        %v3176 = vmul.f32 1.0, %v3175
        %v3177 = vrcp.pop %v3124
        %v3178 = vmul.f32 1.0, %v3177
        %v3179 = vrcp.pop %v3125
        %v3180 = vmul.f32 1.0, %v3179
        %v3181 = vrcp.pop %v3126
        %v3182 = vmul.f32 1.0, %v3181
        %v3183 = vrcp.pop %v3127
        %v3184 = vmul.f32 1.0, %v3183
        %v3185 = vrcp.pop %v3128
        %v3186 = vmul.f32 1.0, %v3185
        %v3187 = vrcp.pop %v3129
        %v3188 = vmul.f32 1.0, %v3187
        %v3189 = vrcp.pop %v3130
        %v3190 = vmul.f32 1.0, %v3189
        %v3191 = vrcp.pop %v3131
        %v3192 = vmul.f32 1.0, %v3191
        %v3193 = vrcp.pop %v3132
        %v3194 = vmul.f32 1.0, %v3193
        %v3195 = vrcp.pop %v3133
        %v3196 = vmul.f32 1.0, %v3195
        %v3197 = vrcp.pop %v3134
        %v3198 = vmul.f32 1.0, %v3197
        %v3199 = vmul.f32 %v3136, 1.0614054
        %v3200 = vmul.f32 %v3138, 1.0614054
        %v3201 = vmul.f32 %v3140, 1.0614054
        %v3202 = vmul.f32 %v3142, 1.0614054
        %v3203 = vmul.f32 %v3144, 1.0614054
        %v3204 = vmul.f32 %v3146, 1.0614054
        %v3205 = vmul.f32 %v3148, 1.0614054
        %v3206 = vmul.f32 %v3150, 1.0614054
        %v3207 = vmul.f32 %v3152, 1.0614054
        %v3208 = vmul.f32 %v3154, 1.0614054
        %v3209 = vmul.f32 %v3156, 1.0614054
        %v3210 = vmul.f32 %v3158, 1.0614054
        %v3211 = vmul.f32 %v3160, 1.0614054
        %v3212 = vmul.f32 %v3162, 1.0614054
        %v3213 = vmul.f32 %v3164, 1.0614054
        %v3214 = vmul.f32 %v3166, 1.0614054
        %v3215 = vmul.f32 %v3168, 1.0614054
        %v3216 = vmul.f32 %v3170, 1.0614054
        %v3217 = vmul.f32 %v3172, 1.0614054
        %v3218 = vmul.f32 %v3174, 1.0614054
        %v3219 = vmul.f32 %v3176, 1.0614054
        %v3220 = vmul.f32 %v3178, 1.0614054
        %v3221 = vmul.f32 %v3180, 1.0614054
        %v3222 = vmul.f32 %v3182, 1.0614054
        %v3223 = vmul.f32 %v3184, 1.0614054
        %v3224 = vmul.f32 %v3186, 1.0614054
        %v3225 = vmul.f32 %v3188, 1.0614054
        %v3226 = vmul.f32 %v3190, 1.0614054
        %v3227 = vmul.f32 %v3192, 1.0614054
        %v3228 = vmul.f32 %v3194, 1.0614054
        %v3229 = vmul.f32 %v3196, 1.0614054
        %v3230 = vmul.f32 %v3198, 1.0614054
        %v3231 = vadd.f32 %v3199, -1.4531521
        %v3232 = vadd.f32 %v3200, -1.4531521
        %v3233 = vadd.f32 %v3201, -1.4531521
        %v3234 = vadd.f32 %v3202, -1.4531521
        %v3235 = vadd.f32 %v3203, -1.4531521
        %v3236 = vadd.f32 %v3204, -1.4531521
        %v3237 = vadd.f32 %v3205, -1.4531521
        %v3238 = vadd.f32 %v3206, -1.4531521
        %v3239 = vadd.f32 %v3207, -1.4531521
        %v3240 = vadd.f32 %v3208, -1.4531521
        %v3241 = vadd.f32 %v3209, -1.4531521
        %v3242 = vadd.f32 %v3210, -1.4531521
        %v3243 = vadd.f32 %v3211, -1.4531521
        %v3244 = vadd.f32 %v3212, -1.4531521
        %v3245 = vadd.f32 %v3213, -1.4531521
        %v3246 = vadd.f32 %v3214, -1.4531521
        %v3247 = vadd.f32 %v3215, -1.4531521
        %v3248 = vadd.f32 %v3216, -1.4531521
        %v3249 = vadd.f32 %v3217, -1.4531521
        %v3250 = vadd.f32 %v3218, -1.4531521
        %v3251 = vadd.f32 %v3219, -1.4531521
        %v3252 = vadd.f32 %v3220, -1.4531521
        %v3253 = vadd.f32 %v3221, -1.4531521
        %v3254 = vadd.f32 %v3222, -1.4531521
        %v3255 = vadd.f32 %v3223, -1.4531521
        %v3256 = vadd.f32 %v3224, -1.4531521
        %v3257 = vadd.f32 %v3225, -1.4531521
        %v3258 = vadd.f32 %v3226, -1.4531521
        %v3259 = vadd.f32 %v3227, -1.4531521
        %v3260 = vadd.f32 %v3228, -1.4531521
        %v3261 = vadd.f32 %v3229, -1.4531521
        %v3262 = vadd.f32 %v3230, -1.4531521
        %v3263 = vmul.f32 %v3231, %v3136
        %v3264 = vmul.f32 %v3232, %v3138
        %v3265 = vmul.f32 %v3233, %v3140
        %v3266 = vmul.f32 %v3234, %v3142
        %v3267 = vmul.f32 %v3235, %v3144
        %v3268 = vmul.f32 %v3236, %v3146
        %v3269 = vmul.f32 %v3237, %v3148
        %v3270 = vmul.f32 %v3238, %v3150
        %v3271 = vmul.f32 %v3239, %v3152
        %v3272 = vmul.f32 %v3240, %v3154
        %v3273 = vmul.f32 %v3241, %v3156
        %v3274 = vmul.f32 %v3242, %v3158
        %v3275 = vmul.f32 %v3243, %v3160
        %v3276 = vmul.f32 %v3244, %v3162
        %v3277 = vmul.f32 %v3245, %v3164
        %v3278 = vmul.f32 %v3246, %v3166
        %v3279 = vmul.f32 %v3247, %v3168
        %v3280 = vmul.f32 %v3248, %v3170
        %v3281 = vmul.f32 %v3249, %v3172
        %v3282 = vmul.f32 %v3250, %v3174
        %v3283 = vmul.f32 %v3251, %v3176
        %v3284 = vmul.f32 %v3252, %v3178
        %v3285 = vmul.f32 %v3253, %v3180
        %v3286 = vmul.f32 %v3254, %v3182
        %v3287 = vmul.f32 %v3255, %v3184
        %v3288 = vmul.f32 %v3256, %v3186
        %v3289 = vmul.f32 %v3257, %v3188
        %v3290 = vmul.f32 %v3258, %v3190
        %v3291 = vmul.f32 %v3259, %v3192
        %v3292 = vmul.f32 %v3260, %v3194
        %v3293 = vmul.f32 %v3261, %v3196
        %v3294 = vmul.f32 %v3262, %v3198
        %v3295 = vadd.f32 %v3263, 1.4214138
        %v3296 = vadd.f32 %v3264, 1.4214138
        %v3297 = vadd.f32 %v3265, 1.4214138
        %v3298 = vadd.f32 %v3266, 1.4214138
        %v3299 = vadd.f32 %v3267, 1.4214138
        %v3300 = vadd.f32 %v3268, 1.4214138
        %v3301 = vadd.f32 %v3269, 1.4214138
        %v3302 = vadd.f32 %v3270, 1.4214138
        %v3303 = vadd.f32 %v3271, 1.4214138
        %v3304 = vadd.f32 %v3272, 1.4214138
        %v3305 = vadd.f32 %v3273, 1.4214138
        %v3306 = vadd.f32 %v3274, 1.4214138
        %v3307 = vadd.f32 %v3275, 1.4214138
        %v3308 = vadd.f32 %v3276, 1.4214138
        %v3309 = vadd.f32 %v3277, 1.4214138
        %v3310 = vadd.f32 %v3278, 1.4214138
        %v3311 = vadd.f32 %v3279, 1.4214138
        %v3312 = vadd.f32 %v3280, 1.4214138
        %v3313 = vadd.f32 %v3281, 1.4214138
        %v3314 = vadd.f32 %v3282, 1.4214138
        %v3315 = vadd.f32 %v3283, 1.4214138
        %v3316 = vadd.f32 %v3284, 1.4214138
        %v3317 = vadd.f32 %v3285, 1.4214138
        %v3318 = vadd.f32 %v3286, 1.4214138
        %v3319 = vadd.f32 %v3287, 1.4214138
        %v3320 = vadd.f32 %v3288, 1.4214138
        %v3321 = vadd.f32 %v3289, 1.4214138
        %v3322 = vadd.f32 %v3290, 1.4214138
        %v3323 = vadd.f32 %v3291, 1.4214138
        %v3324 = vadd.f32 %v3292, 1.4214138
        %v3325 = vadd.f32 %v3293, 1.4214138
        %v3326 = vadd.f32 %v3294, 1.4214138
        %v3327 = vmul.f32 %v3295, %v3136
        %v3328 = vmul.f32 %v3296, %v3138
        %v3329 = vmul.f32 %v3297, %v3140
        %v3330 = vmul.f32 %v3298, %v3142
        %v3331 = vmul.f32 %v3299, %v3144
        %v3332 = vmul.f32 %v3300, %v3146
        %v3333 = vmul.f32 %v3301, %v3148
        %v3334 = vmul.f32 %v3302, %v3150
        %v3335 = vmul.f32 %v3303, %v3152
        %v3336 = vmul.f32 %v3304, %v3154
        %v3337 = vmul.f32 %v3305, %v3156
        %v3338 = vmul.f32 %v3306, %v3158
        %v3339 = vmul.f32 %v3307, %v3160
        %v3340 = vmul.f32 %v3308, %v3162
        %v3341 = vmul.f32 %v3309, %v3164
        %v3342 = vmul.f32 %v3310, %v3166
        %v3343 = vmul.f32 %v3311, %v3168
        %v3344 = vmul.f32 %v3312, %v3170
        %v3345 = vmul.f32 %v3313, %v3172
        %v3346 = vmul.f32 %v3314, %v3174
        %v3347 = vmul.f32 %v3315, %v3176
        %v3348 = vmul.f32 %v3316, %v3178
        %v3349 = vmul.f32 %v3317, %v3180
        %v3350 = vmul.f32 %v3318, %v3182
        %v3351 = vmul.f32 %v3319, %v3184
        %v3352 = vmul.f32 %v3320, %v3186
        %v3353 = vmul.f32 %v3321, %v3188
        %v3354 = vmul.f32 %v3322, %v3190
        %v3355 = vmul.f32 %v3323, %v3192
        %v3356 = vmul.f32 %v3324, %v3194
        %v3357 = vmul.f32 %v3325, %v3196
        %v3358 = vmul.f32 %v3326, %v3198
        %v3359 = vadd.f32 %v3327, -0.28449672
        %v3360 = vadd.f32 %v3328, -0.28449672
        %v3361 = vadd.f32 %v3329, -0.28449672
        %v3362 = vadd.f32 %v3330, -0.28449672
        %v3363 = vadd.f32 %v3331, -0.28449672
        %v3364 = vadd.f32 %v3332, -0.28449672
        %v3365 = vadd.f32 %v3333, -0.28449672
        %v3366 = vadd.f32 %v3334, -0.28449672
        %v3367 = vadd.f32 %v3335, -0.28449672
        %v3368 = vadd.f32 %v3336, -0.28449672
        %v3369 = vadd.f32 %v3337, -0.28449672
        %v3370 = vadd.f32 %v3338, -0.28449672
        %v3371 = vadd.f32 %v3339, -0.28449672
        %v3372 = vadd.f32 %v3340, -0.28449672
        %v3373 = vadd.f32 %v3341, -0.28449672
        %v3374 = vadd.f32 %v3342, -0.28449672
        %v3375 = vadd.f32 %v3343, -0.28449672
        %v3376 = vadd.f32 %v3344, -0.28449672
        %v3377 = vadd.f32 %v3345, -0.28449672
        %v3378 = vadd.f32 %v3346, -0.28449672
        %v3379 = vadd.f32 %v3347, -0.28449672
        %v3380 = vadd.f32 %v3348, -0.28449672
        %v3381 = vadd.f32 %v3349, -0.28449672
        %v3382 = vadd.f32 %v3350, -0.28449672
        %v3383 = vadd.f32 %v3351, -0.28449672
        %v3384 = vadd.f32 %v3352, -0.28449672
        %v3385 = vadd.f32 %v3353, -0.28449672
        %v3386 = vadd.f32 %v3354, -0.28449672
        %v3387 = vadd.f32 %v3355, -0.28449672
        %v3388 = vadd.f32 %v3356, -0.28449672
        %v3389 = vadd.f32 %v3357, -0.28449672
        %v3390 = vadd.f32 %v3358, -0.28449672
        %v3391 = vmul.f32 %v3359, %v3136
        %v3392 = vmul.f32 %v3360, %v3138
        %v3393 = vmul.f32 %v3361, %v3140
        %v3394 = vmul.f32 %v3362, %v3142
        %v3395 = vmul.f32 %v3363, %v3144
        %v3396 = vmul.f32 %v3364, %v3146
        %v3397 = vmul.f32 %v3365, %v3148
        %v3398 = vmul.f32 %v3366, %v3150
        %v3399 = vmul.f32 %v3367, %v3152
        %v3400 = vmul.f32 %v3368, %v3154
        %v3401 = vmul.f32 %v3369, %v3156
        %v3402 = vmul.f32 %v3370, %v3158
        %v3403 = vmul.f32 %v3371, %v3160
        %v3404 = vmul.f32 %v3372, %v3162
        %v3405 = vmul.f32 %v3373, %v3164
        %v3406 = vmul.f32 %v3374, %v3166
        %v3407 = vmul.f32 %v3375, %v3168
        %v3408 = vmul.f32 %v3376, %v3170
        %v3409 = vmul.f32 %v3377, %v3172
        %v3410 = vmul.f32 %v3378, %v3174
        %v3411 = vmul.f32 %v3379, %v3176
        %v3412 = vmul.f32 %v3380, %v3178
        %v3413 = vmul.f32 %v3381, %v3180
        %v3414 = vmul.f32 %v3382, %v3182
        %v3415 = vmul.f32 %v3383, %v3184
        %v3416 = vmul.f32 %v3384, %v3186
        %v3417 = vmul.f32 %v3385, %v3188
        %v3418 = vmul.f32 %v3386, %v3190
        %v3419 = vmul.f32 %v3387, %v3192
        %v3420 = vmul.f32 %v3388, %v3194
        %v3421 = vmul.f32 %v3389, %v3196
        %v3422 = vmul.f32 %v3390, %v3198
        %v3423 = vadd.f32 %v3391, 0.2548296
        %v3424 = vadd.f32 %v3392, 0.2548296
        %v3425 = vadd.f32 %v3393, 0.2548296
        %v3426 = vadd.f32 %v3394, 0.2548296
        %v3427 = vadd.f32 %v3395, 0.2548296
        %v3428 = vadd.f32 %v3396, 0.2548296
        %v3429 = vadd.f32 %v3397, 0.2548296
        %v3430 = vadd.f32 %v3398, 0.2548296
        %v3431 = vadd.f32 %v3399, 0.2548296
        %v3432 = vadd.f32 %v3400, 0.2548296
        %v3433 = vadd.f32 %v3401, 0.2548296
        %v3434 = vadd.f32 %v3402, 0.2548296
        %v3435 = vadd.f32 %v3403, 0.2548296
        %v3436 = vadd.f32 %v3404, 0.2548296
        %v3437 = vadd.f32 %v3405, 0.2548296
        %v3438 = vadd.f32 %v3406, 0.2548296
        %v3439 = vadd.f32 %v3407, 0.2548296
        %v3440 = vadd.f32 %v3408, 0.2548296
        %v3441 = vadd.f32 %v3409, 0.2548296
        %v3442 = vadd.f32 %v3410, 0.2548296
        %v3443 = vadd.f32 %v3411, 0.2548296
        %v3444 = vadd.f32 %v3412, 0.2548296
        %v3445 = vadd.f32 %v3413, 0.2548296
        %v3446 = vadd.f32 %v3414, 0.2548296
        %v3447 = vadd.f32 %v3415, 0.2548296
        %v3448 = vadd.f32 %v3416, 0.2548296
        %v3449 = vadd.f32 %v3417, 0.2548296
        %v3450 = vadd.f32 %v3418, 0.2548296
        %v3451 = vadd.f32 %v3419, 0.2548296
        %v3452 = vadd.f32 %v3420, 0.2548296
        %v3453 = vadd.f32 %v3421, 0.2548296
        %v3454 = vadd.f32 %v3422, 0.2548296
        %v3455 = vmul.f32 %v3423, %v3136
        %v3456 = vmul.f32 %v3424, %v3138
        %v3457 = vmul.f32 %v3425, %v3140
        %v3458 = vmul.f32 %v3426, %v3142
        %v3459 = vmul.f32 %v3427, %v3144
        %v3460 = vmul.f32 %v3428, %v3146
        %v3461 = vmul.f32 %v3429, %v3148
        %v3462 = vmul.f32 %v3430, %v3150
        %v3463 = vmul.f32 %v3431, %v3152
        %v3464 = vmul.f32 %v3432, %v3154
        %v3465 = vmul.f32 %v3433, %v3156
        %v3466 = vmul.f32 %v3434, %v3158
        %v3467 = vmul.f32 %v3435, %v3160
        %v3468 = vmul.f32 %v3436, %v3162
        %v3469 = vmul.f32 %v3437, %v3164
        %v3470 = vmul.f32 %v3438, %v3166
        %v3471 = vmul.f32 %v3439, %v3168
        %v3472 = vmul.f32 %v3440, %v3170
        %v3473 = vmul.f32 %v3441, %v3172
        %v3474 = vmul.f32 %v3442, %v3174
        %v3475 = vmul.f32 %v3443, %v3176
        %v3476 = vmul.f32 %v3444, %v3178
        %v3477 = vmul.f32 %v3445, %v3180
        %v3478 = vmul.f32 %v3446, %v3182
        %v3479 = vmul.f32 %v3447, %v3184
        %v3480 = vmul.f32 %v3448, %v3186
        %v3481 = vmul.f32 %v3449, %v3188
        %v3482 = vmul.f32 %v3450, %v3190
        %v3483 = vmul.f32 %v3451, %v3192
        %v3484 = vmul.f32 %v3452, %v3194
        %v3485 = vmul.f32 %v3453, %v3196
        %v3486 = vmul.f32 %v3454, %v3198
        %v3487 = vmul.f32 %v3039, %v3039
        %v3488 = vmul.f32 %v3040, %v3040
        %v3489 = vmul.f32 %v3041, %v3041
        %v3490 = vmul.f32 %v3042, %v3042
        %v3491 = vmul.f32 %v3043, %v3043
        %v3492 = vmul.f32 %v3044, %v3044
        %v3493 = vmul.f32 %v3045, %v3045
        %v3494 = vmul.f32 %v3046, %v3046
        %v3495 = vmul.f32 %v3047, %v3047
        %v3496 = vmul.f32 %v3048, %v3048
        %v3497 = vmul.f32 %v3049, %v3049
        %v3498 = vmul.f32 %v3050, %v3050
        %v3499 = vmul.f32 %v3051, %v3051
        %v3500 = vmul.f32 %v3052, %v3052
        %v3501 = vmul.f32 %v3053, %v3053
        %v3502 = vmul.f32 %v3054, %v3054
        %v3503 = vmul.f32 %v3055, %v3055
        %v3504 = vmul.f32 %v3056, %v3056
        %v3505 = vmul.f32 %v3057, %v3057
        %v3506 = vmul.f32 %v3058, %v3058
        %v3507 = vmul.f32 %v3059, %v3059
        %v3508 = vmul.f32 %v3060, %v3060
        %v3509 = vmul.f32 %v3061, %v3061
        %v3510 = vmul.f32 %v3062, %v3062
        %v3511 = vmul.f32 %v3063, %v3063
        %v3512 = vmul.f32 %v3064, %v3064
        %v3513 = vmul.f32 %v3065, %v3065
        %v3514 = vmul.f32 %v3066, %v3066
        %v3515 = vmul.f32 %v3067, %v3067
        %v3516 = vmul.f32 %v3068, %v3068
        %v3517 = vmul.f32 %v3069, %v3069
        %v3518 = vmul.f32 %v3070, %v3070
        %v3519 = vsub.f32 0.0, %v3487
        %v3520 = vsub.f32 0.0, %v3488
        %v3521 = vsub.f32 0.0, %v3489
        %v3522 = vsub.f32 0.0, %v3490
        %v3523 = vsub.f32 0.0, %v3491
        %v3524 = vsub.f32 0.0, %v3492
        %v3525 = vsub.f32 0.0, %v3493
        %v3526 = vsub.f32 0.0, %v3494
        %v3527 = vsub.f32 0.0, %v3495
        %v3528 = vsub.f32 0.0, %v3496
        %v3529 = vsub.f32 0.0, %v3497
        %v3530 = vsub.f32 0.0, %v3498
        %v3531 = vsub.f32 0.0, %v3499
        %v3532 = vsub.f32 0.0, %v3500
        %v3533 = vsub.f32 0.0, %v3501
        %v3534 = vsub.f32 0.0, %v3502
        %v3535 = vsub.f32 0.0, %v3503
        %v3536 = vsub.f32 0.0, %v3504
        %v3537 = vsub.f32 0.0, %v3505
        %v3538 = vsub.f32 0.0, %v3506
        %v3539 = vsub.f32 0.0, %v3507
        %v3540 = vsub.f32 0.0, %v3508
        %v3541 = vsub.f32 0.0, %v3509
        %v3542 = vsub.f32 0.0, %v3510
        %v3543 = vsub.f32 0.0, %v3511
        %v3544 = vsub.f32 0.0, %v3512
        %v3545 = vsub.f32 0.0, %v3513
        %v3546 = vsub.f32 0.0, %v3514
        %v3547 = vsub.f32 0.0, %v3515
        %v3548 = vsub.f32 0.0, %v3516
        %v3549 = vsub.f32 0.0, %v3517
        %v3550 = vsub.f32 0.0, %v3518
        %v3551 = vmul.f32 %v3519, 1.442695
        %v3552 = vpow.pop %v3551
        %v3553 = vmul.f32 %v3520, 1.442695
        %v3554 = vpow.pop %v3553
        %v3555 = vmul.f32 %v3521, 1.442695
        %v3556 = vpow.pop %v3555
        %v3557 = vmul.f32 %v3522, 1.442695
        %v3558 = vpow.pop %v3557
        %v3559 = vmul.f32 %v3523, 1.442695
        %v3560 = vpow.pop %v3559
        %v3561 = vmul.f32 %v3524, 1.442695
        %v3562 = vpow.pop %v3561
        %v3563 = vmul.f32 %v3525, 1.442695
        %v3564 = vpow.pop %v3563
        %v3565 = vmul.f32 %v3526, 1.442695
        %v3566 = vpow.pop %v3565
        %v3567 = vmul.f32 %v3527, 1.442695
        %v3568 = vpow.pop %v3567
        %v3569 = vmul.f32 %v3528, 1.442695
        %v3570 = vpow.pop %v3569
        %v3571 = vmul.f32 %v3529, 1.442695
        %v3572 = vpow.pop %v3571
        %v3573 = vmul.f32 %v3530, 1.442695
        %v3574 = vpow.pop %v3573
        %v3575 = vmul.f32 %v3531, 1.442695
        %v3576 = vpow.pop %v3575
        %v3577 = vmul.f32 %v3532, 1.442695
        %v3578 = vpow.pop %v3577
        %v3579 = vmul.f32 %v3533, 1.442695
        %v3580 = vpow.pop %v3579
        %v3581 = vmul.f32 %v3534, 1.442695
        %v3582 = vpow.pop %v3581
        %v3583 = vmul.f32 %v3535, 1.442695
        %v3584 = vpow.pop %v3583
        %v3585 = vmul.f32 %v3536, 1.442695
        %v3586 = vpow.pop %v3585
        %v3587 = vmul.f32 %v3537, 1.442695
        %v3588 = vpow.pop %v3587
        %v3589 = vmul.f32 %v3538, 1.442695
        %v3590 = vpow.pop %v3589
        %v3591 = vmul.f32 %v3539, 1.442695
        %v3592 = vpow.pop %v3591
        %v3593 = vmul.f32 %v3540, 1.442695
        %v3594 = vpow.pop %v3593
        %v3595 = vmul.f32 %v3541, 1.442695
        %v3596 = vpow.pop %v3595
        %v3597 = vmul.f32 %v3542, 1.442695
        %v3598 = vpow.pop %v3597
        %v3599 = vmul.f32 %v3543, 1.442695
        %v3600 = vpow.pop %v3599
        %v3601 = vmul.f32 %v3544, 1.442695
        %v3602 = vpow.pop %v3601
        %v3603 = vmul.f32 %v3545, 1.442695
        %v3604 = vpow.pop %v3603
        %v3605 = vmul.f32 %v3546, 1.442695
        %v3606 = vpow.pop %v3605
        %v3607 = vmul.f32 %v3547, 1.442695
        %v3608 = vpow.pop %v3607
        %v3609 = vmul.f32 %v3548, 1.442695
        %v3610 = vpow.pop %v3609
        %v3611 = vmul.f32 %v3549, 1.442695
        %v3612 = vpow.pop %v3611
        %v3613 = vmul.f32 %v3550, 1.442695
        %v3614 = vpow.pop %v3613
        %v3615 = vmul.f32 %v3455, %v3552
        %v3616 = vmul.f32 %v3456, %v3554
        %v3617 = vmul.f32 %v3457, %v3556
        %v3618 = vmul.f32 %v3458, %v3558
        %v3619 = vmul.f32 %v3459, %v3560
        %v3620 = vmul.f32 %v3460, %v3562
        %v3621 = vmul.f32 %v3461, %v3564
        %v3622 = vmul.f32 %v3462, %v3566
        %v3623 = vmul.f32 %v3463, %v3568
        %v3624 = vmul.f32 %v3464, %v3570
        %v3625 = vmul.f32 %v3465, %v3572
        %v3626 = vmul.f32 %v3466, %v3574
        %v3627 = vmul.f32 %v3467, %v3576
        %v3628 = vmul.f32 %v3468, %v3578
        %v3629 = vmul.f32 %v3469, %v3580
        %v3630 = vmul.f32 %v3470, %v3582
        %v3631 = vmul.f32 %v3471, %v3584
        %v3632 = vmul.f32 %v3472, %v3586
        %v3633 = vmul.f32 %v3473, %v3588
        %v3634 = vmul.f32 %v3474, %v3590
        %v3635 = vmul.f32 %v3475, %v3592
        %v3636 = vmul.f32 %v3476, %v3594
        %v3637 = vmul.f32 %v3477, %v3596
        %v3638 = vmul.f32 %v3478, %v3598
        %v3639 = vmul.f32 %v3479, %v3600
        %v3640 = vmul.f32 %v3480, %v3602
        %v3641 = vmul.f32 %v3481, %v3604
        %v3642 = vmul.f32 %v3482, %v3606
        %v3643 = vmul.f32 %v3483, %v3608
        %v3644 = vmul.f32 %v3484, %v3610
        %v3645 = vmul.f32 %v3485, %v3612
        %v3646 = vmul.f32 %v3486, %v3614
        %v3647 = vsub.f32 1.0, %v3615
        %v3648 = vsub.f32 1.0, %v3616
        %v3649 = vsub.f32 1.0, %v3617
        %v3650 = vsub.f32 1.0, %v3618
        %v3651 = vsub.f32 1.0, %v3619
        %v3652 = vsub.f32 1.0, %v3620
        %v3653 = vsub.f32 1.0, %v3621
        %v3654 = vsub.f32 1.0, %v3622
        %v3655 = vsub.f32 1.0, %v3623
        %v3656 = vsub.f32 1.0, %v3624
        %v3657 = vsub.f32 1.0, %v3625
        %v3658 = vsub.f32 1.0, %v3626
        %v3659 = vsub.f32 1.0, %v3627
        %v3660 = vsub.f32 1.0, %v3628
        %v3661 = vsub.f32 1.0, %v3629
        %v3662 = vsub.f32 1.0, %v3630
        %v3663 = vsub.f32 1.0, %v3631
        %v3664 = vsub.f32 1.0, %v3632
        %v3665 = vsub.f32 1.0, %v3633
        %v3666 = vsub.f32 1.0, %v3634
        %v3667 = vsub.f32 1.0, %v3635
        %v3668 = vsub.f32 1.0, %v3636
        %v3669 = vsub.f32 1.0, %v3637
        %v3670 = vsub.f32 1.0, %v3638
        %v3671 = vsub.f32 1.0, %v3639
        %v3672 = vsub.f32 1.0, %v3640
        %v3673 = vsub.f32 1.0, %v3641
        %v3674 = vsub.f32 1.0, %v3642
        %v3675 = vsub.f32 1.0, %v3643
        %v3676 = vsub.f32 1.0, %v3644
        %v3677 = vsub.f32 1.0, %v3645
        %v3678 = vsub.f32 1.0, %v3646
        %vm3679 = vcmp.lt.f32.partialorder %v3007, 0.0
        %vm3680 = vcmp.lt.f32.partialorder %v3008, 0.0
        %vm3681 = vcmp.lt.f32.partialorder %v3009, 0.0
        %vm3682 = vcmp.lt.f32.partialorder %v3010, 0.0
        %vm3683 = vcmp.lt.f32.partialorder %v3011, 0.0
        %vm3684 = vcmp.lt.f32.partialorder %v3012, 0.0
        %vm3685 = vcmp.lt.f32.partialorder %v3013, 0.0
        %vm3686 = vcmp.lt.f32.partialorder %v3014, 0.0
        %vm3687 = vcmp.lt.f32.partialorder %v3015, 0.0
        %vm3688 = vcmp.lt.f32.partialorder %v3016, 0.0
        %vm3689 = vcmp.lt.f32.partialorder %v3017, 0.0
        %vm3690 = vcmp.lt.f32.partialorder %v3018, 0.0
        %vm3691 = vcmp.lt.f32.partialorder %v3019, 0.0
        %vm3692 = vcmp.lt.f32.partialorder %v3020, 0.0
        %vm3693 = vcmp.lt.f32.partialorder %v3021, 0.0
        %vm3694 = vcmp.lt.f32.partialorder %v3022, 0.0
        %vm3695 = vcmp.lt.f32.partialorder %v3023, 0.0
        %vm3696 = vcmp.lt.f32.partialorder %v3024, 0.0
        %vm3697 = vcmp.lt.f32.partialorder %v3025, 0.0
        %vm3698 = vcmp.lt.f32.partialorder %v3026, 0.0
        %vm3699 = vcmp.lt.f32.partialorder %v3027, 0.0
        %vm3700 = vcmp.lt.f32.partialorder %v3028, 0.0
        %vm3701 = vcmp.lt.f32.partialorder %v3029, 0.0
        %vm3702 = vcmp.lt.f32.partialorder %v3030, 0.0
        %vm3703 = vcmp.lt.f32.partialorder %v3031, 0.0
        %vm3704 = vcmp.lt.f32.partialorder %v3032, 0.0
        %vm3705 = vcmp.lt.f32.partialorder %v3033, 0.0
        %vm3706 = vcmp.lt.f32.partialorder %v3034, 0.0
        %vm3707 = vcmp.lt.f32.partialorder %v3035, 0.0
        %vm3708 = vcmp.lt.f32.partialorder %v3036, 0.0
        %vm3709 = vcmp.lt.f32.partialorder %v3037, 0.0
        %vm3710 = vcmp.lt.f32.partialorder %v3038, 0.0
        %v3711 = vsub.f32 0.0, %v3647
        %v3712 = vsub.f32 0.0, %v3648
        %v3713 = vsub.f32 0.0, %v3649
        %v3714 = vsub.f32 0.0, %v3650
        %v3715 = vsub.f32 0.0, %v3651
        %v3716 = vsub.f32 0.0, %v3652
        %v3717 = vsub.f32 0.0, %v3653
        %v3718 = vsub.f32 0.0, %v3654
        %v3719 = vsub.f32 0.0, %v3655
        %v3720 = vsub.f32 0.0, %v3656
        %v3721 = vsub.f32 0.0, %v3657
        %v3722 = vsub.f32 0.0, %v3658
        %v3723 = vsub.f32 0.0, %v3659
        %v3724 = vsub.f32 0.0, %v3660
        %v3725 = vsub.f32 0.0, %v3661
        %v3726 = vsub.f32 0.0, %v3662
        %v3727 = vsub.f32 0.0, %v3663
        %v3728 = vsub.f32 0.0, %v3664
        %v3729 = vsub.f32 0.0, %v3665
        %v3730 = vsub.f32 0.0, %v3666
        %v3731 = vsub.f32 0.0, %v3667
        %v3732 = vsub.f32 0.0, %v3668
        %v3733 = vsub.f32 0.0, %v3669
        %v3734 = vsub.f32 0.0, %v3670
        %v3735 = vsub.f32 0.0, %v3671
        %v3736 = vsub.f32 0.0, %v3672
        %v3737 = vsub.f32 0.0, %v3673
        %v3738 = vsub.f32 0.0, %v3674
        %v3739 = vsub.f32 0.0, %v3675
        %v3740 = vsub.f32 0.0, %v3676
        %v3741 = vsub.f32 0.0, %v3677
        %v3742 = vsub.f32 0.0, %v3678
        %v3743 = vsel %vm3679, %v3711, %v3647
        %v3744 = vsel %vm3680, %v3712, %v3648
        %v3745 = vsel %vm3681, %v3713, %v3649
        %v3746 = vsel %vm3682, %v3714, %v3650
        %v3747 = vsel %vm3683, %v3715, %v3651
        %v3748 = vsel %vm3684, %v3716, %v3652
        %v3749 = vsel %vm3685, %v3717, %v3653
        %v3750 = vsel %vm3686, %v3718, %v3654
        %v3751 = vsel %vm3687, %v3719, %v3655
        %v3752 = vsel %vm3688, %v3720, %v3656
        %v3753 = vsel %vm3689, %v3721, %v3657
        %v3754 = vsel %vm3690, %v3722, %v3658
        %v3755 = vsel %vm3691, %v3723, %v3659
        %v3756 = vsel %vm3692, %v3724, %v3660
        %v3757 = vsel %vm3693, %v3725, %v3661
        %v3758 = vsel %vm3694, %v3726, %v3662
        %v3759 = vsel %vm3695, %v3727, %v3663
        %v3760 = vsel %vm3696, %v3728, %v3664
        %v3761 = vsel %vm3697, %v3729, %v3665
        %v3762 = vsel %vm3698, %v3730, %v3666
        %v3763 = vsel %vm3699, %v3731, %v3667
        %v3764 = vsel %vm3700, %v3732, %v3668
        %v3765 = vsel %vm3701, %v3733, %v3669
        %v3766 = vsel %vm3702, %v3734, %v3670
        %v3767 = vsel %vm3703, %v3735, %v3671
        %v3768 = vsel %vm3704, %v3736, %v3672
        %v3769 = vsel %vm3705, %v3737, %v3673
        %v3770 = vsel %vm3706, %v3738, %v3674
        %v3771 = vsel %vm3707, %v3739, %v3675
        %v3772 = vsel %vm3708, %v3740, %v3676
        %v3773 = vsel %vm3709, %v3741, %v3677
        %v3774 = vsel %vm3710, %v3742, %v3678
        %v3775 = vadd.f32 %v3743, 1.0
        %v3776 = vadd.f32 %v3744, 1.0
        %v3777 = vadd.f32 %v3745, 1.0
        %v3778 = vadd.f32 %v3746, 1.0
        %v3779 = vadd.f32 %v3747, 1.0
        %v3780 = vadd.f32 %v3748, 1.0
        %v3781 = vadd.f32 %v3749, 1.0
        %v3782 = vadd.f32 %v3750, 1.0
        %v3783 = vadd.f32 %v3751, 1.0
        %v3784 = vadd.f32 %v3752, 1.0
        %v3785 = vadd.f32 %v3753, 1.0
        %v3786 = vadd.f32 %v3754, 1.0
        %v3787 = vadd.f32 %v3755, 1.0
        %v3788 = vadd.f32 %v3756, 1.0
        %v3789 = vadd.f32 %v3757, 1.0
        %v3790 = vadd.f32 %v3758, 1.0
        %v3791 = vadd.f32 %v3759, 1.0
        %v3792 = vadd.f32 %v3760, 1.0
        %v3793 = vadd.f32 %v3761, 1.0
        %v3794 = vadd.f32 %v3762, 1.0
        %v3795 = vadd.f32 %v3763, 1.0
        %v3796 = vadd.f32 %v3764, 1.0
        %v3797 = vadd.f32 %v3765, 1.0
        %v3798 = vadd.f32 %v3766, 1.0
        %v3799 = vadd.f32 %v3767, 1.0
        %v3800 = vadd.f32 %v3768, 1.0
        %v3801 = vadd.f32 %v3769, 1.0
        %v3802 = vadd.f32 %v3770, 1.0
        %v3803 = vadd.f32 %v3771, 1.0
        %v3804 = vadd.f32 %v3772, 1.0
        %v3805 = vadd.f32 %v3773, 1.0
        %v3806 = vadd.f32 %v3774, 1.0
        %v3807 = vmul.f32 %v2975, %v3775
        %v3808 = vmul.f32 %v2976, %v3776
        %v3809 = vmul.f32 %v2977, %v3777
        %v3810 = vmul.f32 %v2978, %v3778
        %v3811 = vmul.f32 %v2979, %v3779
        %v3812 = vmul.f32 %v2980, %v3780
        %v3813 = vmul.f32 %v2981, %v3781
        %v3814 = vmul.f32 %v2982, %v3782
        %v3815 = vmul.f32 %v2983, %v3783
        %v3816 = vmul.f32 %v2984, %v3784
        %v3817 = vmul.f32 %v2985, %v3785
        %v3818 = vmul.f32 %v2986, %v3786
        %v3819 = vmul.f32 %v2987, %v3787
        %v3820 = vmul.f32 %v2988, %v3788
        %v3821 = vmul.f32 %v2989, %v3789
        %v3822 = vmul.f32 %v2990, %v3790
        %v3823 = vmul.f32 %v2991, %v3791
        %v3824 = vmul.f32 %v2992, %v3792
        %v3825 = vmul.f32 %v2993, %v3793
        %v3826 = vmul.f32 %v2994, %v3794
        %v3827 = vmul.f32 %v2995, %v3795
        %v3828 = vmul.f32 %v2996, %v3796
        %v3829 = vmul.f32 %v2997, %v3797
        %v3830 = vmul.f32 %v2998, %v3798
        %v3831 = vmul.f32 %v2999, %v3799
        %v3832 = vmul.f32 %v3000, %v3800
        %v3833 = vmul.f32 %v3001, %v3801
        %v3834 = vmul.f32 %v3002, %v3802
        %v3835 = vmul.f32 %v3003, %v3803
        %v3836 = vmul.f32 %v3004, %v3804
        %v3837 = vmul.f32 %v3005, %v3805
        %v3838 = vmul.f32 %v3006, %v3806
        %v3839 = vld [vmem:[#allocation7] sm:$0xff]
        %v3840 = vld [vmem:[#allocation7 + $0x8] sm:$0xff]
        %v3841 = vld [vmem:[#allocation7 + $0x10] sm:$0xff]
        %v3842 = vld [vmem:[#allocation7 + $0x18] sm:$0xff]
        %v3843 = vld [vmem:[#allocation7 + $0x20] sm:$0xff]
        %v3844 = vld [vmem:[#allocation7 + $0x28] sm:$0xff]
        %v3845 = vld [vmem:[#allocation7 + $0x30] sm:$0xff]
        %v3846 = vld [vmem:[#allocation7 + $0x38] sm:$0xff]
        %v3847 = vld [vmem:[#allocation7 + $0x40] sm:$0xff]
        %v3848 = vld [vmem:[#allocation7 + $0x48] sm:$0xff]
        %v3849 = vld [vmem:[#allocation7 + $0x50] sm:$0xff]
        %v3850 = vld [vmem:[#allocation7 + $0x58] sm:$0xff]
        %v3851 = vld [vmem:[#allocation7 + $0x60] sm:$0xff]
        %v3852 = vld [vmem:[#allocation7 + $0x68] sm:$0xff]
        %v3853 = vld [vmem:[#allocation7 + $0x70] sm:$0xff]
        %v3854 = vld [vmem:[#allocation7 + $0x78] sm:$0xff]
        %v3855 = vld [vmem:[#allocation7 + $0x80] sm:$0xff]
        %v3856 = vld [vmem:[#allocation7 + $0x88] sm:$0xff]
        %v3857 = vld [vmem:[#allocation7 + $0x90] sm:$0xff]
        %v3858 = vld [vmem:[#allocation7 + $0x98] sm:$0xff]
        %v3859 = vld [vmem:[#allocation7 + $0xa0] sm:$0xff]
        %v3860 = vld [vmem:[#allocation7 + $0xa8] sm:$0xff]
        %v3861 = vld [vmem:[#allocation7 + $0xb0] sm:$0xff]
        %v3862 = vld [vmem:[#allocation7 + $0xb8] sm:$0xff]
        %v3863 = vld [vmem:[#allocation7 + $0xc0] sm:$0xff]
        %v3864 = vld [vmem:[#allocation7 + $0xc8] sm:$0xff]
        %v3865 = vld [vmem:[#allocation7 + $0xd0] sm:$0xff]
        %v3866 = vld [vmem:[#allocation7 + $0xd8] sm:$0xff]
        %v3867 = vld [vmem:[#allocation7 + $0xe0] sm:$0xff]
        %v3868 = vld [vmem:[#allocation7 + $0xe8] sm:$0xff]
        %v3869 = vld [vmem:[#allocation7 + $0xf0] sm:$0xff]
        %v3870 = vld [vmem:[#allocation7 + $0xf8] sm:$0xff]
        %v3871 = vld [vmem:[#allocation7 + $0x100] sm:$0xff]
        %v3872 = vld [vmem:[#allocation7 + $0x108] sm:$0xff]
        %v3873 = vld [vmem:[#allocation7 + $0x110] sm:$0xff]
        %v3874 = vld [vmem:[#allocation7 + $0x118] sm:$0xff]
        %v3875 = vld [vmem:[#allocation7 + $0x120] sm:$0xff]
        %v3876 = vld [vmem:[#allocation7 + $0x128] sm:$0xff]
        %v3877 = vld [vmem:[#allocation7 + $0x130] sm:$0xff]
        %v3878 = vld [vmem:[#allocation7 + $0x138] sm:$0xff]
        %v3879 = vld [vmem:[#allocation7 + $0x140] sm:$0xff]
        %v3880 = vld [vmem:[#allocation7 + $0x148] sm:$0xff]
        %v3881 = vld [vmem:[#allocation7 + $0x150] sm:$0xff]
        %v3882 = vld [vmem:[#allocation7 + $0x158] sm:$0xff]
        %v3883 = vld [vmem:[#allocation7 + $0x160] sm:$0xff]
        %v3884 = vld [vmem:[#allocation7 + $0x168] sm:$0xff]
        %v3885 = vld [vmem:[#allocation7 + $0x170] sm:$0xff]
        %v3886 = vld [vmem:[#allocation7 + $0x178] sm:$0xff]
        %v3887 = vld [vmem:[#allocation7 + $0x180] sm:$0xff]
        %v3888 = vld [vmem:[#allocation7 + $0x188] sm:$0xff]
        %v3889 = vld [vmem:[#allocation7 + $0x190] sm:$0xff]
        %v3890 = vld [vmem:[#allocation7 + $0x198] sm:$0xff]
        %v3891 = vld [vmem:[#allocation7 + $0x1a0] sm:$0xff]
        %v3892 = vld [vmem:[#allocation7 + $0x1a8] sm:$0xff]
        %v3893 = vld [vmem:[#allocation7 + $0x1b0] sm:$0xff]
        %v3894 = vld [vmem:[#allocation7 + $0x1b8] sm:$0xff]
        %v3895 = vld [vmem:[#allocation7 + $0x1c0] sm:$0xff]
        %v3896 = vld [vmem:[#allocation7 + $0x1c8] sm:$0xff]
        %v3897 = vld [vmem:[#allocation7 + $0x1d0] sm:$0xff]
        %v3898 = vld [vmem:[#allocation7 + $0x1d8] sm:$0xff]
        %v3899 = vld [vmem:[#allocation7 + $0x1e0] sm:$0xff]
        %v3900 = vld [vmem:[#allocation7 + $0x1e8] sm:$0xff]
        %v3901 = vld [vmem:[#allocation7 + $0x1f0] sm:$0xff]
        %v3902 = vld [vmem:[#allocation7 + $0x1f8] sm:$0xff]
        %v3903 = vld [vmem:[%s6] sm:$0x1]
        %v3905 = vlaneseq
        %v3906 = vshrl.u32 %v3905, 7
        %v3907 = vsub.s32 0, %v3906
        %v3908 = vrot.slane %v3903, %v3907
        %3910 = vmatprep.subr.mxu0 0.0
        %v3911 = vand.u32 %v3839, 4294901760
        %3912 = vmatpush1.msra.mxu0 %v3911
        %3913 = vmatprep.subr.mxu0 0.0
        %v3914 = vand.u32 %v3840, 4294901760
        %3915 = vmatpush1.msra.mxu0 %v3914
        %3916 = vmatprep.subr.mxu0 0.0
        %v3917 = vand.u32 %v3841, 4294901760
        %3918 = vmatpush1.msra.mxu0 %v3917
        %3919 = vmatprep.subr.mxu0 0.0
        %v3920 = vand.u32 %v3842, 4294901760
        %3921 = vmatpush1.msra.mxu0 %v3920
        %3922 = vmatprep.subr.mxu0 0.0
        %v3923 = vand.u32 %v3843, 4294901760
        %3924 = vmatpush1.msra.mxu0 %v3923
        %3925 = vmatprep.subr.mxu0 0.0
        %v3926 = vand.u32 %v3844, 4294901760
        %3927 = vmatpush1.msra.mxu0 %v3926
        %3928 = vmatprep.subr.mxu0 0.0
        %v3929 = vand.u32 %v3845, 4294901760
        %3930 = vmatpush1.msra.mxu0 %v3929
        %3931 = vmatprep.subr.mxu0 0.0
        %v3932 = vand.u32 %v3846, 4294901760
        %3933 = vmatpush1.msra.mxu0 %v3932
        %3934 = vmatprep.subr.mxu0 0.0
        %v3935 = vand.u32 %v3847, 4294901760
        %3936 = vmatpush1.msra.mxu0 %v3935
        %3937 = vmatprep.subr.mxu0 0.0
        %v3938 = vand.u32 %v3848, 4294901760
        %3939 = vmatpush1.msra.mxu0 %v3938
        %3940 = vmatprep.subr.mxu0 0.0
        %v3941 = vand.u32 %v3849, 4294901760
        %3942 = vmatpush1.msra.mxu0 %v3941
        %3943 = vmatprep.subr.mxu0 0.0
        %v3944 = vand.u32 %v3850, 4294901760
        %3945 = vmatpush1.msra.mxu0 %v3944
        %3946 = vmatprep.subr.mxu0 0.0
        %v3947 = vand.u32 %v3851, 4294901760
        %3948 = vmatpush1.msra.mxu0 %v3947
        %3949 = vmatprep.subr.mxu0 0.0
        %v3950 = vand.u32 %v3852, 4294901760
        %3951 = vmatpush1.msra.mxu0 %v3950
        %3952 = vmatprep.subr.mxu0 0.0
        %v3953 = vand.u32 %v3853, 4294901760
        %3954 = vmatpush1.msra.mxu0 %v3953
        %3955 = vmatprep.subr.mxu0 0.0
        %v3956 = vand.u32 %v3854, 4294901760
        %3957 = vmatpush1.msra.mxu0 %v3956
        %3958 = vmatprep.subr.mxu0 0.0
        %v3959 = vand.u32 %v3855, 4294901760
        %3960 = vmatpush1.msra.mxu0 %v3959
        %3961 = vmatprep.subr.mxu0 0.0
        %v3962 = vand.u32 %v3856, 4294901760
        %3963 = vmatpush1.msra.mxu0 %v3962
        %3964 = vmatprep.subr.mxu0 0.0
        %v3965 = vand.u32 %v3857, 4294901760
        %3966 = vmatpush1.msra.mxu0 %v3965
        %3967 = vmatprep.subr.mxu0 0.0
        %v3968 = vand.u32 %v3858, 4294901760
        %3969 = vmatpush1.msra.mxu0 %v3968
        %3970 = vmatprep.subr.mxu0 0.0
        %v3971 = vand.u32 %v3859, 4294901760
        %3972 = vmatpush1.msra.mxu0 %v3971
        %3973 = vmatprep.subr.mxu0 0.0
        %v3974 = vand.u32 %v3860, 4294901760
        %3975 = vmatpush1.msra.mxu0 %v3974
        %3976 = vmatprep.subr.mxu0 0.0
        %v3977 = vand.u32 %v3861, 4294901760
        %3978 = vmatpush1.msra.mxu0 %v3977
        %3979 = vmatprep.subr.mxu0 0.0
        %v3980 = vand.u32 %v3862, 4294901760
        %3981 = vmatpush1.msra.mxu0 %v3980
        %3982 = vmatprep.subr.mxu0 0.0
        %v3983 = vand.u32 %v3863, 4294901760
        %3984 = vmatpush1.msra.mxu0 %v3983
        %3985 = vmatprep.subr.mxu0 0.0
        %v3986 = vand.u32 %v3864, 4294901760
        %3987 = vmatpush1.msra.mxu0 %v3986
        %3988 = vmatprep.subr.mxu0 0.0
        %v3989 = vand.u32 %v3865, 4294901760
        %3990 = vmatpush1.msra.mxu0 %v3989
        %3991 = vmatprep.subr.mxu0 0.0
        %v3992 = vand.u32 %v3866, 4294901760
        %3993 = vmatpush1.msra.mxu0 %v3992
        %3994 = vmatprep.subr.mxu0 0.0
        %v3995 = vand.u32 %v3867, 4294901760
        %3996 = vmatpush1.msra.mxu0 %v3995
        %3997 = vmatprep.subr.mxu0 0.0
        %v3998 = vand.u32 %v3868, 4294901760
        %3999 = vmatpush1.msra.mxu0 %v3998
        %4000 = vmatprep.subr.mxu0 0.0
        %v4001 = vand.u32 %v3869, 4294901760
        %4002 = vmatpush1.msra.mxu0 %v4001
        %4003 = vmatprep.subr.mxu0 0.0
        %v4004 = vand.u32 %v3870, 4294901760
        %4005 = vmatpush1.msra.mxu0 %v4004
        %v4006 = vand.u32 %v3808, 4294901760
        %v4007 = vsub.f32 %v3808, %v4006
        %v4008 = vand.u32 %v4007, 4294901760
        %v4009 = vsub.f32 %v4007, %v4008
        %v4010 = vand.u32 %v4009, 4294901760
        %4011 = vmatprep.mubr.f32.mxu0 %v4010
        %v4012 = vand.u32 %v3807, 4294901760
        %v4013 = vsub.f32 %v3807, %v4012
        %v4014 = vand.u32 %v4013, 4294901760
        %v4015 = vsub.f32 %v4013, %v4014
        %v4016 = vand.u32 %v4015, 4294901760
        %4017 = vmatmul.mubr.f32.gmra.mrb[0].mxu0 %v4016
        %v4018 = vpop.f32.mrb[0].mxu0
        %v4019 = vadd.f32 %v3908, %v4018
        %v4020 = vpop.f32.mrb[0].mxu0
        %v4021 = vand.u32 %v3812, 4294901760
        %v4022 = vsub.f32 %v3812, %v4021
        %v4023 = vand.u32 %v4022, 4294901760
        %v4024 = vsub.f32 %v4022, %v4023
        %v4025 = vand.u32 %v4024, 4294901760
        %4026 = vmatprep.mubr.f32.mxu0 %v4025
        %v4027 = vand.u32 %v3811, 4294901760
        %v4028 = vsub.f32 %v3811, %v4027
        %v4029 = vand.u32 %v4028, 4294901760
        %v4030 = vsub.f32 %v4028, %v4029
        %v4031 = vand.u32 %v4030, 4294901760
        %4032 = vmatmul.mubr.f32.gmra.mrb[0].mxu0 %v4031
        %v4033 = vpop.f32.mrb[0].mxu0
        %v4034 = vadd.f32 %v3908, %v4033
        %v4035 = vpop.f32.mrb[0].mxu0
        %v4036 = vand.u32 %v3816, 4294901760
        %v4037 = vsub.f32 %v3816, %v4036
        %v4038 = vand.u32 %v4037, 4294901760
        %v4039 = vsub.f32 %v4037, %v4038
        %v4040 = vand.u32 %v4039, 4294901760
        %4041 = vmatprep.mubr.f32.mxu0 %v4040
        %v4042 = vand.u32 %v3815, 4294901760
        %v4043 = vsub.f32 %v3815, %v4042
        %v4044 = vand.u32 %v4043, 4294901760
        %v4045 = vsub.f32 %v4043, %v4044
        %v4046 = vand.u32 %v4045, 4294901760
        %4047 = vmatmul.mubr.f32.gmra.mrb[0].mxu0 %v4046
        %v4048 = vpop.f32.mrb[0].mxu0
        %v4049 = vadd.f32 %v3908, %v4048
        %v4050 = vpop.f32.mrb[0].mxu0
        %v4051 = vand.u32 %v3820, 4294901760
        %v4052 = vsub.f32 %v3820, %v4051
        %v4053 = vand.u32 %v4052, 4294901760
        %v4054 = vsub.f32 %v4052, %v4053
        %v4055 = vand.u32 %v4054, 4294901760
        %4056 = vmatprep.mubr.f32.mxu0 %v4055
        %v4057 = vand.u32 %v3819, 4294901760
        %v4058 = vsub.f32 %v3819, %v4057
        %v4059 = vand.u32 %v4058, 4294901760
        %v4060 = vsub.f32 %v4058, %v4059
        %v4061 = vand.u32 %v4060, 4294901760
        %4062 = vmatmul.mubr.f32.gmra.mrb[0].mxu0 %v4061
        %v4063 = vpop.f32.mrb[0].mxu0
        %v4064 = vadd.f32 %v3908, %v4063
        %v4065 = vpop.f32.mrb[0].mxu0
        %v4066 = vand.u32 %v3824, 4294901760
        %v4067 = vsub.f32 %v3824, %v4066
        %v4068 = vand.u32 %v4067, 4294901760
        %v4069 = vsub.f32 %v4067, %v4068
        %v4070 = vand.u32 %v4069, 4294901760
        %4071 = vmatprep.mubr.f32.mxu0 %v4070
        %v4072 = vand.u32 %v3823, 4294901760
        %v4073 = vsub.f32 %v3823, %v4072
        %v4074 = vand.u32 %v4073, 4294901760
        %v4075 = vsub.f32 %v4073, %v4074
        %v4076 = vand.u32 %v4075, 4294901760
        %4077 = vmatmul.mubr.f32.gmra.mrb[0].mxu0 %v4076
        %v4078 = vpop.f32.mrb[0].mxu0
        %v4079 = vadd.f32 %v3908, %v4078
        %v4080 = vpop.f32.mrb[0].mxu0
        %v4081 = vand.u32 %v3828, 4294901760
        %v4082 = vsub.f32 %v3828, %v4081
        %v4083 = vand.u32 %v4082, 4294901760
        %v4084 = vsub.f32 %v4082, %v4083
        %v4085 = vand.u32 %v4084, 4294901760
        %4086 = vmatprep.mubr.f32.mxu0 %v4085
        %v4087 = vand.u32 %v3827, 4294901760
        %v4088 = vsub.f32 %v3827, %v4087
        %v4089 = vand.u32 %v4088, 4294901760
        %v4090 = vsub.f32 %v4088, %v4089
        %v4091 = vand.u32 %v4090, 4294901760
        %4092 = vmatmul.mubr.f32.gmra.mrb[0].mxu0 %v4091
        %v4093 = vpop.f32.mrb[0].mxu0
        %v4094 = vadd.f32 %v3908, %v4093
        %v4095 = vpop.f32.mrb[0].mxu0
        %v4096 = vand.u32 %v3832, 4294901760
        %v4097 = vsub.f32 %v3832, %v4096
        %v4098 = vand.u32 %v4097, 4294901760
        %v4099 = vsub.f32 %v4097, %v4098
        %v4100 = vand.u32 %v4099, 4294901760
        %4101 = vmatprep.mubr.f32.mxu0 %v4100
        %v4102 = vand.u32 %v3831, 4294901760
        %v4103 = vsub.f32 %v3831, %v4102
        %v4104 = vand.u32 %v4103, 4294901760
        %v4105 = vsub.f32 %v4103, %v4104
        %v4106 = vand.u32 %v4105, 4294901760
        %4107 = vmatmul.mubr.f32.gmra.mrb[0].mxu0 %v4106
        %v4108 = vpop.f32.mrb[0].mxu0
        %v4109 = vadd.f32 %v3908, %v4108
        %v4110 = vpop.f32.mrb[0].mxu0
        %v4111 = vand.u32 %v3836, 4294901760
        %v4112 = vsub.f32 %v3836, %v4111
        %v4113 = vand.u32 %v4112, 4294901760
        %v4114 = vsub.f32 %v4112, %v4113
        %v4115 = vand.u32 %v4114, 4294901760
        %4116 = vmatprep.mubr.f32.mxu0 %v4115
        %v4117 = vand.u32 %v3835, 4294901760
        %v4118 = vsub.f32 %v3835, %v4117
        %v4119 = vand.u32 %v4118, 4294901760
        %v4120 = vsub.f32 %v4118, %v4119
        %v4121 = vand.u32 %v4120, 4294901760
        %4122 = vmatmul.mubr.f32.gmra.mrb[0].mxu0 %v4121
        %v4123 = vpop.f32.mrb[0].mxu0
        %v4124 = vadd.f32 %v3908, %v4123
        %v4125 = vpop.f32.mrb[0].mxu0
        %4126 = vdwg.mxu0
        %4127 = vmatprep.subr.mxu0 0.0
        %v4128 = vand.u32 %v3839, 4294901760
        %v4129 = vsub.f32 %v3839, %v4128
        %v4130 = vand.u32 %v4129, 4294901760
        %v4131 = vsub.f32 %v4129, %v4130
        %v4132 = vand.u32 %v4131, 4294901760
        %4133 = vmatpush1.msra.mxu0 %v4132
        %4134 = vmatprep.subr.mxu0 0.0
        %v4135 = vand.u32 %v3840, 4294901760
        %v4136 = vsub.f32 %v3840, %v4135
        %v4137 = vand.u32 %v4136, 4294901760
        %v4138 = vsub.f32 %v4136, %v4137
        %v4139 = vand.u32 %v4138, 4294901760
        %4140 = vmatpush1.msra.mxu0 %v4139
        %4141 = vmatprep.subr.mxu0 0.0
        %v4142 = vand.u32 %v3841, 4294901760
        %v4143 = vsub.f32 %v3841, %v4142
        %v4144 = vand.u32 %v4143, 4294901760
        %v4145 = vsub.f32 %v4143, %v4144
        %v4146 = vand.u32 %v4145, 4294901760
        %4147 = vmatpush1.msra.mxu0 %v4146
        %4148 = vmatprep.subr.mxu0 0.0
        %v4149 = vand.u32 %v3842, 4294901760
        %v4150 = vsub.f32 %v3842, %v4149
        %v4151 = vand.u32 %v4150, 4294901760
        %v4152 = vsub.f32 %v4150, %v4151
        %v4153 = vand.u32 %v4152, 4294901760
        %4154 = vmatpush1.msra.mxu0 %v4153
        %4155 = vmatprep.subr.mxu0 0.0
        %v4156 = vand.u32 %v3843, 4294901760
        %v4157 = vsub.f32 %v3843, %v4156
        %v4158 = vand.u32 %v4157, 4294901760
        %v4159 = vsub.f32 %v4157, %v4158
        %v4160 = vand.u32 %v4159, 4294901760
        %4161 = vmatpush1.msra.mxu0 %v4160
        %4162 = vmatprep.subr.mxu0 0.0
        %v4163 = vand.u32 %v3844, 4294901760
        %v4164 = vsub.f32 %v3844, %v4163
        %v4165 = vand.u32 %v4164, 4294901760
        %v4166 = vsub.f32 %v4164, %v4165
        %v4167 = vand.u32 %v4166, 4294901760
        %4168 = vmatpush1.msra.mxu0 %v4167
        %4169 = vmatprep.subr.mxu0 0.0
        %v4170 = vand.u32 %v3845, 4294901760
        %v4171 = vsub.f32 %v3845, %v4170
        %v4172 = vand.u32 %v4171, 4294901760
        %v4173 = vsub.f32 %v4171, %v4172
        %v4174 = vand.u32 %v4173, 4294901760
        %4175 = vmatpush1.msra.mxu0 %v4174
        %4176 = vmatprep.subr.mxu0 0.0
        %v4177 = vand.u32 %v3846, 4294901760
        %v4178 = vsub.f32 %v3846, %v4177
        %v4179 = vand.u32 %v4178, 4294901760
        %v4180 = vsub.f32 %v4178, %v4179
        %v4181 = vand.u32 %v4180, 4294901760
        %4182 = vmatpush1.msra.mxu0 %v4181
        %4183 = vmatprep.subr.mxu0 0.0
        %v4184 = vand.u32 %v3847, 4294901760
        %v4185 = vsub.f32 %v3847, %v4184
        %v4186 = vand.u32 %v4185, 4294901760
        %v4187 = vsub.f32 %v4185, %v4186
        %v4188 = vand.u32 %v4187, 4294901760
        %4189 = vmatpush1.msra.mxu0 %v4188
        %4190 = vmatprep.subr.mxu0 0.0
        %v4191 = vand.u32 %v3848, 4294901760
        %v4192 = vsub.f32 %v3848, %v4191
        %v4193 = vand.u32 %v4192, 4294901760
        %v4194 = vsub.f32 %v4192, %v4193
        %v4195 = vand.u32 %v4194, 4294901760
        %4196 = vmatpush1.msra.mxu0 %v4195
        %4197 = vmatprep.subr.mxu0 0.0
        %v4198 = vand.u32 %v3849, 4294901760
        %v4199 = vsub.f32 %v3849, %v4198
        %v4200 = vand.u32 %v4199, 4294901760
        %v4201 = vsub.f32 %v4199, %v4200
        %v4202 = vand.u32 %v4201, 4294901760
        %4203 = vmatpush1.msra.mxu0 %v4202
        %4204 = vmatprep.subr.mxu0 0.0
        %v4205 = vand.u32 %v3850, 4294901760
        %v4206 = vsub.f32 %v3850, %v4205
        %v4207 = vand.u32 %v4206, 4294901760
        %v4208 = vsub.f32 %v4206, %v4207
        %v4209 = vand.u32 %v4208, 4294901760
        %4210 = vmatpush1.msra.mxu0 %v4209
        %4211 = vmatprep.subr.mxu0 0.0
        %v4212 = vand.u32 %v3851, 4294901760
        %v4213 = vsub.f32 %v3851, %v4212
        %v4214 = vand.u32 %v4213, 4294901760
        %v4215 = vsub.f32 %v4213, %v4214
        %v4216 = vand.u32 %v4215, 4294901760
        %4217 = vmatpush1.msra.mxu0 %v4216
        %4218 = vmatprep.subr.mxu0 0.0
        %v4219 = vand.u32 %v3852, 4294901760
        %v4220 = vsub.f32 %v3852, %v4219
        %v4221 = vand.u32 %v4220, 4294901760
        %v4222 = vsub.f32 %v4220, %v4221
        %v4223 = vand.u32 %v4222, 4294901760
        %4224 = vmatpush1.msra.mxu0 %v4223
        %4225 = vmatprep.subr.mxu0 0.0
        %v4226 = vand.u32 %v3853, 4294901760
        %v4227 = vsub.f32 %v3853, %v4226
        %v4228 = vand.u32 %v4227, 4294901760
        %v4229 = vsub.f32 %v4227, %v4228
        %v4230 = vand.u32 %v4229, 4294901760
        %4231 = vmatpush1.msra.mxu0 %v4230
        %4232 = vmatprep.subr.mxu0 0.0
        %v4233 = vand.u32 %v3854, 4294901760
        %v4234 = vsub.f32 %v3854, %v4233
        %v4235 = vand.u32 %v4234, 4294901760
        %v4236 = vsub.f32 %v4234, %v4235
        %v4237 = vand.u32 %v4236, 4294901760
        %4238 = vmatpush1.msra.mxu0 %v4237
        %4239 = vmatprep.subr.mxu0 0.0
        %v4240 = vand.u32 %v3855, 4294901760
        %v4241 = vsub.f32 %v3855, %v4240
        %v4242 = vand.u32 %v4241, 4294901760
        %v4243 = vsub.f32 %v4241, %v4242
        %v4244 = vand.u32 %v4243, 4294901760
        %4245 = vmatpush1.msra.mxu0 %v4244
        %4246 = vmatprep.subr.mxu0 0.0
        %v4247 = vand.u32 %v3856, 4294901760
        %v4248 = vsub.f32 %v3856, %v4247
        %v4249 = vand.u32 %v4248, 4294901760
        %v4250 = vsub.f32 %v4248, %v4249
        %v4251 = vand.u32 %v4250, 4294901760
        %4252 = vmatpush1.msra.mxu0 %v4251
        %4253 = vmatprep.subr.mxu0 0.0
        %v4254 = vand.u32 %v3857, 4294901760
        %v4255 = vsub.f32 %v3857, %v4254
        %v4256 = vand.u32 %v4255, 4294901760
        %v4257 = vsub.f32 %v4255, %v4256
        %v4258 = vand.u32 %v4257, 4294901760
        %4259 = vmatpush1.msra.mxu0 %v4258
        %4260 = vmatprep.subr.mxu0 0.0
        %v4261 = vand.u32 %v3858, 4294901760
        %v4262 = vsub.f32 %v3858, %v4261
        %v4263 = vand.u32 %v4262, 4294901760
        %v4264 = vsub.f32 %v4262, %v4263
        %v4265 = vand.u32 %v4264, 4294901760
        %4266 = vmatpush1.msra.mxu0 %v4265
        %4267 = vmatprep.subr.mxu0 0.0
        %v4268 = vand.u32 %v3859, 4294901760
        %v4269 = vsub.f32 %v3859, %v4268
        %v4270 = vand.u32 %v4269, 4294901760
        %v4271 = vsub.f32 %v4269, %v4270
        %v4272 = vand.u32 %v4271, 4294901760
        %4273 = vmatpush1.msra.mxu0 %v4272
        %4274 = vmatprep.subr.mxu0 0.0
        %v4275 = vand.u32 %v3860, 4294901760
        %v4276 = vsub.f32 %v3860, %v4275
        %v4277 = vand.u32 %v4276, 4294901760
        %v4278 = vsub.f32 %v4276, %v4277
        %v4279 = vand.u32 %v4278, 4294901760
        %4280 = vmatpush1.msra.mxu0 %v4279
        %4281 = vmatprep.subr.mxu0 0.0
        %v4282 = vand.u32 %v3861, 4294901760
        %v4283 = vsub.f32 %v3861, %v4282
        %v4284 = vand.u32 %v4283, 4294901760
        %v4285 = vsub.f32 %v4283, %v4284
        %v4286 = vand.u32 %v4285, 4294901760
        %4287 = vmatpush1.msra.mxu0 %v4286
        %4288 = vmatprep.subr.mxu0 0.0
        %v4289 = vand.u32 %v3862, 4294901760
        %v4290 = vsub.f32 %v3862, %v4289
        %v4291 = vand.u32 %v4290, 4294901760
        %v4292 = vsub.f32 %v4290, %v4291
        %v4293 = vand.u32 %v4292, 4294901760
        %4294 = vmatpush1.msra.mxu0 %v4293
        %4295 = vmatprep.subr.mxu0 0.0
        %v4296 = vand.u32 %v3863, 4294901760
        %v4297 = vsub.f32 %v3863, %v4296
        %v4298 = vand.u32 %v4297, 4294901760
        %v4299 = vsub.f32 %v4297, %v4298
        %v4300 = vand.u32 %v4299, 4294901760
        %4301 = vmatpush1.msra.mxu0 %v4300
        %4302 = vmatprep.subr.mxu0 0.0
        %v4303 = vand.u32 %v3864, 4294901760
        %v4304 = vsub.f32 %v3864, %v4303
        %v4305 = vand.u32 %v4304, 4294901760
        %v4306 = vsub.f32 %v4304, %v4305
        %v4307 = vand.u32 %v4306, 4294901760
        %4308 = vmatpush1.msra.mxu0 %v4307
        %4309 = vmatprep.subr.mxu0 0.0
        %v4310 = vand.u32 %v3865, 4294901760
        %v4311 = vsub.f32 %v3865, %v4310
        %v4312 = vand.u32 %v4311, 4294901760
        %v4313 = vsub.f32 %v4311, %v4312
        %v4314 = vand.u32 %v4313, 4294901760
        %4315 = vmatpush1.msra.mxu0 %v4314
        %4316 = vmatprep.subr.mxu0 0.0
        %v4317 = vand.u32 %v3866, 4294901760
        %v4318 = vsub.f32 %v3866, %v4317
        %v4319 = vand.u32 %v4318, 4294901760
        %v4320 = vsub.f32 %v4318, %v4319
        %v4321 = vand.u32 %v4320, 4294901760
        %4322 = vmatpush1.msra.mxu0 %v4321
        %4323 = vmatprep.subr.mxu0 0.0
        %v4324 = vand.u32 %v3867, 4294901760
        %v4325 = vsub.f32 %v3867, %v4324
        %v4326 = vand.u32 %v4325, 4294901760
        %v4327 = vsub.f32 %v4325, %v4326
        %v4328 = vand.u32 %v4327, 4294901760
        %4329 = vmatpush1.msra.mxu0 %v4328
        %4330 = vmatprep.subr.mxu0 0.0
        %v4331 = vand.u32 %v3868, 4294901760
        %v4332 = vsub.f32 %v3868, %v4331
        %v4333 = vand.u32 %v4332, 4294901760
        %v4334 = vsub.f32 %v4332, %v4333
        %v4335 = vand.u32 %v4334, 4294901760
        %4336 = vmatpush1.msra.mxu0 %v4335
        %4337 = vmatprep.subr.mxu0 0.0
        %v4338 = vand.u32 %v3869, 4294901760
        %v4339 = vsub.f32 %v3869, %v4338
        %v4340 = vand.u32 %v4339, 4294901760
        %v4341 = vsub.f32 %v4339, %v4340
        %v4342 = vand.u32 %v4341, 4294901760
        %4343 = vmatpush1.msra.mxu0 %v4342
        %4344 = vmatprep.subr.mxu0 0.0
        %v4345 = vand.u32 %v3870, 4294901760
        %v4346 = vsub.f32 %v3870, %v4345
        %v4347 = vand.u32 %v4346, 4294901760
        %v4348 = vsub.f32 %v4346, %v4347
        %v4349 = vand.u32 %v4348, 4294901760
        %4350 = vmatpush1.msra.mxu0 %v4349
        %v4351 = vand.u32 %v3808, 4294901760
        %4352 = vmatprep.mubr.f32.mxu0 %v4351
        %v4353 = vand.u32 %v3807, 4294901760
        %4354 = vmatmul.mubr.f32.gmra.mrb[0].mxu0 %v4353
        %v4355 = vpop.f32.mrb[0].mxu0
        %v4356 = vadd.f32 %v4019, %v4355
        %v4357 = vpop.f32.mrb[0].mxu0
        %v4358 = vand.u32 %v3812, 4294901760
        %4359 = vmatprep.mubr.f32.mxu0 %v4358
        %v4360 = vand.u32 %v3811, 4294901760
        %4361 = vmatmul.mubr.f32.gmra.mrb[0].mxu0 %v4360
        %v4362 = vpop.f32.mrb[0].mxu0
        %v4363 = vadd.f32 %v4034, %v4362
        %v4364 = vpop.f32.mrb[0].mxu0
        %v4365 = vand.u32 %v3816, 4294901760
        %4366 = vmatprep.mubr.f32.mxu0 %v4365
        %v4367 = vand.u32 %v3815, 4294901760
        %4368 = vmatmul.mubr.f32.gmra.mrb[0].mxu0 %v4367
        %v4369 = vpop.f32.mrb[0].mxu0
        %v4370 = vadd.f32 %v4049, %v4369
        %v4371 = vpop.f32.mrb[0].mxu0
        %v4372 = vand.u32 %v3820, 4294901760
        %4373 = vmatprep.mubr.f32.mxu0 %v4372
        %v4374 = vand.u32 %v3819, 4294901760
        %4375 = vmatmul.mubr.f32.gmra.mrb[0].mxu0 %v4374
        %v4376 = vpop.f32.mrb[0].mxu0
        %v4377 = vadd.f32 %v4064, %v4376
        %v4378 = vpop.f32.mrb[0].mxu0
        %v4379 = vand.u32 %v3824, 4294901760
        %4380 = vmatprep.mubr.f32.mxu0 %v4379
        %v4381 = vand.u32 %v3823, 4294901760
        %4382 = vmatmul.mubr.f32.gmra.mrb[0].mxu0 %v4381
        %v4383 = vpop.f32.mrb[0].mxu0
        %v4384 = vadd.f32 %v4079, %v4383
        %v4385 = vpop.f32.mrb[0].mxu0
        %v4386 = vand.u32 %v3828, 4294901760
        %4387 = vmatprep.mubr.f32.mxu0 %v4386
        %v4388 = vand.u32 %v3827, 4294901760
        %4389 = vmatmul.mubr.f32.gmra.mrb[0].mxu0 %v4388
        %v4390 = vpop.f32.mrb[0].mxu0
        %v4391 = vadd.f32 %v4094, %v4390
        %v4392 = vpop.f32.mrb[0].mxu0
        %v4393 = vand.u32 %v3832, 4294901760
        %4394 = vmatprep.mubr.f32.mxu0 %v4393
        %v4395 = vand.u32 %v3831, 4294901760
        %4396 = vmatmul.mubr.f32.gmra.mrb[0].mxu0 %v4395
        %v4397 = vpop.f32.mrb[0].mxu0
        %v4398 = vadd.f32 %v4109, %v4397
        %v4399 = vpop.f32.mrb[0].mxu0
        %v4400 = vand.u32 %v3836, 4294901760
        %4401 = vmatprep.mubr.f32.mxu0 %v4400
        %v4402 = vand.u32 %v3835, 4294901760
        %4403 = vmatmul.mubr.f32.gmra.mrb[0].mxu0 %v4402
        %v4404 = vpop.f32.mrb[0].mxu0
        %v4405 = vadd.f32 %v4124, %v4404
        %v4406 = vpop.f32.mrb[0].mxu0
        %4407 = vdwg.mxu0
        %4408 = vmatprep.subr.mxu0 0.0
        %v4409 = vand.u32 %v3839, 4294901760
        %v4410 = vsub.f32 %v3839, %v4409
        %4411 = vmatpush1.msra.mxu0 %v4410
        %4412 = vmatprep.subr.mxu0 0.0
        %v4413 = vand.u32 %v3840, 4294901760
        %v4414 = vsub.f32 %v3840, %v4413
        %4415 = vmatpush1.msra.mxu0 %v4414
        %4416 = vmatprep.subr.mxu0 0.0
        %v4417 = vand.u32 %v3841, 4294901760
        %v4418 = vsub.f32 %v3841, %v4417
        %4419 = vmatpush1.msra.mxu0 %v4418
        %4420 = vmatprep.subr.mxu0 0.0
        %v4421 = vand.u32 %v3842, 4294901760
        %v4422 = vsub.f32 %v3842, %v4421
        %4423 = vmatpush1.msra.mxu0 %v4422
        %4424 = vmatprep.subr.mxu0 0.0
        %v4425 = vand.u32 %v3843, 4294901760
        %v4426 = vsub.f32 %v3843, %v4425
        %4427 = vmatpush1.msra.mxu0 %v4426
        %4428 = vmatprep.subr.mxu0 0.0
        %v4429 = vand.u32 %v3844, 4294901760
        %v4430 = vsub.f32 %v3844, %v4429
        %4431 = vmatpush1.msra.mxu0 %v4430
        %4432 = vmatprep.subr.mxu0 0.0
        %v4433 = vand.u32 %v3845, 4294901760
        %v4434 = vsub.f32 %v3845, %v4433
        %4435 = vmatpush1.msra.mxu0 %v4434
        %4436 = vmatprep.subr.mxu0 0.0
        %v4437 = vand.u32 %v3846, 4294901760
        %v4438 = vsub.f32 %v3846, %v4437
        %4439 = vmatpush1.msra.mxu0 %v4438
        %4440 = vmatprep.subr.mxu0 0.0
        %v4441 = vand.u32 %v3847, 4294901760
        %v4442 = vsub.f32 %v3847, %v4441
        %4443 = vmatpush1.msra.mxu0 %v4442
        %4444 = vmatprep.subr.mxu0 0.0
        %v4445 = vand.u32 %v3848, 4294901760
        %v4446 = vsub.f32 %v3848, %v4445
        %4447 = vmatpush1.msra.mxu0 %v4446
        %4448 = vmatprep.subr.mxu0 0.0
        %v4449 = vand.u32 %v3849, 4294901760
        %v4450 = vsub.f32 %v3849, %v4449
        %4451 = vmatpush1.msra.mxu0 %v4450
        %4452 = vmatprep.subr.mxu0 0.0
        %v4453 = vand.u32 %v3850, 4294901760
        %v4454 = vsub.f32 %v3850, %v4453
        %4455 = vmatpush1.msra.mxu0 %v4454
        %4456 = vmatprep.subr.mxu0 0.0
        %v4457 = vand.u32 %v3851, 4294901760
        %v4458 = vsub.f32 %v3851, %v4457
        %4459 = vmatpush1.msra.mxu0 %v4458
        %4460 = vmatprep.subr.mxu0 0.0
        %v4461 = vand.u32 %v3852, 4294901760
        %v4462 = vsub.f32 %v3852, %v4461
        %4463 = vmatpush1.msra.mxu0 %v4462
        %4464 = vmatprep.subr.mxu0 0.0
        %v4465 = vand.u32 %v3853, 4294901760
        %v4466 = vsub.f32 %v3853, %v4465
        %4467 = vmatpush1.msra.mxu0 %v4466
        %4468 = vmatprep.subr.mxu0 0.0
        %v4469 = vand.u32 %v3854, 4294901760
        %v4470 = vsub.f32 %v3854, %v4469
        %4471 = vmatpush1.msra.mxu0 %v4470
        %4472 = vmatprep.subr.mxu0 0.0
        %v4473 = vand.u32 %v3855, 4294901760
        %v4474 = vsub.f32 %v3855, %v4473
        %4475 = vmatpush1.msra.mxu0 %v4474
        %4476 = vmatprep.subr.mxu0 0.0
        %v4477 = vand.u32 %v3856, 4294901760
        %v4478 = vsub.f32 %v3856, %v4477
        %4479 = vmatpush1.msra.mxu0 %v4478
        %4480 = vmatprep.subr.mxu0 0.0
        %v4481 = vand.u32 %v3857, 4294901760
        %v4482 = vsub.f32 %v3857, %v4481
        %4483 = vmatpush1.msra.mxu0 %v4482
        %4484 = vmatprep.subr.mxu0 0.0
        %v4485 = vand.u32 %v3858, 4294901760
        %v4486 = vsub.f32 %v3858, %v4485
        %4487 = vmatpush1.msra.mxu0 %v4486
        %4488 = vmatprep.subr.mxu0 0.0
        %v4489 = vand.u32 %v3859, 4294901760
        %v4490 = vsub.f32 %v3859, %v4489
        %4491 = vmatpush1.msra.mxu0 %v4490
        %4492 = vmatprep.subr.mxu0 0.0
        %v4493 = vand.u32 %v3860, 4294901760
        %v4494 = vsub.f32 %v3860, %v4493
        %4495 = vmatpush1.msra.mxu0 %v4494
        %4496 = vmatprep.subr.mxu0 0.0
        %v4497 = vand.u32 %v3861, 4294901760
        %v4498 = vsub.f32 %v3861, %v4497
        %4499 = vmatpush1.msra.mxu0 %v4498
        %4500 = vmatprep.subr.mxu0 0.0
        %v4501 = vand.u32 %v3862, 4294901760
        %v4502 = vsub.f32 %v3862, %v4501
        %4503 = vmatpush1.msra.mxu0 %v4502
        %4504 = vmatprep.subr.mxu0 0.0
        %v4505 = vand.u32 %v3863, 4294901760
        %v4506 = vsub.f32 %v3863, %v4505
        %4507 = vmatpush1.msra.mxu0 %v4506
        %4508 = vmatprep.subr.mxu0 0.0
        %v4509 = vand.u32 %v3864, 4294901760
        %v4510 = vsub.f32 %v3864, %v4509
        %4511 = vmatpush1.msra.mxu0 %v4510
        %4512 = vmatprep.subr.mxu0 0.0
        %v4513 = vand.u32 %v3865, 4294901760
        %v4514 = vsub.f32 %v3865, %v4513
        %4515 = vmatpush1.msra.mxu0 %v4514
        %4516 = vmatprep.subr.mxu0 0.0
        %v4517 = vand.u32 %v3866, 4294901760
        %v4518 = vsub.f32 %v3866, %v4517
        %4519 = vmatpush1.msra.mxu0 %v4518
        %4520 = vmatprep.subr.mxu0 0.0
        %v4521 = vand.u32 %v3867, 4294901760
        %v4522 = vsub.f32 %v3867, %v4521
        %4523 = vmatpush1.msra.mxu0 %v4522
        %4524 = vmatprep.subr.mxu0 0.0
        %v4525 = vand.u32 %v3868, 4294901760
        %v4526 = vsub.f32 %v3868, %v4525
        %4527 = vmatpush1.msra.mxu0 %v4526
        %4528 = vmatprep.subr.mxu0 0.0
        %v4529 = vand.u32 %v3869, 4294901760
        %v4530 = vsub.f32 %v3869, %v4529
        %4531 = vmatpush1.msra.mxu0 %v4530
        %4532 = vmatprep.subr.mxu0 0.0
        %v4533 = vand.u32 %v3870, 4294901760
        %v4534 = vsub.f32 %v3870, %v4533
        %4535 = vmatpush1.msra.mxu0 %v4534
        %v4536 = vand.u32 %v3808, 4294901760
        %v4537 = vsub.f32 %v3808, %v4536
        %4538 = vmatprep.mubr.f32.mxu0 %v4537
        %v4539 = vand.u32 %v3807, 4294901760
        %v4540 = vsub.f32 %v3807, %v4539
        %4541 = vmatmul.mubr.f32.gmra.mrb[0].mxu0 %v4540
        %v4542 = vpop.f32.mrb[0].mxu0
        %v4543 = vadd.f32 %v4356, %v4542
        %v4544 = vpop.f32.mrb[0].mxu0
        %v4545 = vand.u32 %v3812, 4294901760
        %v4546 = vsub.f32 %v3812, %v4545
        %4547 = vmatprep.mubr.f32.mxu0 %v4546
        %v4548 = vand.u32 %v3811, 4294901760
        %v4549 = vsub.f32 %v3811, %v4548
        %4550 = vmatmul.mubr.f32.gmra.mrb[0].mxu0 %v4549
        %v4551 = vpop.f32.mrb[0].mxu0
        %v4552 = vadd.f32 %v4363, %v4551
        %v4553 = vpop.f32.mrb[0].mxu0
        %v4554 = vand.u32 %v3816, 4294901760
        %v4555 = vsub.f32 %v3816, %v4554
        %4556 = vmatprep.mubr.f32.mxu0 %v4555
        %v4557 = vand.u32 %v3815, 4294901760
        %v4558 = vsub.f32 %v3815, %v4557
        %4559 = vmatmul.mubr.f32.gmra.mrb[0].mxu0 %v4558
        %v4560 = vpop.f32.mrb[0].mxu0
        %v4561 = vadd.f32 %v4370, %v4560
        %v4562 = vpop.f32.mrb[0].mxu0
        %v4563 = vand.u32 %v3820, 4294901760
        %v4564 = vsub.f32 %v3820, %v4563
        %4565 = vmatprep.mubr.f32.mxu0 %v4564
        %v4566 = vand.u32 %v3819, 4294901760
        %v4567 = vsub.f32 %v3819, %v4566
        %4568 = vmatmul.mubr.f32.gmra.mrb[0].mxu0 %v4567
        %v4569 = vpop.f32.mrb[0].mxu0
        %v4570 = vadd.f32 %v4377, %v4569
        %v4571 = vpop.f32.mrb[0].mxu0
        %v4572 = vand.u32 %v3824, 4294901760
        %v4573 = vsub.f32 %v3824, %v4572
        %4574 = vmatprep.mubr.f32.mxu0 %v4573
        %v4575 = vand.u32 %v3823, 4294901760
        %v4576 = vsub.f32 %v3823, %v4575
        %4577 = vmatmul.mubr.f32.gmra.mrb[0].mxu0 %v4576
        %v4578 = vpop.f32.mrb[0].mxu0
        %v4579 = vadd.f32 %v4384, %v4578
        %v4580 = vpop.f32.mrb[0].mxu0
        %v4581 = vand.u32 %v3828, 4294901760
        %v4582 = vsub.f32 %v3828, %v4581
        %4583 = vmatprep.mubr.f32.mxu0 %v4582
        %v4584 = vand.u32 %v3827, 4294901760
        %v4585 = vsub.f32 %v3827, %v4584
        %4586 = vmatmul.mubr.f32.gmra.mrb[0].mxu0 %v4585
        %v4587 = vpop.f32.mrb[0].mxu0
        %v4588 = vadd.f32 %v4391, %v4587
        %v4589 = vpop.f32.mrb[0].mxu0
        %v4590 = vand.u32 %v3832, 4294901760
        %v4591 = vsub.f32 %v3832, %v4590
        %4592 = vmatprep.mubr.f32.mxu0 %v4591
        %v4593 = vand.u32 %v3831, 4294901760
        %v4594 = vsub.f32 %v3831, %v4593
        %4595 = vmatmul.mubr.f32.gmra.mrb[0].mxu0 %v4594
        %v4596 = vpop.f32.mrb[0].mxu0
        %v4597 = vadd.f32 %v4398, %v4596
        %v4598 = vpop.f32.mrb[0].mxu0
        %v4599 = vand.u32 %v3836, 4294901760
        %v4600 = vsub.f32 %v3836, %v4599
        %4601 = vmatprep.mubr.f32.mxu0 %v4600
        %v4602 = vand.u32 %v3835, 4294901760
        %v4603 = vsub.f32 %v3835, %v4602
        %4604 = vmatmul.mubr.f32.gmra.mrb[0].mxu0 %v4603
        %v4605 = vpop.f32.mrb[0].mxu0
        %v4606 = vadd.f32 %v4405, %v4605
        %v4607 = vpop.f32.mrb[0].mxu0
        %4608 = vdwg.mxu0
        %4609 = vmatprep.subr.mxu0 0.0
        %v4610 = vand.u32 %v3839, 4294901760
        %4611 = vmatpush1.msra.mxu0 %v4610
        %4612 = vmatprep.subr.mxu0 0.0
        %v4613 = vand.u32 %v3840, 4294901760
        %4614 = vmatpush1.msra.mxu0 %v4613
        %4615 = vmatprep.subr.mxu0 0.0
        %v4616 = vand.u32 %v3841, 4294901760
        %4617 = vmatpush1.msra.mxu0 %v4616
        %4618 = vmatprep.subr.mxu0 0.0
        %v4619 = vand.u32 %v3842, 4294901760
        %4620 = vmatpush1.msra.mxu0 %v4619
        %4621 = vmatprep.subr.mxu0 0.0
        %v4622 = vand.u32 %v3843, 4294901760
        %4623 = vmatpush1.msra.mxu0 %v4622
        %4624 = vmatprep.subr.mxu0 0.0
        %v4625 = vand.u32 %v3844, 4294901760
        %4626 = vmatpush1.msra.mxu0 %v4625
        %4627 = vmatprep.subr.mxu0 0.0
        %v4628 = vand.u32 %v3845, 4294901760
        %4629 = vmatpush1.msra.mxu0 %v4628
        %4630 = vmatprep.subr.mxu0 0.0
        %v4631 = vand.u32 %v3846, 4294901760
        %4632 = vmatpush1.msra.mxu0 %v4631
        %4633 = vmatprep.subr.mxu0 0.0
        %v4634 = vand.u32 %v3847, 4294901760
        %4635 = vmatpush1.msra.mxu0 %v4634
        %4636 = vmatprep.subr.mxu0 0.0
        %v4637 = vand.u32 %v3848, 4294901760
        %4638 = vmatpush1.msra.mxu0 %v4637
        %4639 = vmatprep.subr.mxu0 0.0
        %v4640 = vand.u32 %v3849, 4294901760
        %4641 = vmatpush1.msra.mxu0 %v4640
        %4642 = vmatprep.subr.mxu0 0.0
        %v4643 = vand.u32 %v3850, 4294901760
        %4644 = vmatpush1.msra.mxu0 %v4643
        %4645 = vmatprep.subr.mxu0 0.0
        %v4646 = vand.u32 %v3851, 4294901760
        %4647 = vmatpush1.msra.mxu0 %v4646
        %4648 = vmatprep.subr.mxu0 0.0
        %v4649 = vand.u32 %v3852, 4294901760
        %4650 = vmatpush1.msra.mxu0 %v4649
        %4651 = vmatprep.subr.mxu0 0.0
        %v4652 = vand.u32 %v3853, 4294901760
        %4653 = vmatpush1.msra.mxu0 %v4652
        %4654 = vmatprep.subr.mxu0 0.0
        %v4655 = vand.u32 %v3854, 4294901760
        %4656 = vmatpush1.msra.mxu0 %v4655
        %4657 = vmatprep.subr.mxu0 0.0
        %v4658 = vand.u32 %v3855, 4294901760
        %4659 = vmatpush1.msra.mxu0 %v4658
        %4660 = vmatprep.subr.mxu0 0.0
        %v4661 = vand.u32 %v3856, 4294901760
        %4662 = vmatpush1.msra.mxu0 %v4661
        %4663 = vmatprep.subr.mxu0 0.0
        %v4664 = vand.u32 %v3857, 4294901760
        %4665 = vmatpush1.msra.mxu0 %v4664
        %4666 = vmatprep.subr.mxu0 0.0
        %v4667 = vand.u32 %v3858, 4294901760
        %4668 = vmatpush1.msra.mxu0 %v4667
        %4669 = vmatprep.subr.mxu0 0.0
        %v4670 = vand.u32 %v3859, 4294901760
        %4671 = vmatpush1.msra.mxu0 %v4670
        %4672 = vmatprep.subr.mxu0 0.0
        %v4673 = vand.u32 %v3860, 4294901760
        %4674 = vmatpush1.msra.mxu0 %v4673
        %4675 = vmatprep.subr.mxu0 0.0
        %v4676 = vand.u32 %v3861, 4294901760
        %4677 = vmatpush1.msra.mxu0 %v4676
        %4678 = vmatprep.subr.mxu0 0.0
        %v4679 = vand.u32 %v3862, 4294901760
        %4680 = vmatpush1.msra.mxu0 %v4679
        %4681 = vmatprep.subr.mxu0 0.0
        %v4682 = vand.u32 %v3863, 4294901760
        %4683 = vmatpush1.msra.mxu0 %v4682
        %4684 = vmatprep.subr.mxu0 0.0
        %v4685 = vand.u32 %v3864, 4294901760
        %4686 = vmatpush1.msra.mxu0 %v4685
        %4687 = vmatprep.subr.mxu0 0.0
        %v4688 = vand.u32 %v3865, 4294901760
        %4689 = vmatpush1.msra.mxu0 %v4688
        %4690 = vmatprep.subr.mxu0 0.0
        %v4691 = vand.u32 %v3866, 4294901760
        %4692 = vmatpush1.msra.mxu0 %v4691
        %4693 = vmatprep.subr.mxu0 0.0
        %v4694 = vand.u32 %v3867, 4294901760
        %4695 = vmatpush1.msra.mxu0 %v4694
        %4696 = vmatprep.subr.mxu0 0.0
        %v4697 = vand.u32 %v3868, 4294901760
        %4698 = vmatpush1.msra.mxu0 %v4697
        %4699 = vmatprep.subr.mxu0 0.0
        %v4700 = vand.u32 %v3869, 4294901760
        %4701 = vmatpush1.msra.mxu0 %v4700
        %4702 = vmatprep.subr.mxu0 0.0
        %v4703 = vand.u32 %v3870, 4294901760
        %4704 = vmatpush1.msra.mxu0 %v4703
        %v4705 = vand.u32 %v3808, 4294901760
        %v4706 = vsub.f32 %v3808, %v4705
        %v4707 = vand.u32 %v4706, 4294901760
        %4708 = vmatprep.mubr.f32.mxu0 %v4707
        %v4709 = vand.u32 %v3807, 4294901760
        %v4710 = vsub.f32 %v3807, %v4709
        %v4711 = vand.u32 %v4710, 4294901760
        %4712 = vmatmul.mubr.f32.gmra.mrb[0].mxu0 %v4711
        %v4713 = vpop.f32.mrb[0].mxu0
        %v4714 = vadd.f32 %v4543, %v4713
        %v4715 = vpop.f32.mrb[0].mxu0
        %v4716 = vand.u32 %v3812, 4294901760
        %v4717 = vsub.f32 %v3812, %v4716
        %v4718 = vand.u32 %v4717, 4294901760
        %4719 = vmatprep.mubr.f32.mxu0 %v4718
        %v4720 = vand.u32 %v3811, 4294901760
        %v4721 = vsub.f32 %v3811, %v4720
        %v4722 = vand.u32 %v4721, 4294901760
        %4723 = vmatmul.mubr.f32.gmra.mrb[0].mxu0 %v4722
        %v4724 = vpop.f32.mrb[0].mxu0
        %v4725 = vadd.f32 %v4552, %v4724
        %v4726 = vpop.f32.mrb[0].mxu0
        %v4727 = vand.u32 %v3816, 4294901760
        %v4728 = vsub.f32 %v3816, %v4727
        %v4729 = vand.u32 %v4728, 4294901760
        %4730 = vmatprep.mubr.f32.mxu0 %v4729
        %v4731 = vand.u32 %v3815, 4294901760
        %v4732 = vsub.f32 %v3815, %v4731
        %v4733 = vand.u32 %v4732, 4294901760
        %4734 = vmatmul.mubr.f32.gmra.mrb[0].mxu0 %v4733
        %v4735 = vpop.f32.mrb[0].mxu0
        %v4736 = vadd.f32 %v4561, %v4735
        %v4737 = vpop.f32.mrb[0].mxu0
        %v4738 = vand.u32 %v3820, 4294901760
        %v4739 = vsub.f32 %v3820, %v4738
        %v4740 = vand.u32 %v4739, 4294901760
        %4741 = vmatprep.mubr.f32.mxu0 %v4740
        %v4742 = vand.u32 %v3819, 4294901760
        %v4743 = vsub.f32 %v3819, %v4742
        %v4744 = vand.u32 %v4743, 4294901760
        %4745 = vmatmul.mubr.f32.gmra.mrb[0].mxu0 %v4744
        %v4746 = vpop.f32.mrb[0].mxu0
        %v4747 = vadd.f32 %v4570, %v4746
        %v4748 = vpop.f32.mrb[0].mxu0
        %v4749 = vand.u32 %v3824, 4294901760
        %v4750 = vsub.f32 %v3824, %v4749
        %v4751 = vand.u32 %v4750, 4294901760
        %4752 = vmatprep.mubr.f32.mxu0 %v4751
        %v4753 = vand.u32 %v3823, 4294901760
        %v4754 = vsub.f32 %v3823, %v4753
        %v4755 = vand.u32 %v4754, 4294901760
        %4756 = vmatmul.mubr.f32.gmra.mrb[0].mxu0 %v4755
        %v4757 = vpop.f32.mrb[0].mxu0
        %v4758 = vadd.f32 %v4579, %v4757
        %v4759 = vpop.f32.mrb[0].mxu0
        %v4760 = vand.u32 %v3828, 4294901760
        %v4761 = vsub.f32 %v3828, %v4760
        %v4762 = vand.u32 %v4761, 4294901760
        %4763 = vmatprep.mubr.f32.mxu0 %v4762
        %v4764 = vand.u32 %v3827, 4294901760
        %v4765 = vsub.f32 %v3827, %v4764
        %v4766 = vand.u32 %v4765, 4294901760
        %4767 = vmatmul.mubr.f32.gmra.mrb[0].mxu0 %v4766
        %v4768 = vpop.f32.mrb[0].mxu0
        %v4769 = vadd.f32 %v4588, %v4768
        %v4770 = vpop.f32.mrb[0].mxu0
        %v4771 = vand.u32 %v3832, 4294901760
        %v4772 = vsub.f32 %v3832, %v4771
        %v4773 = vand.u32 %v4772, 4294901760
        %4774 = vmatprep.mubr.f32.mxu0 %v4773
        %v4775 = vand.u32 %v3831, 4294901760
        %v4776 = vsub.f32 %v3831, %v4775
        %v4777 = vand.u32 %v4776, 4294901760
        %4778 = vmatmul.mubr.f32.gmra.mrb[0].mxu0 %v4777
        %v4779 = vpop.f32.mrb[0].mxu0
        %v4780 = vadd.f32 %v4597, %v4779
        %v4781 = vpop.f32.mrb[0].mxu0
        %v4782 = vand.u32 %v3836, 4294901760
        %v4783 = vsub.f32 %v3836, %v4782
        %v4784 = vand.u32 %v4783, 4294901760
        %4785 = vmatprep.mubr.f32.mxu0 %v4784
        %v4786 = vand.u32 %v3835, 4294901760
        %v4787 = vsub.f32 %v3835, %v4786
        %v4788 = vand.u32 %v4787, 4294901760
        %4789 = vmatmul.mubr.f32.gmra.mrb[0].mxu0 %v4788
        %v4790 = vpop.f32.mrb[0].mxu0
        %v4791 = vadd.f32 %v4606, %v4790
        %v4792 = vpop.f32.mrb[0].mxu0
        %4793 = vdwg.mxu0
        %4794 = vmatprep.subr.mxu0 0.0
        %v4795 = vand.u32 %v3839, 4294901760
        %v4796 = vsub.f32 %v3839, %v4795
        %v4797 = vand.u32 %v4796, 4294901760
        %4798 = vmatpush1.msra.mxu0 %v4797
        %4799 = vmatprep.subr.mxu0 0.0
        %v4800 = vand.u32 %v3840, 4294901760
        %v4801 = vsub.f32 %v3840, %v4800
        %v4802 = vand.u32 %v4801, 4294901760
        %4803 = vmatpush1.msra.mxu0 %v4802
        %4804 = vmatprep.subr.mxu0 0.0
        %v4805 = vand.u32 %v3841, 4294901760
        %v4806 = vsub.f32 %v3841, %v4805
        %v4807 = vand.u32 %v4806, 4294901760
        %4808 = vmatpush1.msra.mxu0 %v4807
        %4809 = vmatprep.subr.mxu0 0.0
        %v4810 = vand.u32 %v3842, 4294901760
        %v4811 = vsub.f32 %v3842, %v4810
        %v4812 = vand.u32 %v4811, 4294901760
        %4813 = vmatpush1.msra.mxu0 %v4812
        %4814 = vmatprep.subr.mxu0 0.0
        %v4815 = vand.u32 %v3843, 4294901760
        %v4816 = vsub.f32 %v3843, %v4815
        %v4817 = vand.u32 %v4816, 4294901760
        %4818 = vmatpush1.msra.mxu0 %v4817
        %4819 = vmatprep.subr.mxu0 0.0
        %v4820 = vand.u32 %v3844, 4294901760
        %v4821 = vsub.f32 %v3844, %v4820
        %v4822 = vand.u32 %v4821, 4294901760
        %4823 = vmatpush1.msra.mxu0 %v4822
        %4824 = vmatprep.subr.mxu0 0.0
        %v4825 = vand.u32 %v3845, 4294901760
        %v4826 = vsub.f32 %v3845, %v4825
        %v4827 = vand.u32 %v4826, 4294901760
        %4828 = vmatpush1.msra.mxu0 %v4827
        %4829 = vmatprep.subr.mxu0 0.0
        %v4830 = vand.u32 %v3846, 4294901760
        %v4831 = vsub.f32 %v3846, %v4830
        %v4832 = vand.u32 %v4831, 4294901760
        %4833 = vmatpush1.msra.mxu0 %v4832
        %4834 = vmatprep.subr.mxu0 0.0
        %v4835 = vand.u32 %v3847, 4294901760
        %v4836 = vsub.f32 %v3847, %v4835
        %v4837 = vand.u32 %v4836, 4294901760
        %4838 = vmatpush1.msra.mxu0 %v4837
        %4839 = vmatprep.subr.mxu0 0.0
        %v4840 = vand.u32 %v3848, 4294901760
        %v4841 = vsub.f32 %v3848, %v4840
        %v4842 = vand.u32 %v4841, 4294901760
        %4843 = vmatpush1.msra.mxu0 %v4842
        %4844 = vmatprep.subr.mxu0 0.0
        %v4845 = vand.u32 %v3849, 4294901760
        %v4846 = vsub.f32 %v3849, %v4845
        %v4847 = vand.u32 %v4846, 4294901760
        %4848 = vmatpush1.msra.mxu0 %v4847
        %4849 = vmatprep.subr.mxu0 0.0
        %v4850 = vand.u32 %v3850, 4294901760
        %v4851 = vsub.f32 %v3850, %v4850
        %v4852 = vand.u32 %v4851, 4294901760
        %4853 = vmatpush1.msra.mxu0 %v4852
        %4854 = vmatprep.subr.mxu0 0.0
        %v4855 = vand.u32 %v3851, 4294901760
        %v4856 = vsub.f32 %v3851, %v4855
        %v4857 = vand.u32 %v4856, 4294901760
        %4858 = vmatpush1.msra.mxu0 %v4857
        %4859 = vmatprep.subr.mxu0 0.0
        %v4860 = vand.u32 %v3852, 4294901760
        %v4861 = vsub.f32 %v3852, %v4860
        %v4862 = vand.u32 %v4861, 4294901760
        %4863 = vmatpush1.msra.mxu0 %v4862
        %4864 = vmatprep.subr.mxu0 0.0
        %v4865 = vand.u32 %v3853, 4294901760
        %v4866 = vsub.f32 %v3853, %v4865
        %v4867 = vand.u32 %v4866, 4294901760
        %4868 = vmatpush1.msra.mxu0 %v4867
        %4869 = vmatprep.subr.mxu0 0.0
        %v4870 = vand.u32 %v3854, 4294901760
        %v4871 = vsub.f32 %v3854, %v4870
        %v4872 = vand.u32 %v4871, 4294901760
        %4873 = vmatpush1.msra.mxu0 %v4872
        %4874 = vmatprep.subr.mxu0 0.0
        %v4875 = vand.u32 %v3855, 4294901760
        %v4876 = vsub.f32 %v3855, %v4875
        %v4877 = vand.u32 %v4876, 4294901760
        %4878 = vmatpush1.msra.mxu0 %v4877
        %4879 = vmatprep.subr.mxu0 0.0
        %v4880 = vand.u32 %v3856, 4294901760
        %v4881 = vsub.f32 %v3856, %v4880
        %v4882 = vand.u32 %v4881, 4294901760
        %4883 = vmatpush1.msra.mxu0 %v4882
        %4884 = vmatprep.subr.mxu0 0.0
        %v4885 = vand.u32 %v3857, 4294901760
        %v4886 = vsub.f32 %v3857, %v4885
        %v4887 = vand.u32 %v4886, 4294901760
        %4888 = vmatpush1.msra.mxu0 %v4887
        %4889 = vmatprep.subr.mxu0 0.0
        %v4890 = vand.u32 %v3858, 4294901760
        %v4891 = vsub.f32 %v3858, %v4890
        %v4892 = vand.u32 %v4891, 4294901760
        %4893 = vmatpush1.msra.mxu0 %v4892
        %4894 = vmatprep.subr.mxu0 0.0
        %v4895 = vand.u32 %v3859, 4294901760
        %v4896 = vsub.f32 %v3859, %v4895
        %v4897 = vand.u32 %v4896, 4294901760
        %4898 = vmatpush1.msra.mxu0 %v4897
        %4899 = vmatprep.subr.mxu0 0.0
        %v4900 = vand.u32 %v3860, 4294901760
        %v4901 = vsub.f32 %v3860, %v4900
        %v4902 = vand.u32 %v4901, 4294901760
        %4903 = vmatpush1.msra.mxu0 %v4902
        %4904 = vmatprep.subr.mxu0 0.0
        %v4905 = vand.u32 %v3861, 4294901760
        %v4906 = vsub.f32 %v3861, %v4905
        %v4907 = vand.u32 %v4906, 4294901760
        %4908 = vmatpush1.msra.mxu0 %v4907
        %4909 = vmatprep.subr.mxu0 0.0
        %v4910 = vand.u32 %v3862, 4294901760
        %v4911 = vsub.f32 %v3862, %v4910
        %v4912 = vand.u32 %v4911, 4294901760
        %4913 = vmatpush1.msra.mxu0 %v4912
        %4914 = vmatprep.subr.mxu0 0.0
        %v4915 = vand.u32 %v3863, 4294901760
        %v4916 = vsub.f32 %v3863, %v4915
        %v4917 = vand.u32 %v4916, 4294901760
        %4918 = vmatpush1.msra.mxu0 %v4917
        %4919 = vmatprep.subr.mxu0 0.0
        %v4920 = vand.u32 %v3864, 4294901760
        %v4921 = vsub.f32 %v3864, %v4920
        %v4922 = vand.u32 %v4921, 4294901760
        %4923 = vmatpush1.msra.mxu0 %v4922
        %4924 = vmatprep.subr.mxu0 0.0
        %v4925 = vand.u32 %v3865, 4294901760
        %v4926 = vsub.f32 %v3865, %v4925
        %v4927 = vand.u32 %v4926, 4294901760
        %4928 = vmatpush1.msra.mxu0 %v4927
        %4929 = vmatprep.subr.mxu0 0.0
        %v4930 = vand.u32 %v3866, 4294901760
        %v4931 = vsub.f32 %v3866, %v4930
        %v4932 = vand.u32 %v4931, 4294901760
        %4933 = vmatpush1.msra.mxu0 %v4932
        %4934 = vmatprep.subr.mxu0 0.0
        %v4935 = vand.u32 %v3867, 4294901760
        %v4936 = vsub.f32 %v3867, %v4935
        %v4937 = vand.u32 %v4936, 4294901760
        %4938 = vmatpush1.msra.mxu0 %v4937
        %4939 = vmatprep.subr.mxu0 0.0
        %v4940 = vand.u32 %v3868, 4294901760
        %v4941 = vsub.f32 %v3868, %v4940
        %v4942 = vand.u32 %v4941, 4294901760
        %4943 = vmatpush1.msra.mxu0 %v4942
        %4944 = vmatprep.subr.mxu0 0.0
        %v4945 = vand.u32 %v3869, 4294901760
        %v4946 = vsub.f32 %v3869, %v4945
        %v4947 = vand.u32 %v4946, 4294901760
        %4948 = vmatpush1.msra.mxu0 %v4947
        %4949 = vmatprep.subr.mxu0 0.0
        %v4950 = vand.u32 %v3870, 4294901760
        %v4951 = vsub.f32 %v3870, %v4950
        %v4952 = vand.u32 %v4951, 4294901760
        %4953 = vmatpush1.msra.mxu0 %v4952
        %v4954 = vand.u32 %v3808, 4294901760
        %4955 = vmatprep.mubr.f32.mxu0 %v4954
        %v4956 = vand.u32 %v3807, 4294901760
        %4957 = vmatmul.mubr.f32.gmra.mrb[0].mxu0 %v4956
        %v4958 = vpop.f32.mrb[0].mxu0
        %v4959 = vadd.f32 %v4714, %v4958
        %v4960 = vpop.f32.mrb[0].mxu0
        %v4961 = vand.u32 %v3812, 4294901760
        %4962 = vmatprep.mubr.f32.mxu0 %v4961
        %v4963 = vand.u32 %v3811, 4294901760
        %4964 = vmatmul.mubr.f32.gmra.mrb[0].mxu0 %v4963
        %v4965 = vpop.f32.mrb[0].mxu0
        %v4966 = vadd.f32 %v4725, %v4965
        %v4967 = vpop.f32.mrb[0].mxu0
        %v4968 = vand.u32 %v3816, 4294901760
        %4969 = vmatprep.mubr.f32.mxu0 %v4968
        %v4970 = vand.u32 %v3815, 4294901760
        %4971 = vmatmul.mubr.f32.gmra.mrb[0].mxu0 %v4970
        %v4972 = vpop.f32.mrb[0].mxu0
        %v4973 = vadd.f32 %v4736, %v4972
        %v4974 = vpop.f32.mrb[0].mxu0
        %v4975 = vand.u32 %v3820, 4294901760
        %4976 = vmatprep.mubr.f32.mxu0 %v4975
        %v4977 = vand.u32 %v3819, 4294901760
        %4978 = vmatmul.mubr.f32.gmra.mrb[0].mxu0 %v4977
        %v4979 = vpop.f32.mrb[0].mxu0
        %v4980 = vadd.f32 %v4747, %v4979
        %v4981 = vpop.f32.mrb[0].mxu0
        %v4982 = vand.u32 %v3824, 4294901760
        %4983 = vmatprep.mubr.f32.mxu0 %v4982
        %v4984 = vand.u32 %v3823, 4294901760
        %4985 = vmatmul.mubr.f32.gmra.mrb[0].mxu0 %v4984
        %v4986 = vpop.f32.mrb[0].mxu0
        %v4987 = vadd.f32 %v4758, %v4986
        %v4988 = vpop.f32.mrb[0].mxu0
        %v4989 = vand.u32 %v3828, 4294901760
        %4990 = vmatprep.mubr.f32.mxu0 %v4989
        %v4991 = vand.u32 %v3827, 4294901760
        %4992 = vmatmul.mubr.f32.gmra.mrb[0].mxu0 %v4991
        %v4993 = vpop.f32.mrb[0].mxu0
        %v4994 = vadd.f32 %v4769, %v4993
        %v4995 = vpop.f32.mrb[0].mxu0
        %v4996 = vand.u32 %v3832, 4294901760
        %4997 = vmatprep.mubr.f32.mxu0 %v4996
        %v4998 = vand.u32 %v3831, 4294901760
        %4999 = vmatmul.mubr.f32.gmra.mrb[0].mxu0 %v4998
        %v5000 = vpop.f32.mrb[0].mxu0
        %v5001 = vadd.f32 %v4780, %v5000
        %v5002 = vpop.f32.mrb[0].mxu0
        %v5003 = vand.u32 %v3836, 4294901760
        %5004 = vmatprep.mubr.f32.mxu0 %v5003
        %v5005 = vand.u32 %v3835, 4294901760
        %5006 = vmatmul.mubr.f32.gmra.mrb[0].mxu0 %v5005
        %v5007 = vpop.f32.mrb[0].mxu0
        %v5008 = vadd.f32 %v4791, %v5007
        %v5009 = vpop.f32.mrb[0].mxu0
        %5010 = vdwg.mxu0
        %5011 = vmatprep.subr.mxu0 0.0
        %v5012 = vand.u32 %v3839, 4294901760
        %5013 = vmatpush1.msra.mxu0 %v5012
        %5014 = vmatprep.subr.mxu0 0.0
        %v5015 = vand.u32 %v3840, 4294901760
        %5016 = vmatpush1.msra.mxu0 %v5015
        %5017 = vmatprep.subr.mxu0 0.0
        %v5018 = vand.u32 %v3841, 4294901760
        %5019 = vmatpush1.msra.mxu0 %v5018
        %5020 = vmatprep.subr.mxu0 0.0
        %v5021 = vand.u32 %v3842, 4294901760
        %5022 = vmatpush1.msra.mxu0 %v5021
        %5023 = vmatprep.subr.mxu0 0.0
        %v5024 = vand.u32 %v3843, 4294901760
        %5025 = vmatpush1.msra.mxu0 %v5024
        %5026 = vmatprep.subr.mxu0 0.0
        %v5027 = vand.u32 %v3844, 4294901760
        %5028 = vmatpush1.msra.mxu0 %v5027
        %5029 = vmatprep.subr.mxu0 0.0
        %v5030 = vand.u32 %v3845, 4294901760
        %5031 = vmatpush1.msra.mxu0 %v5030
        %5032 = vmatprep.subr.mxu0 0.0
        %v5033 = vand.u32 %v3846, 4294901760
        %5034 = vmatpush1.msra.mxu0 %v5033
        %5035 = vmatprep.subr.mxu0 0.0
        %v5036 = vand.u32 %v3847, 4294901760
        %5037 = vmatpush1.msra.mxu0 %v5036
        %5038 = vmatprep.subr.mxu0 0.0
        %v5039 = vand.u32 %v3848, 4294901760
        %5040 = vmatpush1.msra.mxu0 %v5039
        %5041 = vmatprep.subr.mxu0 0.0
        %v5042 = vand.u32 %v3849, 4294901760
        %5043 = vmatpush1.msra.mxu0 %v5042
        %5044 = vmatprep.subr.mxu0 0.0
        %v5045 = vand.u32 %v3850, 4294901760
        %5046 = vmatpush1.msra.mxu0 %v5045
        %5047 = vmatprep.subr.mxu0 0.0
        %v5048 = vand.u32 %v3851, 4294901760
        %5049 = vmatpush1.msra.mxu0 %v5048
        %5050 = vmatprep.subr.mxu0 0.0
        %v5051 = vand.u32 %v3852, 4294901760
        %5052 = vmatpush1.msra.mxu0 %v5051
        %5053 = vmatprep.subr.mxu0 0.0
        %v5054 = vand.u32 %v3853, 4294901760
        %5055 = vmatpush1.msra.mxu0 %v5054
        %5056 = vmatprep.subr.mxu0 0.0
        %v5057 = vand.u32 %v3854, 4294901760
        %5058 = vmatpush1.msra.mxu0 %v5057
        %5059 = vmatprep.subr.mxu0 0.0
        %v5060 = vand.u32 %v3855, 4294901760
        %5061 = vmatpush1.msra.mxu0 %v5060
        %5062 = vmatprep.subr.mxu0 0.0
        %v5063 = vand.u32 %v3856, 4294901760
        %5064 = vmatpush1.msra.mxu0 %v5063
        %5065 = vmatprep.subr.mxu0 0.0
        %v5066 = vand.u32 %v3857, 4294901760
        %5067 = vmatpush1.msra.mxu0 %v5066
        %5068 = vmatprep.subr.mxu0 0.0
        %v5069 = vand.u32 %v3858, 4294901760
        %5070 = vmatpush1.msra.mxu0 %v5069
        %5071 = vmatprep.subr.mxu0 0.0
        %v5072 = vand.u32 %v3859, 4294901760
        %5073 = vmatpush1.msra.mxu0 %v5072
        %5074 = vmatprep.subr.mxu0 0.0
        %v5075 = vand.u32 %v3860, 4294901760
        %5076 = vmatpush1.msra.mxu0 %v5075
        %5077 = vmatprep.subr.mxu0 0.0
        %v5078 = vand.u32 %v3861, 4294901760
        %5079 = vmatpush1.msra.mxu0 %v5078
        %5080 = vmatprep.subr.mxu0 0.0
        %v5081 = vand.u32 %v3862, 4294901760
        %5082 = vmatpush1.msra.mxu0 %v5081
        %5083 = vmatprep.subr.mxu0 0.0
        %v5084 = vand.u32 %v3863, 4294901760
        %5085 = vmatpush1.msra.mxu0 %v5084
        %5086 = vmatprep.subr.mxu0 0.0
        %v5087 = vand.u32 %v3864, 4294901760
        %5088 = vmatpush1.msra.mxu0 %v5087
        %5089 = vmatprep.subr.mxu0 0.0
        %v5090 = vand.u32 %v3865, 4294901760
        %5091 = vmatpush1.msra.mxu0 %v5090
        %5092 = vmatprep.subr.mxu0 0.0
        %v5093 = vand.u32 %v3866, 4294901760
        %5094 = vmatpush1.msra.mxu0 %v5093
        %5095 = vmatprep.subr.mxu0 0.0
        %v5096 = vand.u32 %v3867, 4294901760
        %5097 = vmatpush1.msra.mxu0 %v5096
        %5098 = vmatprep.subr.mxu0 0.0
        %v5099 = vand.u32 %v3868, 4294901760
        %5100 = vmatpush1.msra.mxu0 %v5099
        %5101 = vmatprep.subr.mxu0 0.0
        %v5102 = vand.u32 %v3869, 4294901760
        %5103 = vmatpush1.msra.mxu0 %v5102
        %5104 = vmatprep.subr.mxu0 0.0
        %v5105 = vand.u32 %v3870, 4294901760
        %5106 = vmatpush1.msra.mxu0 %v5105
        %v5107 = vand.u32 %v3808, 4294901760
        %5108 = vmatprep.mubr.f32.mxu0 %v5107
        %v5109 = vand.u32 %v3807, 4294901760
        %5110 = vmatmul.mubr.f32.gmra.mrb[0].mxu0 %v5109
        %v5111 = vpop.f32.mrb[0].mxu0
        %v5112 = vadd.f32 %v4959, %v5111
        %v5113 = vpop.f32.mrb[0].mxu0
        %v5114 = vand.u32 %v3812, 4294901760
        %5115 = vmatprep.mubr.f32.mxu0 %v5114
        %v5116 = vand.u32 %v3811, 4294901760
        %5117 = vmatmul.mubr.f32.gmra.mrb[0].mxu0 %v5116
        %v5118 = vpop.f32.mrb[0].mxu0
        %v5119 = vadd.f32 %v4966, %v5118
        %v5120 = vpop.f32.mrb[0].mxu0
        %v5121 = vand.u32 %v3816, 4294901760
        %5122 = vmatprep.mubr.f32.mxu0 %v5121
        %v5123 = vand.u32 %v3815, 4294901760
        %5124 = vmatmul.mubr.f32.gmra.mrb[0].mxu0 %v5123
        %v5125 = vpop.f32.mrb[0].mxu0
        %v5126 = vadd.f32 %v4973, %v5125
        %v5127 = vpop.f32.mrb[0].mxu0
        %v5128 = vand.u32 %v3820, 4294901760
        %5129 = vmatprep.mubr.f32.mxu0 %v5128
        %v5130 = vand.u32 %v3819, 4294901760
        %5131 = vmatmul.mubr.f32.gmra.mrb[0].mxu0 %v5130
        %v5132 = vpop.f32.mrb[0].mxu0
        %v5133 = vadd.f32 %v4980, %v5132
        %v5134 = vpop.f32.mrb[0].mxu0
        %v5135 = vand.u32 %v3824, 4294901760
        %5136 = vmatprep.mubr.f32.mxu0 %v5135
        %v5137 = vand.u32 %v3823, 4294901760
        %5138 = vmatmul.mubr.f32.gmra.mrb[0].mxu0 %v5137
        %v5139 = vpop.f32.mrb[0].mxu0
        %v5140 = vadd.f32 %v4987, %v5139
        %v5141 = vpop.f32.mrb[0].mxu0
        %v5142 = vand.u32 %v3828, 4294901760
        %5143 = vmatprep.mubr.f32.mxu0 %v5142
        %v5144 = vand.u32 %v3827, 4294901760
        %5145 = vmatmul.mubr.f32.gmra.mrb[0].mxu0 %v5144
        %v5146 = vpop.f32.mrb[0].mxu0
        %v5147 = vadd.f32 %v4994, %v5146
        %v5148 = vpop.f32.mrb[0].mxu0
        %v5149 = vand.u32 %v3832, 4294901760
        %5150 = vmatprep.mubr.f32.mxu0 %v5149
        %v5151 = vand.u32 %v3831, 4294901760
        %5152 = vmatmul.mubr.f32.gmra.mrb[0].mxu0 %v5151
        %v5153 = vpop.f32.mrb[0].mxu0
        %v5154 = vadd.f32 %v5001, %v5153
        %v5155 = vpop.f32.mrb[0].mxu0
        %v5156 = vand.u32 %v3836, 4294901760
        %5157 = vmatprep.mubr.f32.mxu0 %v5156
        %v5158 = vand.u32 %v3835, 4294901760
        %5159 = vmatmul.mubr.f32.gmra.mrb[0].mxu0 %v5158
        %v5160 = vpop.f32.mrb[0].mxu0
        %v5161 = vadd.f32 %v5008, %v5160
        %v5162 = vpop.f32.mrb[0].mxu0
        %5163 = vdwg.mxu0
        %5164 = vmatprep.subr.mxu0 0.0
        %v5165 = vand.u32 %v3871, 4294901760
        %5166 = vmatpush1.msra.mxu0 %v5165
        %5167 = vmatprep.subr.mxu0 0.0
        %v5168 = vand.u32 %v3872, 4294901760
        %5169 = vmatpush1.msra.mxu0 %v5168
        %5170 = vmatprep.subr.mxu0 0.0
        %v5171 = vand.u32 %v3873, 4294901760
        %5172 = vmatpush1.msra.mxu0 %v5171
        %5173 = vmatprep.subr.mxu0 0.0
        %v5174 = vand.u32 %v3874, 4294901760
        %5175 = vmatpush1.msra.mxu0 %v5174
        %5176 = vmatprep.subr.mxu0 0.0
        %v5177 = vand.u32 %v3875, 4294901760
        %5178 = vmatpush1.msra.mxu0 %v5177
        %5179 = vmatprep.subr.mxu0 0.0
        %v5180 = vand.u32 %v3876, 4294901760
        %5181 = vmatpush1.msra.mxu0 %v5180
        %5182 = vmatprep.subr.mxu0 0.0
        %v5183 = vand.u32 %v3877, 4294901760
        %5184 = vmatpush1.msra.mxu0 %v5183
        %5185 = vmatprep.subr.mxu0 0.0
        %v5186 = vand.u32 %v3878, 4294901760
        %5187 = vmatpush1.msra.mxu0 %v5186
        %5188 = vmatprep.subr.mxu0 0.0
        %v5189 = vand.u32 %v3879, 4294901760
        %5190 = vmatpush1.msra.mxu0 %v5189
        %5191 = vmatprep.subr.mxu0 0.0
        %v5192 = vand.u32 %v3880, 4294901760
        %5193 = vmatpush1.msra.mxu0 %v5192
        %5194 = vmatprep.subr.mxu0 0.0
        %v5195 = vand.u32 %v3881, 4294901760
        %5196 = vmatpush1.msra.mxu0 %v5195
        %5197 = vmatprep.subr.mxu0 0.0
        %v5198 = vand.u32 %v3882, 4294901760
        %5199 = vmatpush1.msra.mxu0 %v5198
        %5200 = vmatprep.subr.mxu0 0.0
        %v5201 = vand.u32 %v3883, 4294901760
        %5202 = vmatpush1.msra.mxu0 %v5201
        %5203 = vmatprep.subr.mxu0 0.0
        %v5204 = vand.u32 %v3884, 4294901760
        %5205 = vmatpush1.msra.mxu0 %v5204
        %5206 = vmatprep.subr.mxu0 0.0
        %v5207 = vand.u32 %v3885, 4294901760
        %5208 = vmatpush1.msra.mxu0 %v5207
        %5209 = vmatprep.subr.mxu0 0.0
        %v5210 = vand.u32 %v3886, 4294901760
        %5211 = vmatpush1.msra.mxu0 %v5210
        %5212 = vmatprep.subr.mxu0 0.0
        %v5213 = vand.u32 %v3887, 4294901760
        %5214 = vmatpush1.msra.mxu0 %v5213
        %5215 = vmatprep.subr.mxu0 0.0
        %v5216 = vand.u32 %v3888, 4294901760
        %5217 = vmatpush1.msra.mxu0 %v5216
        %5218 = vmatprep.subr.mxu0 0.0
        %v5219 = vand.u32 %v3889, 4294901760
        %5220 = vmatpush1.msra.mxu0 %v5219
        %5221 = vmatprep.subr.mxu0 0.0
        %v5222 = vand.u32 %v3890, 4294901760
        %5223 = vmatpush1.msra.mxu0 %v5222
        %5224 = vmatprep.subr.mxu0 0.0
        %v5225 = vand.u32 %v3891, 4294901760
        %5226 = vmatpush1.msra.mxu0 %v5225
        %5227 = vmatprep.subr.mxu0 0.0
        %v5228 = vand.u32 %v3892, 4294901760
        %5229 = vmatpush1.msra.mxu0 %v5228
        %5230 = vmatprep.subr.mxu0 0.0
        %v5231 = vand.u32 %v3893, 4294901760
        %5232 = vmatpush1.msra.mxu0 %v5231
        %5233 = vmatprep.subr.mxu0 0.0
        %v5234 = vand.u32 %v3894, 4294901760
        %5235 = vmatpush1.msra.mxu0 %v5234
        %5236 = vmatprep.subr.mxu0 0.0
        %v5237 = vand.u32 %v3895, 4294901760
        %5238 = vmatpush1.msra.mxu0 %v5237
        %5239 = vmatprep.subr.mxu0 0.0
        %v5240 = vand.u32 %v3896, 4294901760
        %5241 = vmatpush1.msra.mxu0 %v5240
        %5242 = vmatprep.subr.mxu0 0.0
        %v5243 = vand.u32 %v3897, 4294901760
        %5244 = vmatpush1.msra.mxu0 %v5243
        %5245 = vmatprep.subr.mxu0 0.0
        %v5246 = vand.u32 %v3898, 4294901760
        %5247 = vmatpush1.msra.mxu0 %v5246
        %5248 = vmatprep.subr.mxu0 0.0
        %v5249 = vand.u32 %v3899, 4294901760
        %5250 = vmatpush1.msra.mxu0 %v5249
        %5251 = vmatprep.subr.mxu0 0.0
        %v5252 = vand.u32 %v3900, 4294901760
        %5253 = vmatpush1.msra.mxu0 %v5252
        %5254 = vmatprep.subr.mxu0 0.0
        %v5255 = vand.u32 %v3901, 4294901760
        %5256 = vmatpush1.msra.mxu0 %v5255
        %5257 = vmatprep.subr.mxu0 0.0
        %v5258 = vand.u32 %v3902, 4294901760
        %5259 = vmatpush1.msra.mxu0 %v5258
        %v5260 = vand.u32 %v3810, 4294901760
        %v5261 = vsub.f32 %v3810, %v5260
        %v5262 = vand.u32 %v5261, 4294901760
        %v5263 = vsub.f32 %v5261, %v5262
        %v5264 = vand.u32 %v5263, 4294901760
        %5265 = vmatprep.mubr.f32.mxu0 %v5264
        %v5266 = vand.u32 %v3809, 4294901760
        %v5267 = vsub.f32 %v3809, %v5266
        %v5268 = vand.u32 %v5267, 4294901760
        %v5269 = vsub.f32 %v5267, %v5268
        %v5270 = vand.u32 %v5269, 4294901760
        %5271 = vmatmul.mubr.f32.gmra.mrb[0].mxu0 %v5270
        %v5272 = vpop.f32.mrb[0].mxu0
        %v5273 = vadd.f32 %v5112, %v5272
        %v5274 = vpop.f32.mrb[0].mxu0
        %v5275 = vand.u32 %v3814, 4294901760
        %v5276 = vsub.f32 %v3814, %v5275
        %v5277 = vand.u32 %v5276, 4294901760
        %v5278 = vsub.f32 %v5276, %v5277
        %v5279 = vand.u32 %v5278, 4294901760
        %5280 = vmatprep.mubr.f32.mxu0 %v5279
        %v5281 = vand.u32 %v3813, 4294901760
        %v5282 = vsub.f32 %v3813, %v5281
        %v5283 = vand.u32 %v5282, 4294901760
        %v5284 = vsub.f32 %v5282, %v5283
        %v5285 = vand.u32 %v5284, 4294901760
        %5286 = vmatmul.mubr.f32.gmra.mrb[0].mxu0 %v5285
        %v5287 = vpop.f32.mrb[0].mxu0
        %v5288 = vadd.f32 %v5119, %v5287
        %v5289 = vpop.f32.mrb[0].mxu0
        %v5290 = vand.u32 %v3818, 4294901760
        %v5291 = vsub.f32 %v3818, %v5290
        %v5292 = vand.u32 %v5291, 4294901760
        %v5293 = vsub.f32 %v5291, %v5292
        %v5294 = vand.u32 %v5293, 4294901760
        %5295 = vmatprep.mubr.f32.mxu0 %v5294
        %v5296 = vand.u32 %v3817, 4294901760
        %v5297 = vsub.f32 %v3817, %v5296
        %v5298 = vand.u32 %v5297, 4294901760
        %v5299 = vsub.f32 %v5297, %v5298
        %v5300 = vand.u32 %v5299, 4294901760
        %5301 = vmatmul.mubr.f32.gmra.mrb[0].mxu0 %v5300
        %v5302 = vpop.f32.mrb[0].mxu0
        %v5303 = vadd.f32 %v5126, %v5302
        %v5304 = vpop.f32.mrb[0].mxu0
        %v5305 = vand.u32 %v3822, 4294901760
        %v5306 = vsub.f32 %v3822, %v5305
        %v5307 = vand.u32 %v5306, 4294901760
        %v5308 = vsub.f32 %v5306, %v5307
        %v5309 = vand.u32 %v5308, 4294901760
        %5310 = vmatprep.mubr.f32.mxu0 %v5309
        %v5311 = vand.u32 %v3821, 4294901760
        %v5312 = vsub.f32 %v3821, %v5311
        %v5313 = vand.u32 %v5312, 4294901760
        %v5314 = vsub.f32 %v5312, %v5313
        %v5315 = vand.u32 %v5314, 4294901760
        %5316 = vmatmul.mubr.f32.gmra.mrb[0].mxu0 %v5315
        %v5317 = vpop.f32.mrb[0].mxu0
        %v5318 = vadd.f32 %v5133, %v5317
        %v5319 = vpop.f32.mrb[0].mxu0
        %v5320 = vand.u32 %v3826, 4294901760
        %v5321 = vsub.f32 %v3826, %v5320
        %v5322 = vand.u32 %v5321, 4294901760
        %v5323 = vsub.f32 %v5321, %v5322
        %v5324 = vand.u32 %v5323, 4294901760
        %5325 = vmatprep.mubr.f32.mxu0 %v5324
        %v5326 = vand.u32 %v3825, 4294901760
        %v5327 = vsub.f32 %v3825, %v5326
        %v5328 = vand.u32 %v5327, 4294901760
        %v5329 = vsub.f32 %v5327, %v5328
        %v5330 = vand.u32 %v5329, 4294901760
        %5331 = vmatmul.mubr.f32.gmra.mrb[0].mxu0 %v5330
        %v5332 = vpop.f32.mrb[0].mxu0
        %v5333 = vadd.f32 %v5140, %v5332
        %v5334 = vpop.f32.mrb[0].mxu0
        %v5335 = vand.u32 %v3830, 4294901760
        %v5336 = vsub.f32 %v3830, %v5335
        %v5337 = vand.u32 %v5336, 4294901760
        %v5338 = vsub.f32 %v5336, %v5337
        %v5339 = vand.u32 %v5338, 4294901760
        %5340 = vmatprep.mubr.f32.mxu0 %v5339
        %v5341 = vand.u32 %v3829, 4294901760
        %v5342 = vsub.f32 %v3829, %v5341
        %v5343 = vand.u32 %v5342, 4294901760
        %v5344 = vsub.f32 %v5342, %v5343
        %v5345 = vand.u32 %v5344, 4294901760
        %5346 = vmatmul.mubr.f32.gmra.mrb[0].mxu0 %v5345
        %v5347 = vpop.f32.mrb[0].mxu0
        %v5348 = vadd.f32 %v5147, %v5347
        %v5349 = vpop.f32.mrb[0].mxu0
        %v5350 = vand.u32 %v3834, 4294901760
        %v5351 = vsub.f32 %v3834, %v5350
        %v5352 = vand.u32 %v5351, 4294901760
        %v5353 = vsub.f32 %v5351, %v5352
        %v5354 = vand.u32 %v5353, 4294901760
        %5355 = vmatprep.mubr.f32.mxu0 %v5354
        %v5356 = vand.u32 %v3833, 4294901760
        %v5357 = vsub.f32 %v3833, %v5356
        %v5358 = vand.u32 %v5357, 4294901760
        %v5359 = vsub.f32 %v5357, %v5358
        %v5360 = vand.u32 %v5359, 4294901760
        %5361 = vmatmul.mubr.f32.gmra.mrb[0].mxu0 %v5360
        %v5362 = vpop.f32.mrb[0].mxu0
        %v5363 = vadd.f32 %v5154, %v5362
        %v5364 = vpop.f32.mrb[0].mxu0
        %v5365 = vand.u32 %v3838, 4294901760
        %v5366 = vsub.f32 %v3838, %v5365
        %v5367 = vand.u32 %v5366, 4294901760
        %v5368 = vsub.f32 %v5366, %v5367
        %v5369 = vand.u32 %v5368, 4294901760
        %5370 = vmatprep.mubr.f32.mxu0 %v5369
        %v5371 = vand.u32 %v3837, 4294901760
        %v5372 = vsub.f32 %v3837, %v5371
        %v5373 = vand.u32 %v5372, 4294901760
        %v5374 = vsub.f32 %v5372, %v5373
        %v5375 = vand.u32 %v5374, 4294901760
        %5376 = vmatmul.mubr.f32.gmra.mrb[0].mxu0 %v5375
        %v5377 = vpop.f32.mrb[0].mxu0
        %v5378 = vadd.f32 %v5161, %v5377
        %v5379 = vpop.f32.mrb[0].mxu0
        %5380 = vdwg.mxu0
        %5381 = vmatprep.subr.mxu0 0.0
        %v5382 = vand.u32 %v3871, 4294901760
        %v5383 = vsub.f32 %v3871, %v5382
        %v5384 = vand.u32 %v5383, 4294901760
        %v5385 = vsub.f32 %v5383, %v5384
        %v5386 = vand.u32 %v5385, 4294901760
        %5387 = vmatpush1.msra.mxu0 %v5386
        %5388 = vmatprep.subr.mxu0 0.0
        %v5389 = vand.u32 %v3872, 4294901760
        %v5390 = vsub.f32 %v3872, %v5389
        %v5391 = vand.u32 %v5390, 4294901760
        %v5392 = vsub.f32 %v5390, %v5391
        %v5393 = vand.u32 %v5392, 4294901760
        %5394 = vmatpush1.msra.mxu0 %v5393
        %5395 = vmatprep.subr.mxu0 0.0
        %v5396 = vand.u32 %v3873, 4294901760
        %v5397 = vsub.f32 %v3873, %v5396
        %v5398 = vand.u32 %v5397, 4294901760
        %v5399 = vsub.f32 %v5397, %v5398
        %v5400 = vand.u32 %v5399, 4294901760
        %5401 = vmatpush1.msra.mxu0 %v5400
        %5402 = vmatprep.subr.mxu0 0.0
        %v5403 = vand.u32 %v3874, 4294901760
        %v5404 = vsub.f32 %v3874, %v5403
        %v5405 = vand.u32 %v5404, 4294901760
        %v5406 = vsub.f32 %v5404, %v5405
        %v5407 = vand.u32 %v5406, 4294901760
        %5408 = vmatpush1.msra.mxu0 %v5407
        %5409 = vmatprep.subr.mxu0 0.0
        %v5410 = vand.u32 %v3875, 4294901760
        %v5411 = vsub.f32 %v3875, %v5410
        %v5412 = vand.u32 %v5411, 4294901760
        %v5413 = vsub.f32 %v5411, %v5412
        %v5414 = vand.u32 %v5413, 4294901760
        %5415 = vmatpush1.msra.mxu0 %v5414
        %5416 = vmatprep.subr.mxu0 0.0
        %v5417 = vand.u32 %v3876, 4294901760
        %v5418 = vsub.f32 %v3876, %v5417
        %v5419 = vand.u32 %v5418, 4294901760
        %v5420 = vsub.f32 %v5418, %v5419
        %v5421 = vand.u32 %v5420, 4294901760
        %5422 = vmatpush1.msra.mxu0 %v5421
        %5423 = vmatprep.subr.mxu0 0.0
        %v5424 = vand.u32 %v3877, 4294901760
        %v5425 = vsub.f32 %v3877, %v5424
        %v5426 = vand.u32 %v5425, 4294901760
        %v5427 = vsub.f32 %v5425, %v5426
        %v5428 = vand.u32 %v5427, 4294901760
        %5429 = vmatpush1.msra.mxu0 %v5428
        %5430 = vmatprep.subr.mxu0 0.0
        %v5431 = vand.u32 %v3878, 4294901760
        %v5432 = vsub.f32 %v3878, %v5431
        %v5433 = vand.u32 %v5432, 4294901760
        %v5434 = vsub.f32 %v5432, %v5433
        %v5435 = vand.u32 %v5434, 4294901760
        %5436 = vmatpush1.msra.mxu0 %v5435
        %5437 = vmatprep.subr.mxu0 0.0
        %v5438 = vand.u32 %v3879, 4294901760
        %v5439 = vsub.f32 %v3879, %v5438
        %v5440 = vand.u32 %v5439, 4294901760
        %v5441 = vsub.f32 %v5439, %v5440
        %v5442 = vand.u32 %v5441, 4294901760
        %5443 = vmatpush1.msra.mxu0 %v5442
        %5444 = vmatprep.subr.mxu0 0.0
        %v5445 = vand.u32 %v3880, 4294901760
        %v5446 = vsub.f32 %v3880, %v5445
        %v5447 = vand.u32 %v5446, 4294901760
        %v5448 = vsub.f32 %v5446, %v5447
        %v5449 = vand.u32 %v5448, 4294901760
        %5450 = vmatpush1.msra.mxu0 %v5449
        %5451 = vmatprep.subr.mxu0 0.0
        %v5452 = vand.u32 %v3881, 4294901760
        %v5453 = vsub.f32 %v3881, %v5452
        %v5454 = vand.u32 %v5453, 4294901760
        %v5455 = vsub.f32 %v5453, %v5454
        %v5456 = vand.u32 %v5455, 4294901760
        %5457 = vmatpush1.msra.mxu0 %v5456
        %5458 = vmatprep.subr.mxu0 0.0
        %v5459 = vand.u32 %v3882, 4294901760
        %v5460 = vsub.f32 %v3882, %v5459
        %v5461 = vand.u32 %v5460, 4294901760
        %v5462 = vsub.f32 %v5460, %v5461
        %v5463 = vand.u32 %v5462, 4294901760
        %5464 = vmatpush1.msra.mxu0 %v5463
        %5465 = vmatprep.subr.mxu0 0.0
        %v5466 = vand.u32 %v3883, 4294901760
        %v5467 = vsub.f32 %v3883, %v5466
        %v5468 = vand.u32 %v5467, 4294901760
        %v5469 = vsub.f32 %v5467, %v5468
        %v5470 = vand.u32 %v5469, 4294901760
        %5471 = vmatpush1.msra.mxu0 %v5470
        %5472 = vmatprep.subr.mxu0 0.0
        %v5473 = vand.u32 %v3884, 4294901760
        %v5474 = vsub.f32 %v3884, %v5473
        %v5475 = vand.u32 %v5474, 4294901760
        %v5476 = vsub.f32 %v5474, %v5475
        %v5477 = vand.u32 %v5476, 4294901760
        %5478 = vmatpush1.msra.mxu0 %v5477
        %5479 = vmatprep.subr.mxu0 0.0
        %v5480 = vand.u32 %v3885, 4294901760
        %v5481 = vsub.f32 %v3885, %v5480
        %v5482 = vand.u32 %v5481, 4294901760
        %v5483 = vsub.f32 %v5481, %v5482
        %v5484 = vand.u32 %v5483, 4294901760
        %5485 = vmatpush1.msra.mxu0 %v5484
        %5486 = vmatprep.subr.mxu0 0.0
        %v5487 = vand.u32 %v3886, 4294901760
        %v5488 = vsub.f32 %v3886, %v5487
        %v5489 = vand.u32 %v5488, 4294901760
        %v5490 = vsub.f32 %v5488, %v5489
        %v5491 = vand.u32 %v5490, 4294901760
        %5492 = vmatpush1.msra.mxu0 %v5491
        %5493 = vmatprep.subr.mxu0 0.0
        %v5494 = vand.u32 %v3887, 4294901760
        %v5495 = vsub.f32 %v3887, %v5494
        %v5496 = vand.u32 %v5495, 4294901760
        %v5497 = vsub.f32 %v5495, %v5496
        %v5498 = vand.u32 %v5497, 4294901760
        %5499 = vmatpush1.msra.mxu0 %v5498
        %5500 = vmatprep.subr.mxu0 0.0
        %v5501 = vand.u32 %v3888, 4294901760
        %v5502 = vsub.f32 %v3888, %v5501
        %v5503 = vand.u32 %v5502, 4294901760
        %v5504 = vsub.f32 %v5502, %v5503
        %v5505 = vand.u32 %v5504, 4294901760
        %5506 = vmatpush1.msra.mxu0 %v5505
        %5507 = vmatprep.subr.mxu0 0.0
        %v5508 = vand.u32 %v3889, 4294901760
        %v5509 = vsub.f32 %v3889, %v5508
        %v5510 = vand.u32 %v5509, 4294901760
        %v5511 = vsub.f32 %v5509, %v5510
        %v5512 = vand.u32 %v5511, 4294901760
        %5513 = vmatpush1.msra.mxu0 %v5512
        %5514 = vmatprep.subr.mxu0 0.0
        %v5515 = vand.u32 %v3890, 4294901760
        %v5516 = vsub.f32 %v3890, %v5515
        %v5517 = vand.u32 %v5516, 4294901760
        %v5518 = vsub.f32 %v5516, %v5517
        %v5519 = vand.u32 %v5518, 4294901760
        %5520 = vmatpush1.msra.mxu0 %v5519
        %5521 = vmatprep.subr.mxu0 0.0
        %v5522 = vand.u32 %v3891, 4294901760
        %v5523 = vsub.f32 %v3891, %v5522
        %v5524 = vand.u32 %v5523, 4294901760
        %v5525 = vsub.f32 %v5523, %v5524
        %v5526 = vand.u32 %v5525, 4294901760
        %5527 = vmatpush1.msra.mxu0 %v5526
        %5528 = vmatprep.subr.mxu0 0.0
        %v5529 = vand.u32 %v3892, 4294901760
        %v5530 = vsub.f32 %v3892, %v5529
        %v5531 = vand.u32 %v5530, 4294901760
        %v5532 = vsub.f32 %v5530, %v5531
        %v5533 = vand.u32 %v5532, 4294901760
        %5534 = vmatpush1.msra.mxu0 %v5533
        %5535 = vmatprep.subr.mxu0 0.0
        %v5536 = vand.u32 %v3893, 4294901760
        %v5537 = vsub.f32 %v3893, %v5536
        %v5538 = vand.u32 %v5537, 4294901760
        %v5539 = vsub.f32 %v5537, %v5538
        %v5540 = vand.u32 %v5539, 4294901760
        %5541 = vmatpush1.msra.mxu0 %v5540
        %5542 = vmatprep.subr.mxu0 0.0
        %v5543 = vand.u32 %v3894, 4294901760
        %v5544 = vsub.f32 %v3894, %v5543
        %v5545 = vand.u32 %v5544, 4294901760
        %v5546 = vsub.f32 %v5544, %v5545
        %v5547 = vand.u32 %v5546, 4294901760
        %5548 = vmatpush1.msra.mxu0 %v5547
        %5549 = vmatprep.subr.mxu0 0.0
        %v5550 = vand.u32 %v3895, 4294901760
        %v5551 = vsub.f32 %v3895, %v5550
        %v5552 = vand.u32 %v5551, 4294901760
        %v5553 = vsub.f32 %v5551, %v5552
        %v5554 = vand.u32 %v5553, 4294901760
        %5555 = vmatpush1.msra.mxu0 %v5554
        %5556 = vmatprep.subr.mxu0 0.0
        %v5557 = vand.u32 %v3896, 4294901760
        %v5558 = vsub.f32 %v3896, %v5557
        %v5559 = vand.u32 %v5558, 4294901760
        %v5560 = vsub.f32 %v5558, %v5559
        %v5561 = vand.u32 %v5560, 4294901760
        %5562 = vmatpush1.msra.mxu0 %v5561
        %5563 = vmatprep.subr.mxu0 0.0
        %v5564 = vand.u32 %v3897, 4294901760
        %v5565 = vsub.f32 %v3897, %v5564
        %v5566 = vand.u32 %v5565, 4294901760
        %v5567 = vsub.f32 %v5565, %v5566
        %v5568 = vand.u32 %v5567, 4294901760
        %5569 = vmatpush1.msra.mxu0 %v5568
        %5570 = vmatprep.subr.mxu0 0.0
        %v5571 = vand.u32 %v3898, 4294901760
        %v5572 = vsub.f32 %v3898, %v5571
        %v5573 = vand.u32 %v5572, 4294901760
        %v5574 = vsub.f32 %v5572, %v5573
        %v5575 = vand.u32 %v5574, 4294901760
        %5576 = vmatpush1.msra.mxu0 %v5575
        %5577 = vmatprep.subr.mxu0 0.0
        %v5578 = vand.u32 %v3899, 4294901760
        %v5579 = vsub.f32 %v3899, %v5578
        %v5580 = vand.u32 %v5579, 4294901760
        %v5581 = vsub.f32 %v5579, %v5580
        %v5582 = vand.u32 %v5581, 4294901760
        %5583 = vmatpush1.msra.mxu0 %v5582
        %5584 = vmatprep.subr.mxu0 0.0
        %v5585 = vand.u32 %v3900, 4294901760
        %v5586 = vsub.f32 %v3900, %v5585
        %v5587 = vand.u32 %v5586, 4294901760
        %v5588 = vsub.f32 %v5586, %v5587
        %v5589 = vand.u32 %v5588, 4294901760
        %5590 = vmatpush1.msra.mxu0 %v5589
        %5591 = vmatprep.subr.mxu0 0.0
        %v5592 = vand.u32 %v3901, 4294901760
        %v5593 = vsub.f32 %v3901, %v5592
        %v5594 = vand.u32 %v5593, 4294901760
        %v5595 = vsub.f32 %v5593, %v5594
        %v5596 = vand.u32 %v5595, 4294901760
        %5597 = vmatpush1.msra.mxu0 %v5596
        %5598 = vmatprep.subr.mxu0 0.0
        %v5599 = vand.u32 %v3902, 4294901760
        %v5600 = vsub.f32 %v3902, %v5599
        %v5601 = vand.u32 %v5600, 4294901760
        %v5602 = vsub.f32 %v5600, %v5601
        %v5603 = vand.u32 %v5602, 4294901760
        %5604 = vmatpush1.msra.mxu0 %v5603
        %v5605 = vand.u32 %v3810, 4294901760
        %5606 = vmatprep.mubr.f32.mxu0 %v5605
        %v5607 = vand.u32 %v3809, 4294901760
        %5608 = vmatmul.mubr.f32.gmra.mrb[0].mxu0 %v5607
        %v5609 = vpop.f32.mrb[0].mxu0
        %v5610 = vadd.f32 %v5273, %v5609
        %v5611 = vpop.f32.mrb[0].mxu0
        %v5612 = vand.u32 %v3814, 4294901760
        %5613 = vmatprep.mubr.f32.mxu0 %v5612
        %v5614 = vand.u32 %v3813, 4294901760
        %5615 = vmatmul.mubr.f32.gmra.mrb[0].mxu0 %v5614
        %v5616 = vpop.f32.mrb[0].mxu0
        %v5617 = vadd.f32 %v5288, %v5616
        %v5618 = vpop.f32.mrb[0].mxu0
        %v5619 = vand.u32 %v3818, 4294901760
        %5620 = vmatprep.mubr.f32.mxu0 %v5619
        %v5621 = vand.u32 %v3817, 4294901760
        %5622 = vmatmul.mubr.f32.gmra.mrb[0].mxu0 %v5621
        %v5623 = vpop.f32.mrb[0].mxu0
        %v5624 = vadd.f32 %v5303, %v5623
        %v5625 = vpop.f32.mrb[0].mxu0
        %v5626 = vand.u32 %v3822, 4294901760
        %5627 = vmatprep.mubr.f32.mxu0 %v5626
        %v5628 = vand.u32 %v3821, 4294901760
        %5629 = vmatmul.mubr.f32.gmra.mrb[0].mxu0 %v5628
        %v5630 = vpop.f32.mrb[0].mxu0
        %v5631 = vadd.f32 %v5318, %v5630
        %v5632 = vpop.f32.mrb[0].mxu0
        %v5633 = vand.u32 %v3826, 4294901760
        %5634 = vmatprep.mubr.f32.mxu0 %v5633
        %v5635 = vand.u32 %v3825, 4294901760
        %5636 = vmatmul.mubr.f32.gmra.mrb[0].mxu0 %v5635
        %v5637 = vpop.f32.mrb[0].mxu0
        %v5638 = vadd.f32 %v5333, %v5637
        %v5639 = vpop.f32.mrb[0].mxu0
        %v5640 = vand.u32 %v3830, 4294901760
        %5641 = vmatprep.mubr.f32.mxu0 %v5640
        %v5642 = vand.u32 %v3829, 4294901760
        %5643 = vmatmul.mubr.f32.gmra.mrb[0].mxu0 %v5642
        %v5644 = vpop.f32.mrb[0].mxu0
        %v5645 = vadd.f32 %v5348, %v5644
        %v5646 = vpop.f32.mrb[0].mxu0
        %v5647 = vand.u32 %v3834, 4294901760
        %5648 = vmatprep.mubr.f32.mxu0 %v5647
        %v5649 = vand.u32 %v3833, 4294901760
        %5650 = vmatmul.mubr.f32.gmra.mrb[0].mxu0 %v5649
        %v5651 = vpop.f32.mrb[0].mxu0
        %v5652 = vadd.f32 %v5363, %v5651
        %v5653 = vpop.f32.mrb[0].mxu0
        %v5654 = vand.u32 %v3838, 4294901760
        %5655 = vmatprep.mubr.f32.mxu0 %v5654
        %v5656 = vand.u32 %v3837, 4294901760
        %5657 = vmatmul.mubr.f32.gmra.mrb[0].mxu0 %v5656
        %v5658 = vpop.f32.mrb[0].mxu0
        %v5659 = vadd.f32 %v5378, %v5658
        %v5660 = vpop.f32.mrb[0].mxu0
        %5661 = vdwg.mxu0
        %5662 = vmatprep.subr.mxu0 0.0
        %v5663 = vand.u32 %v3871, 4294901760
        %v5664 = vsub.f32 %v3871, %v5663
        %5665 = vmatpush1.msra.mxu0 %v5664
        %5666 = vmatprep.subr.mxu0 0.0
        %v5667 = vand.u32 %v3872, 4294901760
        %v5668 = vsub.f32 %v3872, %v5667
        %5669 = vmatpush1.msra.mxu0 %v5668
        %5670 = vmatprep.subr.mxu0 0.0
        %v5671 = vand.u32 %v3873, 4294901760
        %v5672 = vsub.f32 %v3873, %v5671
        %5673 = vmatpush1.msra.mxu0 %v5672
        %5674 = vmatprep.subr.mxu0 0.0
        %v5675 = vand.u32 %v3874, 4294901760
        %v5676 = vsub.f32 %v3874, %v5675
        %5677 = vmatpush1.msra.mxu0 %v5676
        %5678 = vmatprep.subr.mxu0 0.0
        %v5679 = vand.u32 %v3875, 4294901760
        %v5680 = vsub.f32 %v3875, %v5679
        %5681 = vmatpush1.msra.mxu0 %v5680
        %5682 = vmatprep.subr.mxu0 0.0
        %v5683 = vand.u32 %v3876, 4294901760
        %v5684 = vsub.f32 %v3876, %v5683
        %5685 = vmatpush1.msra.mxu0 %v5684
        %5686 = vmatprep.subr.mxu0 0.0
        %v5687 = vand.u32 %v3877, 4294901760
        %v5688 = vsub.f32 %v3877, %v5687
        %5689 = vmatpush1.msra.mxu0 %v5688
        %5690 = vmatprep.subr.mxu0 0.0
        %v5691 = vand.u32 %v3878, 4294901760
        %v5692 = vsub.f32 %v3878, %v5691
        %5693 = vmatpush1.msra.mxu0 %v5692
        %5694 = vmatprep.subr.mxu0 0.0
        %v5695 = vand.u32 %v3879, 4294901760
        %v5696 = vsub.f32 %v3879, %v5695
        %5697 = vmatpush1.msra.mxu0 %v5696
        %5698 = vmatprep.subr.mxu0 0.0
        %v5699 = vand.u32 %v3880, 4294901760
        %v5700 = vsub.f32 %v3880, %v5699
        %5701 = vmatpush1.msra.mxu0 %v5700
        %5702 = vmatprep.subr.mxu0 0.0
        %v5703 = vand.u32 %v3881, 4294901760
        %v5704 = vsub.f32 %v3881, %v5703
        %5705 = vmatpush1.msra.mxu0 %v5704
        %5706 = vmatprep.subr.mxu0 0.0
        %v5707 = vand.u32 %v3882, 4294901760
        %v5708 = vsub.f32 %v3882, %v5707
        %5709 = vmatpush1.msra.mxu0 %v5708
        %5710 = vmatprep.subr.mxu0 0.0
        %v5711 = vand.u32 %v3883, 4294901760
        %v5712 = vsub.f32 %v3883, %v5711
        %5713 = vmatpush1.msra.mxu0 %v5712
        %5714 = vmatprep.subr.mxu0 0.0
        %v5715 = vand.u32 %v3884, 4294901760
        %v5716 = vsub.f32 %v3884, %v5715
        %5717 = vmatpush1.msra.mxu0 %v5716
        %5718 = vmatprep.subr.mxu0 0.0
        %v5719 = vand.u32 %v3885, 4294901760
        %v5720 = vsub.f32 %v3885, %v5719
        %5721 = vmatpush1.msra.mxu0 %v5720
        %5722 = vmatprep.subr.mxu0 0.0
        %v5723 = vand.u32 %v3886, 4294901760
        %v5724 = vsub.f32 %v3886, %v5723
        %5725 = vmatpush1.msra.mxu0 %v5724
        %5726 = vmatprep.subr.mxu0 0.0
        %v5727 = vand.u32 %v3887, 4294901760
        %v5728 = vsub.f32 %v3887, %v5727
        %5729 = vmatpush1.msra.mxu0 %v5728
        %5730 = vmatprep.subr.mxu0 0.0
        %v5731 = vand.u32 %v3888, 4294901760
        %v5732 = vsub.f32 %v3888, %v5731
        %5733 = vmatpush1.msra.mxu0 %v5732
        %5734 = vmatprep.subr.mxu0 0.0
        %v5735 = vand.u32 %v3889, 4294901760
        %v5736 = vsub.f32 %v3889, %v5735
        %5737 = vmatpush1.msra.mxu0 %v5736
        %5738 = vmatprep.subr.mxu0 0.0
        %v5739 = vand.u32 %v3890, 4294901760
        %v5740 = vsub.f32 %v3890, %v5739
        %5741 = vmatpush1.msra.mxu0 %v5740
        %5742 = vmatprep.subr.mxu0 0.0
        %v5743 = vand.u32 %v3891, 4294901760
        %v5744 = vsub.f32 %v3891, %v5743
        %5745 = vmatpush1.msra.mxu0 %v5744
        %5746 = vmatprep.subr.mxu0 0.0
        %v5747 = vand.u32 %v3892, 4294901760
        %v5748 = vsub.f32 %v3892, %v5747
        %5749 = vmatpush1.msra.mxu0 %v5748
        %5750 = vmatprep.subr.mxu0 0.0
        %v5751 = vand.u32 %v3893, 4294901760
        %v5752 = vsub.f32 %v3893, %v5751
        %5753 = vmatpush1.msra.mxu0 %v5752
        %5754 = vmatprep.subr.mxu0 0.0
        %v5755 = vand.u32 %v3894, 4294901760
        %v5756 = vsub.f32 %v3894, %v5755
        %5757 = vmatpush1.msra.mxu0 %v5756
        %5758 = vmatprep.subr.mxu0 0.0
        %v5759 = vand.u32 %v3895, 4294901760
        %v5760 = vsub.f32 %v3895, %v5759
        %5761 = vmatpush1.msra.mxu0 %v5760
        %5762 = vmatprep.subr.mxu0 0.0
        %v5763 = vand.u32 %v3896, 4294901760
        %v5764 = vsub.f32 %v3896, %v5763
        %5765 = vmatpush1.msra.mxu0 %v5764
        %5766 = vmatprep.subr.mxu0 0.0
        %v5767 = vand.u32 %v3897, 4294901760
        %v5768 = vsub.f32 %v3897, %v5767
        %5769 = vmatpush1.msra.mxu0 %v5768
        %5770 = vmatprep.subr.mxu0 0.0
        %v5771 = vand.u32 %v3898, 4294901760
        %v5772 = vsub.f32 %v3898, %v5771
        %5773 = vmatpush1.msra.mxu0 %v5772
        %5774 = vmatprep.subr.mxu0 0.0
        %v5775 = vand.u32 %v3899, 4294901760
        %v5776 = vsub.f32 %v3899, %v5775
        %5777 = vmatpush1.msra.mxu0 %v5776
        %5778 = vmatprep.subr.mxu0 0.0
        %v5779 = vand.u32 %v3900, 4294901760
        %v5780 = vsub.f32 %v3900, %v5779
        %5781 = vmatpush1.msra.mxu0 %v5780
        %5782 = vmatprep.subr.mxu0 0.0
        %v5783 = vand.u32 %v3901, 4294901760
        %v5784 = vsub.f32 %v3901, %v5783
        %5785 = vmatpush1.msra.mxu0 %v5784
        %5786 = vmatprep.subr.mxu0 0.0
        %v5787 = vand.u32 %v3902, 4294901760
        %v5788 = vsub.f32 %v3902, %v5787
        %5789 = vmatpush1.msra.mxu0 %v5788
        %v5790 = vand.u32 %v3810, 4294901760
        %v5791 = vsub.f32 %v3810, %v5790
        %5792 = vmatprep.mubr.f32.mxu0 %v5791
        %v5793 = vand.u32 %v3809, 4294901760
        %v5794 = vsub.f32 %v3809, %v5793
        %5795 = vmatmul.mubr.f32.gmra.mrb[0].mxu0 %v5794
        %v5796 = vpop.f32.mrb[0].mxu0
        %v5797 = vadd.f32 %v5610, %v5796
        %v5798 = vpop.f32.mrb[0].mxu0
        %v5799 = vand.u32 %v3814, 4294901760
        %v5800 = vsub.f32 %v3814, %v5799
        %5801 = vmatprep.mubr.f32.mxu0 %v5800
        %v5802 = vand.u32 %v3813, 4294901760
        %v5803 = vsub.f32 %v3813, %v5802
        %5804 = vmatmul.mubr.f32.gmra.mrb[0].mxu0 %v5803
        %v5805 = vpop.f32.mrb[0].mxu0
        %v5806 = vadd.f32 %v5617, %v5805
        %v5807 = vpop.f32.mrb[0].mxu0
        %v5808 = vand.u32 %v3818, 4294901760
        %v5809 = vsub.f32 %v3818, %v5808
        %5810 = vmatprep.mubr.f32.mxu0 %v5809
        %v5811 = vand.u32 %v3817, 4294901760
        %v5812 = vsub.f32 %v3817, %v5811
        %5813 = vmatmul.mubr.f32.gmra.mrb[0].mxu0 %v5812
        %v5814 = vpop.f32.mrb[0].mxu0
        %v5815 = vadd.f32 %v5624, %v5814
        %v5816 = vpop.f32.mrb[0].mxu0
        %v5817 = vand.u32 %v3822, 4294901760
        %v5818 = vsub.f32 %v3822, %v5817
        %5819 = vmatprep.mubr.f32.mxu0 %v5818
        %v5820 = vand.u32 %v3821, 4294901760
        %v5821 = vsub.f32 %v3821, %v5820
        %5822 = vmatmul.mubr.f32.gmra.mrb[0].mxu0 %v5821
        %v5823 = vpop.f32.mrb[0].mxu0
        %v5824 = vadd.f32 %v5631, %v5823
        %v5825 = vpop.f32.mrb[0].mxu0
        %v5826 = vand.u32 %v3826, 4294901760
        %v5827 = vsub.f32 %v3826, %v5826
        %5828 = vmatprep.mubr.f32.mxu0 %v5827
        %v5829 = vand.u32 %v3825, 4294901760
        %v5830 = vsub.f32 %v3825, %v5829
        %5831 = vmatmul.mubr.f32.gmra.mrb[0].mxu0 %v5830
        %v5832 = vpop.f32.mrb[0].mxu0
        %v5833 = vadd.f32 %v5638, %v5832
        %v5834 = vpop.f32.mrb[0].mxu0
        %v5835 = vand.u32 %v3830, 4294901760
        %v5836 = vsub.f32 %v3830, %v5835
        %5837 = vmatprep.mubr.f32.mxu0 %v5836
        %v5838 = vand.u32 %v3829, 4294901760
        %v5839 = vsub.f32 %v3829, %v5838
        %5840 = vmatmul.mubr.f32.gmra.mrb[0].mxu0 %v5839
        %v5841 = vpop.f32.mrb[0].mxu0
        %v5842 = vadd.f32 %v5645, %v5841
        %v5843 = vpop.f32.mrb[0].mxu0
        %v5844 = vand.u32 %v3834, 4294901760
        %v5845 = vsub.f32 %v3834, %v5844
        %5846 = vmatprep.mubr.f32.mxu0 %v5845
        %v5847 = vand.u32 %v3833, 4294901760
        %v5848 = vsub.f32 %v3833, %v5847
        %5849 = vmatmul.mubr.f32.gmra.mrb[0].mxu0 %v5848
        %v5850 = vpop.f32.mrb[0].mxu0
        %v5851 = vadd.f32 %v5652, %v5850
        %v5852 = vpop.f32.mrb[0].mxu0
        %v5853 = vand.u32 %v3838, 4294901760
        %v5854 = vsub.f32 %v3838, %v5853
        %5855 = vmatprep.mubr.f32.mxu0 %v5854
        %v5856 = vand.u32 %v3837, 4294901760
        %v5857 = vsub.f32 %v3837, %v5856
        %5858 = vmatmul.mubr.f32.gmra.mrb[0].mxu0 %v5857
        %v5859 = vpop.f32.mrb[0].mxu0
        %v5860 = vadd.f32 %v5659, %v5859
        %v5861 = vpop.f32.mrb[0].mxu0
        %5862 = vdwg.mxu0
        %5863 = vmatprep.subr.mxu0 0.0
        %v5864 = vand.u32 %v3871, 4294901760
        %5865 = vmatpush1.msra.mxu0 %v5864
        %5866 = vmatprep.subr.mxu0 0.0
        %v5867 = vand.u32 %v3872, 4294901760
        %5868 = vmatpush1.msra.mxu0 %v5867
        %5869 = vmatprep.subr.mxu0 0.0
        %v5870 = vand.u32 %v3873, 4294901760
        %5871 = vmatpush1.msra.mxu0 %v5870
        %5872 = vmatprep.subr.mxu0 0.0
        %v5873 = vand.u32 %v3874, 4294901760
        %5874 = vmatpush1.msra.mxu0 %v5873
        %5875 = vmatprep.subr.mxu0 0.0
        %v5876 = vand.u32 %v3875, 4294901760
        %5877 = vmatpush1.msra.mxu0 %v5876
        %5878 = vmatprep.subr.mxu0 0.0
        %v5879 = vand.u32 %v3876, 4294901760
        %5880 = vmatpush1.msra.mxu0 %v5879
        %5881 = vmatprep.subr.mxu0 0.0
        %v5882 = vand.u32 %v3877, 4294901760
        %5883 = vmatpush1.msra.mxu0 %v5882
        %5884 = vmatprep.subr.mxu0 0.0
        %v5885 = vand.u32 %v3878, 4294901760
        %5886 = vmatpush1.msra.mxu0 %v5885
        %5887 = vmatprep.subr.mxu0 0.0
        %v5888 = vand.u32 %v3879, 4294901760
        %5889 = vmatpush1.msra.mxu0 %v5888
        %5890 = vmatprep.subr.mxu0 0.0
        %v5891 = vand.u32 %v3880, 4294901760
        %5892 = vmatpush1.msra.mxu0 %v5891
        %5893 = vmatprep.subr.mxu0 0.0
        %v5894 = vand.u32 %v3881, 4294901760
        %5895 = vmatpush1.msra.mxu0 %v5894
        %5896 = vmatprep.subr.mxu0 0.0
        %v5897 = vand.u32 %v3882, 4294901760
        %5898 = vmatpush1.msra.mxu0 %v5897
        %5899 = vmatprep.subr.mxu0 0.0
        %v5900 = vand.u32 %v3883, 4294901760
        %5901 = vmatpush1.msra.mxu0 %v5900
        %5902 = vmatprep.subr.mxu0 0.0
        %v5903 = vand.u32 %v3884, 4294901760
        %5904 = vmatpush1.msra.mxu0 %v5903
        %5905 = vmatprep.subr.mxu0 0.0
        %v5906 = vand.u32 %v3885, 4294901760
        %5907 = vmatpush1.msra.mxu0 %v5906
        %5908 = vmatprep.subr.mxu0 0.0
        %v5909 = vand.u32 %v3886, 4294901760
        %5910 = vmatpush1.msra.mxu0 %v5909
        %5911 = vmatprep.subr.mxu0 0.0
        %v5912 = vand.u32 %v3887, 4294901760
        %5913 = vmatpush1.msra.mxu0 %v5912
        %5914 = vmatprep.subr.mxu0 0.0
        %v5915 = vand.u32 %v3888, 4294901760
        %5916 = vmatpush1.msra.mxu0 %v5915
        %5917 = vmatprep.subr.mxu0 0.0
        %v5918 = vand.u32 %v3889, 4294901760
        %5919 = vmatpush1.msra.mxu0 %v5918
        %5920 = vmatprep.subr.mxu0 0.0
        %v5921 = vand.u32 %v3890, 4294901760
        %5922 = vmatpush1.msra.mxu0 %v5921
        %5923 = vmatprep.subr.mxu0 0.0
        %v5924 = vand.u32 %v3891, 4294901760
        %5925 = vmatpush1.msra.mxu0 %v5924
        %5926 = vmatprep.subr.mxu0 0.0
        %v5927 = vand.u32 %v3892, 4294901760
        %5928 = vmatpush1.msra.mxu0 %v5927
        %5929 = vmatprep.subr.mxu0 0.0
        %v5930 = vand.u32 %v3893, 4294901760
        %5931 = vmatpush1.msra.mxu0 %v5930
        %5932 = vmatprep.subr.mxu0 0.0
        %v5933 = vand.u32 %v3894, 4294901760
        %5934 = vmatpush1.msra.mxu0 %v5933
        %5935 = vmatprep.subr.mxu0 0.0
        %v5936 = vand.u32 %v3895, 4294901760
        %5937 = vmatpush1.msra.mxu0 %v5936
        %5938 = vmatprep.subr.mxu0 0.0
        %v5939 = vand.u32 %v3896, 4294901760
        %5940 = vmatpush1.msra.mxu0 %v5939
        %5941 = vmatprep.subr.mxu0 0.0
        %v5942 = vand.u32 %v3897, 4294901760
        %5943 = vmatpush1.msra.mxu0 %v5942
        %5944 = vmatprep.subr.mxu0 0.0
        %v5945 = vand.u32 %v3898, 4294901760
        %5946 = vmatpush1.msra.mxu0 %v5945
        %5947 = vmatprep.subr.mxu0 0.0
        %v5948 = vand.u32 %v3899, 4294901760
        %5949 = vmatpush1.msra.mxu0 %v5948
        %5950 = vmatprep.subr.mxu0 0.0
        %v5951 = vand.u32 %v3900, 4294901760
        %5952 = vmatpush1.msra.mxu0 %v5951
        %5953 = vmatprep.subr.mxu0 0.0
        %v5954 = vand.u32 %v3901, 4294901760
        %5955 = vmatpush1.msra.mxu0 %v5954
        %5956 = vmatprep.subr.mxu0 0.0
        %v5957 = vand.u32 %v3902, 4294901760
        %5958 = vmatpush1.msra.mxu0 %v5957
        %v5959 = vand.u32 %v3810, 4294901760
        %v5960 = vsub.f32 %v3810, %v5959
        %v5961 = vand.u32 %v5960, 4294901760
        %5962 = vmatprep.mubr.f32.mxu0 %v5961
        %v5963 = vand.u32 %v3809, 4294901760
        %v5964 = vsub.f32 %v3809, %v5963
        %v5965 = vand.u32 %v5964, 4294901760
        %5966 = vmatmul.mubr.f32.gmra.mrb[0].mxu0 %v5965
        %v5967 = vpop.f32.mrb[0].mxu0
        %v5968 = vadd.f32 %v5797, %v5967
        %v5969 = vpop.f32.mrb[0].mxu0
        %v5970 = vand.u32 %v3814, 4294901760
        %v5971 = vsub.f32 %v3814, %v5970
        %v5972 = vand.u32 %v5971, 4294901760
        %5973 = vmatprep.mubr.f32.mxu0 %v5972
        %v5974 = vand.u32 %v3813, 4294901760
        %v5975 = vsub.f32 %v3813, %v5974
        %v5976 = vand.u32 %v5975, 4294901760
        %5977 = vmatmul.mubr.f32.gmra.mrb[0].mxu0 %v5976
        %v5978 = vpop.f32.mrb[0].mxu0
        %v5979 = vadd.f32 %v5806, %v5978
        %v5980 = vpop.f32.mrb[0].mxu0
        %v5981 = vand.u32 %v3818, 4294901760
        %v5982 = vsub.f32 %v3818, %v5981
        %v5983 = vand.u32 %v5982, 4294901760
        %5984 = vmatprep.mubr.f32.mxu0 %v5983
        %v5985 = vand.u32 %v3817, 4294901760
        %v5986 = vsub.f32 %v3817, %v5985
        %v5987 = vand.u32 %v5986, 4294901760
        %5988 = vmatmul.mubr.f32.gmra.mrb[0].mxu0 %v5987
        %v5989 = vpop.f32.mrb[0].mxu0
        %v5990 = vadd.f32 %v5815, %v5989
        %v5991 = vpop.f32.mrb[0].mxu0
        %v5992 = vand.u32 %v3822, 4294901760
        %v5993 = vsub.f32 %v3822, %v5992
        %v5994 = vand.u32 %v5993, 4294901760
        %5995 = vmatprep.mubr.f32.mxu0 %v5994
        %v5996 = vand.u32 %v3821, 4294901760
        %v5997 = vsub.f32 %v3821, %v5996
        %v5998 = vand.u32 %v5997, 4294901760
        %5999 = vmatmul.mubr.f32.gmra.mrb[0].mxu0 %v5998
        %v6000 = vpop.f32.mrb[0].mxu0
        %v6001 = vadd.f32 %v5824, %v6000
        %v6002 = vpop.f32.mrb[0].mxu0
        %v6003 = vand.u32 %v3826, 4294901760
        %v6004 = vsub.f32 %v3826, %v6003
        %v6005 = vand.u32 %v6004, 4294901760
        %6006 = vmatprep.mubr.f32.mxu0 %v6005
        %v6007 = vand.u32 %v3825, 4294901760
        %v6008 = vsub.f32 %v3825, %v6007
        %v6009 = vand.u32 %v6008, 4294901760
        %6010 = vmatmul.mubr.f32.gmra.mrb[0].mxu0 %v6009
        %v6011 = vpop.f32.mrb[0].mxu0
        %v6012 = vadd.f32 %v5833, %v6011
        %v6013 = vpop.f32.mrb[0].mxu0
        %v6014 = vand.u32 %v3830, 4294901760
        %v6015 = vsub.f32 %v3830, %v6014
        %v6016 = vand.u32 %v6015, 4294901760
        %6017 = vmatprep.mubr.f32.mxu0 %v6016
        %v6018 = vand.u32 %v3829, 4294901760
        %v6019 = vsub.f32 %v3829, %v6018
        %v6020 = vand.u32 %v6019, 4294901760
        %6021 = vmatmul.mubr.f32.gmra.mrb[0].mxu0 %v6020
        %v6022 = vpop.f32.mrb[0].mxu0
        %v6023 = vadd.f32 %v5842, %v6022
        %v6024 = vpop.f32.mrb[0].mxu0
        %v6025 = vand.u32 %v3834, 4294901760
        %v6026 = vsub.f32 %v3834, %v6025
        %v6027 = vand.u32 %v6026, 4294901760
        %6028 = vmatprep.mubr.f32.mxu0 %v6027
        %v6029 = vand.u32 %v3833, 4294901760
        %v6030 = vsub.f32 %v3833, %v6029
        %v6031 = vand.u32 %v6030, 4294901760
        %6032 = vmatmul.mubr.f32.gmra.mrb[0].mxu0 %v6031
        %v6033 = vpop.f32.mrb[0].mxu0
        %v6034 = vadd.f32 %v5851, %v6033
        %v6035 = vpop.f32.mrb[0].mxu0
        %v6036 = vand.u32 %v3838, 4294901760
        %v6037 = vsub.f32 %v3838, %v6036
        %v6038 = vand.u32 %v6037, 4294901760
        %6039 = vmatprep.mubr.f32.mxu0 %v6038
        %v6040 = vand.u32 %v3837, 4294901760
        %v6041 = vsub.f32 %v3837, %v6040
        %v6042 = vand.u32 %v6041, 4294901760
        %6043 = vmatmul.mubr.f32.gmra.mrb[0].mxu0 %v6042
        %v6044 = vpop.f32.mrb[0].mxu0
        %v6045 = vadd.f32 %v5860, %v6044
        %v6046 = vpop.f32.mrb[0].mxu0
        %6047 = vdwg.mxu0
        %6048 = vmatprep.subr.mxu0 0.0
        %v6049 = vand.u32 %v3871, 4294901760
        %v6050 = vsub.f32 %v3871, %v6049
        %v6051 = vand.u32 %v6050, 4294901760
        %6052 = vmatpush1.msra.mxu0 %v6051
        %6053 = vmatprep.subr.mxu0 0.0
        %v6054 = vand.u32 %v3872, 4294901760
        %v6055 = vsub.f32 %v3872, %v6054
        %v6056 = vand.u32 %v6055, 4294901760
        %6057 = vmatpush1.msra.mxu0 %v6056
        %6058 = vmatprep.subr.mxu0 0.0
        %v6059 = vand.u32 %v3873, 4294901760
        %v6060 = vsub.f32 %v3873, %v6059
        %v6061 = vand.u32 %v6060, 4294901760
        %6062 = vmatpush1.msra.mxu0 %v6061
        %6063 = vmatprep.subr.mxu0 0.0
        %v6064 = vand.u32 %v3874, 4294901760
        %v6065 = vsub.f32 %v3874, %v6064
        %v6066 = vand.u32 %v6065, 4294901760
        %6067 = vmatpush1.msra.mxu0 %v6066
        %6068 = vmatprep.subr.mxu0 0.0
        %v6069 = vand.u32 %v3875, 4294901760
        %v6070 = vsub.f32 %v3875, %v6069
        %v6071 = vand.u32 %v6070, 4294901760
        %6072 = vmatpush1.msra.mxu0 %v6071
        %6073 = vmatprep.subr.mxu0 0.0
        %v6074 = vand.u32 %v3876, 4294901760
        %v6075 = vsub.f32 %v3876, %v6074
        %v6076 = vand.u32 %v6075, 4294901760
        %6077 = vmatpush1.msra.mxu0 %v6076
        %6078 = vmatprep.subr.mxu0 0.0
        %v6079 = vand.u32 %v3877, 4294901760
        %v6080 = vsub.f32 %v3877, %v6079
        %v6081 = vand.u32 %v6080, 4294901760
        %6082 = vmatpush1.msra.mxu0 %v6081
        %6083 = vmatprep.subr.mxu0 0.0
        %v6084 = vand.u32 %v3878, 4294901760
        %v6085 = vsub.f32 %v3878, %v6084
        %v6086 = vand.u32 %v6085, 4294901760
        %6087 = vmatpush1.msra.mxu0 %v6086
        %6088 = vmatprep.subr.mxu0 0.0
        %v6089 = vand.u32 %v3879, 4294901760
        %v6090 = vsub.f32 %v3879, %v6089
        %v6091 = vand.u32 %v6090, 4294901760
        %6092 = vmatpush1.msra.mxu0 %v6091
        %6093 = vmatprep.subr.mxu0 0.0
        %v6094 = vand.u32 %v3880, 4294901760
        %v6095 = vsub.f32 %v3880, %v6094
        %v6096 = vand.u32 %v6095, 4294901760
        %6097 = vmatpush1.msra.mxu0 %v6096
        %6098 = vmatprep.subr.mxu0 0.0
        %v6099 = vand.u32 %v3881, 4294901760
        %v6100 = vsub.f32 %v3881, %v6099
        %v6101 = vand.u32 %v6100, 4294901760
        %6102 = vmatpush1.msra.mxu0 %v6101
        %6103 = vmatprep.subr.mxu0 0.0
        %v6104 = vand.u32 %v3882, 4294901760
        %v6105 = vsub.f32 %v3882, %v6104
        %v6106 = vand.u32 %v6105, 4294901760
        %6107 = vmatpush1.msra.mxu0 %v6106
        %6108 = vmatprep.subr.mxu0 0.0
        %v6109 = vand.u32 %v3883, 4294901760
        %v6110 = vsub.f32 %v3883, %v6109
        %v6111 = vand.u32 %v6110, 4294901760
        %6112 = vmatpush1.msra.mxu0 %v6111
        %6113 = vmatprep.subr.mxu0 0.0
        %v6114 = vand.u32 %v3884, 4294901760
        %v6115 = vsub.f32 %v3884, %v6114
        %v6116 = vand.u32 %v6115, 4294901760
        %6117 = vmatpush1.msra.mxu0 %v6116
        %6118 = vmatprep.subr.mxu0 0.0
        %v6119 = vand.u32 %v3885, 4294901760
        %v6120 = vsub.f32 %v3885, %v6119
        %v6121 = vand.u32 %v6120, 4294901760
        %6122 = vmatpush1.msra.mxu0 %v6121
        %6123 = vmatprep.subr.mxu0 0.0
        %v6124 = vand.u32 %v3886, 4294901760
        %v6125 = vsub.f32 %v3886, %v6124
        %v6126 = vand.u32 %v6125, 4294901760
        %6127 = vmatpush1.msra.mxu0 %v6126
        %6128 = vmatprep.subr.mxu0 0.0
        %v6129 = vand.u32 %v3887, 4294901760
        %v6130 = vsub.f32 %v3887, %v6129
        %v6131 = vand.u32 %v6130, 4294901760
        %6132 = vmatpush1.msra.mxu0 %v6131
        %6133 = vmatprep.subr.mxu0 0.0
        %v6134 = vand.u32 %v3888, 4294901760
        %v6135 = vsub.f32 %v3888, %v6134
        %v6136 = vand.u32 %v6135, 4294901760
        %6137 = vmatpush1.msra.mxu0 %v6136
        %6138 = vmatprep.subr.mxu0 0.0
        %v6139 = vand.u32 %v3889, 4294901760
        %v6140 = vsub.f32 %v3889, %v6139
        %v6141 = vand.u32 %v6140, 4294901760
        %6142 = vmatpush1.msra.mxu0 %v6141
        %6143 = vmatprep.subr.mxu0 0.0
        %v6144 = vand.u32 %v3890, 4294901760
        %v6145 = vsub.f32 %v3890, %v6144
        %v6146 = vand.u32 %v6145, 4294901760
        %6147 = vmatpush1.msra.mxu0 %v6146
        %6148 = vmatprep.subr.mxu0 0.0
        %v6149 = vand.u32 %v3891, 4294901760
        %v6150 = vsub.f32 %v3891, %v6149
        %v6151 = vand.u32 %v6150, 4294901760
        %6152 = vmatpush1.msra.mxu0 %v6151
        %6153 = vmatprep.subr.mxu0 0.0
        %v6154 = vand.u32 %v3892, 4294901760
        %v6155 = vsub.f32 %v3892, %v6154
        %v6156 = vand.u32 %v6155, 4294901760
        %6157 = vmatpush1.msra.mxu0 %v6156
        %6158 = vmatprep.subr.mxu0 0.0
        %v6159 = vand.u32 %v3893, 4294901760
        %v6160 = vsub.f32 %v3893, %v6159
        %v6161 = vand.u32 %v6160, 4294901760
        %6162 = vmatpush1.msra.mxu0 %v6161
        %6163 = vmatprep.subr.mxu0 0.0
        %v6164 = vand.u32 %v3894, 4294901760
        %v6165 = vsub.f32 %v3894, %v6164
        %v6166 = vand.u32 %v6165, 4294901760
        %6167 = vmatpush1.msra.mxu0 %v6166
        %6168 = vmatprep.subr.mxu0 0.0
        %v6169 = vand.u32 %v3895, 4294901760
        %v6170 = vsub.f32 %v3895, %v6169
        %v6171 = vand.u32 %v6170, 4294901760
        %6172 = vmatpush1.msra.mxu0 %v6171
        %6173 = vmatprep.subr.mxu0 0.0
        %v6174 = vand.u32 %v3896, 4294901760
        %v6175 = vsub.f32 %v3896, %v6174
        %v6176 = vand.u32 %v6175, 4294901760
        %6177 = vmatpush1.msra.mxu0 %v6176
        %6178 = vmatprep.subr.mxu0 0.0
        %v6179 = vand.u32 %v3897, 4294901760
        %v6180 = vsub.f32 %v3897, %v6179
        %v6181 = vand.u32 %v6180, 4294901760
        %6182 = vmatpush1.msra.mxu0 %v6181
        %6183 = vmatprep.subr.mxu0 0.0
        %v6184 = vand.u32 %v3898, 4294901760
        %v6185 = vsub.f32 %v3898, %v6184
        %v6186 = vand.u32 %v6185, 4294901760
        %6187 = vmatpush1.msra.mxu0 %v6186
        %6188 = vmatprep.subr.mxu0 0.0
        %v6189 = vand.u32 %v3899, 4294901760
        %v6190 = vsub.f32 %v3899, %v6189
        %v6191 = vand.u32 %v6190, 4294901760
        %6192 = vmatpush1.msra.mxu0 %v6191
        %6193 = vmatprep.subr.mxu0 0.0
        %v6194 = vand.u32 %v3900, 4294901760
        %v6195 = vsub.f32 %v3900, %v6194
        %v6196 = vand.u32 %v6195, 4294901760
        %6197 = vmatpush1.msra.mxu0 %v6196
        %6198 = vmatprep.subr.mxu0 0.0
        %v6199 = vand.u32 %v3901, 4294901760
        %v6200 = vsub.f32 %v3901, %v6199
        %v6201 = vand.u32 %v6200, 4294901760
        %6202 = vmatpush1.msra.mxu0 %v6201
        %6203 = vmatprep.subr.mxu0 0.0
        %v6204 = vand.u32 %v3902, 4294901760
        %v6205 = vsub.f32 %v3902, %v6204
        %v6206 = vand.u32 %v6205, 4294901760
        %6207 = vmatpush1.msra.mxu0 %v6206
        %v6208 = vand.u32 %v3810, 4294901760
        %6209 = vmatprep.mubr.f32.mxu0 %v6208
        %v6210 = vand.u32 %v3809, 4294901760
        %6211 = vmatmul.mubr.f32.gmra.mrb[0].mxu0 %v6210
        %v6212 = vpop.f32.mrb[0].mxu0
        %v6213 = vadd.f32 %v5968, %v6212
        %v6214 = vpop.f32.mrb[0].mxu0
        %v6215 = vand.u32 %v3814, 4294901760
        %6216 = vmatprep.mubr.f32.mxu0 %v6215
        %v6217 = vand.u32 %v3813, 4294901760
        %6218 = vmatmul.mubr.f32.gmra.mrb[0].mxu0 %v6217
        %v6219 = vpop.f32.mrb[0].mxu0
        %v6220 = vadd.f32 %v5979, %v6219
        %v6221 = vpop.f32.mrb[0].mxu0
        %v6222 = vand.u32 %v3818, 4294901760
        %6223 = vmatprep.mubr.f32.mxu0 %v6222
        %v6224 = vand.u32 %v3817, 4294901760
        %6225 = vmatmul.mubr.f32.gmra.mrb[0].mxu0 %v6224
        %v6226 = vpop.f32.mrb[0].mxu0
        %v6227 = vadd.f32 %v5990, %v6226
        %v6228 = vpop.f32.mrb[0].mxu0
        %v6229 = vand.u32 %v3822, 4294901760
        %6230 = vmatprep.mubr.f32.mxu0 %v6229
        %v6231 = vand.u32 %v3821, 4294901760
        %6232 = vmatmul.mubr.f32.gmra.mrb[0].mxu0 %v6231
        %v6233 = vpop.f32.mrb[0].mxu0
        %v6234 = vadd.f32 %v6001, %v6233
        %v6235 = vpop.f32.mrb[0].mxu0
        %v6236 = vand.u32 %v3826, 4294901760
        %6237 = vmatprep.mubr.f32.mxu0 %v6236
        %v6238 = vand.u32 %v3825, 4294901760
        %6239 = vmatmul.mubr.f32.gmra.mrb[0].mxu0 %v6238
        %v6240 = vpop.f32.mrb[0].mxu0
        %v6241 = vadd.f32 %v6012, %v6240
        %v6242 = vpop.f32.mrb[0].mxu0
        %v6243 = vand.u32 %v3830, 4294901760
        %6244 = vmatprep.mubr.f32.mxu0 %v6243
        %v6245 = vand.u32 %v3829, 4294901760
        %6246 = vmatmul.mubr.f32.gmra.mrb[0].mxu0 %v6245
        %v6247 = vpop.f32.mrb[0].mxu0
        %v6248 = vadd.f32 %v6023, %v6247
        %v6249 = vpop.f32.mrb[0].mxu0
        %v6250 = vand.u32 %v3834, 4294901760
        %6251 = vmatprep.mubr.f32.mxu0 %v6250
        %v6252 = vand.u32 %v3833, 4294901760
        %6253 = vmatmul.mubr.f32.gmra.mrb[0].mxu0 %v6252
        %v6254 = vpop.f32.mrb[0].mxu0
        %v6255 = vadd.f32 %v6034, %v6254
        %v6256 = vpop.f32.mrb[0].mxu0
        %v6257 = vand.u32 %v3838, 4294901760
        %6258 = vmatprep.mubr.f32.mxu0 %v6257
        %v6259 = vand.u32 %v3837, 4294901760
        %6260 = vmatmul.mubr.f32.gmra.mrb[0].mxu0 %v6259
        %v6261 = vpop.f32.mrb[0].mxu0
        %v6262 = vadd.f32 %v6045, %v6261
        %v6263 = vpop.f32.mrb[0].mxu0
        %6264 = vdwg.mxu0
        %6265 = vmatprep.subr.mxu0 0.0
        %v6266 = vand.u32 %v3871, 4294901760
        %6267 = vmatpush1.msra.mxu0 %v6266
        %6268 = vmatprep.subr.mxu0 0.0
        %v6269 = vand.u32 %v3872, 4294901760
        %6270 = vmatpush1.msra.mxu0 %v6269
        %6271 = vmatprep.subr.mxu0 0.0
        %v6272 = vand.u32 %v3873, 4294901760
        %6273 = vmatpush1.msra.mxu0 %v6272
        %6274 = vmatprep.subr.mxu0 0.0
        %v6275 = vand.u32 %v3874, 4294901760
        %6276 = vmatpush1.msra.mxu0 %v6275
        %6277 = vmatprep.subr.mxu0 0.0
        %v6278 = vand.u32 %v3875, 4294901760
        %6279 = vmatpush1.msra.mxu0 %v6278
        %6280 = vmatprep.subr.mxu0 0.0
        %v6281 = vand.u32 %v3876, 4294901760
        %6282 = vmatpush1.msra.mxu0 %v6281
        %6283 = vmatprep.subr.mxu0 0.0
        %v6284 = vand.u32 %v3877, 4294901760
        %6285 = vmatpush1.msra.mxu0 %v6284
        %6286 = vmatprep.subr.mxu0 0.0
        %v6287 = vand.u32 %v3878, 4294901760
        %6288 = vmatpush1.msra.mxu0 %v6287
        %6289 = vmatprep.subr.mxu0 0.0
        %v6290 = vand.u32 %v3879, 4294901760
        %6291 = vmatpush1.msra.mxu0 %v6290
        %6292 = vmatprep.subr.mxu0 0.0
        %v6293 = vand.u32 %v3880, 4294901760
        %6294 = vmatpush1.msra.mxu0 %v6293
        %6295 = vmatprep.subr.mxu0 0.0
        %v6296 = vand.u32 %v3881, 4294901760
        %6297 = vmatpush1.msra.mxu0 %v6296
        %6298 = vmatprep.subr.mxu0 0.0
        %v6299 = vand.u32 %v3882, 4294901760
        %6300 = vmatpush1.msra.mxu0 %v6299
        %6301 = vmatprep.subr.mxu0 0.0
        %v6302 = vand.u32 %v3883, 4294901760
        %6303 = vmatpush1.msra.mxu0 %v6302
        %6304 = vmatprep.subr.mxu0 0.0
        %v6305 = vand.u32 %v3884, 4294901760
        %6306 = vmatpush1.msra.mxu0 %v6305
        %6307 = vmatprep.subr.mxu0 0.0
        %v6308 = vand.u32 %v3885, 4294901760
        %6309 = vmatpush1.msra.mxu0 %v6308
        %6310 = vmatprep.subr.mxu0 0.0
        %v6311 = vand.u32 %v3886, 4294901760
        %6312 = vmatpush1.msra.mxu0 %v6311
        %6313 = vmatprep.subr.mxu0 0.0
        %v6314 = vand.u32 %v3887, 4294901760
        %6315 = vmatpush1.msra.mxu0 %v6314
        %6316 = vmatprep.subr.mxu0 0.0
        %v6317 = vand.u32 %v3888, 4294901760
        %6318 = vmatpush1.msra.mxu0 %v6317
        %6319 = vmatprep.subr.mxu0 0.0
        %v6320 = vand.u32 %v3889, 4294901760
        %6321 = vmatpush1.msra.mxu0 %v6320
        %6322 = vmatprep.subr.mxu0 0.0
        %v6323 = vand.u32 %v3890, 4294901760
        %6324 = vmatpush1.msra.mxu0 %v6323
        %6325 = vmatprep.subr.mxu0 0.0
        %v6326 = vand.u32 %v3891, 4294901760
        %6327 = vmatpush1.msra.mxu0 %v6326
        %6328 = vmatprep.subr.mxu0 0.0
        %v6329 = vand.u32 %v3892, 4294901760
        %6330 = vmatpush1.msra.mxu0 %v6329
        %6331 = vmatprep.subr.mxu0 0.0
        %v6332 = vand.u32 %v3893, 4294901760
        %6333 = vmatpush1.msra.mxu0 %v6332
        %6334 = vmatprep.subr.mxu0 0.0
        %v6335 = vand.u32 %v3894, 4294901760
        %6336 = vmatpush1.msra.mxu0 %v6335
        %6337 = vmatprep.subr.mxu0 0.0
        %v6338 = vand.u32 %v3895, 4294901760
        %6339 = vmatpush1.msra.mxu0 %v6338
        %6340 = vmatprep.subr.mxu0 0.0
        %v6341 = vand.u32 %v3896, 4294901760
        %6342 = vmatpush1.msra.mxu0 %v6341
        %6343 = vmatprep.subr.mxu0 0.0
        %v6344 = vand.u32 %v3897, 4294901760
        %6345 = vmatpush1.msra.mxu0 %v6344
        %6346 = vmatprep.subr.mxu0 0.0
        %v6347 = vand.u32 %v3898, 4294901760
        %6348 = vmatpush1.msra.mxu0 %v6347
        %6349 = vmatprep.subr.mxu0 0.0
        %v6350 = vand.u32 %v3899, 4294901760
        %6351 = vmatpush1.msra.mxu0 %v6350
        %6352 = vmatprep.subr.mxu0 0.0
        %v6353 = vand.u32 %v3900, 4294901760
        %6354 = vmatpush1.msra.mxu0 %v6353
        %6355 = vmatprep.subr.mxu0 0.0
        %v6356 = vand.u32 %v3901, 4294901760
        %6357 = vmatpush1.msra.mxu0 %v6356
        %6358 = vmatprep.subr.mxu0 0.0
        %v6359 = vand.u32 %v3902, 4294901760
        %6360 = vmatpush1.msra.mxu0 %v6359
        %v6361 = vand.u32 %v3810, 4294901760
        %6362 = vmatprep.mubr.f32.mxu0 %v6361
        %v6363 = vand.u32 %v3809, 4294901760
        %6364 = vmatmul.mubr.f32.gmra.mrb[0].mxu0 %v6363
        %v6365 = vpop.f32.mrb[0].mxu0
        %v6366 = vadd.f32 %v6213, %v6365
        %v6367 = vpop.f32.mrb[0].mxu0
        %v6368 = vand.u32 %v3814, 4294901760
        %6369 = vmatprep.mubr.f32.mxu0 %v6368
        %v6370 = vand.u32 %v3813, 4294901760
        %6371 = vmatmul.mubr.f32.gmra.mrb[0].mxu0 %v6370
        %v6372 = vpop.f32.mrb[0].mxu0
        %v6373 = vadd.f32 %v6220, %v6372
        %v6374 = vpop.f32.mrb[0].mxu0
        %v6375 = vand.u32 %v3818, 4294901760
        %6376 = vmatprep.mubr.f32.mxu0 %v6375
        %v6377 = vand.u32 %v3817, 4294901760
        %6378 = vmatmul.mubr.f32.gmra.mrb[0].mxu0 %v6377
        %v6379 = vpop.f32.mrb[0].mxu0
        %v6380 = vadd.f32 %v6227, %v6379
        %v6381 = vpop.f32.mrb[0].mxu0
        %v6382 = vand.u32 %v3822, 4294901760
        %6383 = vmatprep.mubr.f32.mxu0 %v6382
        %v6384 = vand.u32 %v3821, 4294901760
        %6385 = vmatmul.mubr.f32.gmra.mrb[0].mxu0 %v6384
        %v6386 = vpop.f32.mrb[0].mxu0
        %v6387 = vadd.f32 %v6234, %v6386
        %v6388 = vpop.f32.mrb[0].mxu0
        %v6389 = vand.u32 %v3826, 4294901760
        %6390 = vmatprep.mubr.f32.mxu0 %v6389
        %v6391 = vand.u32 %v3825, 4294901760
        %6392 = vmatmul.mubr.f32.gmra.mrb[0].mxu0 %v6391
        %v6393 = vpop.f32.mrb[0].mxu0
        %v6394 = vadd.f32 %v6241, %v6393
        %v6395 = vpop.f32.mrb[0].mxu0
        %v6396 = vand.u32 %v3830, 4294901760
        %6397 = vmatprep.mubr.f32.mxu0 %v6396
        %v6398 = vand.u32 %v3829, 4294901760
        %6399 = vmatmul.mubr.f32.gmra.mrb[0].mxu0 %v6398
        %v6400 = vpop.f32.mrb[0].mxu0
        %v6401 = vadd.f32 %v6248, %v6400
        %v6402 = vpop.f32.mrb[0].mxu0
        %v6403 = vand.u32 %v3834, 4294901760
        %6404 = vmatprep.mubr.f32.mxu0 %v6403
        %v6405 = vand.u32 %v3833, 4294901760
        %6406 = vmatmul.mubr.f32.gmra.mrb[0].mxu0 %v6405
        %v6407 = vpop.f32.mrb[0].mxu0
        %v6408 = vadd.f32 %v6255, %v6407
        %v6409 = vpop.f32.mrb[0].mxu0
        %v6410 = vand.u32 %v3838, 4294901760
        %6411 = vmatprep.mubr.f32.mxu0 %v6410
        %v6412 = vand.u32 %v3837, 4294901760
        %6413 = vmatmul.mubr.f32.gmra.mrb[0].mxu0 %v6412
        %v6414 = vpop.f32.mrb[0].mxu0
        %v6415 = vadd.f32 %v6262, %v6414
        %v6416 = vpop.f32.mrb[0].mxu0
        %6417 = vdwg.mxu0
        %6418 = vst [vmem:[%s331] sm:$0xff] %v6366
        %6419 = vst [vmem:[%s331 + $0x8] sm:$0xff] %v6373
        %6420 = vst [vmem:[%s331 + $0x10] sm:$0xff] %v6380
        %6421 = vst [vmem:[%s331 + $0x18] sm:$0xff] %v6387
        %6422 = vst [vmem:[%s331 + $0x20] sm:$0xff] %v6394
        %6423 = vst [vmem:[%s331 + $0x28] sm:$0xff] %v6401
        %6424 = vst [vmem:[%s331 + $0x30] sm:$0xff] %v6408
        %6425 = vst [vmem:[%s331 + $0x38] sm:$0xff] %v6415
        %s6426 = sand.u32 %s185, 1
        %s6427 = scalar_lea.sflag [#allocation4], %s6426
        %s6428 = sand.u32 %s185, 1
        %s6429 = smul.addr %s6428, 64
        %s6430 = scalar_lea.vmem [#allocation8], %s6429
        // Predicated region
        $region61: #{mlp_forward.1} parent=47 // pred_check
          %p6431 = pneg %p195
        $region62: #{mlp_forward.1} parent=47 // pred_check_branch
          %6433 = sbr.rel (%p6431) target = $region64
        $region63: #{mlp_forward.1} parent=47 // pred_region
          %s6434 = smul.u32 8, %s25
          %s6435 = ssub.s32 10, %s6434
          %p6436 = scmp.lt.s32.totalorder %s6435, 8
          %s6437 = scalar_select %p6436, %s6435, 8
          %s6438 = smul.u32 128, %s6437
          %s6440 = ssub.s32 1024, %s6438
          %6441 = vsyncadd %s6427, %s6440
          %p6442 = scmp.ne.s32.totalorder 0, %s6438
          %s6443 = smul.addr %s6434, 128
          %s6444 = scalar_lea.hbm %s7, %s6443
          %s6445 = smul.u32 8, %s6437
          %s6446 = sshll.u32 %s6430, 4
          %s6447 = int_to_ptr.vmem [resolvable:$true] %s6446
          %s6448 = sshll.u32 %s6445, 4
          %6452 = dma.vmem_to_hbm [thread:$0]  (%p6442), %s6447, %s6448, %s6444, %s6427, 128, 128, 8
        $region64: #{mlp_forward.1} parent=47 // pred_fallthru
          _
      $region48: #{mlp_forward.1} parent=5 // pred_fallthru
        _
      %p6453 = scmp.le.s32.totalorder 2, %s20
      // Predicated region
      $region65: #{mlp_forward.1} parent=5 // pred_check
        %p6454 = pneg %p6453
      $region66: #{mlp_forward.1} parent=5 // pred_check_branch
        %6456 = sbr.rel (%p6454) target = $region68
      $region67: #{mlp_forward.1} parent=5 // pred_region
        %s6457 = ssub.s32 %s20, 2
        // Predicated region
        $region69: #{mlp_forward.1} parent=67 // pred_check
          %p6458 = pneg %p201
        $region70: #{mlp_forward.1} parent=67 // pred_check_branch
          %6460 = sbr.rel (%p6458) target = $region72
        $region71: #{mlp_forward.1} parent=67 // pred_region
          %s6461 = sand.u32 %s186, 1
          %s6462 = scalar_lea.sflag [#allocation4], %s6461
          %s6463 = sand.u32 %s186, 1
          %s6464 = smul.addr %s6463, 64
          %s6465 = scalar_lea.vmem [#allocation8], %s6464
          %6466 = dma.done %s6462, 1024
        $region72: #{mlp_forward.1} parent=67 // pred_fallthru
          _
      $region68: #{mlp_forward.1} parent=5 // pred_fallthru
        _
    $region6: #{mlp_forward.1} parent=1 // loop_footer
      %s24 = sadd.s32 1, %s20
    $region7: #{mlp_forward.1} parent=1 // loop_footer_branch
      %19 = sbr.rel target = $region3
    $region8: #{mlp_forward.1} parent=1 // loop_exit
      _
    %6467 = vsyncpa [#allocation3], 1
    %s6468 = scalar_lea.sflag [#allocation3], 1
    %6469 = vsyncpa %s6468, 1
    %6470 = vsyncpa [#allocation6], 1
    %6471 = vsyncpa [#allocation4], 1
    %s6472 = scalar_lea.sflag [#allocation4], 1
    %6473 = vsyncpa %s6472, 1

</llo_original>
